<compile_context>
chip_gen: v5e
topology: v5e:2x2
jax: 0.10.0
libtpu: 0.0.40
codegen_flags: <defaults>
</compile_context>

<pallas_src>
import jax
import jax.numpy as jnp
from jax.experimental import pallas as pl
from jax.experimental.pallas import tpu as pltpu

LATENT = 100
LATENT_PAD = 128          # pad contraction dim to one lane-dense MXU pass
H1, H2, H3 = 256, 512, 1024
OUT = 28 * 28             # 784
OUT_PAD = 896             # 7 * 128 -> unmasked, lane-dense output stores
SUBLANE = 16              # bf16 sublane packing -> batch tiles multiple of 16


def _round_up(x, m):
    return (x + m - 1) // m * m


def _chip_budget():
    """(batch-tile cap, vmem_limit_bytes) sized for this chip's physical VMEM."""
    try:
        cap = int(getattr(pltpu.get_tpu_info(), "vmem_capacity_bytes", 0))
    except Exception:
        cap = 0
    if cap >= (96 << 20):          # 128 MiB parts (v5e / v6e): amortize step overhead
        return 1024, 64 << 20
    return 512, 48 << 20           # 64 MiB v7x (and safe default)


def _generator_kernel(x_ref,
                      w1_ref, b1_ref,
                      w2_ref, b2_ref,
                      w3_ref, b3_ref,
                      w4_ref, b4_ref,
                      o_ref):
    # bf16 operands into the MXU, f32 accumulation; ReLU on the VPU and tanh on
    # the EUP stay in f32; final store is bf16 (lane-dense, halved writeback).
    h = jnp.dot(x_ref[...], w1_ref[...],
                preferred_element_type=jnp.float32) + b1_ref[...]
    h = jnp.maximum(h, 0.0)

    h = jnp.dot(h.astype(jnp.bfloat16), w2_ref[...],
                preferred_element_type=jnp.float32) + b2_ref[...]
    h = jnp.maximum(h, 0.0)

    h = jnp.dot(h.astype(jnp.bfloat16), w3_ref[...],
                preferred_element_type=jnp.float32) + b3_ref[...]
    h = jnp.maximum(h, 0.0)

    h = jnp.dot(h.astype(jnp.bfloat16), w4_ref[...],
                preferred_element_type=jnp.float32) + b4_ref[...]
    o_ref[...] = jnp.tanh(h).astype(o_ref.dtype)


def _prepare_params(params):
    """Pad W1 rows 100->128, pad W4/b4 cols 784->896 (zeros), cast W to bf16."""
    (w1, b1), (w2, b2), (w3, b3), (w4, b4) = params
    w1p = jnp.pad(w1, ((0, LATENT_PAD - LATENT), (0, 0)))
    w4p = jnp.pad(w4, ((0, 0), (0, OUT_PAD - OUT)))
    b4p = jnp.pad(b4, ((0, 0), (0, OUT_PAD - OUT)))
    to_bf16 = lambda w: w.astype(jnp.bfloat16)
    return ((to_bf16(w1p), b1.astype(jnp.float32)),
            (to_bf16(w2), b2.astype(jnp.float32)),
            (to_bf16(w3), b3.astype(jnp.float32)),
            (to_bf16(w4p), b4p.astype(jnp.float32)))


def generator_forward(x, params, *, tile_b=None):
    """x: (B, 100) float32 latent vectors -> (B, 1, 28, 28) float32 in [-1, 1]."""
    B = x.shape[0]
    (w1, b1), (w2, b2), (w3, b3), (w4, b4) = _prepare_params(params)

    tb_cap, vmem_limit = _chip_budget()
    if tile_b is None:
        tile_b = tb_cap

    # Balanced batch tiling: pick the tile count first, then size tiles so the
    # padding waste is < SUBLANE rows per tile. Force >= 2 tiles when there is
    # enough real work so the "parallel" axis keeps both v7x TCs busy.
    nt = pl.cdiv(B, tile_b)
    if nt == 1 and B >= 2 * SUBLANE:
        nt = 2
    tb = _round_up(pl.cdiv(B, nt), SUBLANE)
    b_pad = nt * tb

    # Pad latent 100->128 lanes and batch up to nt*tb rows, pre-cast to bf16 so
    # the per-step input DMA is half-size and layer-1 feeds the MXU directly.
    xp = jnp.pad(x.astype(jnp.float32),
                 ((0, b_pad - B), (0, LATENT_PAD - LATENT))).astype(jnp.bfloat16)

    flops = 2 * b_pad * (LATENT_PAD * H1 + H1 * H2 + H2 * H3 + H3 * OUT_PAD)
    weight_bytes = sum(int(w.size) * 2 + int(b.size) * 4
                       for (w, b) in ((w1, b1), (w2, b2), (w3, b3), (w4, b4)))
    bytes_accessed = int(xp.size) * 2 + b_pad * OUT_PAD * 2 + weight_bytes

    def run(single_buffer_weights):
        # Weights/biases: full-array blocks with a constant index_map -> stay
        # VMEM-resident across batch tiles; optionally single-buffered.
        def resident(a):
            kwargs = {}
            if single_buffer_weights:
                kwargs["pipeline_mode"] = pl.Buffered(1)
            return pl.BlockSpec(a.shape, lambda i: (0,) * a.ndim, **kwargs)

        return pl.pallas_call(
            _generator_kernel,
            out_shape=jax.ShapeDtypeStruct((b_pad, OUT_PAD), jnp.bfloat16),
            grid=(nt,),
            in_specs=[pl.BlockSpec((tb, LATENT_PAD), lambda i: (i, 0)),
                      resident(w1), resident(b1),
                      resident(w2), resident(b2),
                      resident(w3), resident(b3),
                      resident(w4), resident(b4)],
            out_specs=pl.BlockSpec((tb, OUT_PAD), lambda i: (i, 0)),
            compiler_params=pltpu.CompilerParams(
                dimension_semantics=("parallel",),
                vmem_limit_bytes=vmem_limit),
            cost_estimate=pl.CostEstimate(
                flops=flops,
                transcendentals=b_pad * OUT_PAD,
                bytes_accessed=bytes_accessed),
        )(xp, w1, b1, w2, b2, w3, b3, w4, b4)

    try:
        out = run(single_buffer_weights=True)
    except Exception:
        # Installed JAX rejected pl.Buffered(1); default double-buffering only
        # costs ~3 MiB extra and still fits every part's VMEM at these tiles.
        out = run(single_buffer_weights=False)

    # Drop padded rows/columns, back to f32, pure view -> NCHW (.view(-1,1,28,28)).
    return out[:B, :OUT].astype(jnp.float32).reshape(B, 1, 28, 28)


def init_params(key):
    """PyTorch Linear-like init (uniform(-1/sqrt(fan_in), 1/sqrt(fan_in))).
    Weights stored (in, out) so the kernel computes y = x @ W + b."""
    dims = [(LATENT, H1), (H1, H2), (H2, H3), (H3, OUT)]
    params = []
    for (fan_in, fan_out) in dims:
        key, kw, kb = jax.random.split(key, 3)
        bound = 1.0 / jnp.sqrt(jnp.float32(fan_in))
        w = jax.random.uniform(kw, (fan_in, fan_out), jnp.float32, -bound, bound)
        b = jax.random.uniform(kb, (1, fan_out), jnp.float32, -bound, bound)
        params.append((w, b))
    return params


def reference_forward(x, params):
    """Pure-JAX reference mirroring the kernel math (bf16 MXU operands,
    f32 accumulation / activations, f32 output)."""
    h = x.astype(jnp.float32)
    for i, (w, b) in enumerate(params):
        h = jnp.dot(h.astype(jnp.bfloat16), w.astype(jnp.bfloat16),
                    preferred_element_type=jnp.float32) + b
        h = jnp.maximum(h, 0.0) if i < 3 else jnp.tanh(h)
    return h.reshape(-1, 1, 28, 28)


def reference_forward_f32(x, params):
    """Full-precision reference (sanity bound on the bf16 precision contract)."""
    h = x
    for i, (w, b) in enumerate(params):
        h = h @ w + b
        h = jnp.maximum(h, 0.0) if i < 3 else jnp.tanh(h)
    return h.reshape(-1, 1, 28, 28)


if __name__ == "__main__":
    key = jax.random.PRNGKey(0)
    kx, kp = jax.random.split(key)
    params = init_params(kp)

    # B=8 exercises the single-tile path; B=40 exercises the multi-tile
    # ("parallel") grid with balanced tiles and padded-row slicing.
    for B in (8, 40):
        x = jax.random.normal(jax.random.fold_in(kx, B), (B, LATENT), jnp.float32)

        y = jax.block_until_ready(generator_forward(x, params))
        assert y.shape == (B, 1, 28, 28), y.shape

        # Exact-math reference (bf16 operands, f32 accumulation) — tight check.
        y_ref = reference_forward(x, params)
        assert jnp.allclose(y, y_ref, atol=2e-2, rtol=2e-2), \
            f"mismatch vs bf16 reference (B={B})"

        # f32 reference — loose check that the bf16 precision contract is benign.
        y_f32 = reference_forward_f32(x, params)
        assert float(jnp.max(jnp.abs(y - y_f32))) < 5e-2, \
            f"drifted too far from f32 reference (B={B})"

    print("KERNEL_OK")
</pallas_src>

<mosaic_0001>
module attributes {stable_mosaic.version = 11 : i64} {
  func.func @_generator_kernel(%arg0: i32, %arg1: memref<16x128xbf16, #tpu.memory_space<vmem>>, %arg2: memref<128x256xbf16, #tpu.memory_space<vmem>>, %arg3: memref<1x256xf32, #tpu.memory_space<vmem>>, %arg4: memref<256x512xbf16, #tpu.memory_space<vmem>>, %arg5: memref<1x512xf32, #tpu.memory_space<vmem>>, %arg6: memref<512x1024xbf16, #tpu.memory_space<vmem>>, %arg7: memref<1x1024xf32, #tpu.memory_space<vmem>>, %arg8: memref<1024x896xbf16, #tpu.memory_space<vmem>>, %arg9: memref<1x896xf32, #tpu.memory_space<vmem>>, %arg10: memref<16x896xbf16, #tpu.memory_space<vmem>>) attributes {dimension_semantics = [#tpu.dimension_semantics<parallel>], iteration_bounds = array<i64: 1>, scalar_prefetch = 0 : i64, scratch_operands = 0 : i64, tpu.core_type = #tpu.core_type<tc>, window_params = [{transform_indices = @transform_0, window_bounds = array<i64: 16, 128>}, {pipeline_mode = #tpu.pipeline_mode<synchronous>, transform_indices = @transform_1, window_bounds = array<i64: 128, 256>}, {pipeline_mode = #tpu.pipeline_mode<synchronous>, transform_indices = @transform_2, window_bounds = array<i64: 1, 256>}, {pipeline_mode = #tpu.pipeline_mode<synchronous>, transform_indices = @transform_3, window_bounds = array<i64: 256, 512>}, {pipeline_mode = #tpu.pipeline_mode<synchronous>, transform_indices = @transform_4, window_bounds = array<i64: 1, 512>}, {pipeline_mode = #tpu.pipeline_mode<synchronous>, transform_indices = @transform_5, window_bounds = array<i64: 512, 1024>}, {pipeline_mode = #tpu.pipeline_mode<synchronous>, transform_indices = @transform_6, window_bounds = array<i64: 1, 1024>}, {pipeline_mode = #tpu.pipeline_mode<synchronous>, transform_indices = @transform_7, window_bounds = array<i64: 1024, 896>}, {pipeline_mode = #tpu.pipeline_mode<synchronous>, transform_indices = @transform_8, window_bounds = array<i64: 1, 896>}, {transform_indices = @transform_9, window_bounds = array<i64: 16, 896>}]} {
    %c0 = arith.constant 0 : index
    %c0_0 = arith.constant 0 : index
    %0 = vector.load %arg1[%c0, %c0_0] : memref<16x128xbf16, #tpu.memory_space<vmem>>, vector<16x128xbf16>
    %c0_1 = arith.constant 0 : index
    %c0_2 = arith.constant 0 : index
    %1 = vector.load %arg2[%c0_1, %c0_2] : memref<128x256xbf16, #tpu.memory_space<vmem>>, vector<128x256xbf16>
    %cst = arith.constant dense<0.000000e+00> : vector<16x256xf32>
    %2 = tpu.matmul %0, %1, %cst {dimension_numbers = #tpu.dot_dimension_numbers<[1], [0], [0], [1], [0, 0, 1, 1], [], []>} : vector<16x128xbf16>, vector<128x256xbf16>, vector<16x256xf32> -> vector<16x256xf32>
    %c0_3 = arith.constant 0 : index
    %c0_4 = arith.constant 0 : index
    %3 = vector.load %arg3[%c0_3, %c0_4] : memref<1x256xf32, #tpu.memory_space<vmem>>, vector<1x256xf32>
    %4 = vector.broadcast %3 : vector<1x256xf32> to vector<16x256xf32>
    %5 = arith.addf %2, %4 : vector<16x256xf32>
    %cst_5 = arith.constant 0.000000e+00 : f32
    %6 = vector.broadcast %cst_5 : f32 to vector<16x256xf32>
    %7 = arith.maximumf %5, %6 : vector<16x256xf32>
    %8 = arith.truncf %7 : vector<16x256xf32> to vector<16x256xbf16>
    %c0_6 = arith.constant 0 : index
    %c0_7 = arith.constant 0 : index
    %9 = vector.load %arg4[%c0_6, %c0_7] : memref<256x512xbf16, #tpu.memory_space<vmem>>, vector<256x512xbf16>
    %cst_8 = arith.constant dense<0.000000e+00> : vector<16x512xf32>
    %10 = tpu.matmul %8, %9, %cst_8 {dimension_numbers = #tpu.dot_dimension_numbers<[1], [0], [0], [1], [0, 0, 1, 1], [], []>} : vector<16x256xbf16>, vector<256x512xbf16>, vector<16x512xf32> -> vector<16x512xf32>
    %c0_9 = arith.constant 0 : index
    %c0_10 = arith.constant 0 : index
    %11 = vector.load %arg5[%c0_9, %c0_10] : memref<1x512xf32, #tpu.memory_space<vmem>>, vector<1x512xf32>
    %12 = vector.broadcast %11 : vector<1x512xf32> to vector<16x512xf32>
    %13 = arith.addf %10, %12 : vector<16x512xf32>
    %cst_11 = arith.constant 0.000000e+00 : f32
    %14 = vector.broadcast %cst_11 : f32 to vector<16x512xf32>
    %15 = arith.maximumf %13, %14 : vector<16x512xf32>
    %16 = arith.truncf %15 : vector<16x512xf32> to vector<16x512xbf16>
    %c0_12 = arith.constant 0 : index
    %c0_13 = arith.constant 0 : index
    %17 = vector.load %arg6[%c0_12, %c0_13] : memref<512x1024xbf16, #tpu.memory_space<vmem>>, vector<512x1024xbf16>
    %cst_14 = arith.constant dense<0.000000e+00> : vector<16x1024xf32>
    %18 = tpu.matmul %16, %17, %cst_14 {dimension_numbers = #tpu.dot_dimension_numbers<[1], [0], [0], [1], [0, 0, 1, 1], [], []>} : vector<16x512xbf16>, vector<512x1024xbf16>, vector<16x1024xf32> -> vector<16x1024xf32>
    %c0_15 = arith.constant 0 : index
    %c0_16 = arith.constant 0 : index
    %19 = vector.load %arg7[%c0_15, %c0_16] : memref<1x1024xf32, #tpu.memory_space<vmem>>, vector<1x1024xf32>
    %20 = vector.broadcast %19 : vector<1x1024xf32> to vector<16x1024xf32>
    %21 = arith.addf %18, %20 : vector<16x1024xf32>
    %cst_17 = arith.constant 0.000000e+00 : f32
    %22 = vector.broadcast %cst_17 : f32 to vector<16x1024xf32>
    %23 = arith.maximumf %21, %22 : vector<16x1024xf32>
    %24 = arith.truncf %23 : vector<16x1024xf32> to vector<16x1024xbf16>
    %c0_18 = arith.constant 0 : index
    %c0_19 = arith.constant 0 : index
    %25 = vector.load %arg8[%c0_18, %c0_19] : memref<1024x896xbf16, #tpu.memory_space<vmem>>, vector<1024x896xbf16>
    %cst_20 = arith.constant dense<0.000000e+00> : vector<16x896xf32>
    %26 = tpu.matmul %24, %25, %cst_20 {dimension_numbers = #tpu.dot_dimension_numbers<[1], [0], [0], [1], [0, 0, 1, 1], [], []>} : vector<16x1024xbf16>, vector<1024x896xbf16>, vector<16x896xf32> -> vector<16x896xf32>
    %c0_21 = arith.constant 0 : index
    %c0_22 = arith.constant 0 : index
    %27 = vector.load %arg9[%c0_21, %c0_22] : memref<1x896xf32, #tpu.memory_space<vmem>>, vector<1x896xf32>
    %28 = vector.broadcast %27 : vector<1x896xf32> to vector<16x896xf32>
    %29 = arith.addf %26, %28 : vector<16x896xf32>
    %30 = math.tanh %29 : vector<16x896xf32>
    %31 = arith.truncf %30 : vector<16x896xf32> to vector<16x896xbf16>
    %c0_23 = arith.constant 0 : index
    %c0_24 = arith.constant 0 : index
    %32 = vector.load %arg10[%c0_23, %c0_24] : memref<16x896xbf16, #tpu.memory_space<vmem>>, vector<16x896xbf16>
    tpu.vector_store %arg10[%c0_23, %c0_24], %31 {strides = array<i32>} : memref<16x896xbf16, #tpu.memory_space<vmem>>, vector<16x896xbf16>,
    return
  }
  func.func @transform_0(%arg0: i32) -> (i32, i32) {
    %c0_i32 = arith.constant 0 : i32
    %c0_i32_0 = arith.constant 0 : i32
    return %arg0, %c0_i32 : i32, i32
  }
  func.func @transform_1(%arg0: i32) -> (i32, i32) {
    %c0_i32 = arith.constant 0 : i32
    %c0_i32_0 = arith.constant 0 : i32
    %c0_i32_1 = arith.constant 0 : i32
    return %c0_i32, %c0_i32_0 : i32, i32
  }
  func.func @transform_2(%arg0: i32) -> (i32, i32) {
    %c0_i32 = arith.constant 0 : i32
    %c0_i32_0 = arith.constant 0 : i32
    %c0_i32_1 = arith.constant 0 : i32
    return %c0_i32, %c0_i32_0 : i32, i32
  }
  func.func @transform_3(%arg0: i32) -> (i32, i32) {
    %c0_i32 = arith.constant 0 : i32
    %c0_i32_0 = arith.constant 0 : i32
    %c0_i32_1 = arith.constant 0 : i32
    return %c0_i32, %c0_i32_0 : i32, i32
  }
  func.func @transform_4(%arg0: i32) -> (i32, i32) {
    %c0_i32 = arith.constant 0 : i32
    %c0_i32_0 = arith.constant 0 : i32
    %c0_i32_1 = arith.constant 0 : i32
    return %c0_i32, %c0_i32_0 : i32, i32
  }
  func.func @transform_5(%arg0: i32) -> (i32, i32) {
    %c0_i32 = arith.constant 0 : i32
    %c0_i32_0 = arith.constant 0 : i32
    %c0_i32_1 = arith.constant 0 : i32
    return %c0_i32, %c0_i32_0 : i32, i32
  }
  func.func @transform_6(%arg0: i32) -> (i32, i32) {
    %c0_i32 = arith.constant 0 : i32
    %c0_i32_0 = arith.constant 0 : i32
    %c0_i32_1 = arith.constant 0 : i32
    return %c0_i32, %c0_i32_0 : i32, i32
  }
  func.func @transform_7(%arg0: i32) -> (i32, i32) {
    %c0_i32 = arith.constant 0 : i32
    %c0_i32_0 = arith.constant 0 : i32
    %c0_i32_1 = arith.constant 0 : i32
    return %c0_i32, %c0_i32_0 : i32, i32
  }
  func.func @transform_8(%arg0: i32) -> (i32, i32) {
    %c0_i32 = arith.constant 0 : i32
    %c0_i32_0 = arith.constant 0 : i32
    %c0_i32_1 = arith.constant 0 : i32
    return %c0_i32, %c0_i32_0 : i32, i32
  }
  func.func @transform_9(%arg0: i32) -> (i32, i32) {
    %c0_i32 = arith.constant 0 : i32
    %c0_i32_0 = arith.constant 0 : i32
    return %arg0, %c0_i32 : i32, i32
  }
}

module attributes {stable_mosaic.version = 11 : i64} {
  func.func @_generator_kernel(%arg0: i32, %arg1: memref<16x128xbf16, #tpu.memory_space<vmem>>, %arg2: memref<128x256xbf16, #tpu.memory_space<vmem>>, %arg3: memref<1x256xf32, #tpu.memory_space<vmem>>, %arg4: memref<256x512xbf16, #tpu.memory_space<vmem>>, %arg5: memref<1x512xf32, #tpu.memory_space<vmem>>, %arg6: memref<512x1024xbf16, #tpu.memory_space<vmem>>, %arg7: memref<1x1024xf32, #tpu.memory_space<vmem>>, %arg8: memref<1024x896xbf16, #tpu.memory_space<vmem>>, %arg9: memref<1x896xf32, #tpu.memory_space<vmem>>, %arg10: memref<16x896xbf16, #tpu.memory_space<vmem>>) attributes {dimension_semantics = [#tpu.dimension_semantics<parallel>], iteration_bounds = array<i64: 1>, scalar_prefetch = 0 : i64, scratch_operands = 0 : i64, tpu.core_type = #tpu.core_type<tc>, window_params = [{transform_indices = @transform_0, window_bounds = array<i64: 16, 128>}, {pipeline_mode = #tpu.pipeline_mode<synchronous>, transform_indices = @transform_1, window_bounds = array<i64: 128, 256>}, {pipeline_mode = #tpu.pipeline_mode<synchronous>, transform_indices = @transform_2, window_bounds = array<i64: 1, 256>}, {pipeline_mode = #tpu.pipeline_mode<synchronous>, transform_indices = @transform_3, window_bounds = array<i64: 256, 512>}, {pipeline_mode = #tpu.pipeline_mode<synchronous>, transform_indices = @transform_4, window_bounds = array<i64: 1, 512>}, {pipeline_mode = #tpu.pipeline_mode<synchronous>, transform_indices = @transform_5, window_bounds = array<i64: 512, 1024>}, {pipeline_mode = #tpu.pipeline_mode<synchronous>, transform_indices = @transform_6, window_bounds = array<i64: 1, 1024>}, {pipeline_mode = #tpu.pipeline_mode<synchronous>, transform_indices = @transform_7, window_bounds = array<i64: 1024, 896>}, {pipeline_mode = #tpu.pipeline_mode<synchronous>, transform_indices = @transform_8, window_bounds = array<i64: 1, 896>}, {transform_indices = @transform_9, window_bounds = array<i64: 16, 896>}]} {
    %c0 = arith.constant 0 : index
    %c0_0 = arith.constant 0 : index
    %0 = vector.load %arg1[%c0, %c0_0] : memref<16x128xbf16, #tpu.memory_space<vmem>>, vector<16x128xbf16>
    %c0_1 = arith.constant 0 : index
    %c0_2 = arith.constant 0 : index
    %1 = vector.load %arg2[%c0_1, %c0_2] : memref<128x256xbf16, #tpu.memory_space<vmem>>, vector<128x256xbf16>
    %cst = arith.constant dense<0.000000e+00> : vector<16x256xf32>
    %2 = tpu.matmul %0, %1, %cst {dimension_numbers = #tpu.dot_dimension_numbers<[1], [0], [0], [1], [0, 0, 1, 1], [], []>} : vector<16x128xbf16>, vector<128x256xbf16>, vector<16x256xf32> -> vector<16x256xf32>
    %c0_3 = arith.constant 0 : index
    %c0_4 = arith.constant 0 : index
    %3 = vector.load %arg3[%c0_3, %c0_4] : memref<1x256xf32, #tpu.memory_space<vmem>>, vector<1x256xf32>
    %4 = vector.broadcast %3 : vector<1x256xf32> to vector<16x256xf32>
    %5 = arith.addf %2, %4 : vector<16x256xf32>
    %cst_5 = arith.constant 0.000000e+00 : f32
    %6 = vector.broadcast %cst_5 : f32 to vector<16x256xf32>
    %7 = arith.maximumf %5, %6 : vector<16x256xf32>
    %8 = arith.truncf %7 : vector<16x256xf32> to vector<16x256xbf16>
    %c0_6 = arith.constant 0 : index
    %c0_7 = arith.constant 0 : index
    %9 = vector.load %arg4[%c0_6, %c0_7] : memref<256x512xbf16, #tpu.memory_space<vmem>>, vector<256x512xbf16>
    %cst_8 = arith.constant dense<0.000000e+00> : vector<16x512xf32>
    %10 = tpu.matmul %8, %9, %cst_8 {dimension_numbers = #tpu.dot_dimension_numbers<[1], [0], [0], [1], [0, 0, 1, 1], [], []>} : vector<16x256xbf16>, vector<256x512xbf16>, vector<16x512xf32> -> vector<16x512xf32>
    %c0_9 = arith.constant 0 : index
    %c0_10 = arith.constant 0 : index
    %11 = vector.load %arg5[%c0_9, %c0_10] : memref<1x512xf32, #tpu.memory_space<vmem>>, vector<1x512xf32>
    %12 = vector.broadcast %11 : vector<1x512xf32> to vector<16x512xf32>
    %13 = arith.addf %10, %12 : vector<16x512xf32>
    %cst_11 = arith.constant 0.000000e+00 : f32
    %14 = vector.broadcast %cst_11 : f32 to vector<16x512xf32>
    %15 = arith.maximumf %13, %14 : vector<16x512xf32>
    %16 = arith.truncf %15 : vector<16x512xf32> to vector<16x512xbf16>
    %c0_12 = arith.constant 0 : index
    %c0_13 = arith.constant 0 : index
    %17 = vector.load %arg6[%c0_12, %c0_13] : memref<512x1024xbf16, #tpu.memory_space<vmem>>, vector<512x1024xbf16>
    %cst_14 = arith.constant dense<0.000000e+00> : vector<16x1024xf32>
    %18 = tpu.matmul %16, %17, %cst_14 {dimension_numbers = #tpu.dot_dimension_numbers<[1], [0], [0], [1], [0, 0, 1, 1], [], []>} : vector<16x512xbf16>, vector<512x1024xbf16>, vector<16x1024xf32> -> vector<16x1024xf32>
    %c0_15 = arith.constant 0 : index
    %c0_16 = arith.constant 0 : index
    %19 = vector.load %arg7[%c0_15, %c0_16] : memref<1x1024xf32, #tpu.memory_space<vmem>>, vector<1x1024xf32>
    %20 = vector.broadcast %19 : vector<1x1024xf32> to vector<16x1024xf32>
    %21 = arith.addf %18, %20 : vector<16x1024xf32>
    %cst_17 = arith.constant 0.000000e+00 : f32
    %22 = vector.broadcast %cst_17 : f32 to vector<16x1024xf32>
    %23 = arith.maximumf %21, %22 : vector<16x1024xf32>
    %24 = arith.truncf %23 : vector<16x1024xf32> to vector<16x1024xbf16>
    %c0_18 = arith.constant 0 : index
    %c0_19 = arith.constant 0 : index
    %25 = vector.load %arg8[%c0_18, %c0_19] : memref<1024x896xbf16, #tpu.memory_space<vmem>>, vector<1024x896xbf16>
    %cst_20 = arith.constant dense<0.000000e+00> : vector<16x896xf32>
    %26 = tpu.matmul %24, %25, %cst_20 {dimension_numbers = #tpu.dot_dimension_numbers<[1], [0], [0], [1], [0, 0, 1, 1], [], []>} : vector<16x1024xbf16>, vector<1024x896xbf16>, vector<16x896xf32> -> vector<16x896xf32>
    %c0_21 = arith.constant 0 : index
    %c0_22 = arith.constant 0 : index
    %27 = vector.load %arg9[%c0_21, %c0_22] : memref<1x896xf32, #tpu.memory_space<vmem>>, vector<1x896xf32>
    %28 = vector.broadcast %27 : vector<1x896xf32> to vector<16x896xf32>
    %29 = arith.addf %26, %28 : vector<16x896xf32>
    %30 = math.tanh %29 : vector<16x896xf32>
    %31 = arith.truncf %30 : vector<16x896xf32> to vector<16x896xbf16>
    %c0_23 = arith.constant 0 : index
    %c0_24 = arith.constant 0 : index
    %32 = vector.load %arg10[%c0_23, %c0_24] : memref<16x896xbf16, #tpu.memory_space<vmem>>, vector<16x896xbf16>
    tpu.vector_store %arg10[%c0_23, %c0_24], %31 {strides = array<i32>} : memref<16x896xbf16, #tpu.memory_space<vmem>>, vector<16x896xbf16>,
    return
  }
  func.func @transform_0(%arg0: i32) -> (i32, i32) {
    %c0_i32 = arith.constant 0 : i32
    %c0_i32_0 = arith.constant 0 : i32
    return %arg0, %c0_i32 : i32, i32
  }
  func.func @transform_1(%arg0: i32) -> (i32, i32) {
    %c0_i32 = arith.constant 0 : i32
    %c0_i32_0 = arith.constant 0 : i32
    %c0_i32_1 = arith.constant 0 : i32
    return %c0_i32, %c0_i32_0 : i32, i32
  }
  func.func @transform_2(%arg0: i32) -> (i32, i32) {
    %c0_i32 = arith.constant 0 : i32
    %c0_i32_0 = arith.constant 0 : i32
    %c0_i32_1 = arith.constant 0 : i32
    return %c0_i32, %c0_i32_0 : i32, i32
  }
  func.func @transform_3(%arg0: i32) -> (i32, i32) {
    %c0_i32 = arith.constant 0 : i32
    %c0_i32_0 = arith.constant 0 : i32
    %c0_i32_1 = arith.constant 0 : i32
    return %c0_i32, %c0_i32_0 : i32, i32
  }
  func.func @transform_4(%arg0: i32) -> (i32, i32) {
    %c0_i32 = arith.constant 0 : i32
    %c0_i32_0 = arith.constant 0 : i32
    %c0_i32_1 = arith.constant 0 : i32
    return %c0_i32, %c0_i32_0 : i32, i32
  }
  func.func @transform_5(%arg0: i32) -> (i32, i32) {
    %c0_i32 = arith.constant 0 : i32
    %c0_i32_0 = arith.constant 0 : i32
    %c0_i32_1 = arith.constant 0 : i32
    return %c0_i32, %c0_i32_0 : i32, i32
  }
  func.func @transform_6(%arg0: i32) -> (i32, i32) {
    %c0_i32 = arith.constant 0 : i32
    %c0_i32_0 = arith.constant 0 : i32
    %c0_i32_1 = arith.constant 0 : i32
    return %c0_i32, %c0_i32_0 : i32, i32
  }
  func.func @transform_7(%arg0: i32) -> (i32, i32) {
    %c0_i32 = arith.constant 0 : i32
    %c0_i32_0 = arith.constant 0 : i32
    %c0_i32_1 = arith.constant 0 : i32
    return %c0_i32, %c0_i32_0 : i32, i32
  }
  func.func @transform_8(%arg0: i32) -> (i32, i32) {
    %c0_i32 = arith.constant 0 : i32
    %c0_i32_0 = arith.constant 0 : i32
    %c0_i32_1 = arith.constant 0 : i32
    return %c0_i32, %c0_i32_0 : i32, i32
  }
  func.func @transform_9(%arg0: i32) -> (i32, i32) {
    %c0_i32 = arith.constant 0 : i32
    %c0_i32_0 = arith.constant 0 : i32
    return %arg0, %c0_i32 : i32, i32
  }
}

</mosaic_0001>

<llo_original>
// kernel: tpu_custom_call.1
$region0: #{tpu_custom_call.1}
  #allocation0 [shape = 'u32[]', space=smem, size = 0x4, offset = 0x4, fixed_abs, tag = 'smem constant byte address 0x4 - core index']
  #allocation1 [shape = 'u32[72,128]{1,0:T(1,128)}', space=vmem, size = 0x9000, scoped, tag = 'internal scratch']
  %s0 = inlined_call_operand.hbm [shape: bf16[16,128], index: 0, kind: input, shape index: {}]
  %s1 = inlined_call_operand.hbm [shape: bf16[128,256], index: 1, kind: input, shape index: {}]
  %s2 = inlined_call_operand.hbm [shape: f32[1,256], index: 2, kind: input, shape index: {}]
  %s3 = inlined_call_operand.hbm [shape: bf16[256,512], index: 3, kind: input, shape index: {}]
  %s4 = inlined_call_operand.hbm [shape: f32[1,512], index: 4, kind: input, shape index: {}]
  %s5 = inlined_call_operand.hbm [shape: bf16[512,1024], index: 5, kind: input, shape index: {}]
  %s6 = inlined_call_operand.hbm [shape: f32[1,1024], index: 6, kind: input, shape index: {}]
  %s7 = inlined_call_operand.hbm [shape: bf16[1024,896], index: 7, kind: input, shape index: {}]
  %s8 = inlined_call_operand.hbm [shape: f32[1,896], index: 8, kind: input, shape index: {}]
  %s9 = inlined_call_operand.hbm [shape: bf16[16,896], index: 9, kind: output, shape index: {}]
  %s10 = sld [smem:[#allocation0]]
  $region82: #{tpu_custom_call.1} parent=0
    _
  %s12 = ssub.s32 1, %s10
  %s13 = scalar_select 0, %s12, %s10
  $region1: #{tpu_custom_call.1} parent=0
    #allocation2 [shape = 'u8[4096]{0}', space=vmem, size = 0x1000, scoped, tag = 'input window, operand 0, single buffered']
    #allocation3 [shape = 's32[1]{0}', space=sflag, size = 0x4, scoped, tag = 'scoped memory for tpu_custom_call.1']
    #allocation4 [shape = 's32[1]{0}', space=sflag, size = 0x4, scoped, tag = 'scoped memory for tpu_custom_call.1']
    #allocation5 [shape = 'u8[65536]{0}', space=vmem, size = 0x10000, scoped, tag = 'input window, operand 1, single buffered']
    #allocation6 [shape = 's32[1]{0}', space=sflag, size = 0x4, scoped, tag = 'scoped memory for tpu_custom_call.1']
    #allocation7 [shape = 'u8[1024]{0}', space=vmem, size = 0x400, scoped, tag = 'input window, operand 2, single buffered']
    #allocation8 [shape = 'u8[262144]{0}', space=vmem, size = 0x40000, scoped, tag = 'input window, operand 3, single buffered']
    #allocation9 [shape = 's32[1]{0}', space=sflag, size = 0x4, scoped, tag = 'scoped memory for tpu_custom_call.1']
    #allocation10 [shape = 'u8[2048]{0}', space=vmem, size = 0x800, scoped, tag = 'input window, operand 4, single buffered']
    #allocation11 [shape = 'u8[1048576]{0}', space=vmem, size = 0x100000, scoped, tag = 'input window, operand 5, single buffered']
    #allocation12 [shape = 's32[1]{0}', space=sflag, size = 0x4, scoped, tag = 'scoped memory for tpu_custom_call.1']
    #allocation13 [shape = 'u8[4096]{0}', space=vmem, size = 0x1000, scoped, tag = 'input window, operand 6, single buffered']
    #allocation14 [shape = 'u8[1835008]{0}', space=vmem, size = 0x1c0000, scoped, tag = 'input window, operand 7, single buffered']
    #allocation15 [shape = 's32[1]{0}', space=sflag, size = 0x4, scoped, tag = 'scoped memory for tpu_custom_call.1']
    #allocation16 [shape = 'u8[3584]{0}', space=vmem, size = 0x1000, scoped, tag = 'input window, operand 8, single buffered']
    #allocation17 [shape = 'u8[28672]{0}', space=vmem, size = 0x7000, scoped, tag = 'output window, operand 0, single buffered']
    %14 = vsyncpa [#allocation3], 0
    %15 = vsyncpa [#allocation6], 0
    %16 = vsyncpa [#allocation9], 0
    %17 = vsyncpa [#allocation12], 0
    %18 = vsyncpa [#allocation15], 0
    %19 = vsyncpa [#allocation4], 0
    // Predicated region
    $region2: #{tpu_custom_call.1} parent=1 // pred_check
      _
    $region3: #{tpu_custom_call.1} parent=1 // pred_check_branch
      %21 = sbr.rel (0) target = $region5
    $region4: #{tpu_custom_call.1} parent=1 // pred_region
      %23 = vsyncadd [#allocation3], 0
      %s24 = sshll.u32 %s0, 4
      %s25 = int_to_ptr.hbm [resolvable:$true] %s24
      %s26 = sshll.u32 [#allocation2], 4
      %s27 = int_to_ptr.vmem [resolvable:$true] %s26
      %32 = dma.hbm_to_vmem [thread:$0]  %s25, 128, %s27, [#allocation3], 64, 64, 4
    $region5: #{tpu_custom_call.1} parent=1 // pred_fallthru
      _
    // Predicated region
    $region6: #{tpu_custom_call.1} parent=1 // pred_check
      _
    $region7: #{tpu_custom_call.1} parent=1 // pred_check_branch
      %34 = sbr.rel (0) target = $region9
    $region8: #{tpu_custom_call.1} parent=1 // pred_region
      %36 = vsyncadd [#allocation6], 0
      %s37 = sshll.u32 %s1, 4
      %s38 = int_to_ptr.hbm [resolvable:$true] %s37
      %s39 = sshll.u32 [#allocation5], 4
      %s40 = int_to_ptr.vmem [resolvable:$true] %s39
      %45 = dma.hbm_to_vmem [thread:$0]  %s38, 2048, %s40, [#allocation6], 128, 128, 8
    $region9: #{tpu_custom_call.1} parent=1 // pred_fallthru
      _
    // Predicated region
    $region10: #{tpu_custom_call.1} parent=1 // pred_check
      _
    $region11: #{tpu_custom_call.1} parent=1 // pred_check_branch
      %47 = sbr.rel (0) target = $region13
    $region12: #{tpu_custom_call.1} parent=1 // pred_region
      %49 = vsyncadd [#allocation6], 0
      %s51 = sshll.u32 %s2, 4
      %s52 = int_to_ptr.hbm [resolvable:$true] %s51
      %s53 = sshll.u32 [#allocation7], 4
      %s54 = int_to_ptr.vmem [resolvable:$true] %s53
      %56 = dma.hbm_to_vmem [thread:$0]  %s52, 32, %s54, [#allocation6]
    $region13: #{tpu_custom_call.1} parent=1 // pred_fallthru
      _
    // Predicated region
    $region14: #{tpu_custom_call.1} parent=1 // pred_check
      _
    $region15: #{tpu_custom_call.1} parent=1 // pred_check_branch
      %58 = sbr.rel (0) target = $region17
    $region16: #{tpu_custom_call.1} parent=1 // pred_region
      %60 = vsyncadd [#allocation9], 0
      %s61 = sshll.u32 %s3, 4
      %s62 = int_to_ptr.hbm [resolvable:$true] %s61
      %s63 = sshll.u32 [#allocation8], 4
      %s64 = int_to_ptr.vmem [resolvable:$true] %s63
      %69 = dma.hbm_to_vmem [thread:$0]  %s62, 8192, %s64, [#allocation9], 256, 256, 16
    $region17: #{tpu_custom_call.1} parent=1 // pred_fallthru
      _
    // Predicated region
    $region18: #{tpu_custom_call.1} parent=1 // pred_check
      _
    $region19: #{tpu_custom_call.1} parent=1 // pred_check_branch
      %71 = sbr.rel (0) target = $region21
    $region20: #{tpu_custom_call.1} parent=1 // pred_region
      %73 = vsyncadd [#allocation9], 0
      %s75 = sshll.u32 %s4, 4
      %s76 = int_to_ptr.hbm [resolvable:$true] %s75
      %s77 = sshll.u32 [#allocation10], 4
      %s78 = int_to_ptr.vmem [resolvable:$true] %s77
      %80 = dma.hbm_to_vmem [thread:$0]  %s76, 64, %s78, [#allocation9]
    $region21: #{tpu_custom_call.1} parent=1 // pred_fallthru
      _
    // Predicated region
    $region22: #{tpu_custom_call.1} parent=1 // pred_check
      _
    $region23: #{tpu_custom_call.1} parent=1 // pred_check_branch
      %82 = sbr.rel (0) target = $region25
    $region24: #{tpu_custom_call.1} parent=1 // pred_region
      %84 = vsyncadd [#allocation12], 0
      %s85 = sshll.u32 %s5, 4
      %s86 = int_to_ptr.hbm [resolvable:$true] %s85
      %s87 = sshll.u32 [#allocation11], 4
      %s88 = int_to_ptr.vmem [resolvable:$true] %s87
      %93 = dma.hbm_to_vmem [thread:$0]  %s86, 32768, %s88, [#allocation12], 512, 512, 32
    $region25: #{tpu_custom_call.1} parent=1 // pred_fallthru
      _
    // Predicated region
    $region26: #{tpu_custom_call.1} parent=1 // pred_check
      _
    $region27: #{tpu_custom_call.1} parent=1 // pred_check_branch
      %95 = sbr.rel (0) target = $region29
    $region28: #{tpu_custom_call.1} parent=1 // pred_region
      %97 = vsyncadd [#allocation12], 0
      %s99 = sshll.u32 %s6, 4
      %s100 = int_to_ptr.hbm [resolvable:$true] %s99
      %s101 = sshll.u32 [#allocation13], 4
      %s102 = int_to_ptr.vmem [resolvable:$true] %s101
      %104 = dma.hbm_to_vmem [thread:$0]  %s100, 128, %s102, [#allocation12]
    $region29: #{tpu_custom_call.1} parent=1 // pred_fallthru
      _
    // Predicated region
    $region30: #{tpu_custom_call.1} parent=1 // pred_check
      _
    $region31: #{tpu_custom_call.1} parent=1 // pred_check_branch
      %106 = sbr.rel (0) target = $region33
    $region32: #{tpu_custom_call.1} parent=1 // pred_region
      %108 = vsyncadd [#allocation15], 0
      %s109 = sshll.u32 %s7, 4
      %s110 = int_to_ptr.hbm [resolvable:$true] %s109
      %s111 = sshll.u32 [#allocation14], 4
      %s112 = int_to_ptr.vmem [resolvable:$true] %s111
      %117 = dma.hbm_to_vmem [thread:$0]  %s110, 57344, %s112, [#allocation15], 448, 448, 28
    $region33: #{tpu_custom_call.1} parent=1 // pred_fallthru
      _
    // Predicated region
    $region34: #{tpu_custom_call.1} parent=1 // pred_check
      _
    $region35: #{tpu_custom_call.1} parent=1 // pred_check_branch
      %119 = sbr.rel (0) target = $region37
    $region36: #{tpu_custom_call.1} parent=1 // pred_region
      %121 = vsyncadd [#allocation15], 0
      %s123 = sshll.u32 %s8, 4
      %s124 = int_to_ptr.hbm [resolvable:$true] %s123
      %s125 = sshll.u32 [#allocation16], 4
      %s126 = int_to_ptr.vmem [resolvable:$true] %s125
      %128 = dma.hbm_to_vmem [thread:$0]  %s124, 112, %s126, [#allocation15]
    $region37: #{tpu_custom_call.1} parent=1 // pred_fallthru
      _
    // Predicated region
    $region38: #{tpu_custom_call.1} parent=1 // pred_check
      _
    $region39: #{tpu_custom_call.1} parent=1 // pred_check_branch
      %130 = sbr.rel (0) target = $region41
    $region40: #{tpu_custom_call.1} parent=1 // pred_region
      %132 = dma.done [#allocation3], 128
    $region41: #{tpu_custom_call.1} parent=1 // pred_fallthru
      _
    // Predicated region
    $region42: #{tpu_custom_call.1} parent=1 // pred_check
      _
    $region43: #{tpu_custom_call.1} parent=1 // pred_check_branch
      %134 = sbr.rel (0) target = $region45
    $region44: #{tpu_custom_call.1} parent=1 // pred_region
      %136 = dma.done [#allocation6], 2048
    $region45: #{tpu_custom_call.1} parent=1 // pred_fallthru
      _
    // Predicated region
    $region46: #{tpu_custom_call.1} parent=1 // pred_check
      _
    $region47: #{tpu_custom_call.1} parent=1 // pred_check_branch
      %138 = sbr.rel (0) target = $region49
    $region48: #{tpu_custom_call.1} parent=1 // pred_region
      %140 = dma.done [#allocation6], 32
    $region49: #{tpu_custom_call.1} parent=1 // pred_fallthru
      _
    // Predicated region
    $region50: #{tpu_custom_call.1} parent=1 // pred_check
      _
    $region51: #{tpu_custom_call.1} parent=1 // pred_check_branch
      %142 = sbr.rel (0) target = $region53
    $region52: #{tpu_custom_call.1} parent=1 // pred_region
      %144 = dma.done [#allocation9], 8192
    $region53: #{tpu_custom_call.1} parent=1 // pred_fallthru
      _
    // Predicated region
    $region54: #{tpu_custom_call.1} parent=1 // pred_check
      _
    $region55: #{tpu_custom_call.1} parent=1 // pred_check_branch
      %146 = sbr.rel (0) target = $region57
    $region56: #{tpu_custom_call.1} parent=1 // pred_region
      %148 = dma.done [#allocation9], 64
    $region57: #{tpu_custom_call.1} parent=1 // pred_fallthru
      _
    // Predicated region
    $region58: #{tpu_custom_call.1} parent=1 // pred_check
      _
    $region59: #{tpu_custom_call.1} parent=1 // pred_check_branch
      %150 = sbr.rel (0) target = $region61
    $region60: #{tpu_custom_call.1} parent=1 // pred_region
      %152 = dma.done [#allocation12], 32768
    $region61: #{tpu_custom_call.1} parent=1 // pred_fallthru
      _
    // Predicated region
    $region62: #{tpu_custom_call.1} parent=1 // pred_check
      _
    $region63: #{tpu_custom_call.1} parent=1 // pred_check_branch
      %154 = sbr.rel (0) target = $region65
    $region64: #{tpu_custom_call.1} parent=1 // pred_region
      %156 = dma.done [#allocation12], 128
    $region65: #{tpu_custom_call.1} parent=1 // pred_fallthru
      _
    // Predicated region
    $region66: #{tpu_custom_call.1} parent=1 // pred_check
      _
    $region67: #{tpu_custom_call.1} parent=1 // pred_check_branch
      %158 = sbr.rel (0) target = $region69
    $region68: #{tpu_custom_call.1} parent=1 // pred_region
      %160 = dma.done [#allocation15], 57344
    $region69: #{tpu_custom_call.1} parent=1 // pred_fallthru
      _
    // Predicated region
    $region70: #{tpu_custom_call.1} parent=1 // pred_check
      _
    $region71: #{tpu_custom_call.1} parent=1 // pred_check_branch
      %162 = sbr.rel (0) target = $region73
    $region72: #{tpu_custom_call.1} parent=1 // pred_region
      %164 = dma.done [#allocation15], 112
    $region73: #{tpu_custom_call.1} parent=1 // pred_fallthru
      _
    %v165 = vld [vmem:[#allocation2] sm:$0xf]
    %v166 = vld [vmem:[#allocation2 + $0x4] sm:$0xf]
    %v167 = vld [vmem:[#allocation5] sm:$0xff]
    %v168 = vld [vmem:[#allocation5 + $0x8] sm:$0xff]
    %v169 = vld [vmem:[#allocation5 + $0x10] sm:$0xff]
    %v170 = vld [vmem:[#allocation5 + $0x18] sm:$0xff]
    %v171 = vld [vmem:[#allocation5 + $0x20] sm:$0xff]
    %v172 = vld [vmem:[#allocation5 + $0x28] sm:$0xff]
    %v173 = vld [vmem:[#allocation5 + $0x30] sm:$0xff]
    %v174 = vld [vmem:[#allocation5 + $0x38] sm:$0xff]
    %v175 = vld [vmem:[#allocation5 + $0x40] sm:$0xff]
    %v176 = vld [vmem:[#allocation5 + $0x48] sm:$0xff]
    %v177 = vld [vmem:[#allocation5 + $0x50] sm:$0xff]
    %v178 = vld [vmem:[#allocation5 + $0x58] sm:$0xff]
    %v179 = vld [vmem:[#allocation5 + $0x60] sm:$0xff]
    %v180 = vld [vmem:[#allocation5 + $0x68] sm:$0xff]
    %v181 = vld [vmem:[#allocation5 + $0x70] sm:$0xff]
    %v182 = vld [vmem:[#allocation5 + $0x78] sm:$0xff]
    %v183 = vld [vmem:[#allocation7] sm:$0x3]
    %v185 = vperm.slane %v183, 0
    %v186 = vperm.slane %v183, 1
    %v191 = vunpack.c.l.b16 %v165
    %v192 = vunpack.c.l.b16 %v166
    %v193 = vpack.c.b16 %v192, %v191
    %v211 = vunpack.c.l.b16 %v167
    %v212 = vunpack.c.h.b16 %v167
    %v213 = vunpack.c.l.b16 %v168
    %v214 = vunpack.c.h.b16 %v168
    %v215 = vunpack.c.l.b16 %v169
    %v216 = vunpack.c.h.b16 %v169
    %v217 = vunpack.c.l.b16 %v170
    %v218 = vunpack.c.h.b16 %v170
    %v219 = vunpack.c.l.b16 %v171
    %v220 = vunpack.c.h.b16 %v171
    %v221 = vunpack.c.l.b16 %v172
    %v222 = vunpack.c.h.b16 %v172
    %v223 = vunpack.c.l.b16 %v173
    %v224 = vunpack.c.h.b16 %v173
    %v225 = vunpack.c.l.b16 %v174
    %v226 = vunpack.c.h.b16 %v174
    %v227 = vunpack.c.l.b16 %v175
    %v228 = vunpack.c.h.b16 %v175
    %v229 = vunpack.c.l.b16 %v176
    %v230 = vunpack.c.h.b16 %v176
    %v231 = vunpack.c.l.b16 %v177
    %v232 = vunpack.c.h.b16 %v177
    %v233 = vunpack.c.l.b16 %v178
    %v234 = vunpack.c.h.b16 %v178
    %v235 = vunpack.c.l.b16 %v179
    %v236 = vunpack.c.h.b16 %v179
    %v237 = vunpack.c.l.b16 %v180
    %v238 = vunpack.c.h.b16 %v180
    %v239 = vunpack.c.l.b16 %v181
    %v240 = vunpack.c.h.b16 %v181
    %v241 = vunpack.c.l.b16 %v182
    %v242 = vunpack.c.h.b16 %v182
    %v243 = vpack.c.b16 %v213, %v211
    %v244 = vpack.c.b16 %v214, %v212
    %v245 = vpack.c.b16 %v217, %v215
    %v246 = vpack.c.b16 %v218, %v216
    %v247 = vpack.c.b16 %v221, %v219
    %v248 = vpack.c.b16 %v222, %v220
    %v249 = vpack.c.b16 %v225, %v223
    %v250 = vpack.c.b16 %v226, %v224
    %v251 = vpack.c.b16 %v229, %v227
    %v252 = vpack.c.b16 %v230, %v228
    %v253 = vpack.c.b16 %v233, %v231
    %v254 = vpack.c.b16 %v234, %v232
    %v255 = vpack.c.b16 %v237, %v235
    %v256 = vpack.c.b16 %v238, %v236
    %v257 = vpack.c.b16 %v241, %v239
    %v258 = vpack.c.b16 %v242, %v240
    %275 = vmatpush.bf16.msra.mxu0 %v257
    %276 = vmatpush.bf16.msra.mxu0 %v255
    %277 = vmatpush.bf16.msra.mxu0 %v253
    %278 = vmatpush.bf16.msra.mxu0 %v251
    %279 = vmatpush.bf16.msra.mxu0 %v249
    %280 = vmatpush.bf16.msra.mxu0 %v247
    %281 = vmatpush.bf16.msra.mxu0 %v245
    %282 = vmatpush.bf16.msra.mxu0 %v243
    %283 = vmatmul.bf16.gmra.mxu0 %v193
    %v284 = vpop.f32.mrf.mxu0
    %v285 = vadd.f32 %v185, %v284
    %v286 = vpop.f32.mrf.mxu0
    %v287 = vadd.f32 %v185, %v286
    %288 = vdwg.mxu0
    %289 = vmatpush.bf16.msra.mxu0 %v258
    %290 = vmatpush.bf16.msra.mxu0 %v256
    %291 = vmatpush.bf16.msra.mxu0 %v254
    %292 = vmatpush.bf16.msra.mxu0 %v252
    %293 = vmatpush.bf16.msra.mxu0 %v250
    %294 = vmatpush.bf16.msra.mxu0 %v248
    %295 = vmatpush.bf16.msra.mxu0 %v246
    %296 = vmatpush.bf16.msra.mxu0 %v244
    %297 = vmatmul.bf16.gmra.mxu0 %v193
    %v298 = vpop.f32.mrf.mxu0
    %v299 = vadd.f32 %v186, %v298
    %v300 = vpop.f32.mrf.mxu0
    %v301 = vadd.f32 %v186, %v300
    %302 = vdwg.mxu0
    %v303 = vmax.f32 %v285, 0.0
    %v304 = vmax.f32 %v299, 0.0
    %v305 = vmax.f32 %v287, 0.0
    %v306 = vmax.f32 %v301, 0.0
    %v307 = vpack.c.bf16 %v305, %v303
    %v308 = vpack.c.bf16 %v306, %v304
    %v309 = vld [vmem:[#allocation8] sm:$0xff]
    %v310 = vld [vmem:[#allocation8 + $0x8] sm:$0xff]
    %v311 = vld [vmem:[#allocation8 + $0x10] sm:$0xff]
    %v312 = vld [vmem:[#allocation8 + $0x18] sm:$0xff]
    %v313 = vld [vmem:[#allocation8 + $0x20] sm:$0xff]
    %v314 = vld [vmem:[#allocation8 + $0x28] sm:$0xff]
    %v315 = vld [vmem:[#allocation8 + $0x30] sm:$0xff]
    %v316 = vld [vmem:[#allocation8 + $0x38] sm:$0xff]
    %v317 = vld [vmem:[#allocation8 + $0x40] sm:$0xff]
    %v318 = vld [vmem:[#allocation8 + $0x48] sm:$0xff]
    %v319 = vld [vmem:[#allocation8 + $0x50] sm:$0xff]
    %v320 = vld [vmem:[#allocation8 + $0x58] sm:$0xff]
    %v321 = vld [vmem:[#allocation8 + $0x60] sm:$0xff]
    %v322 = vld [vmem:[#allocation8 + $0x68] sm:$0xff]
    %v323 = vld [vmem:[#allocation8 + $0x70] sm:$0xff]
    %v324 = vld [vmem:[#allocation8 + $0x78] sm:$0xff]
    %v325 = vld [vmem:[#allocation8 + $0x80] sm:$0xff]
    %v326 = vld [vmem:[#allocation8 + $0x88] sm:$0xff]
    %v327 = vld [vmem:[#allocation8 + $0x90] sm:$0xff]
    %v328 = vld [vmem:[#allocation8 + $0x98] sm:$0xff]
    %v329 = vld [vmem:[#allocation8 + $0xa0] sm:$0xff]
    %v330 = vld [vmem:[#allocation8 + $0xa8] sm:$0xff]
    %v331 = vld [vmem:[#allocation8 + $0xb0] sm:$0xff]
    %v332 = vld [vmem:[#allocation8 + $0xb8] sm:$0xff]
    %v333 = vld [vmem:[#allocation8 + $0xc0] sm:$0xff]
    %v334 = vld [vmem:[#allocation8 + $0xc8] sm:$0xff]
    %v335 = vld [vmem:[#allocation8 + $0xd0] sm:$0xff]
    %v336 = vld [vmem:[#allocation8 + $0xd8] sm:$0xff]
    %v337 = vld [vmem:[#allocation8 + $0xe0] sm:$0xff]
    %v338 = vld [vmem:[#allocation8 + $0xe8] sm:$0xff]
    %v339 = vld [vmem:[#allocation8 + $0xf0] sm:$0xff]
    %v340 = vld [vmem:[#allocation8 + $0xf8] sm:$0xff]
    %v341 = vld [vmem:[#allocation8 + $0x100] sm:$0xff]
    %v342 = vld [vmem:[#allocation8 + $0x108] sm:$0xff]
    %v343 = vld [vmem:[#allocation8 + $0x110] sm:$0xff]
    %v344 = vld [vmem:[#allocation8 + $0x118] sm:$0xff]
    %v345 = vld [vmem:[#allocation8 + $0x120] sm:$0xff]
    %v346 = vld [vmem:[#allocation8 + $0x128] sm:$0xff]
    %v347 = vld [vmem:[#allocation8 + $0x130] sm:$0xff]
    %v348 = vld [vmem:[#allocation8 + $0x138] sm:$0xff]
    %v349 = vld [vmem:[#allocation8 + $0x140] sm:$0xff]
    %v350 = vld [vmem:[#allocation8 + $0x148] sm:$0xff]
    %v351 = vld [vmem:[#allocation8 + $0x150] sm:$0xff]
    %v352 = vld [vmem:[#allocation8 + $0x158] sm:$0xff]
    %v353 = vld [vmem:[#allocation8 + $0x160] sm:$0xff]
    %v354 = vld [vmem:[#allocation8 + $0x168] sm:$0xff]
    %v355 = vld [vmem:[#allocation8 + $0x170] sm:$0xff]
    %v356 = vld [vmem:[#allocation8 + $0x178] sm:$0xff]
    %v357 = vld [vmem:[#allocation8 + $0x180] sm:$0xff]
    %v358 = vld [vmem:[#allocation8 + $0x188] sm:$0xff]
    %v359 = vld [vmem:[#allocation8 + $0x190] sm:$0xff]
    %v360 = vld [vmem:[#allocation8 + $0x198] sm:$0xff]
    %v361 = vld [vmem:[#allocation8 + $0x1a0] sm:$0xff]
    %v362 = vld [vmem:[#allocation8 + $0x1a8] sm:$0xff]
    %v363 = vld [vmem:[#allocation8 + $0x1b0] sm:$0xff]
    %v364 = vld [vmem:[#allocation8 + $0x1b8] sm:$0xff]
    %v365 = vld [vmem:[#allocation8 + $0x1c0] sm:$0xff]
    %v366 = vld [vmem:[#allocation8 + $0x1c8] sm:$0xff]
    %v367 = vld [vmem:[#allocation8 + $0x1d0] sm:$0xff]
    %v368 = vld [vmem:[#allocation8 + $0x1d8] sm:$0xff]
    %v369 = vld [vmem:[#allocation8 + $0x1e0] sm:$0xff]
    %v370 = vld [vmem:[#allocation8 + $0x1e8] sm:$0xff]
    %v371 = vld [vmem:[#allocation8 + $0x1f0] sm:$0xff]
    %v372 = vld [vmem:[#allocation8 + $0x1f8] sm:$0xff]
    %v373 = vld [vmem:[#allocation10] sm:$0xf]
    %v375 = vperm.slane %v373, 0
    %v376 = vperm.slane %v373, 1
    %v377 = vperm.slane %v373, 2
    %v378 = vperm.slane %v373, 3
    %v447 = vunpack.c.l.b16 %v309
    %v448 = vunpack.c.h.b16 %v309
    %v449 = vunpack.c.l.b16 %v310
    %v450 = vunpack.c.h.b16 %v310
    %v451 = vunpack.c.l.b16 %v311
    %v452 = vunpack.c.h.b16 %v311
    %v453 = vunpack.c.l.b16 %v312
    %v454 = vunpack.c.h.b16 %v312
    %v455 = vunpack.c.l.b16 %v313
    %v456 = vunpack.c.h.b16 %v313
    %v457 = vunpack.c.l.b16 %v314
    %v458 = vunpack.c.h.b16 %v314
    %v459 = vunpack.c.l.b16 %v315
    %v460 = vunpack.c.h.b16 %v315
    %v461 = vunpack.c.l.b16 %v316
    %v462 = vunpack.c.h.b16 %v316
    %v463 = vunpack.c.l.b16 %v317
    %v464 = vunpack.c.h.b16 %v317
    %v465 = vunpack.c.l.b16 %v318
    %v466 = vunpack.c.h.b16 %v318
    %v467 = vunpack.c.l.b16 %v319
    %v468 = vunpack.c.h.b16 %v319
    %v469 = vunpack.c.l.b16 %v320
    %v470 = vunpack.c.h.b16 %v320
    %v471 = vunpack.c.l.b16 %v321
    %v472 = vunpack.c.h.b16 %v321
    %v473 = vunpack.c.l.b16 %v322
    %v474 = vunpack.c.h.b16 %v322
    %v475 = vunpack.c.l.b16 %v323
    %v476 = vunpack.c.h.b16 %v323
    %v477 = vunpack.c.l.b16 %v324
    %v478 = vunpack.c.h.b16 %v324
    %v479 = vunpack.c.l.b16 %v325
    %v480 = vunpack.c.h.b16 %v325
    %v481 = vunpack.c.l.b16 %v326
    %v482 = vunpack.c.h.b16 %v326
    %v483 = vunpack.c.l.b16 %v327
    %v484 = vunpack.c.h.b16 %v327
    %v485 = vunpack.c.l.b16 %v328
    %v486 = vunpack.c.h.b16 %v328
    %v487 = vunpack.c.l.b16 %v329
    %v488 = vunpack.c.h.b16 %v329
    %v489 = vunpack.c.l.b16 %v330
    %v490 = vunpack.c.h.b16 %v330
    %v491 = vunpack.c.l.b16 %v331
    %v492 = vunpack.c.h.b16 %v331
    %v493 = vunpack.c.l.b16 %v332
    %v494 = vunpack.c.h.b16 %v332
    %v495 = vunpack.c.l.b16 %v333
    %v496 = vunpack.c.h.b16 %v333
    %v497 = vunpack.c.l.b16 %v334
    %v498 = vunpack.c.h.b16 %v334
    %v499 = vunpack.c.l.b16 %v335
    %v500 = vunpack.c.h.b16 %v335
    %v501 = vunpack.c.l.b16 %v336
    %v502 = vunpack.c.h.b16 %v336
    %v503 = vunpack.c.l.b16 %v337
    %v504 = vunpack.c.h.b16 %v337
    %v505 = vunpack.c.l.b16 %v338
    %v506 = vunpack.c.h.b16 %v338
    %v507 = vunpack.c.l.b16 %v339
    %v508 = vunpack.c.h.b16 %v339
    %v509 = vunpack.c.l.b16 %v340
    %v510 = vunpack.c.h.b16 %v340
    %v511 = vunpack.c.l.b16 %v341
    %v512 = vunpack.c.h.b16 %v341
    %v513 = vunpack.c.l.b16 %v342
    %v514 = vunpack.c.h.b16 %v342
    %v515 = vunpack.c.l.b16 %v343
    %v516 = vunpack.c.h.b16 %v343
    %v517 = vunpack.c.l.b16 %v344
    %v518 = vunpack.c.h.b16 %v344
    %v519 = vunpack.c.l.b16 %v345
    %v520 = vunpack.c.h.b16 %v345
    %v521 = vunpack.c.l.b16 %v346
    %v522 = vunpack.c.h.b16 %v346
    %v523 = vunpack.c.l.b16 %v347
    %v524 = vunpack.c.h.b16 %v347
    %v525 = vunpack.c.l.b16 %v348
    %v526 = vunpack.c.h.b16 %v348
    %v527 = vunpack.c.l.b16 %v349
    %v528 = vunpack.c.h.b16 %v349
    %v529 = vunpack.c.l.b16 %v350
    %v530 = vunpack.c.h.b16 %v350
    %v531 = vunpack.c.l.b16 %v351
    %v532 = vunpack.c.h.b16 %v351
    %v533 = vunpack.c.l.b16 %v352
    %v534 = vunpack.c.h.b16 %v352
    %v535 = vunpack.c.l.b16 %v353
    %v536 = vunpack.c.h.b16 %v353
    %v537 = vunpack.c.l.b16 %v354
    %v538 = vunpack.c.h.b16 %v354
    %v539 = vunpack.c.l.b16 %v355
    %v540 = vunpack.c.h.b16 %v355
    %v541 = vunpack.c.l.b16 %v356
    %v542 = vunpack.c.h.b16 %v356
    %v543 = vunpack.c.l.b16 %v357
    %v544 = vunpack.c.h.b16 %v357
    %v545 = vunpack.c.l.b16 %v358
    %v546 = vunpack.c.h.b16 %v358
    %v547 = vunpack.c.l.b16 %v359
    %v548 = vunpack.c.h.b16 %v359
    %v549 = vunpack.c.l.b16 %v360
    %v550 = vunpack.c.h.b16 %v360
    %v551 = vunpack.c.l.b16 %v361
    %v552 = vunpack.c.h.b16 %v361
    %v553 = vunpack.c.l.b16 %v362
    %v554 = vunpack.c.h.b16 %v362
    %v555 = vunpack.c.l.b16 %v363
    %v556 = vunpack.c.h.b16 %v363
    %v557 = vunpack.c.l.b16 %v364
    %v558 = vunpack.c.h.b16 %v364
    %v559 = vunpack.c.l.b16 %v365
    %v560 = vunpack.c.h.b16 %v365
    %v561 = vunpack.c.l.b16 %v366
    %v562 = vunpack.c.h.b16 %v366
    %v563 = vunpack.c.l.b16 %v367
    %v564 = vunpack.c.h.b16 %v367
    %v565 = vunpack.c.l.b16 %v368
    %v566 = vunpack.c.h.b16 %v368
    %v567 = vunpack.c.l.b16 %v369
    %v568 = vunpack.c.h.b16 %v369
    %v569 = vunpack.c.l.b16 %v370
    %v570 = vunpack.c.h.b16 %v370
    %v571 = vunpack.c.l.b16 %v371
    %v572 = vunpack.c.h.b16 %v371
    %v573 = vunpack.c.l.b16 %v372
    %v574 = vunpack.c.h.b16 %v372
    %v575 = vpack.c.b16 %v451, %v447
    %v576 = vpack.c.b16 %v452, %v448
    %v577 = vpack.c.b16 %v453, %v449
    %v578 = vpack.c.b16 %v454, %v450
    %v579 = vpack.c.b16 %v459, %v455
    %v580 = vpack.c.b16 %v460, %v456
    %v581 = vpack.c.b16 %v461, %v457
    %v582 = vpack.c.b16 %v462, %v458
    %v583 = vpack.c.b16 %v467, %v463
    %v584 = vpack.c.b16 %v468, %v464
    %v585 = vpack.c.b16 %v469, %v465
    %v586 = vpack.c.b16 %v470, %v466
    %v587 = vpack.c.b16 %v475, %v471
    %v588 = vpack.c.b16 %v476, %v472
    %v589 = vpack.c.b16 %v477, %v473
    %v590 = vpack.c.b16 %v478, %v474
    %v591 = vpack.c.b16 %v483, %v479
    %v592 = vpack.c.b16 %v484, %v480
    %v593 = vpack.c.b16 %v485, %v481
    %v594 = vpack.c.b16 %v486, %v482
    %v595 = vpack.c.b16 %v491, %v487
    %v596 = vpack.c.b16 %v492, %v488
    %v597 = vpack.c.b16 %v493, %v489
    %v598 = vpack.c.b16 %v494, %v490
    %v599 = vpack.c.b16 %v499, %v495
    %v600 = vpack.c.b16 %v500, %v496
    %v601 = vpack.c.b16 %v501, %v497
    %v602 = vpack.c.b16 %v502, %v498
    %v603 = vpack.c.b16 %v507, %v503
    %v604 = vpack.c.b16 %v508, %v504
    %v605 = vpack.c.b16 %v509, %v505
    %v606 = vpack.c.b16 %v510, %v506
    %v607 = vpack.c.b16 %v515, %v511
    %v608 = vpack.c.b16 %v516, %v512
    %v609 = vpack.c.b16 %v517, %v513
    %v610 = vpack.c.b16 %v518, %v514
    %v611 = vpack.c.b16 %v523, %v519
    %v612 = vpack.c.b16 %v524, %v520
    %v613 = vpack.c.b16 %v525, %v521
    %v614 = vpack.c.b16 %v526, %v522
    %v615 = vpack.c.b16 %v531, %v527
    %v616 = vpack.c.b16 %v532, %v528
    %v617 = vpack.c.b16 %v533, %v529
    %v618 = vpack.c.b16 %v534, %v530
    %v619 = vpack.c.b16 %v539, %v535
    %v620 = vpack.c.b16 %v540, %v536
    %v621 = vpack.c.b16 %v541, %v537
    %v622 = vpack.c.b16 %v542, %v538
    %v623 = vpack.c.b16 %v547, %v543
    %v624 = vpack.c.b16 %v548, %v544
    %v625 = vpack.c.b16 %v549, %v545
    %v626 = vpack.c.b16 %v550, %v546
    %v627 = vpack.c.b16 %v555, %v551
    %v628 = vpack.c.b16 %v556, %v552
    %v629 = vpack.c.b16 %v557, %v553
    %v630 = vpack.c.b16 %v558, %v554
    %v631 = vpack.c.b16 %v563, %v559
    %v632 = vpack.c.b16 %v564, %v560
    %v633 = vpack.c.b16 %v565, %v561
    %v634 = vpack.c.b16 %v566, %v562
    %v635 = vpack.c.b16 %v571, %v567
    %v636 = vpack.c.b16 %v572, %v568
    %v637 = vpack.c.b16 %v573, %v569
    %v638 = vpack.c.b16 %v574, %v570
    %703 = vmatpush.bf16.msra.mxu0 %v603
    %704 = vmatpush.bf16.msra.mxu0 %v599
    %705 = vmatpush.bf16.msra.mxu0 %v595
    %706 = vmatpush.bf16.msra.mxu0 %v591
    %707 = vmatpush.bf16.msra.mxu0 %v587
    %708 = vmatpush.bf16.msra.mxu0 %v583
    %709 = vmatpush.bf16.msra.mxu0 %v579
    %710 = vmatpush.bf16.msra.mxu0 %v575
    %711 = vmatmul.bf16.gmra.mxu0 %v307
    %v712 = vpop.f32.mrf.mxu0
    %v713 = vadd.f32 %v375, %v712
    %v714 = vpop.f32.mrf.mxu0
    %v715 = vadd.f32 %v375, %v714
    %716 = vdwg.mxu0
    %717 = vmatpush.bf16.msra.mxu0 %v635
    %718 = vmatpush.bf16.msra.mxu0 %v631
    %719 = vmatpush.bf16.msra.mxu0 %v627
    %720 = vmatpush.bf16.msra.mxu0 %v623
    %721 = vmatpush.bf16.msra.mxu0 %v619
    %722 = vmatpush.bf16.msra.mxu0 %v615
    %723 = vmatpush.bf16.msra.mxu0 %v611
    %724 = vmatpush.bf16.msra.mxu0 %v607
    %725 = vmatmul.bf16.gmra.mxu0 %v308
    %v726 = vpop.f32.mrf.mxu0
    %v727 = vadd.f32 %v713, %v726
    %v728 = vpop.f32.mrf.mxu0
    %v729 = vadd.f32 %v715, %v728
    %730 = vdwg.mxu0
    %731 = vmatpush.bf16.msra.mxu0 %v604
    %732 = vmatpush.bf16.msra.mxu0 %v600
    %733 = vmatpush.bf16.msra.mxu0 %v596
    %734 = vmatpush.bf16.msra.mxu0 %v592
    %735 = vmatpush.bf16.msra.mxu0 %v588
    %736 = vmatpush.bf16.msra.mxu0 %v584
    %737 = vmatpush.bf16.msra.mxu0 %v580
    %738 = vmatpush.bf16.msra.mxu0 %v576
    %739 = vmatmul.bf16.gmra.mxu0 %v307
    %v740 = vpop.f32.mrf.mxu0
    %v741 = vadd.f32 %v376, %v740
    %v742 = vpop.f32.mrf.mxu0
    %v743 = vadd.f32 %v376, %v742
    %744 = vdwg.mxu0
    %745 = vmatpush.bf16.msra.mxu0 %v636
    %746 = vmatpush.bf16.msra.mxu0 %v632
    %747 = vmatpush.bf16.msra.mxu0 %v628
    %748 = vmatpush.bf16.msra.mxu0 %v624
    %749 = vmatpush.bf16.msra.mxu0 %v620
    %750 = vmatpush.bf16.msra.mxu0 %v616
    %751 = vmatpush.bf16.msra.mxu0 %v612
    %752 = vmatpush.bf16.msra.mxu0 %v608
    %753 = vmatmul.bf16.gmra.mxu0 %v308
    %v754 = vpop.f32.mrf.mxu0
    %v755 = vadd.f32 %v741, %v754
    %v756 = vpop.f32.mrf.mxu0
    %v757 = vadd.f32 %v743, %v756
    %758 = vdwg.mxu0
    %759 = vmatpush.bf16.msra.mxu0 %v605
    %760 = vmatpush.bf16.msra.mxu0 %v601
    %761 = vmatpush.bf16.msra.mxu0 %v597
    %762 = vmatpush.bf16.msra.mxu0 %v593
    %763 = vmatpush.bf16.msra.mxu0 %v589
    %764 = vmatpush.bf16.msra.mxu0 %v585
    %765 = vmatpush.bf16.msra.mxu0 %v581
    %766 = vmatpush.bf16.msra.mxu0 %v577
    %767 = vmatmul.bf16.gmra.mxu0 %v307
    %v768 = vpop.f32.mrf.mxu0
    %v769 = vadd.f32 %v377, %v768
    %v770 = vpop.f32.mrf.mxu0
    %v771 = vadd.f32 %v377, %v770
    %772 = vdwg.mxu0
    %773 = vmatpush.bf16.msra.mxu0 %v637
    %774 = vmatpush.bf16.msra.mxu0 %v633
    %775 = vmatpush.bf16.msra.mxu0 %v629
    %776 = vmatpush.bf16.msra.mxu0 %v625
    %777 = vmatpush.bf16.msra.mxu0 %v621
    %778 = vmatpush.bf16.msra.mxu0 %v617
    %779 = vmatpush.bf16.msra.mxu0 %v613
    %780 = vmatpush.bf16.msra.mxu0 %v609
    %781 = vmatmul.bf16.gmra.mxu0 %v308
    %v782 = vpop.f32.mrf.mxu0
    %v783 = vadd.f32 %v769, %v782
    %v784 = vpop.f32.mrf.mxu0
    %v785 = vadd.f32 %v771, %v784
    %786 = vdwg.mxu0
    %787 = vmatpush.bf16.msra.mxu0 %v606
    %788 = vmatpush.bf16.msra.mxu0 %v602
    %789 = vmatpush.bf16.msra.mxu0 %v598
    %790 = vmatpush.bf16.msra.mxu0 %v594
    %791 = vmatpush.bf16.msra.mxu0 %v590
    %792 = vmatpush.bf16.msra.mxu0 %v586
    %793 = vmatpush.bf16.msra.mxu0 %v582
    %794 = vmatpush.bf16.msra.mxu0 %v578
    %795 = vmatmul.bf16.gmra.mxu0 %v307
    %v796 = vpop.f32.mrf.mxu0
    %v797 = vadd.f32 %v378, %v796
    %v798 = vpop.f32.mrf.mxu0
    %v799 = vadd.f32 %v378, %v798
    %800 = vdwg.mxu0
    %801 = vmatpush.bf16.msra.mxu0 %v638
    %802 = vmatpush.bf16.msra.mxu0 %v634
    %803 = vmatpush.bf16.msra.mxu0 %v630
    %804 = vmatpush.bf16.msra.mxu0 %v626
    %805 = vmatpush.bf16.msra.mxu0 %v622
    %806 = vmatpush.bf16.msra.mxu0 %v618
    %807 = vmatpush.bf16.msra.mxu0 %v614
    %808 = vmatpush.bf16.msra.mxu0 %v610
    %809 = vmatmul.bf16.gmra.mxu0 %v308
    %v810 = vpop.f32.mrf.mxu0
    %v811 = vadd.f32 %v797, %v810
    %v812 = vpop.f32.mrf.mxu0
    %v813 = vadd.f32 %v799, %v812
    %814 = vdwg.mxu0
    %v815 = vmax.f32 %v727, 0.0
    %v816 = vmax.f32 %v755, 0.0
    %v817 = vmax.f32 %v783, 0.0
    %v818 = vmax.f32 %v811, 0.0
    %v819 = vmax.f32 %v729, 0.0
    %v820 = vmax.f32 %v757, 0.0
    %v821 = vmax.f32 %v785, 0.0
    %v822 = vmax.f32 %v813, 0.0
    %v823 = vpack.c.bf16 %v819, %v815
    %v824 = vpack.c.bf16 %v820, %v816
    %v825 = vpack.c.bf16 %v821, %v817
    %v826 = vpack.c.bf16 %v822, %v818
    %v827 = vld [vmem:[#allocation11] sm:$0xff]
    %v828 = vld [vmem:[#allocation11 + $0x8] sm:$0xff]
    %v829 = vld [vmem:[#allocation11 + $0x10] sm:$0xff]
    %v830 = vld [vmem:[#allocation11 + $0x18] sm:$0xff]
    %v831 = vld [vmem:[#allocation11 + $0x20] sm:$0xff]
    %v832 = vld [vmem:[#allocation11 + $0x28] sm:$0xff]
    %v833 = vld [vmem:[#allocation11 + $0x30] sm:$0xff]
    %v834 = vld [vmem:[#allocation11 + $0x38] sm:$0xff]
    %v835 = vld [vmem:[#allocation11 + $0x40] sm:$0xff]
    %v836 = vld [vmem:[#allocation11 + $0x48] sm:$0xff]
    %v837 = vld [vmem:[#allocation11 + $0x50] sm:$0xff]
    %v838 = vld [vmem:[#allocation11 + $0x58] sm:$0xff]
    %v839 = vld [vmem:[#allocation11 + $0x60] sm:$0xff]
    %v840 = vld [vmem:[#allocation11 + $0x68] sm:$0xff]
    %v841 = vld [vmem:[#allocation11 + $0x70] sm:$0xff]
    %v842 = vld [vmem:[#allocation11 + $0x78] sm:$0xff]
    %v843 = vld [vmem:[#allocation11 + $0x80] sm:$0xff]
    %v844 = vld [vmem:[#allocation11 + $0x88] sm:$0xff]
    %v845 = vld [vmem:[#allocation11 + $0x90] sm:$0xff]
    %v846 = vld [vmem:[#allocation11 + $0x98] sm:$0xff]
    %v847 = vld [vmem:[#allocation11 + $0xa0] sm:$0xff]
    %v848 = vld [vmem:[#allocation11 + $0xa8] sm:$0xff]
    %v849 = vld [vmem:[#allocation11 + $0xb0] sm:$0xff]
    %v850 = vld [vmem:[#allocation11 + $0xb8] sm:$0xff]
    %v851 = vld [vmem:[#allocation11 + $0xc0] sm:$0xff]
    %v852 = vld [vmem:[#allocation11 + $0xc8] sm:$0xff]
    %v853 = vld [vmem:[#allocation11 + $0xd0] sm:$0xff]
    %v854 = vld [vmem:[#allocation11 + $0xd8] sm:$0xff]
    %v855 = vld [vmem:[#allocation11 + $0xe0] sm:$0xff]
    %v856 = vld [vmem:[#allocation11 + $0xe8] sm:$0xff]
    %v857 = vld [vmem:[#allocation11 + $0xf0] sm:$0xff]
    %v858 = vld [vmem:[#allocation11 + $0xf8] sm:$0xff]
    %v859 = vld [vmem:[#allocation11 + $0x100] sm:$0xff]
    %v860 = vld [vmem:[#allocation11 + $0x108] sm:$0xff]
    %v861 = vld [vmem:[#allocation11 + $0x110] sm:$0xff]
    %v862 = vld [vmem:[#allocation11 + $0x118] sm:$0xff]
    %v863 = vld [vmem:[#allocation11 + $0x120] sm:$0xff]
    %v864 = vld [vmem:[#allocation11 + $0x128] sm:$0xff]
    %v865 = vld [vmem:[#allocation11 + $0x130] sm:$0xff]
    %v866 = vld [vmem:[#allocation11 + $0x138] sm:$0xff]
    %v867 = vld [vmem:[#allocation11 + $0x140] sm:$0xff]
    %v868 = vld [vmem:[#allocation11 + $0x148] sm:$0xff]
    %v869 = vld [vmem:[#allocation11 + $0x150] sm:$0xff]
    %v870 = vld [vmem:[#allocation11 + $0x158] sm:$0xff]
    %v871 = vld [vmem:[#allocation11 + $0x160] sm:$0xff]
    %v872 = vld [vmem:[#allocation11 + $0x168] sm:$0xff]
    %v873 = vld [vmem:[#allocation11 + $0x170] sm:$0xff]
    %v874 = vld [vmem:[#allocation11 + $0x178] sm:$0xff]
    %v875 = vld [vmem:[#allocation11 + $0x180] sm:$0xff]
    %v876 = vld [vmem:[#allocation11 + $0x188] sm:$0xff]
    %v877 = vld [vmem:[#allocation11 + $0x190] sm:$0xff]
    %v878 = vld [vmem:[#allocation11 + $0x198] sm:$0xff]
    %v879 = vld [vmem:[#allocation11 + $0x1a0] sm:$0xff]
    %v880 = vld [vmem:[#allocation11 + $0x1a8] sm:$0xff]
    %v881 = vld [vmem:[#allocation11 + $0x1b0] sm:$0xff]
    %v882 = vld [vmem:[#allocation11 + $0x1b8] sm:$0xff]
    %v883 = vld [vmem:[#allocation11 + $0x1c0] sm:$0xff]
    %v884 = vld [vmem:[#allocation11 + $0x1c8] sm:$0xff]
    %v885 = vld [vmem:[#allocation11 + $0x1d0] sm:$0xff]
    %v886 = vld [vmem:[#allocation11 + $0x1d8] sm:$0xff]
    %v887 = vld [vmem:[#allocation11 + $0x1e0] sm:$0xff]
    %v888 = vld [vmem:[#allocation11 + $0x1e8] sm:$0xff]
    %v889 = vld [vmem:[#allocation11 + $0x1f0] sm:$0xff]
    %v890 = vld [vmem:[#allocation11 + $0x1f8] sm:$0xff]
    %v891 = vld [vmem:[#allocation11 + $0x200] sm:$0xff]
    %v892 = vld [vmem:[#allocation11 + $0x208] sm:$0xff]
    %v893 = vld [vmem:[#allocation11 + $0x210] sm:$0xff]
    %v894 = vld [vmem:[#allocation11 + $0x218] sm:$0xff]
    %v895 = vld [vmem:[#allocation11 + $0x220] sm:$0xff]
    %v896 = vld [vmem:[#allocation11 + $0x228] sm:$0xff]
    %v897 = vld [vmem:[#allocation11 + $0x230] sm:$0xff]
    %v898 = vld [vmem:[#allocation11 + $0x238] sm:$0xff]
    %v899 = vld [vmem:[#allocation11 + $0x240] sm:$0xff]
    %v900 = vld [vmem:[#allocation11 + $0x248] sm:$0xff]
    %v901 = vld [vmem:[#allocation11 + $0x250] sm:$0xff]
    %v902 = vld [vmem:[#allocation11 + $0x258] sm:$0xff]
    %v903 = vld [vmem:[#allocation11 + $0x260] sm:$0xff]
    %v904 = vld [vmem:[#allocation11 + $0x268] sm:$0xff]
    %v905 = vld [vmem:[#allocation11 + $0x270] sm:$0xff]
    %v906 = vld [vmem:[#allocation11 + $0x278] sm:$0xff]
    %v907 = vld [vmem:[#allocation11 + $0x280] sm:$0xff]
    %v908 = vld [vmem:[#allocation11 + $0x288] sm:$0xff]
    %v909 = vld [vmem:[#allocation11 + $0x290] sm:$0xff]
    %v910 = vld [vmem:[#allocation11 + $0x298] sm:$0xff]
    %v911 = vld [vmem:[#allocation11 + $0x2a0] sm:$0xff]
    %v912 = vld [vmem:[#allocation11 + $0x2a8] sm:$0xff]
    %v913 = vld [vmem:[#allocation11 + $0x2b0] sm:$0xff]
    %v914 = vld [vmem:[#allocation11 + $0x2b8] sm:$0xff]
    %v915 = vld [vmem:[#allocation11 + $0x2c0] sm:$0xff]
    %v916 = vld [vmem:[#allocation11 + $0x2c8] sm:$0xff]
    %v917 = vld [vmem:[#allocation11 + $0x2d0] sm:$0xff]
    %v918 = vld [vmem:[#allocation11 + $0x2d8] sm:$0xff]
    %v919 = vld [vmem:[#allocation11 + $0x2e0] sm:$0xff]
    %v920 = vld [vmem:[#allocation11 + $0x2e8] sm:$0xff]
    %v921 = vld [vmem:[#allocation11 + $0x2f0] sm:$0xff]
    %v922 = vld [vmem:[#allocation11 + $0x2f8] sm:$0xff]
    %v923 = vld [vmem:[#allocation11 + $0x300] sm:$0xff]
    %v924 = vld [vmem:[#allocation11 + $0x308] sm:$0xff]
    %v925 = vld [vmem:[#allocation11 + $0x310] sm:$0xff]
    %v926 = vld [vmem:[#allocation11 + $0x318] sm:$0xff]
    %v927 = vld [vmem:[#allocation11 + $0x320] sm:$0xff]
    %v928 = vld [vmem:[#allocation11 + $0x328] sm:$0xff]
    %v929 = vld [vmem:[#allocation11 + $0x330] sm:$0xff]
    %v930 = vld [vmem:[#allocation11 + $0x338] sm:$0xff]
    %v931 = vld [vmem:[#allocation11 + $0x340] sm:$0xff]
    %v932 = vld [vmem:[#allocation11 + $0x348] sm:$0xff]
    %v933 = vld [vmem:[#allocation11 + $0x350] sm:$0xff]
    %v934 = vld [vmem:[#allocation11 + $0x358] sm:$0xff]
    %v935 = vld [vmem:[#allocation11 + $0x360] sm:$0xff]
    %v936 = vld [vmem:[#allocation11 + $0x368] sm:$0xff]
    %v937 = vld [vmem:[#allocation11 + $0x370] sm:$0xff]
    %v938 = vld [vmem:[#allocation11 + $0x378] sm:$0xff]
    %v939 = vld [vmem:[#allocation11 + $0x380] sm:$0xff]
    %v940 = vld [vmem:[#allocation11 + $0x388] sm:$0xff]
    %v941 = vld [vmem:[#allocation11 + $0x390] sm:$0xff]
    %v942 = vld [vmem:[#allocation11 + $0x398] sm:$0xff]
    %v943 = vld [vmem:[#allocation11 + $0x3a0] sm:$0xff]
    %v944 = vld [vmem:[#allocation11 + $0x3a8] sm:$0xff]
    %v945 = vld [vmem:[#allocation11 + $0x3b0] sm:$0xff]
    %v946 = vld [vmem:[#allocation11 + $0x3b8] sm:$0xff]
    %v947 = vld [vmem:[#allocation11 + $0x3c0] sm:$0xff]
    %v948 = vld [vmem:[#allocation11 + $0x3c8] sm:$0xff]
    %v949 = vld [vmem:[#allocation11 + $0x3d0] sm:$0xff]
    %v950 = vld [vmem:[#allocation11 + $0x3d8] sm:$0xff]
    %v951 = vld [vmem:[#allocation11 + $0x3e0] sm:$0xff]
    %v952 = vld [vmem:[#allocation11 + $0x3e8] sm:$0xff]
    %v953 = vld [vmem:[#allocation11 + $0x3f0] sm:$0xff]
    %v954 = vld [vmem:[#allocation11 + $0x3f8] sm:$0xff]
    %v955 = vld [vmem:[#allocation11 + $0x400] sm:$0xff]
    %v956 = vld [vmem:[#allocation11 + $0x408] sm:$0xff]
    %v957 = vld [vmem:[#allocation11 + $0x410] sm:$0xff]
    %v958 = vld [vmem:[#allocation11 + $0x418] sm:$0xff]
    %v959 = vld [vmem:[#allocation11 + $0x420] sm:$0xff]
    %v960 = vld [vmem:[#allocation11 + $0x428] sm:$0xff]
    %v961 = vld [vmem:[#allocation11 + $0x430] sm:$0xff]
    %v962 = vld [vmem:[#allocation11 + $0x438] sm:$0xff]
    %v963 = vld [vmem:[#allocation11 + $0x440] sm:$0xff]
    %v964 = vld [vmem:[#allocation11 + $0x448] sm:$0xff]
    %v965 = vld [vmem:[#allocation11 + $0x450] sm:$0xff]
    %v966 = vld [vmem:[#allocation11 + $0x458] sm:$0xff]
    %v967 = vld [vmem:[#allocation11 + $0x460] sm:$0xff]
    %v968 = vld [vmem:[#allocation11 + $0x468] sm:$0xff]
    %v969 = vld [vmem:[#allocation11 + $0x470] sm:$0xff]
    %v970 = vld [vmem:[#allocation11 + $0x478] sm:$0xff]
    %v971 = vld [vmem:[#allocation11 + $0x480] sm:$0xff]
    %v972 = vld [vmem:[#allocation11 + $0x488] sm:$0xff]
    %v973 = vld [vmem:[#allocation11 + $0x490] sm:$0xff]
    %v974 = vld [vmem:[#allocation11 + $0x498] sm:$0xff]
    %v975 = vld [vmem:[#allocation11 + $0x4a0] sm:$0xff]
    %v976 = vld [vmem:[#allocation11 + $0x4a8] sm:$0xff]
    %v977 = vld [vmem:[#allocation11 + $0x4b0] sm:$0xff]
    %v978 = vld [vmem:[#allocation11 + $0x4b8] sm:$0xff]
    %v979 = vld [vmem:[#allocation11 + $0x4c0] sm:$0xff]
    %v980 = vld [vmem:[#allocation11 + $0x4c8] sm:$0xff]
    %v981 = vld [vmem:[#allocation11 + $0x4d0] sm:$0xff]
    %v982 = vld [vmem:[#allocation11 + $0x4d8] sm:$0xff]
    %v983 = vld [vmem:[#allocation11 + $0x4e0] sm:$0xff]
    %v984 = vld [vmem:[#allocation11 + $0x4e8] sm:$0xff]
    %v985 = vld [vmem:[#allocation11 + $0x4f0] sm:$0xff]
    %v986 = vld [vmem:[#allocation11 + $0x4f8] sm:$0xff]
    %v987 = vld [vmem:[#allocation11 + $0x500] sm:$0xff]
    %v988 = vld [vmem:[#allocation11 + $0x508] sm:$0xff]
    %v989 = vld [vmem:[#allocation11 + $0x510] sm:$0xff]
    %v990 = vld [vmem:[#allocation11 + $0x518] sm:$0xff]
    %v991 = vld [vmem:[#allocation11 + $0x520] sm:$0xff]
    %v992 = vld [vmem:[#allocation11 + $0x528] sm:$0xff]
    %v993 = vld [vmem:[#allocation11 + $0x530] sm:$0xff]
    %v994 = vld [vmem:[#allocation11 + $0x538] sm:$0xff]
    %v995 = vld [vmem:[#allocation11 + $0x540] sm:$0xff]
    %v996 = vld [vmem:[#allocation11 + $0x548] sm:$0xff]
    %v997 = vld [vmem:[#allocation11 + $0x550] sm:$0xff]
    %v998 = vld [vmem:[#allocation11 + $0x558] sm:$0xff]
    %v999 = vld [vmem:[#allocation11 + $0x560] sm:$0xff]
    %v1000 = vld [vmem:[#allocation11 + $0x568] sm:$0xff]
    %v1001 = vld [vmem:[#allocation11 + $0x570] sm:$0xff]
    %v1002 = vld [vmem:[#allocation11 + $0x578] sm:$0xff]
    %v1003 = vld [vmem:[#allocation11 + $0x580] sm:$0xff]
    %v1004 = vld [vmem:[#allocation11 + $0x588] sm:$0xff]
    %v1005 = vld [vmem:[#allocation11 + $0x590] sm:$0xff]
    %v1006 = vld [vmem:[#allocation11 + $0x598] sm:$0xff]
    %v1007 = vld [vmem:[#allocation11 + $0x5a0] sm:$0xff]
    %v1008 = vld [vmem:[#allocation11 + $0x5a8] sm:$0xff]
    %v1009 = vld [vmem:[#allocation11 + $0x5b0] sm:$0xff]
    %v1010 = vld [vmem:[#allocation11 + $0x5b8] sm:$0xff]
    %v1011 = vld [vmem:[#allocation11 + $0x5c0] sm:$0xff]
    %v1012 = vld [vmem:[#allocation11 + $0x5c8] sm:$0xff]
    %v1013 = vld [vmem:[#allocation11 + $0x5d0] sm:$0xff]
    %v1014 = vld [vmem:[#allocation11 + $0x5d8] sm:$0xff]
    %v1015 = vld [vmem:[#allocation11 + $0x5e0] sm:$0xff]
    %v1016 = vld [vmem:[#allocation11 + $0x5e8] sm:$0xff]
    %v1017 = vld [vmem:[#allocation11 + $0x5f0] sm:$0xff]
    %v1018 = vld [vmem:[#allocation11 + $0x5f8] sm:$0xff]
    %v1019 = vld [vmem:[#allocation11 + $0x600] sm:$0xff]
    %v1020 = vld [vmem:[#allocation11 + $0x608] sm:$0xff]
    %v1021 = vld [vmem:[#allocation11 + $0x610] sm:$0xff]
    %v1022 = vld [vmem:[#allocation11 + $0x618] sm:$0xff]
    %v1023 = vld [vmem:[#allocation11 + $0x620] sm:$0xff]
    %v1024 = vld [vmem:[#allocation11 + $0x628] sm:$0xff]
    %v1025 = vld [vmem:[#allocation11 + $0x630] sm:$0xff]
    %v1026 = vld [vmem:[#allocation11 + $0x638] sm:$0xff]
    %v1027 = vld [vmem:[#allocation11 + $0x640] sm:$0xff]
    %v1028 = vld [vmem:[#allocation11 + $0x648] sm:$0xff]
    %v1029 = vld [vmem:[#allocation11 + $0x650] sm:$0xff]
    %v1030 = vld [vmem:[#allocation11 + $0x658] sm:$0xff]
    %v1031 = vld [vmem:[#allocation11 + $0x660] sm:$0xff]
    %v1032 = vld [vmem:[#allocation11 + $0x668] sm:$0xff]
    %v1033 = vld [vmem:[#allocation11 + $0x670] sm:$0xff]
    %v1034 = vld [vmem:[#allocation11 + $0x678] sm:$0xff]
    %v1035 = vld [vmem:[#allocation11 + $0x680] sm:$0xff]
    %v1036 = vld [vmem:[#allocation11 + $0x688] sm:$0xff]
    %v1037 = vld [vmem:[#allocation11 + $0x690] sm:$0xff]
    %v1038 = vld [vmem:[#allocation11 + $0x698] sm:$0xff]
    %v1039 = vld [vmem:[#allocation11 + $0x6a0] sm:$0xff]
    %v1040 = vld [vmem:[#allocation11 + $0x6a8] sm:$0xff]
    %v1041 = vld [vmem:[#allocation11 + $0x6b0] sm:$0xff]
    %v1042 = vld [vmem:[#allocation11 + $0x6b8] sm:$0xff]
    %v1043 = vld [vmem:[#allocation11 + $0x6c0] sm:$0xff]
    %v1044 = vld [vmem:[#allocation11 + $0x6c8] sm:$0xff]
    %v1045 = vld [vmem:[#allocation11 + $0x6d0] sm:$0xff]
    %v1046 = vld [vmem:[#allocation11 + $0x6d8] sm:$0xff]
    %v1047 = vld [vmem:[#allocation11 + $0x6e0] sm:$0xff]
    %v1048 = vld [vmem:[#allocation11 + $0x6e8] sm:$0xff]
    %v1049 = vld [vmem:[#allocation11 + $0x6f0] sm:$0xff]
    %v1050 = vld [vmem:[#allocation11 + $0x6f8] sm:$0xff]
    %v1051 = vld [vmem:[#allocation11 + $0x700] sm:$0xff]
    %v1052 = vld [vmem:[#allocation11 + $0x708] sm:$0xff]
    %v1053 = vld [vmem:[#allocation11 + $0x710] sm:$0xff]
    %v1054 = vld [vmem:[#allocation11 + $0x718] sm:$0xff]
    %v1055 = vld [vmem:[#allocation11 + $0x720] sm:$0xff]
    %v1056 = vld [vmem:[#allocation11 + $0x728] sm:$0xff]
    %v1057 = vld [vmem:[#allocation11 + $0x730] sm:$0xff]
    %v1058 = vld [vmem:[#allocation11 + $0x738] sm:$0xff]
    %v1059 = vld [vmem:[#allocation11 + $0x740] sm:$0xff]
    %v1060 = vld [vmem:[#allocation11 + $0x748] sm:$0xff]
    %v1061 = vld [vmem:[#allocation11 + $0x750] sm:$0xff]
    %v1062 = vld [vmem:[#allocation11 + $0x758] sm:$0xff]
    %v1063 = vld [vmem:[#allocation11 + $0x760] sm:$0xff]
    %v1064 = vld [vmem:[#allocation11 + $0x768] sm:$0xff]
    %v1065 = vld [vmem:[#allocation11 + $0x770] sm:$0xff]
    %v1066 = vld [vmem:[#allocation11 + $0x778] sm:$0xff]
    %v1067 = vld [vmem:[#allocation11 + $0x780] sm:$0xff]
    %v1068 = vld [vmem:[#allocation11 + $0x788] sm:$0xff]
    %v1069 = vld [vmem:[#allocation11 + $0x790] sm:$0xff]
    %v1070 = vld [vmem:[#allocation11 + $0x798] sm:$0xff]
    %v1071 = vld [vmem:[#allocation11 + $0x7a0] sm:$0xff]
    %v1072 = vld [vmem:[#allocation11 + $0x7a8] sm:$0xff]
    %v1073 = vld [vmem:[#allocation11 + $0x7b0] sm:$0xff]
    %v1074 = vld [vmem:[#allocation11 + $0x7b8] sm:$0xff]
    %v1075 = vld [vmem:[#allocation11 + $0x7c0] sm:$0xff]
    %v1076 = vld [vmem:[#allocation11 + $0x7c8] sm:$0xff]
    %v1077 = vld [vmem:[#allocation11 + $0x7d0] sm:$0xff]
    %v1078 = vld [vmem:[#allocation11 + $0x7d8] sm:$0xff]
    %v1079 = vld [vmem:[#allocation11 + $0x7e0] sm:$0xff]
    %v1080 = vld [vmem:[#allocation11 + $0x7e8] sm:$0xff]
    %v1081 = vld [vmem:[#allocation11 + $0x7f0] sm:$0xff]
    %v1082 = vld [vmem:[#allocation11 + $0x7f8] sm:$0xff]
    %v1083 = vld [vmem:[#allocation13] sm:$0xff]
    %v1085 = vperm.slane %v1083, 0
    %v1086 = vperm.slane %v1083, 1
    %v1087 = vperm.slane %v1083, 2
    %v1088 = vperm.slane %v1083, 3
    %v1089 = vperm.slane %v1083, 4
    %v1090 = vperm.slane %v1083, 5
    %v1091 = vperm.slane %v1083, 6
    %v1092 = vperm.slane %v1083, 7
    %v1357 = vunpack.c.l.b16 %v827
    %v1358 = vunpack.c.h.b16 %v827
    %v1359 = vunpack.c.l.b16 %v828
    %v1360 = vunpack.c.h.b16 %v828
    %v1361 = vunpack.c.l.b16 %v829
    %v1362 = vunpack.c.h.b16 %v829
    %v1363 = vunpack.c.l.b16 %v830
    %v1364 = vunpack.c.h.b16 %v830
    %v1365 = vunpack.c.l.b16 %v831
    %v1366 = vunpack.c.h.b16 %v831
    %v1367 = vunpack.c.l.b16 %v832
    %v1368 = vunpack.c.h.b16 %v832
    %v1369 = vunpack.c.l.b16 %v833
    %v1370 = vunpack.c.h.b16 %v833
    %v1371 = vunpack.c.l.b16 %v834
    %v1372 = vunpack.c.h.b16 %v834
    %v1373 = vunpack.c.l.b16 %v835
    %v1374 = vunpack.c.h.b16 %v835
    %v1375 = vunpack.c.l.b16 %v836
    %v1376 = vunpack.c.h.b16 %v836
    %v1377 = vunpack.c.l.b16 %v837
    %v1378 = vunpack.c.h.b16 %v837
    %v1379 = vunpack.c.l.b16 %v838
    %v1380 = vunpack.c.h.b16 %v838
    %v1381 = vunpack.c.l.b16 %v839
    %v1382 = vunpack.c.h.b16 %v839
    %v1383 = vunpack.c.l.b16 %v840
    %v1384 = vunpack.c.h.b16 %v840
    %v1385 = vunpack.c.l.b16 %v841
    %v1386 = vunpack.c.h.b16 %v841
    %v1387 = vunpack.c.l.b16 %v842
    %v1388 = vunpack.c.h.b16 %v842
    %v1389 = vunpack.c.l.b16 %v843
    %v1390 = vunpack.c.h.b16 %v843
    %v1391 = vunpack.c.l.b16 %v844
    %v1392 = vunpack.c.h.b16 %v844
    %v1393 = vunpack.c.l.b16 %v845
    %v1394 = vunpack.c.h.b16 %v845
    %v1395 = vunpack.c.l.b16 %v846
    %v1396 = vunpack.c.h.b16 %v846
    %v1397 = vunpack.c.l.b16 %v847
    %v1398 = vunpack.c.h.b16 %v847
    %v1399 = vunpack.c.l.b16 %v848
    %v1400 = vunpack.c.h.b16 %v848
    %v1401 = vunpack.c.l.b16 %v849
    %v1402 = vunpack.c.h.b16 %v849
    %v1403 = vunpack.c.l.b16 %v850
    %v1404 = vunpack.c.h.b16 %v850
    %v1405 = vunpack.c.l.b16 %v851
    %v1406 = vunpack.c.h.b16 %v851
    %v1407 = vunpack.c.l.b16 %v852
    %v1408 = vunpack.c.h.b16 %v852
    %v1409 = vunpack.c.l.b16 %v853
    %v1410 = vunpack.c.h.b16 %v853
    %v1411 = vunpack.c.l.b16 %v854
    %v1412 = vunpack.c.h.b16 %v854
    %v1413 = vunpack.c.l.b16 %v855
    %v1414 = vunpack.c.h.b16 %v855
    %v1415 = vunpack.c.l.b16 %v856
    %v1416 = vunpack.c.h.b16 %v856
    %v1417 = vunpack.c.l.b16 %v857
    %v1418 = vunpack.c.h.b16 %v857
    %v1419 = vunpack.c.l.b16 %v858
    %v1420 = vunpack.c.h.b16 %v858
    %v1421 = vunpack.c.l.b16 %v859
    %v1422 = vunpack.c.h.b16 %v859
    %v1423 = vunpack.c.l.b16 %v860
    %v1424 = vunpack.c.h.b16 %v860
    %v1425 = vunpack.c.l.b16 %v861
    %v1426 = vunpack.c.h.b16 %v861
    %v1427 = vunpack.c.l.b16 %v862
    %v1428 = vunpack.c.h.b16 %v862
    %v1429 = vunpack.c.l.b16 %v863
    %v1430 = vunpack.c.h.b16 %v863
    %v1431 = vunpack.c.l.b16 %v864
    %v1432 = vunpack.c.h.b16 %v864
    %v1433 = vunpack.c.l.b16 %v865
    %v1434 = vunpack.c.h.b16 %v865
    %v1435 = vunpack.c.l.b16 %v866
    %v1436 = vunpack.c.h.b16 %v866
    %v1437 = vunpack.c.l.b16 %v867
    %v1438 = vunpack.c.h.b16 %v867
    %v1439 = vunpack.c.l.b16 %v868
    %v1440 = vunpack.c.h.b16 %v868
    %v1441 = vunpack.c.l.b16 %v869
    %v1442 = vunpack.c.h.b16 %v869
    %v1443 = vunpack.c.l.b16 %v870
    %v1444 = vunpack.c.h.b16 %v870
    %v1445 = vunpack.c.l.b16 %v871
    %v1446 = vunpack.c.h.b16 %v871
    %v1447 = vunpack.c.l.b16 %v872
    %v1448 = vunpack.c.h.b16 %v872
    %v1449 = vunpack.c.l.b16 %v873
    %v1450 = vunpack.c.h.b16 %v873
    %v1451 = vunpack.c.l.b16 %v874
    %v1452 = vunpack.c.h.b16 %v874
    %v1453 = vunpack.c.l.b16 %v875
    %v1454 = vunpack.c.h.b16 %v875
    %v1455 = vunpack.c.l.b16 %v876
    %v1456 = vunpack.c.h.b16 %v876
    %v1457 = vunpack.c.l.b16 %v877
    %v1458 = vunpack.c.h.b16 %v877
    %v1459 = vunpack.c.l.b16 %v878
    %v1460 = vunpack.c.h.b16 %v878
    %v1461 = vunpack.c.l.b16 %v879
    %v1462 = vunpack.c.h.b16 %v879
    %v1463 = vunpack.c.l.b16 %v880
    %v1464 = vunpack.c.h.b16 %v880
    %v1465 = vunpack.c.l.b16 %v881
    %v1466 = vunpack.c.h.b16 %v881
    %v1467 = vunpack.c.l.b16 %v882
    %v1468 = vunpack.c.h.b16 %v882
    %v1469 = vunpack.c.l.b16 %v883
    %v1470 = vunpack.c.h.b16 %v883
    %v1471 = vunpack.c.l.b16 %v884
    %v1472 = vunpack.c.h.b16 %v884
    %v1473 = vunpack.c.l.b16 %v885
    %v1474 = vunpack.c.h.b16 %v885
    %v1475 = vunpack.c.l.b16 %v886
    %v1476 = vunpack.c.h.b16 %v886
    %v1477 = vunpack.c.l.b16 %v887
    %v1478 = vunpack.c.h.b16 %v887
    %v1479 = vunpack.c.l.b16 %v888
    %v1480 = vunpack.c.h.b16 %v888
    %v1481 = vunpack.c.l.b16 %v889
    %v1482 = vunpack.c.h.b16 %v889
    %v1483 = vunpack.c.l.b16 %v890
    %v1484 = vunpack.c.h.b16 %v890
    %v1485 = vunpack.c.l.b16 %v891
    %v1486 = vunpack.c.h.b16 %v891
    %v1487 = vunpack.c.l.b16 %v892
    %v1488 = vunpack.c.h.b16 %v892
    %v1489 = vunpack.c.l.b16 %v893
    %v1490 = vunpack.c.h.b16 %v893
    %v1491 = vunpack.c.l.b16 %v894
    %v1492 = vunpack.c.h.b16 %v894
    %v1493 = vunpack.c.l.b16 %v895
    %v1494 = vunpack.c.h.b16 %v895
    %v1495 = vunpack.c.l.b16 %v896
    %v1496 = vunpack.c.h.b16 %v896
    %v1497 = vunpack.c.l.b16 %v897
    %v1498 = vunpack.c.h.b16 %v897
    %v1499 = vunpack.c.l.b16 %v898
    %v1500 = vunpack.c.h.b16 %v898
    %v1501 = vunpack.c.l.b16 %v899
    %v1502 = vunpack.c.h.b16 %v899
    %v1503 = vunpack.c.l.b16 %v900
    %v1504 = vunpack.c.h.b16 %v900
    %v1505 = vunpack.c.l.b16 %v901
    %v1506 = vunpack.c.h.b16 %v901
    %v1507 = vunpack.c.l.b16 %v902
    %v1508 = vunpack.c.h.b16 %v902
    %v1509 = vunpack.c.l.b16 %v903
    %v1510 = vunpack.c.h.b16 %v903
    %v1511 = vunpack.c.l.b16 %v904
    %v1512 = vunpack.c.h.b16 %v904
    %v1513 = vunpack.c.l.b16 %v905
    %v1514 = vunpack.c.h.b16 %v905
    %v1515 = vunpack.c.l.b16 %v906
    %v1516 = vunpack.c.h.b16 %v906
    %v1517 = vunpack.c.l.b16 %v907
    %v1518 = vunpack.c.h.b16 %v907
    %v1519 = vunpack.c.l.b16 %v908
    %v1520 = vunpack.c.h.b16 %v908
    %v1521 = vunpack.c.l.b16 %v909
    %v1522 = vunpack.c.h.b16 %v909
    %v1523 = vunpack.c.l.b16 %v910
    %v1524 = vunpack.c.h.b16 %v910
    %v1525 = vunpack.c.l.b16 %v911
    %v1526 = vunpack.c.h.b16 %v911
    %v1527 = vunpack.c.l.b16 %v912
    %v1528 = vunpack.c.h.b16 %v912
    %v1529 = vunpack.c.l.b16 %v913
    %v1530 = vunpack.c.h.b16 %v913
    %v1531 = vunpack.c.l.b16 %v914
    %v1532 = vunpack.c.h.b16 %v914
    %v1533 = vunpack.c.l.b16 %v915
    %v1534 = vunpack.c.h.b16 %v915
    %v1535 = vunpack.c.l.b16 %v916
    %v1536 = vunpack.c.h.b16 %v916
    %v1537 = vunpack.c.l.b16 %v917
    %v1538 = vunpack.c.h.b16 %v917
    %v1539 = vunpack.c.l.b16 %v918
    %v1540 = vunpack.c.h.b16 %v918
    %v1541 = vunpack.c.l.b16 %v919
    %v1542 = vunpack.c.h.b16 %v919
    %v1543 = vunpack.c.l.b16 %v920
    %v1544 = vunpack.c.h.b16 %v920
    %v1545 = vunpack.c.l.b16 %v921
    %v1546 = vunpack.c.h.b16 %v921
    %v1547 = vunpack.c.l.b16 %v922
    %v1548 = vunpack.c.h.b16 %v922
    %v1549 = vunpack.c.l.b16 %v923
    %v1550 = vunpack.c.h.b16 %v923
    %v1551 = vunpack.c.l.b16 %v924
    %v1552 = vunpack.c.h.b16 %v924
    %v1553 = vunpack.c.l.b16 %v925
    %v1554 = vunpack.c.h.b16 %v925
    %v1555 = vunpack.c.l.b16 %v926
    %v1556 = vunpack.c.h.b16 %v926
    %v1557 = vunpack.c.l.b16 %v927
    %v1558 = vunpack.c.h.b16 %v927
    %v1559 = vunpack.c.l.b16 %v928
    %v1560 = vunpack.c.h.b16 %v928
    %v1561 = vunpack.c.l.b16 %v929
    %v1562 = vunpack.c.h.b16 %v929
    %v1563 = vunpack.c.l.b16 %v930
    %v1564 = vunpack.c.h.b16 %v930
    %v1565 = vunpack.c.l.b16 %v931
    %v1566 = vunpack.c.h.b16 %v931
    %v1567 = vunpack.c.l.b16 %v932
    %v1568 = vunpack.c.h.b16 %v932
    %v1569 = vunpack.c.l.b16 %v933
    %v1570 = vunpack.c.h.b16 %v933
    %v1571 = vunpack.c.l.b16 %v934
    %v1572 = vunpack.c.h.b16 %v934
    %v1573 = vunpack.c.l.b16 %v935
    %v1574 = vunpack.c.h.b16 %v935
    %v1575 = vunpack.c.l.b16 %v936
    %v1576 = vunpack.c.h.b16 %v936
    %v1577 = vunpack.c.l.b16 %v937
    %v1578 = vunpack.c.h.b16 %v937
    %v1579 = vunpack.c.l.b16 %v938
    %v1580 = vunpack.c.h.b16 %v938
    %v1581 = vunpack.c.l.b16 %v939
    %v1582 = vunpack.c.h.b16 %v939
    %v1583 = vunpack.c.l.b16 %v940
    %v1584 = vunpack.c.h.b16 %v940
    %v1585 = vunpack.c.l.b16 %v941
    %v1586 = vunpack.c.h.b16 %v941
    %v1587 = vunpack.c.l.b16 %v942
    %v1588 = vunpack.c.h.b16 %v942
    %v1589 = vunpack.c.l.b16 %v943
    %v1590 = vunpack.c.h.b16 %v943
    %v1591 = vunpack.c.l.b16 %v944
    %v1592 = vunpack.c.h.b16 %v944
    %v1593 = vunpack.c.l.b16 %v945
    %v1594 = vunpack.c.h.b16 %v945
    %v1595 = vunpack.c.l.b16 %v946
    %v1596 = vunpack.c.h.b16 %v946
    %v1597 = vunpack.c.l.b16 %v947
    %v1598 = vunpack.c.h.b16 %v947
    %v1599 = vunpack.c.l.b16 %v948
    %v1600 = vunpack.c.h.b16 %v948
    %v1601 = vunpack.c.l.b16 %v949
    %v1602 = vunpack.c.h.b16 %v949
    %v1603 = vunpack.c.l.b16 %v950
    %v1604 = vunpack.c.h.b16 %v950
    %v1605 = vunpack.c.l.b16 %v951
    %v1606 = vunpack.c.h.b16 %v951
    %v1607 = vunpack.c.l.b16 %v952
    %v1608 = vunpack.c.h.b16 %v952
    %v1609 = vunpack.c.l.b16 %v953
    %v1610 = vunpack.c.h.b16 %v953
    %v1611 = vunpack.c.l.b16 %v954
    %v1612 = vunpack.c.h.b16 %v954
    %v1613 = vunpack.c.l.b16 %v955
    %v1614 = vunpack.c.h.b16 %v955
    %v1615 = vunpack.c.l.b16 %v956
    %v1616 = vunpack.c.h.b16 %v956
    %v1617 = vunpack.c.l.b16 %v957
    %v1618 = vunpack.c.h.b16 %v957
    %v1619 = vunpack.c.l.b16 %v958
    %v1620 = vunpack.c.h.b16 %v958
    %v1621 = vunpack.c.l.b16 %v959
    %v1622 = vunpack.c.h.b16 %v959
    %v1623 = vunpack.c.l.b16 %v960
    %v1624 = vunpack.c.h.b16 %v960
    %v1625 = vunpack.c.l.b16 %v961
    %v1626 = vunpack.c.h.b16 %v961
    %v1627 = vunpack.c.l.b16 %v962
    %v1628 = vunpack.c.h.b16 %v962
    %v1629 = vunpack.c.l.b16 %v963
    %v1630 = vunpack.c.h.b16 %v963
    %v1631 = vunpack.c.l.b16 %v964
    %v1632 = vunpack.c.h.b16 %v964
    %v1633 = vunpack.c.l.b16 %v965
    %v1634 = vunpack.c.h.b16 %v965
    %v1635 = vunpack.c.l.b16 %v966
    %v1636 = vunpack.c.h.b16 %v966
    %v1637 = vunpack.c.l.b16 %v967
    %v1638 = vunpack.c.h.b16 %v967
    %v1639 = vunpack.c.l.b16 %v968
    %v1640 = vunpack.c.h.b16 %v968
    %v1641 = vunpack.c.l.b16 %v969
    %v1642 = vunpack.c.h.b16 %v969
    %v1643 = vunpack.c.l.b16 %v970
    %v1644 = vunpack.c.h.b16 %v970
    %v1645 = vunpack.c.l.b16 %v971
    %v1646 = vunpack.c.h.b16 %v971
    %v1647 = vunpack.c.l.b16 %v972
    %v1648 = vunpack.c.h.b16 %v972
    %v1649 = vunpack.c.l.b16 %v973
    %v1650 = vunpack.c.h.b16 %v973
    %v1651 = vunpack.c.l.b16 %v974
    %v1652 = vunpack.c.h.b16 %v974
    %v1653 = vunpack.c.l.b16 %v975
    %v1654 = vunpack.c.h.b16 %v975
    %v1655 = vunpack.c.l.b16 %v976
    %v1656 = vunpack.c.h.b16 %v976
    %v1657 = vunpack.c.l.b16 %v977
    %v1658 = vunpack.c.h.b16 %v977
    %v1659 = vunpack.c.l.b16 %v978
    %v1660 = vunpack.c.h.b16 %v978
    %v1661 = vunpack.c.l.b16 %v979
    %v1662 = vunpack.c.h.b16 %v979
    %v1663 = vunpack.c.l.b16 %v980
    %v1664 = vunpack.c.h.b16 %v980
    %v1665 = vunpack.c.l.b16 %v981
    %v1666 = vunpack.c.h.b16 %v981
    %v1667 = vunpack.c.l.b16 %v982
    %v1668 = vunpack.c.h.b16 %v982
    %v1669 = vunpack.c.l.b16 %v983
    %v1670 = vunpack.c.h.b16 %v983
    %v1671 = vunpack.c.l.b16 %v984
    %v1672 = vunpack.c.h.b16 %v984
    %v1673 = vunpack.c.l.b16 %v985
    %v1674 = vunpack.c.h.b16 %v985
    %v1675 = vunpack.c.l.b16 %v986
    %v1676 = vunpack.c.h.b16 %v986
    %v1677 = vunpack.c.l.b16 %v987
    %v1678 = vunpack.c.h.b16 %v987
    %v1679 = vunpack.c.l.b16 %v988
    %v1680 = vunpack.c.h.b16 %v988
    %v1681 = vunpack.c.l.b16 %v989
    %v1682 = vunpack.c.h.b16 %v989
    %v1683 = vunpack.c.l.b16 %v990
    %v1684 = vunpack.c.h.b16 %v990
    %v1685 = vunpack.c.l.b16 %v991
    %v1686 = vunpack.c.h.b16 %v991
    %v1687 = vunpack.c.l.b16 %v992
    %v1688 = vunpack.c.h.b16 %v992
    %v1689 = vunpack.c.l.b16 %v993
    %v1690 = vunpack.c.h.b16 %v993
    %v1691 = vunpack.c.l.b16 %v994
    %v1692 = vunpack.c.h.b16 %v994
    %v1693 = vunpack.c.l.b16 %v995
    %v1694 = vunpack.c.h.b16 %v995
    %v1695 = vunpack.c.l.b16 %v996
    %v1696 = vunpack.c.h.b16 %v996
    %v1697 = vunpack.c.l.b16 %v997
    %v1698 = vunpack.c.h.b16 %v997
    %v1699 = vunpack.c.l.b16 %v998
    %v1700 = vunpack.c.h.b16 %v998
    %v1701 = vunpack.c.l.b16 %v999
    %v1702 = vunpack.c.h.b16 %v999
    %v1703 = vunpack.c.l.b16 %v1000
    %v1704 = vunpack.c.h.b16 %v1000
    %v1705 = vunpack.c.l.b16 %v1001
    %v1706 = vunpack.c.h.b16 %v1001
    %v1707 = vunpack.c.l.b16 %v1002
    %v1708 = vunpack.c.h.b16 %v1002
    %v1709 = vunpack.c.l.b16 %v1003
    %v1710 = vunpack.c.h.b16 %v1003
    %v1711 = vunpack.c.l.b16 %v1004
    %v1712 = vunpack.c.h.b16 %v1004
    %v1713 = vunpack.c.l.b16 %v1005
    %v1714 = vunpack.c.h.b16 %v1005
    %v1715 = vunpack.c.l.b16 %v1006
    %v1716 = vunpack.c.h.b16 %v1006
    %v1717 = vunpack.c.l.b16 %v1007
    %v1718 = vunpack.c.h.b16 %v1007
    %v1719 = vunpack.c.l.b16 %v1008
    %v1720 = vunpack.c.h.b16 %v1008
    %v1721 = vunpack.c.l.b16 %v1009
    %v1722 = vunpack.c.h.b16 %v1009
    %v1723 = vunpack.c.l.b16 %v1010
    %v1724 = vunpack.c.h.b16 %v1010
    %v1725 = vunpack.c.l.b16 %v1011
    %v1726 = vunpack.c.h.b16 %v1011
    %v1727 = vunpack.c.l.b16 %v1012
    %v1728 = vunpack.c.h.b16 %v1012
    %v1729 = vunpack.c.l.b16 %v1013
    %v1730 = vunpack.c.h.b16 %v1013
    %v1731 = vunpack.c.l.b16 %v1014
    %v1732 = vunpack.c.h.b16 %v1014
    %v1733 = vunpack.c.l.b16 %v1015
    %v1734 = vunpack.c.h.b16 %v1015
    %v1735 = vunpack.c.l.b16 %v1016
    %v1736 = vunpack.c.h.b16 %v1016
    %v1737 = vunpack.c.l.b16 %v1017
    %v1738 = vunpack.c.h.b16 %v1017
    %v1739 = vunpack.c.l.b16 %v1018
    %v1740 = vunpack.c.h.b16 %v1018
    %v1741 = vunpack.c.l.b16 %v1019
    %v1742 = vunpack.c.h.b16 %v1019
    %v1743 = vunpack.c.l.b16 %v1020
    %v1744 = vunpack.c.h.b16 %v1020
    %v1745 = vunpack.c.l.b16 %v1021
    %v1746 = vunpack.c.h.b16 %v1021
    %v1747 = vunpack.c.l.b16 %v1022
    %v1748 = vunpack.c.h.b16 %v1022
    %v1749 = vunpack.c.l.b16 %v1023
    %v1750 = vunpack.c.h.b16 %v1023
    %v1751 = vunpack.c.l.b16 %v1024
    %v1752 = vunpack.c.h.b16 %v1024
    %v1753 = vunpack.c.l.b16 %v1025
    %v1754 = vunpack.c.h.b16 %v1025
    %v1755 = vunpack.c.l.b16 %v1026
    %v1756 = vunpack.c.h.b16 %v1026
    %v1757 = vunpack.c.l.b16 %v1027
    %v1758 = vunpack.c.h.b16 %v1027
    %v1759 = vunpack.c.l.b16 %v1028
    %v1760 = vunpack.c.h.b16 %v1028
    %v1761 = vunpack.c.l.b16 %v1029
    %v1762 = vunpack.c.h.b16 %v1029
    %v1763 = vunpack.c.l.b16 %v1030
    %v1764 = vunpack.c.h.b16 %v1030
    %v1765 = vunpack.c.l.b16 %v1031
    %v1766 = vunpack.c.h.b16 %v1031
    %v1767 = vunpack.c.l.b16 %v1032
    %v1768 = vunpack.c.h.b16 %v1032
    %v1769 = vunpack.c.l.b16 %v1033
    %v1770 = vunpack.c.h.b16 %v1033
    %v1771 = vunpack.c.l.b16 %v1034
    %v1772 = vunpack.c.h.b16 %v1034
    %v1773 = vunpack.c.l.b16 %v1035
    %v1774 = vunpack.c.h.b16 %v1035
    %v1775 = vunpack.c.l.b16 %v1036
    %v1776 = vunpack.c.h.b16 %v1036
    %v1777 = vunpack.c.l.b16 %v1037
    %v1778 = vunpack.c.h.b16 %v1037
    %v1779 = vunpack.c.l.b16 %v1038
    %v1780 = vunpack.c.h.b16 %v1038
    %v1781 = vunpack.c.l.b16 %v1039
    %v1782 = vunpack.c.h.b16 %v1039
    %v1783 = vunpack.c.l.b16 %v1040
    %v1784 = vunpack.c.h.b16 %v1040
    %v1785 = vunpack.c.l.b16 %v1041
    %v1786 = vunpack.c.h.b16 %v1041
    %v1787 = vunpack.c.l.b16 %v1042
    %v1788 = vunpack.c.h.b16 %v1042
    %v1789 = vunpack.c.l.b16 %v1043
    %v1790 = vunpack.c.h.b16 %v1043
    %v1791 = vunpack.c.l.b16 %v1044
    %v1792 = vunpack.c.h.b16 %v1044
    %v1793 = vunpack.c.l.b16 %v1045
    %v1794 = vunpack.c.h.b16 %v1045
    %v1795 = vunpack.c.l.b16 %v1046
    %v1796 = vunpack.c.h.b16 %v1046
    %v1797 = vunpack.c.l.b16 %v1047
    %v1798 = vunpack.c.h.b16 %v1047
    %v1799 = vunpack.c.l.b16 %v1048
    %v1800 = vunpack.c.h.b16 %v1048
    %v1801 = vunpack.c.l.b16 %v1049
    %v1802 = vunpack.c.h.b16 %v1049
    %v1803 = vunpack.c.l.b16 %v1050
    %v1804 = vunpack.c.h.b16 %v1050
    %v1805 = vunpack.c.l.b16 %v1051
    %v1806 = vunpack.c.h.b16 %v1051
    %v1807 = vunpack.c.l.b16 %v1052
    %v1808 = vunpack.c.h.b16 %v1052
    %v1809 = vunpack.c.l.b16 %v1053
    %v1810 = vunpack.c.h.b16 %v1053
    %v1811 = vunpack.c.l.b16 %v1054
    %v1812 = vunpack.c.h.b16 %v1054
    %v1813 = vunpack.c.l.b16 %v1055
    %v1814 = vunpack.c.h.b16 %v1055
    %v1815 = vunpack.c.l.b16 %v1056
    %v1816 = vunpack.c.h.b16 %v1056
    %v1817 = vunpack.c.l.b16 %v1057
    %v1818 = vunpack.c.h.b16 %v1057
    %v1819 = vunpack.c.l.b16 %v1058
    %v1820 = vunpack.c.h.b16 %v1058
    %v1821 = vunpack.c.l.b16 %v1059
    %v1822 = vunpack.c.h.b16 %v1059
    %v1823 = vunpack.c.l.b16 %v1060
    %v1824 = vunpack.c.h.b16 %v1060
    %v1825 = vunpack.c.l.b16 %v1061
    %v1826 = vunpack.c.h.b16 %v1061
    %v1827 = vunpack.c.l.b16 %v1062
    %v1828 = vunpack.c.h.b16 %v1062
    %v1829 = vunpack.c.l.b16 %v1063
    %v1830 = vunpack.c.h.b16 %v1063
    %v1831 = vunpack.c.l.b16 %v1064
    %v1832 = vunpack.c.h.b16 %v1064
    %v1833 = vunpack.c.l.b16 %v1065
    %v1834 = vunpack.c.h.b16 %v1065
    %v1835 = vunpack.c.l.b16 %v1066
    %v1836 = vunpack.c.h.b16 %v1066
    %v1837 = vunpack.c.l.b16 %v1067
    %v1838 = vunpack.c.h.b16 %v1067
    %v1839 = vunpack.c.l.b16 %v1068
    %v1840 = vunpack.c.h.b16 %v1068
    %v1841 = vunpack.c.l.b16 %v1069
    %v1842 = vunpack.c.h.b16 %v1069
    %v1843 = vunpack.c.l.b16 %v1070
    %v1844 = vunpack.c.h.b16 %v1070
    %v1845 = vunpack.c.l.b16 %v1071
    %v1846 = vunpack.c.h.b16 %v1071
    %v1847 = vunpack.c.l.b16 %v1072
    %v1848 = vunpack.c.h.b16 %v1072
    %v1849 = vunpack.c.l.b16 %v1073
    %v1850 = vunpack.c.h.b16 %v1073
    %v1851 = vunpack.c.l.b16 %v1074
    %v1852 = vunpack.c.h.b16 %v1074
    %v1853 = vunpack.c.l.b16 %v1075
    %v1854 = vunpack.c.h.b16 %v1075
    %v1855 = vunpack.c.l.b16 %v1076
    %v1856 = vunpack.c.h.b16 %v1076
    %v1857 = vunpack.c.l.b16 %v1077
    %v1858 = vunpack.c.h.b16 %v1077
    %v1859 = vunpack.c.l.b16 %v1078
    %v1860 = vunpack.c.h.b16 %v1078
    %v1861 = vunpack.c.l.b16 %v1079
    %v1862 = vunpack.c.h.b16 %v1079
    %v1863 = vunpack.c.l.b16 %v1080
    %v1864 = vunpack.c.h.b16 %v1080
    %v1865 = vunpack.c.l.b16 %v1081
    %v1866 = vunpack.c.h.b16 %v1081
    %v1867 = vunpack.c.l.b16 %v1082
    %v1868 = vunpack.c.h.b16 %v1082
    %v1869 = vpack.c.b16 %v1365, %v1357
    %v1870 = vpack.c.b16 %v1366, %v1358
    %v1871 = vpack.c.b16 %v1367, %v1359
    %v1872 = vpack.c.b16 %v1368, %v1360
    %v1873 = vpack.c.b16 %v1369, %v1361
    %v1874 = vpack.c.b16 %v1370, %v1362
    %v1875 = vpack.c.b16 %v1371, %v1363
    %v1876 = vpack.c.b16 %v1372, %v1364
    %v1877 = vpack.c.b16 %v1381, %v1373
    %v1878 = vpack.c.b16 %v1382, %v1374
    %v1879 = vpack.c.b16 %v1383, %v1375
    %v1880 = vpack.c.b16 %v1384, %v1376
    %v1881 = vpack.c.b16 %v1385, %v1377
    %v1882 = vpack.c.b16 %v1386, %v1378
    %v1883 = vpack.c.b16 %v1387, %v1379
    %v1884 = vpack.c.b16 %v1388, %v1380
    %v1885 = vpack.c.b16 %v1397, %v1389
    %v1886 = vpack.c.b16 %v1398, %v1390
    %v1887 = vpack.c.b16 %v1399, %v1391
    %v1888 = vpack.c.b16 %v1400, %v1392
    %v1889 = vpack.c.b16 %v1401, %v1393
    %v1890 = vpack.c.b16 %v1402, %v1394
    %v1891 = vpack.c.b16 %v1403, %v1395
    %v1892 = vpack.c.b16 %v1404, %v1396
    %v1893 = vpack.c.b16 %v1413, %v1405
    %v1894 = vpack.c.b16 %v1414, %v1406
    %v1895 = vpack.c.b16 %v1415, %v1407
    %v1896 = vpack.c.b16 %v1416, %v1408
    %v1897 = vpack.c.b16 %v1417, %v1409
    %v1898 = vpack.c.b16 %v1418, %v1410
    %v1899 = vpack.c.b16 %v1419, %v1411
    %v1900 = vpack.c.b16 %v1420, %v1412
    %v1901 = vpack.c.b16 %v1429, %v1421
    %v1902 = vpack.c.b16 %v1430, %v1422
    %v1903 = vpack.c.b16 %v1431, %v1423
    %v1904 = vpack.c.b16 %v1432, %v1424
    %v1905 = vpack.c.b16 %v1433, %v1425
    %v1906 = vpack.c.b16 %v1434, %v1426
    %v1907 = vpack.c.b16 %v1435, %v1427
    %v1908 = vpack.c.b16 %v1436, %v1428
    %v1909 = vpack.c.b16 %v1445, %v1437
    %v1910 = vpack.c.b16 %v1446, %v1438
    %v1911 = vpack.c.b16 %v1447, %v1439
    %v1912 = vpack.c.b16 %v1448, %v1440
    %v1913 = vpack.c.b16 %v1449, %v1441
    %v1914 = vpack.c.b16 %v1450, %v1442
    %v1915 = vpack.c.b16 %v1451, %v1443
    %v1916 = vpack.c.b16 %v1452, %v1444
    %v1917 = vpack.c.b16 %v1461, %v1453
    %v1918 = vpack.c.b16 %v1462, %v1454
    %v1919 = vpack.c.b16 %v1463, %v1455
    %v1920 = vpack.c.b16 %v1464, %v1456
    %v1921 = vpack.c.b16 %v1465, %v1457
    %v1922 = vpack.c.b16 %v1466, %v1458
    %v1923 = vpack.c.b16 %v1467, %v1459
    %v1924 = vpack.c.b16 %v1468, %v1460
    %v1925 = vpack.c.b16 %v1477, %v1469
    %v1926 = vpack.c.b16 %v1478, %v1470
    %v1927 = vpack.c.b16 %v1479, %v1471
    %v1928 = vpack.c.b16 %v1480, %v1472
    %v1929 = vpack.c.b16 %v1481, %v1473
    %v1930 = vpack.c.b16 %v1482, %v1474
    %v1931 = vpack.c.b16 %v1483, %v1475
    %v1932 = vpack.c.b16 %v1484, %v1476
    %v1933 = vpack.c.b16 %v1493, %v1485
    %v1934 = vpack.c.b16 %v1494, %v1486
    %v1935 = vpack.c.b16 %v1495, %v1487
    %v1936 = vpack.c.b16 %v1496, %v1488
    %v1937 = vpack.c.b16 %v1497, %v1489
    %v1938 = vpack.c.b16 %v1498, %v1490
    %v1939 = vpack.c.b16 %v1499, %v1491
    %v1940 = vpack.c.b16 %v1500, %v1492
    %v1941 = vpack.c.b16 %v1509, %v1501
    %v1942 = vpack.c.b16 %v1510, %v1502
    %v1943 = vpack.c.b16 %v1511, %v1503
    %v1944 = vpack.c.b16 %v1512, %v1504
    %v1945 = vpack.c.b16 %v1513, %v1505
    %v1946 = vpack.c.b16 %v1514, %v1506
    %v1947 = vpack.c.b16 %v1515, %v1507
    %v1948 = vpack.c.b16 %v1516, %v1508
    %v1949 = vpack.c.b16 %v1525, %v1517
    %v1950 = vpack.c.b16 %v1526, %v1518
    %v1951 = vpack.c.b16 %v1527, %v1519
    %v1952 = vpack.c.b16 %v1528, %v1520
    %v1953 = vpack.c.b16 %v1529, %v1521
    %v1954 = vpack.c.b16 %v1530, %v1522
    %v1955 = vpack.c.b16 %v1531, %v1523
    %v1956 = vpack.c.b16 %v1532, %v1524
    %v1957 = vpack.c.b16 %v1541, %v1533
    %v1958 = vpack.c.b16 %v1542, %v1534
    %v1959 = vpack.c.b16 %v1543, %v1535
    %v1960 = vpack.c.b16 %v1544, %v1536
    %v1961 = vpack.c.b16 %v1545, %v1537
    %v1962 = vpack.c.b16 %v1546, %v1538
    %v1963 = vpack.c.b16 %v1547, %v1539
    %v1964 = vpack.c.b16 %v1548, %v1540
    %v1965 = vpack.c.b16 %v1557, %v1549
    %v1966 = vpack.c.b16 %v1558, %v1550
    %v1967 = vpack.c.b16 %v1559, %v1551
    %v1968 = vpack.c.b16 %v1560, %v1552
    %v1969 = vpack.c.b16 %v1561, %v1553
    %v1970 = vpack.c.b16 %v1562, %v1554
    %v1971 = vpack.c.b16 %v1563, %v1555
    %v1972 = vpack.c.b16 %v1564, %v1556
    %v1973 = vpack.c.b16 %v1573, %v1565
    %v1974 = vpack.c.b16 %v1574, %v1566
    %v1975 = vpack.c.b16 %v1575, %v1567
    %v1976 = vpack.c.b16 %v1576, %v1568
    %v1977 = vpack.c.b16 %v1577, %v1569
    %v1978 = vpack.c.b16 %v1578, %v1570
    %v1979 = vpack.c.b16 %v1579, %v1571
    %v1980 = vpack.c.b16 %v1580, %v1572
    %v1981 = vpack.c.b16 %v1589, %v1581
    %v1982 = vpack.c.b16 %v1590, %v1582
    %v1983 = vpack.c.b16 %v1591, %v1583
    %v1984 = vpack.c.b16 %v1592, %v1584
    %v1985 = vpack.c.b16 %v1593, %v1585
    %v1986 = vpack.c.b16 %v1594, %v1586
    %v1987 = vpack.c.b16 %v1595, %v1587
    %v1988 = vpack.c.b16 %v1596, %v1588
    %v1989 = vpack.c.b16 %v1605, %v1597
    %v1990 = vpack.c.b16 %v1606, %v1598
    %v1991 = vpack.c.b16 %v1607, %v1599
    %v1992 = vpack.c.b16 %v1608, %v1600
    %v1993 = vpack.c.b16 %v1609, %v1601
    %v1994 = vpack.c.b16 %v1610, %v1602
    %v1995 = vpack.c.b16 %v1611, %v1603
    %v1996 = vpack.c.b16 %v1612, %v1604
    %v1997 = vpack.c.b16 %v1621, %v1613
    %v1998 = vpack.c.b16 %v1622, %v1614
    %v1999 = vpack.c.b16 %v1623, %v1615
    %v2000 = vpack.c.b16 %v1624, %v1616
    %v2001 = vpack.c.b16 %v1625, %v1617
    %v2002 = vpack.c.b16 %v1626, %v1618
    %v2003 = vpack.c.b16 %v1627, %v1619
    %v2004 = vpack.c.b16 %v1628, %v1620
    %v2005 = vpack.c.b16 %v1637, %v1629
    %v2006 = vpack.c.b16 %v1638, %v1630
    %v2007 = vpack.c.b16 %v1639, %v1631
    %v2008 = vpack.c.b16 %v1640, %v1632
    %v2009 = vpack.c.b16 %v1641, %v1633
    %v2010 = vpack.c.b16 %v1642, %v1634
    %v2011 = vpack.c.b16 %v1643, %v1635
    %v2012 = vpack.c.b16 %v1644, %v1636
    %v2013 = vpack.c.b16 %v1653, %v1645
    %v2014 = vpack.c.b16 %v1654, %v1646
    %v2015 = vpack.c.b16 %v1655, %v1647
    %v2016 = vpack.c.b16 %v1656, %v1648
    %v2017 = vpack.c.b16 %v1657, %v1649
    %v2018 = vpack.c.b16 %v1658, %v1650
    %v2019 = vpack.c.b16 %v1659, %v1651
    %v2020 = vpack.c.b16 %v1660, %v1652
    %v2021 = vpack.c.b16 %v1669, %v1661
    %v2022 = vpack.c.b16 %v1670, %v1662
    %v2023 = vpack.c.b16 %v1671, %v1663
    %v2024 = vpack.c.b16 %v1672, %v1664
    %v2025 = vpack.c.b16 %v1673, %v1665
    %v2026 = vpack.c.b16 %v1674, %v1666
    %v2027 = vpack.c.b16 %v1675, %v1667
    %v2028 = vpack.c.b16 %v1676, %v1668
    %v2029 = vpack.c.b16 %v1685, %v1677
    %v2030 = vpack.c.b16 %v1686, %v1678
    %v2031 = vpack.c.b16 %v1687, %v1679
    %v2032 = vpack.c.b16 %v1688, %v1680
    %v2033 = vpack.c.b16 %v1689, %v1681
    %v2034 = vpack.c.b16 %v1690, %v1682
    %v2035 = vpack.c.b16 %v1691, %v1683
    %v2036 = vpack.c.b16 %v1692, %v1684
    %v2037 = vpack.c.b16 %v1701, %v1693
    %v2038 = vpack.c.b16 %v1702, %v1694
    %v2039 = vpack.c.b16 %v1703, %v1695
    %v2040 = vpack.c.b16 %v1704, %v1696
    %v2041 = vpack.c.b16 %v1705, %v1697
    %v2042 = vpack.c.b16 %v1706, %v1698
    %v2043 = vpack.c.b16 %v1707, %v1699
    %v2044 = vpack.c.b16 %v1708, %v1700
    %v2045 = vpack.c.b16 %v1717, %v1709
    %v2046 = vpack.c.b16 %v1718, %v1710
    %v2047 = vpack.c.b16 %v1719, %v1711
    %v2048 = vpack.c.b16 %v1720, %v1712
    %v2049 = vpack.c.b16 %v1721, %v1713
    %v2050 = vpack.c.b16 %v1722, %v1714
    %v2051 = vpack.c.b16 %v1723, %v1715
    %v2052 = vpack.c.b16 %v1724, %v1716
    %v2053 = vpack.c.b16 %v1733, %v1725
    %v2054 = vpack.c.b16 %v1734, %v1726
    %v2055 = vpack.c.b16 %v1735, %v1727
    %v2056 = vpack.c.b16 %v1736, %v1728
    %v2057 = vpack.c.b16 %v1737, %v1729
    %v2058 = vpack.c.b16 %v1738, %v1730
    %v2059 = vpack.c.b16 %v1739, %v1731
    %v2060 = vpack.c.b16 %v1740, %v1732
    %v2061 = vpack.c.b16 %v1749, %v1741
    %v2062 = vpack.c.b16 %v1750, %v1742
    %v2063 = vpack.c.b16 %v1751, %v1743
    %v2064 = vpack.c.b16 %v1752, %v1744
    %v2065 = vpack.c.b16 %v1753, %v1745
    %v2066 = vpack.c.b16 %v1754, %v1746
    %v2067 = vpack.c.b16 %v1755, %v1747
    %v2068 = vpack.c.b16 %v1756, %v1748
    %v2069 = vpack.c.b16 %v1765, %v1757
    %v2070 = vpack.c.b16 %v1766, %v1758
    %v2071 = vpack.c.b16 %v1767, %v1759
    %v2072 = vpack.c.b16 %v1768, %v1760
    %v2073 = vpack.c.b16 %v1769, %v1761
    %v2074 = vpack.c.b16 %v1770, %v1762
    %v2075 = vpack.c.b16 %v1771, %v1763
    %v2076 = vpack.c.b16 %v1772, %v1764
    %v2077 = vpack.c.b16 %v1781, %v1773
    %v2078 = vpack.c.b16 %v1782, %v1774
    %v2079 = vpack.c.b16 %v1783, %v1775
    %v2080 = vpack.c.b16 %v1784, %v1776
    %v2081 = vpack.c.b16 %v1785, %v1777
    %v2082 = vpack.c.b16 %v1786, %v1778
    %v2083 = vpack.c.b16 %v1787, %v1779
    %v2084 = vpack.c.b16 %v1788, %v1780
    %v2085 = vpack.c.b16 %v1797, %v1789
    %v2086 = vpack.c.b16 %v1798, %v1790
    %v2087 = vpack.c.b16 %v1799, %v1791
    %v2088 = vpack.c.b16 %v1800, %v1792
    %v2089 = vpack.c.b16 %v1801, %v1793
    %v2090 = vpack.c.b16 %v1802, %v1794
    %v2091 = vpack.c.b16 %v1803, %v1795
    %v2092 = vpack.c.b16 %v1804, %v1796
    %v2093 = vpack.c.b16 %v1813, %v1805
    %v2094 = vpack.c.b16 %v1814, %v1806
    %v2095 = vpack.c.b16 %v1815, %v1807
    %v2096 = vpack.c.b16 %v1816, %v1808
    %v2097 = vpack.c.b16 %v1817, %v1809
    %v2098 = vpack.c.b16 %v1818, %v1810
    %v2099 = vpack.c.b16 %v1819, %v1811
    %v2100 = vpack.c.b16 %v1820, %v1812
    %v2101 = vpack.c.b16 %v1829, %v1821
    %v2102 = vpack.c.b16 %v1830, %v1822
    %v2103 = vpack.c.b16 %v1831, %v1823
    %v2104 = vpack.c.b16 %v1832, %v1824
    %v2105 = vpack.c.b16 %v1833, %v1825
    %v2106 = vpack.c.b16 %v1834, %v1826
    %v2107 = vpack.c.b16 %v1835, %v1827
    %v2108 = vpack.c.b16 %v1836, %v1828
    %v2109 = vpack.c.b16 %v1845, %v1837
    %v2110 = vpack.c.b16 %v1846, %v1838
    %v2111 = vpack.c.b16 %v1847, %v1839
    %v2112 = vpack.c.b16 %v1848, %v1840
    %v2113 = vpack.c.b16 %v1849, %v1841
    %v2114 = vpack.c.b16 %v1850, %v1842
    %v2115 = vpack.c.b16 %v1851, %v1843
    %v2116 = vpack.c.b16 %v1852, %v1844
    %v2117 = vpack.c.b16 %v1861, %v1853
    %v2118 = vpack.c.b16 %v1862, %v1854
    %v2119 = vpack.c.b16 %v1863, %v1855
    %v2120 = vpack.c.b16 %v1864, %v1856
    %v2121 = vpack.c.b16 %v1865, %v1857
    %v2122 = vpack.c.b16 %v1866, %v1858
    %v2123 = vpack.c.b16 %v1867, %v1859
    %v2124 = vpack.c.b16 %v1868, %v1860
    %2381 = vmatpush.bf16.msra.mxu0 %v1925
    %2382 = vmatpush.bf16.msra.mxu0 %v1917
    %2383 = vmatpush.bf16.msra.mxu0 %v1909
    %2384 = vmatpush.bf16.msra.mxu0 %v1901
    %2385 = vmatpush.bf16.msra.mxu0 %v1893
    %2386 = vmatpush.bf16.msra.mxu0 %v1885
    %2387 = vmatpush.bf16.msra.mxu0 %v1877
    %2388 = vmatpush.bf16.msra.mxu0 %v1869
    %2389 = vmatmul.bf16.gmra.mxu0 %v823
    %v2390 = vpop.f32.mrf.mxu0
    %v2391 = vadd.f32 %v1085, %v2390
    %v2392 = vpop.f32.mrf.mxu0
    %v2393 = vadd.f32 %v1085, %v2392
    %2394 = vdwg.mxu0
    %2395 = vmatpush.bf16.msra.mxu0 %v1989
    %2396 = vmatpush.bf16.msra.mxu0 %v1981
    %2397 = vmatpush.bf16.msra.mxu0 %v1973
    %2398 = vmatpush.bf16.msra.mxu0 %v1965
    %2399 = vmatpush.bf16.msra.mxu0 %v1957
    %2400 = vmatpush.bf16.msra.mxu0 %v1949
    %2401 = vmatpush.bf16.msra.mxu0 %v1941
    %2402 = vmatpush.bf16.msra.mxu0 %v1933
    %2403 = vmatmul.bf16.gmra.mxu0 %v824
    %v2404 = vpop.f32.mrf.mxu0
    %v2405 = vadd.f32 %v2391, %v2404
    %v2406 = vpop.f32.mrf.mxu0
    %v2407 = vadd.f32 %v2393, %v2406
    %2408 = vdwg.mxu0
    %2409 = vmatpush.bf16.msra.mxu0 %v2053
    %2410 = vmatpush.bf16.msra.mxu0 %v2045
    %2411 = vmatpush.bf16.msra.mxu0 %v2037
    %2412 = vmatpush.bf16.msra.mxu0 %v2029
    %2413 = vmatpush.bf16.msra.mxu0 %v2021
    %2414 = vmatpush.bf16.msra.mxu0 %v2013
    %2415 = vmatpush.bf16.msra.mxu0 %v2005
    %2416 = vmatpush.bf16.msra.mxu0 %v1997
    %2417 = vmatmul.bf16.gmra.mxu0 %v825
    %v2418 = vpop.f32.mrf.mxu0
    %v2419 = vadd.f32 %v2405, %v2418
    %v2420 = vpop.f32.mrf.mxu0
    %v2421 = vadd.f32 %v2407, %v2420
    %2422 = vdwg.mxu0
    %2423 = vmatpush.bf16.msra.mxu0 %v2117
    %2424 = vmatpush.bf16.msra.mxu0 %v2109
    %2425 = vmatpush.bf16.msra.mxu0 %v2101
    %2426 = vmatpush.bf16.msra.mxu0 %v2093
    %2427 = vmatpush.bf16.msra.mxu0 %v2085
    %2428 = vmatpush.bf16.msra.mxu0 %v2077
    %2429 = vmatpush.bf16.msra.mxu0 %v2069
    %2430 = vmatpush.bf16.msra.mxu0 %v2061
    %2431 = vmatmul.bf16.gmra.mxu0 %v826
    %v2432 = vpop.f32.mrf.mxu0
    %v2433 = vadd.f32 %v2419, %v2432
    %v2434 = vpop.f32.mrf.mxu0
    %v2435 = vadd.f32 %v2421, %v2434
    %2436 = vdwg.mxu0
    %2437 = vmatpush.bf16.msra.mxu0 %v1926
    %2438 = vmatpush.bf16.msra.mxu0 %v1918
    %2439 = vmatpush.bf16.msra.mxu0 %v1910
    %2440 = vmatpush.bf16.msra.mxu0 %v1902
    %2441 = vmatpush.bf16.msra.mxu0 %v1894
    %2442 = vmatpush.bf16.msra.mxu0 %v1886
    %2443 = vmatpush.bf16.msra.mxu0 %v1878
    %2444 = vmatpush.bf16.msra.mxu0 %v1870
    %2445 = vmatmul.bf16.gmra.mxu0 %v823
    %v2446 = vpop.f32.mrf.mxu0
    %v2447 = vadd.f32 %v1086, %v2446
    %v2448 = vpop.f32.mrf.mxu0
    %v2449 = vadd.f32 %v1086, %v2448
    %2450 = vdwg.mxu0
    %2451 = vmatpush.bf16.msra.mxu0 %v1990
    %2452 = vmatpush.bf16.msra.mxu0 %v1982
    %2453 = vmatpush.bf16.msra.mxu0 %v1974
    %2454 = vmatpush.bf16.msra.mxu0 %v1966
    %2455 = vmatpush.bf16.msra.mxu0 %v1958
    %2456 = vmatpush.bf16.msra.mxu0 %v1950
    %2457 = vmatpush.bf16.msra.mxu0 %v1942
    %2458 = vmatpush.bf16.msra.mxu0 %v1934
    %2459 = vmatmul.bf16.gmra.mxu0 %v824
    %v2460 = vpop.f32.mrf.mxu0
    %v2461 = vadd.f32 %v2447, %v2460
    %v2462 = vpop.f32.mrf.mxu0
    %v2463 = vadd.f32 %v2449, %v2462
    %2464 = vdwg.mxu0
    %2465 = vmatpush.bf16.msra.mxu0 %v2054
    %2466 = vmatpush.bf16.msra.mxu0 %v2046
    %2467 = vmatpush.bf16.msra.mxu0 %v2038
    %2468 = vmatpush.bf16.msra.mxu0 %v2030
    %2469 = vmatpush.bf16.msra.mxu0 %v2022
    %2470 = vmatpush.bf16.msra.mxu0 %v2014
    %2471 = vmatpush.bf16.msra.mxu0 %v2006
    %2472 = vmatpush.bf16.msra.mxu0 %v1998
    %2473 = vmatmul.bf16.gmra.mxu0 %v825
    %v2474 = vpop.f32.mrf.mxu0
    %v2475 = vadd.f32 %v2461, %v2474
    %v2476 = vpop.f32.mrf.mxu0
    %v2477 = vadd.f32 %v2463, %v2476
    %2478 = vdwg.mxu0
    %2479 = vmatpush.bf16.msra.mxu0 %v2118
    %2480 = vmatpush.bf16.msra.mxu0 %v2110
    %2481 = vmatpush.bf16.msra.mxu0 %v2102
    %2482 = vmatpush.bf16.msra.mxu0 %v2094
    %2483 = vmatpush.bf16.msra.mxu0 %v2086
    %2484 = vmatpush.bf16.msra.mxu0 %v2078
    %2485 = vmatpush.bf16.msra.mxu0 %v2070
    %2486 = vmatpush.bf16.msra.mxu0 %v2062
    %2487 = vmatmul.bf16.gmra.mxu0 %v826
    %v2488 = vpop.f32.mrf.mxu0
    %v2489 = vadd.f32 %v2475, %v2488
    %v2490 = vpop.f32.mrf.mxu0
    %v2491 = vadd.f32 %v2477, %v2490
    %2492 = vdwg.mxu0
    %2493 = vmatpush.bf16.msra.mxu0 %v1927
    %2494 = vmatpush.bf16.msra.mxu0 %v1919
    %2495 = vmatpush.bf16.msra.mxu0 %v1911
    %2496 = vmatpush.bf16.msra.mxu0 %v1903
    %2497 = vmatpush.bf16.msra.mxu0 %v1895
    %2498 = vmatpush.bf16.msra.mxu0 %v1887
    %2499 = vmatpush.bf16.msra.mxu0 %v1879
    %2500 = vmatpush.bf16.msra.mxu0 %v1871
    %2501 = vmatmul.bf16.gmra.mxu0 %v823
    %v2502 = vpop.f32.mrf.mxu0
    %v2503 = vadd.f32 %v1087, %v2502
    %v2504 = vpop.f32.mrf.mxu0
    %v2505 = vadd.f32 %v1087, %v2504
    %2506 = vdwg.mxu0
    %2507 = vmatpush.bf16.msra.mxu0 %v1991
    %2508 = vmatpush.bf16.msra.mxu0 %v1983
    %2509 = vmatpush.bf16.msra.mxu0 %v1975
    %2510 = vmatpush.bf16.msra.mxu0 %v1967
    %2511 = vmatpush.bf16.msra.mxu0 %v1959
    %2512 = vmatpush.bf16.msra.mxu0 %v1951
    %2513 = vmatpush.bf16.msra.mxu0 %v1943
    %2514 = vmatpush.bf16.msra.mxu0 %v1935
    %2515 = vmatmul.bf16.gmra.mxu0 %v824
    %v2516 = vpop.f32.mrf.mxu0
    %v2517 = vadd.f32 %v2503, %v2516
    %v2518 = vpop.f32.mrf.mxu0
    %v2519 = vadd.f32 %v2505, %v2518
    %2520 = vdwg.mxu0
    %2521 = vmatpush.bf16.msra.mxu0 %v2055
    %2522 = vmatpush.bf16.msra.mxu0 %v2047
    %2523 = vmatpush.bf16.msra.mxu0 %v2039
    %2524 = vmatpush.bf16.msra.mxu0 %v2031
    %2525 = vmatpush.bf16.msra.mxu0 %v2023
    %2526 = vmatpush.bf16.msra.mxu0 %v2015
    %2527 = vmatpush.bf16.msra.mxu0 %v2007
    %2528 = vmatpush.bf16.msra.mxu0 %v1999
    %2529 = vmatmul.bf16.gmra.mxu0 %v825
    %v2530 = vpop.f32.mrf.mxu0
    %v2531 = vadd.f32 %v2517, %v2530
    %v2532 = vpop.f32.mrf.mxu0
    %v2533 = vadd.f32 %v2519, %v2532
    %2534 = vdwg.mxu0
    %2535 = vmatpush.bf16.msra.mxu0 %v2119
    %2536 = vmatpush.bf16.msra.mxu0 %v2111
    %2537 = vmatpush.bf16.msra.mxu0 %v2103
    %2538 = vmatpush.bf16.msra.mxu0 %v2095
    %2539 = vmatpush.bf16.msra.mxu0 %v2087
    %2540 = vmatpush.bf16.msra.mxu0 %v2079
    %2541 = vmatpush.bf16.msra.mxu0 %v2071
    %2542 = vmatpush.bf16.msra.mxu0 %v2063
    %2543 = vmatmul.bf16.gmra.mxu0 %v826
    %v2544 = vpop.f32.mrf.mxu0
    %v2545 = vadd.f32 %v2531, %v2544
    %v2546 = vpop.f32.mrf.mxu0
    %v2547 = vadd.f32 %v2533, %v2546
    %2548 = vdwg.mxu0
    %2549 = vmatpush.bf16.msra.mxu0 %v1928
    %2550 = vmatpush.bf16.msra.mxu0 %v1920
    %2551 = vmatpush.bf16.msra.mxu0 %v1912
    %2552 = vmatpush.bf16.msra.mxu0 %v1904
    %2553 = vmatpush.bf16.msra.mxu0 %v1896
    %2554 = vmatpush.bf16.msra.mxu0 %v1888
    %2555 = vmatpush.bf16.msra.mxu0 %v1880
    %2556 = vmatpush.bf16.msra.mxu0 %v1872
    %2557 = vmatmul.bf16.gmra.mxu0 %v823
    %v2558 = vpop.f32.mrf.mxu0
    %v2559 = vadd.f32 %v1088, %v2558
    %v2560 = vpop.f32.mrf.mxu0
    %v2561 = vadd.f32 %v1088, %v2560
    %2562 = vdwg.mxu0
    %2563 = vmatpush.bf16.msra.mxu0 %v1992
    %2564 = vmatpush.bf16.msra.mxu0 %v1984
    %2565 = vmatpush.bf16.msra.mxu0 %v1976
    %2566 = vmatpush.bf16.msra.mxu0 %v1968
    %2567 = vmatpush.bf16.msra.mxu0 %v1960
    %2568 = vmatpush.bf16.msra.mxu0 %v1952
    %2569 = vmatpush.bf16.msra.mxu0 %v1944
    %2570 = vmatpush.bf16.msra.mxu0 %v1936
    %2571 = vmatmul.bf16.gmra.mxu0 %v824
    %v2572 = vpop.f32.mrf.mxu0
    %v2573 = vadd.f32 %v2559, %v2572
    %v2574 = vpop.f32.mrf.mxu0
    %v2575 = vadd.f32 %v2561, %v2574
    %2576 = vdwg.mxu0
    %2577 = vmatpush.bf16.msra.mxu0 %v2056
    %2578 = vmatpush.bf16.msra.mxu0 %v2048
    %2579 = vmatpush.bf16.msra.mxu0 %v2040
    %2580 = vmatpush.bf16.msra.mxu0 %v2032
    %2581 = vmatpush.bf16.msra.mxu0 %v2024
    %2582 = vmatpush.bf16.msra.mxu0 %v2016
    %2583 = vmatpush.bf16.msra.mxu0 %v2008
    %2584 = vmatpush.bf16.msra.mxu0 %v2000
    %2585 = vmatmul.bf16.gmra.mxu0 %v825
    %v2586 = vpop.f32.mrf.mxu0
    %v2587 = vadd.f32 %v2573, %v2586
    %v2588 = vpop.f32.mrf.mxu0
    %v2589 = vadd.f32 %v2575, %v2588
    %2590 = vdwg.mxu0
    %2591 = vmatpush.bf16.msra.mxu0 %v2120
    %2592 = vmatpush.bf16.msra.mxu0 %v2112
    %2593 = vmatpush.bf16.msra.mxu0 %v2104
    %2594 = vmatpush.bf16.msra.mxu0 %v2096
    %2595 = vmatpush.bf16.msra.mxu0 %v2088
    %2596 = vmatpush.bf16.msra.mxu0 %v2080
    %2597 = vmatpush.bf16.msra.mxu0 %v2072
    %2598 = vmatpush.bf16.msra.mxu0 %v2064
    %2599 = vmatmul.bf16.gmra.mxu0 %v826
    %v2600 = vpop.f32.mrf.mxu0
    %v2601 = vadd.f32 %v2587, %v2600
    %v2602 = vpop.f32.mrf.mxu0
    %v2603 = vadd.f32 %v2589, %v2602
    %2604 = vdwg.mxu0
    %2605 = vmatpush.bf16.msra.mxu0 %v1929
    %2606 = vmatpush.bf16.msra.mxu0 %v1921
    %2607 = vmatpush.bf16.msra.mxu0 %v1913
    %2608 = vmatpush.bf16.msra.mxu0 %v1905
    %2609 = vmatpush.bf16.msra.mxu0 %v1897
    %2610 = vmatpush.bf16.msra.mxu0 %v1889
    %2611 = vmatpush.bf16.msra.mxu0 %v1881
    %2612 = vmatpush.bf16.msra.mxu0 %v1873
    %2613 = vmatmul.bf16.gmra.mxu0 %v823
    %v2614 = vpop.f32.mrf.mxu0
    %v2615 = vadd.f32 %v1089, %v2614
    %v2616 = vpop.f32.mrf.mxu0
    %v2617 = vadd.f32 %v1089, %v2616
    %2618 = vdwg.mxu0
    %2619 = vmatpush.bf16.msra.mxu0 %v1993
    %2620 = vmatpush.bf16.msra.mxu0 %v1985
    %2621 = vmatpush.bf16.msra.mxu0 %v1977
    %2622 = vmatpush.bf16.msra.mxu0 %v1969
    %2623 = vmatpush.bf16.msra.mxu0 %v1961
    %2624 = vmatpush.bf16.msra.mxu0 %v1953
    %2625 = vmatpush.bf16.msra.mxu0 %v1945
    %2626 = vmatpush.bf16.msra.mxu0 %v1937
    %2627 = vmatmul.bf16.gmra.mxu0 %v824
    %v2628 = vpop.f32.mrf.mxu0
    %v2629 = vadd.f32 %v2615, %v2628
    %v2630 = vpop.f32.mrf.mxu0
    %v2631 = vadd.f32 %v2617, %v2630
    %2632 = vdwg.mxu0
    %2633 = vmatpush.bf16.msra.mxu0 %v2057
    %2634 = vmatpush.bf16.msra.mxu0 %v2049
    %2635 = vmatpush.bf16.msra.mxu0 %v2041
    %2636 = vmatpush.bf16.msra.mxu0 %v2033
    %2637 = vmatpush.bf16.msra.mxu0 %v2025
    %2638 = vmatpush.bf16.msra.mxu0 %v2017
    %2639 = vmatpush.bf16.msra.mxu0 %v2009
    %2640 = vmatpush.bf16.msra.mxu0 %v2001
    %2641 = vmatmul.bf16.gmra.mxu0 %v825
    %v2642 = vpop.f32.mrf.mxu0
    %v2643 = vadd.f32 %v2629, %v2642
    %v2644 = vpop.f32.mrf.mxu0
    %v2645 = vadd.f32 %v2631, %v2644
    %2646 = vdwg.mxu0
    %2647 = vmatpush.bf16.msra.mxu0 %v2121
    %2648 = vmatpush.bf16.msra.mxu0 %v2113
    %2649 = vmatpush.bf16.msra.mxu0 %v2105
    %2650 = vmatpush.bf16.msra.mxu0 %v2097
    %2651 = vmatpush.bf16.msra.mxu0 %v2089
    %2652 = vmatpush.bf16.msra.mxu0 %v2081
    %2653 = vmatpush.bf16.msra.mxu0 %v2073
    %2654 = vmatpush.bf16.msra.mxu0 %v2065
    %2655 = vmatmul.bf16.gmra.mxu0 %v826
    %v2656 = vpop.f32.mrf.mxu0
    %v2657 = vadd.f32 %v2643, %v2656
    %v2658 = vpop.f32.mrf.mxu0
    %v2659 = vadd.f32 %v2645, %v2658
    %2660 = vdwg.mxu0
    %2661 = vmatpush.bf16.msra.mxu0 %v1930
    %2662 = vmatpush.bf16.msra.mxu0 %v1922
    %2663 = vmatpush.bf16.msra.mxu0 %v1914
    %2664 = vmatpush.bf16.msra.mxu0 %v1906
    %2665 = vmatpush.bf16.msra.mxu0 %v1898
    %2666 = vmatpush.bf16.msra.mxu0 %v1890
    %2667 = vmatpush.bf16.msra.mxu0 %v1882
    %2668 = vmatpush.bf16.msra.mxu0 %v1874
    %2669 = vmatmul.bf16.gmra.mxu0 %v823
    %v2670 = vpop.f32.mrf.mxu0
    %v2671 = vadd.f32 %v1090, %v2670
    %v2672 = vpop.f32.mrf.mxu0
    %v2673 = vadd.f32 %v1090, %v2672
    %2674 = vdwg.mxu0
    %2675 = vmatpush.bf16.msra.mxu0 %v1994
    %2676 = vmatpush.bf16.msra.mxu0 %v1986
    %2677 = vmatpush.bf16.msra.mxu0 %v1978
    %2678 = vmatpush.bf16.msra.mxu0 %v1970
    %2679 = vmatpush.bf16.msra.mxu0 %v1962
    %2680 = vmatpush.bf16.msra.mxu0 %v1954
    %2681 = vmatpush.bf16.msra.mxu0 %v1946
    %2682 = vmatpush.bf16.msra.mxu0 %v1938
    %2683 = vmatmul.bf16.gmra.mxu0 %v824
    %v2684 = vpop.f32.mrf.mxu0
    %v2685 = vadd.f32 %v2671, %v2684
    %v2686 = vpop.f32.mrf.mxu0
    %v2687 = vadd.f32 %v2673, %v2686
    %2688 = vdwg.mxu0
    %2689 = vmatpush.bf16.msra.mxu0 %v2058
    %2690 = vmatpush.bf16.msra.mxu0 %v2050
    %2691 = vmatpush.bf16.msra.mxu0 %v2042
    %2692 = vmatpush.bf16.msra.mxu0 %v2034
    %2693 = vmatpush.bf16.msra.mxu0 %v2026
    %2694 = vmatpush.bf16.msra.mxu0 %v2018
    %2695 = vmatpush.bf16.msra.mxu0 %v2010
    %2696 = vmatpush.bf16.msra.mxu0 %v2002
    %2697 = vmatmul.bf16.gmra.mxu0 %v825
    %v2698 = vpop.f32.mrf.mxu0
    %v2699 = vadd.f32 %v2685, %v2698
    %v2700 = vpop.f32.mrf.mxu0
    %v2701 = vadd.f32 %v2687, %v2700
    %2702 = vdwg.mxu0
    %2703 = vmatpush.bf16.msra.mxu0 %v2122
    %2704 = vmatpush.bf16.msra.mxu0 %v2114
    %2705 = vmatpush.bf16.msra.mxu0 %v2106
    %2706 = vmatpush.bf16.msra.mxu0 %v2098
    %2707 = vmatpush.bf16.msra.mxu0 %v2090
    %2708 = vmatpush.bf16.msra.mxu0 %v2082
    %2709 = vmatpush.bf16.msra.mxu0 %v2074
    %2710 = vmatpush.bf16.msra.mxu0 %v2066
    %2711 = vmatmul.bf16.gmra.mxu0 %v826
    %v2712 = vpop.f32.mrf.mxu0
    %v2713 = vadd.f32 %v2699, %v2712
    %v2714 = vpop.f32.mrf.mxu0
    %v2715 = vadd.f32 %v2701, %v2714
    %2716 = vdwg.mxu0
    %2717 = vmatpush.bf16.msra.mxu0 %v1931
    %2718 = vmatpush.bf16.msra.mxu0 %v1923
    %2719 = vmatpush.bf16.msra.mxu0 %v1915
    %2720 = vmatpush.bf16.msra.mxu0 %v1907
    %2721 = vmatpush.bf16.msra.mxu0 %v1899
    %2722 = vmatpush.bf16.msra.mxu0 %v1891
    %2723 = vmatpush.bf16.msra.mxu0 %v1883
    %2724 = vmatpush.bf16.msra.mxu0 %v1875
    %2725 = vmatmul.bf16.gmra.mxu0 %v823
    %v2726 = vpop.f32.mrf.mxu0
    %v2727 = vadd.f32 %v1091, %v2726
    %v2728 = vpop.f32.mrf.mxu0
    %v2729 = vadd.f32 %v1091, %v2728
    %2730 = vdwg.mxu0
    %2731 = vmatpush.bf16.msra.mxu0 %v1995
    %2732 = vmatpush.bf16.msra.mxu0 %v1987
    %2733 = vmatpush.bf16.msra.mxu0 %v1979
    %2734 = vmatpush.bf16.msra.mxu0 %v1971
    %2735 = vmatpush.bf16.msra.mxu0 %v1963
    %2736 = vmatpush.bf16.msra.mxu0 %v1955
    %2737 = vmatpush.bf16.msra.mxu0 %v1947
    %2738 = vmatpush.bf16.msra.mxu0 %v1939
    %2739 = vmatmul.bf16.gmra.mxu0 %v824
    %v2740 = vpop.f32.mrf.mxu0
    %v2741 = vadd.f32 %v2727, %v2740
    %v2742 = vpop.f32.mrf.mxu0
    %v2743 = vadd.f32 %v2729, %v2742
    %2744 = vdwg.mxu0
    %2745 = vmatpush.bf16.msra.mxu0 %v2059
    %2746 = vmatpush.bf16.msra.mxu0 %v2051
    %2747 = vmatpush.bf16.msra.mxu0 %v2043
    %2748 = vmatpush.bf16.msra.mxu0 %v2035
    %2749 = vmatpush.bf16.msra.mxu0 %v2027
    %2750 = vmatpush.bf16.msra.mxu0 %v2019
    %2751 = vmatpush.bf16.msra.mxu0 %v2011
    %2752 = vmatpush.bf16.msra.mxu0 %v2003
    %2753 = vmatmul.bf16.gmra.mxu0 %v825
    %v2754 = vpop.f32.mrf.mxu0
    %v2755 = vadd.f32 %v2741, %v2754
    %v2756 = vpop.f32.mrf.mxu0
    %v2757 = vadd.f32 %v2743, %v2756
    %2758 = vdwg.mxu0
    %2759 = vmatpush.bf16.msra.mxu0 %v2123
    %2760 = vmatpush.bf16.msra.mxu0 %v2115
    %2761 = vmatpush.bf16.msra.mxu0 %v2107
    %2762 = vmatpush.bf16.msra.mxu0 %v2099
    %2763 = vmatpush.bf16.msra.mxu0 %v2091
    %2764 = vmatpush.bf16.msra.mxu0 %v2083
    %2765 = vmatpush.bf16.msra.mxu0 %v2075
    %2766 = vmatpush.bf16.msra.mxu0 %v2067
    %2767 = vmatmul.bf16.gmra.mxu0 %v826
    %v2768 = vpop.f32.mrf.mxu0
    %v2769 = vadd.f32 %v2755, %v2768
    %v2770 = vpop.f32.mrf.mxu0
    %v2771 = vadd.f32 %v2757, %v2770
    %2772 = vdwg.mxu0
    %2773 = vmatpush.bf16.msra.mxu0 %v1932
    %2774 = vmatpush.bf16.msra.mxu0 %v1924
    %2775 = vmatpush.bf16.msra.mxu0 %v1916
    %2776 = vmatpush.bf16.msra.mxu0 %v1908
    %2777 = vmatpush.bf16.msra.mxu0 %v1900
    %2778 = vmatpush.bf16.msra.mxu0 %v1892
    %2779 = vmatpush.bf16.msra.mxu0 %v1884
    %2780 = vmatpush.bf16.msra.mxu0 %v1876
    %2781 = vmatmul.bf16.gmra.mxu0 %v823
    %v2782 = vpop.f32.mrf.mxu0
    %v2783 = vadd.f32 %v1092, %v2782
    %v2784 = vpop.f32.mrf.mxu0
    %v2785 = vadd.f32 %v1092, %v2784
    %2786 = vdwg.mxu0
    %2787 = vmatpush.bf16.msra.mxu0 %v1996
    %2788 = vmatpush.bf16.msra.mxu0 %v1988
    %2789 = vmatpush.bf16.msra.mxu0 %v1980
    %2790 = vmatpush.bf16.msra.mxu0 %v1972
    %2791 = vmatpush.bf16.msra.mxu0 %v1964
    %2792 = vmatpush.bf16.msra.mxu0 %v1956
    %2793 = vmatpush.bf16.msra.mxu0 %v1948
    %2794 = vmatpush.bf16.msra.mxu0 %v1940
    %2795 = vmatmul.bf16.gmra.mxu0 %v824
    %v2796 = vpop.f32.mrf.mxu0
    %v2797 = vadd.f32 %v2783, %v2796
    %v2798 = vpop.f32.mrf.mxu0
    %v2799 = vadd.f32 %v2785, %v2798
    %2800 = vdwg.mxu0
    %2801 = vmatpush.bf16.msra.mxu0 %v2060
    %2802 = vmatpush.bf16.msra.mxu0 %v2052
    %2803 = vmatpush.bf16.msra.mxu0 %v2044
    %2804 = vmatpush.bf16.msra.mxu0 %v2036
    %2805 = vmatpush.bf16.msra.mxu0 %v2028
    %2806 = vmatpush.bf16.msra.mxu0 %v2020
    %2807 = vmatpush.bf16.msra.mxu0 %v2012
    %2808 = vmatpush.bf16.msra.mxu0 %v2004
    %2809 = vmatmul.bf16.gmra.mxu0 %v825
    %v2810 = vpop.f32.mrf.mxu0
    %v2811 = vadd.f32 %v2797, %v2810
    %v2812 = vpop.f32.mrf.mxu0
    %v2813 = vadd.f32 %v2799, %v2812
    %2814 = vdwg.mxu0
    %2815 = vmatpush.bf16.msra.mxu0 %v2124
    %2816 = vmatpush.bf16.msra.mxu0 %v2116
    %2817 = vmatpush.bf16.msra.mxu0 %v2108
    %2818 = vmatpush.bf16.msra.mxu0 %v2100
    %2819 = vmatpush.bf16.msra.mxu0 %v2092
    %2820 = vmatpush.bf16.msra.mxu0 %v2084
    %2821 = vmatpush.bf16.msra.mxu0 %v2076
    %2822 = vmatpush.bf16.msra.mxu0 %v2068
    %2823 = vmatmul.bf16.gmra.mxu0 %v826
    %v2824 = vpop.f32.mrf.mxu0
    %v2825 = vadd.f32 %v2811, %v2824
    %v2826 = vpop.f32.mrf.mxu0
    %v2827 = vadd.f32 %v2813, %v2826
    %2828 = vdwg.mxu0
    %v2829 = vmax.f32 %v2433, 0.0
    %v2830 = vmax.f32 %v2489, 0.0
    %v2831 = vmax.f32 %v2545, 0.0
    %v2832 = vmax.f32 %v2601, 0.0
    %v2833 = vmax.f32 %v2657, 0.0
    %v2834 = vmax.f32 %v2713, 0.0
    %v2835 = vmax.f32 %v2769, 0.0
    %v2836 = vmax.f32 %v2825, 0.0
    %v2837 = vmax.f32 %v2435, 0.0
    %v2838 = vmax.f32 %v2491, 0.0
    %v2839 = vmax.f32 %v2547, 0.0
    %v2840 = vmax.f32 %v2603, 0.0
    %v2841 = vmax.f32 %v2659, 0.0
    %v2842 = vmax.f32 %v2715, 0.0
    %v2843 = vmax.f32 %v2771, 0.0
    %v2844 = vmax.f32 %v2827, 0.0
    %v2845 = vpack.c.bf16 %v2837, %v2829
    %v2846 = vpack.c.bf16 %v2838, %v2830
    %v2847 = vpack.c.bf16 %v2839, %v2831
    %v2848 = vpack.c.bf16 %v2840, %v2832
    %v2849 = vpack.c.bf16 %v2841, %v2833
    %v2850 = vpack.c.bf16 %v2842, %v2834
    %v2851 = vpack.c.bf16 %v2843, %v2835
    %v2852 = vpack.c.bf16 %v2844, %v2836
    %v2853 = vld [vmem:[#allocation14] sm:$0xff]
    %v2854 = vld [vmem:[#allocation14 + $0x8] sm:$0xff]
    %v2855 = vld [vmem:[#allocation14 + $0x10] sm:$0xff]
    %v2856 = vld [vmem:[#allocation14 + $0x18] sm:$0xf]
    %v2857 = vld [vmem:[#allocation14 + $0x1c] sm:$0xff]
    %v2858 = vld [vmem:[#allocation14 + $0x24] sm:$0xff]
    %v2859 = vld [vmem:[#allocation14 + $0x2c] sm:$0xff]
    %v2860 = vld [vmem:[#allocation14 + $0x34] sm:$0xf]
    %v2861 = vld [vmem:[#allocation14 + $0x38] sm:$0xff]
    %v2862 = vld [vmem:[#allocation14 + $0x40] sm:$0xff]
    %v2863 = vld [vmem:[#allocation14 + $0x48] sm:$0xff]
    %v2864 = vld [vmem:[#allocation14 + $0x50] sm:$0xf]
    %v2865 = vld [vmem:[#allocation14 + $0x54] sm:$0xff]
    %v2866 = vld [vmem:[#allocation14 + $0x5c] sm:$0xff]
    %v2867 = vld [vmem:[#allocation14 + $0x64] sm:$0xff]
    %v2868 = vld [vmem:[#allocation14 + $0x6c] sm:$0xf]
    %v2869 = vld [vmem:[#allocation14 + $0x70] sm:$0xff]
    %v2870 = vld [vmem:[#allocation14 + $0x78] sm:$0xff]
    %v2871 = vld [vmem:[#allocation14 + $0x80] sm:$0xff]
    %v2872 = vld [vmem:[#allocation14 + $0x88] sm:$0xf]
    %v2873 = vld [vmem:[#allocation14 + $0x8c] sm:$0xff]
    %v2874 = vld [vmem:[#allocation14 + $0x94] sm:$0xff]
    %v2875 = vld [vmem:[#allocation14 + $0x9c] sm:$0xff]
    %v2876 = vld [vmem:[#allocation14 + $0xa4] sm:$0xf]
    %v2877 = vld [vmem:[#allocation14 + $0xa8] sm:$0xff]
    %v2878 = vld [vmem:[#allocation14 + $0xb0] sm:$0xff]
    %v2879 = vld [vmem:[#allocation14 + $0xb8] sm:$0xff]
    %v2880 = vld [vmem:[#allocation14 + $0xc0] sm:$0xf]
    %v2881 = vld [vmem:[#allocation14 + $0xc4] sm:$0xff]
    %v2882 = vld [vmem:[#allocation14 + $0xcc] sm:$0xff]
    %v2883 = vld [vmem:[#allocation14 + $0xd4] sm:$0xff]
    %v2884 = vld [vmem:[#allocation14 + $0xdc] sm:$0xf]
    %v2885 = vld [vmem:[#allocation14 + $0xe0] sm:$0xff]
    %v2886 = vld [vmem:[#allocation14 + $0xe8] sm:$0xff]
    %v2887 = vld [vmem:[#allocation14 + $0xf0] sm:$0xff]
    %v2888 = vld [vmem:[#allocation14 + $0xf8] sm:$0xf]
    %v2889 = vld [vmem:[#allocation14 + $0xfc] sm:$0xff]
    %v2890 = vld [vmem:[#allocation14 + $0x104] sm:$0xff]
    %v2891 = vld [vmem:[#allocation14 + $0x10c] sm:$0xff]
    %v2892 = vld [vmem:[#allocation14 + $0x114] sm:$0xf]
    %v2893 = vld [vmem:[#allocation14 + $0x118] sm:$0xff]
    %v2894 = vld [vmem:[#allocation14 + $0x120] sm:$0xff]
    %v2895 = vld [vmem:[#allocation14 + $0x128] sm:$0xff]
    %v2896 = vld [vmem:[#allocation14 + $0x130] sm:$0xf]
    %v2897 = vld [vmem:[#allocation14 + $0x134] sm:$0xff]
    %v2898 = vld [vmem:[#allocation14 + $0x13c] sm:$0xff]
    %v2899 = vld [vmem:[#allocation14 + $0x144] sm:$0xff]
    %v2900 = vld [vmem:[#allocation14 + $0x14c] sm:$0xf]
    %v2901 = vld [vmem:[#allocation14 + $0x150] sm:$0xff]
    %v2902 = vld [vmem:[#allocation14 + $0x158] sm:$0xff]
    %v2903 = vld [vmem:[#allocation14 + $0x160] sm:$0xff]
    %v2904 = vld [vmem:[#allocation14 + $0x168] sm:$0xf]
    %v2905 = vld [vmem:[#allocation14 + $0x16c] sm:$0xff]
    %v2906 = vld [vmem:[#allocation14 + $0x174] sm:$0xff]
    %v2907 = vld [vmem:[#allocation14 + $0x17c] sm:$0xff]
    %v2908 = vld [vmem:[#allocation14 + $0x184] sm:$0xf]
    %v2909 = vld [vmem:[#allocation14 + $0x188] sm:$0xff]
    %v2910 = vld [vmem:[#allocation14 + $0x190] sm:$0xff]
    %v2911 = vld [vmem:[#allocation14 + $0x198] sm:$0xff]
    %v2912 = vld [vmem:[#allocation14 + $0x1a0] sm:$0xf]
    %v2913 = vld [vmem:[#allocation14 + $0x1a4] sm:$0xff]
    %v2914 = vld [vmem:[#allocation14 + $0x1ac] sm:$0xff]
    %v2915 = vld [vmem:[#allocation14 + $0x1b4] sm:$0xff]
    %v2916 = vld [vmem:[#allocation14 + $0x1bc] sm:$0xf]
    %v2917 = vld [vmem:[#allocation14 + $0x1c0] sm:$0xff]
    %v2918 = vld [vmem:[#allocation14 + $0x1c8] sm:$0xff]
    %v2919 = vld [vmem:[#allocation14 + $0x1d0] sm:$0xff]
    %v2920 = vld [vmem:[#allocation14 + $0x1d8] sm:$0xf]
    %v2921 = vld [vmem:[#allocation14 + $0x1dc] sm:$0xff]
    %v2922 = vld [vmem:[#allocation14 + $0x1e4] sm:$0xff]
    %v2923 = vld [vmem:[#allocation14 + $0x1ec] sm:$0xff]
    %v2924 = vld [vmem:[#allocation14 + $0x1f4] sm:$0xf]
    %v2925 = vld [vmem:[#allocation14 + $0x1f8] sm:$0xff]
    %v2926 = vld [vmem:[#allocation14 + $0x200] sm:$0xff]
    %v2927 = vld [vmem:[#allocation14 + $0x208] sm:$0xff]
    %v2928 = vld [vmem:[#allocation14 + $0x210] sm:$0xf]
    %v2929 = vld [vmem:[#allocation14 + $0x214] sm:$0xff]
    %v2930 = vld [vmem:[#allocation14 + $0x21c] sm:$0xff]
    %v2931 = vld [vmem:[#allocation14 + $0x224] sm:$0xff]
    %v2932 = vld [vmem:[#allocation14 + $0x22c] sm:$0xf]
    %v2933 = vld [vmem:[#allocation14 + $0x230] sm:$0xff]
    %v2934 = vld [vmem:[#allocation14 + $0x238] sm:$0xff]
    %v2935 = vld [vmem:[#allocation14 + $0x240] sm:$0xff]
    %v2936 = vld [vmem:[#allocation14 + $0x248] sm:$0xf]
    %v2937 = vld [vmem:[#allocation14 + $0x24c] sm:$0xff]
    %v2938 = vld [vmem:[#allocation14 + $0x254] sm:$0xff]
    %v2939 = vld [vmem:[#allocation14 + $0x25c] sm:$0xff]
    %v2940 = vld [vmem:[#allocation14 + $0x264] sm:$0xf]
    %v2941 = vld [vmem:[#allocation14 + $0x268] sm:$0xff]
    %v2942 = vld [vmem:[#allocation14 + $0x270] sm:$0xff]
    %v2943 = vld [vmem:[#allocation14 + $0x278] sm:$0xff]
    %v2944 = vld [vmem:[#allocation14 + $0x280] sm:$0xf]
    %v2945 = vld [vmem:[#allocation14 + $0x284] sm:$0xff]
    %v2946 = vld [vmem:[#allocation14 + $0x28c] sm:$0xff]
    %v2947 = vld [vmem:[#allocation14 + $0x294] sm:$0xff]
    %v2948 = vld [vmem:[#allocation14 + $0x29c] sm:$0xf]
    %v2949 = vld [vmem:[#allocation14 + $0x2a0] sm:$0xff]
    %v2950 = vld [vmem:[#allocation14 + $0x2a8] sm:$0xff]
    %v2951 = vld [vmem:[#allocation14 + $0x2b0] sm:$0xff]
    %v2952 = vld [vmem:[#allocation14 + $0x2b8] sm:$0xf]
    %v2953 = vld [vmem:[#allocation14 + $0x2bc] sm:$0xff]
    %v2954 = vld [vmem:[#allocation14 + $0x2c4] sm:$0xff]
    %v2955 = vld [vmem:[#allocation14 + $0x2cc] sm:$0xff]
    %v2956 = vld [vmem:[#allocation14 + $0x2d4] sm:$0xf]
    %v2957 = vld [vmem:[#allocation14 + $0x2d8] sm:$0xff]
    %v2958 = vld [vmem:[#allocation14 + $0x2e0] sm:$0xff]
    %v2959 = vld [vmem:[#allocation14 + $0x2e8] sm:$0xff]
    %v2960 = vld [vmem:[#allocation14 + $0x2f0] sm:$0xf]
    %v2961 = vld [vmem:[#allocation14 + $0x2f4] sm:$0xff]
    %v2962 = vld [vmem:[#allocation14 + $0x2fc] sm:$0xff]
    %v2963 = vld [vmem:[#allocation14 + $0x304] sm:$0xff]
    %v2964 = vld [vmem:[#allocation14 + $0x30c] sm:$0xf]
    %v2965 = vld [vmem:[#allocation14 + $0x310] sm:$0xff]
    %v2966 = vld [vmem:[#allocation14 + $0x318] sm:$0xff]
    %v2967 = vld [vmem:[#allocation14 + $0x320] sm:$0xff]
    %v2968 = vld [vmem:[#allocation14 + $0x328] sm:$0xf]
    %v2969 = vld [vmem:[#allocation14 + $0x32c] sm:$0xff]
    %v2970 = vld [vmem:[#allocation14 + $0x334] sm:$0xff]
    %v2971 = vld [vmem:[#allocation14 + $0x33c] sm:$0xff]
    %v2972 = vld [vmem:[#allocation14 + $0x344] sm:$0xf]
    %v2973 = vld [vmem:[#allocation14 + $0x348] sm:$0xff]
    %v2974 = vld [vmem:[#allocation14 + $0x350] sm:$0xff]
    %v2975 = vld [vmem:[#allocation14 + $0x358] sm:$0xff]
    %v2976 = vld [vmem:[#allocation14 + $0x360] sm:$0xf]
    %v2977 = vld [vmem:[#allocation14 + $0x364] sm:$0xff]
    %v2978 = vld [vmem:[#allocation14 + $0x36c] sm:$0xff]
    %v2979 = vld [vmem:[#allocation14 + $0x374] sm:$0xff]
    %v2980 = vld [vmem:[#allocation14 + $0x37c] sm:$0xf]
    %v2981 = vld [vmem:[#allocation14 + $0x380] sm:$0xff]
    %v2982 = vld [vmem:[#allocation14 + $0x388] sm:$0xff]
    %v2983 = vld [vmem:[#allocation14 + $0x390] sm:$0xff]
    %v2984 = vld [vmem:[#allocation14 + $0x398] sm:$0xf]
    %v2985 = vld [vmem:[#allocation14 + $0x39c] sm:$0xff]
    %v2986 = vld [vmem:[#allocation14 + $0x3a4] sm:$0xff]
    %v2987 = vld [vmem:[#allocation14 + $0x3ac] sm:$0xff]
    %v2988 = vld [vmem:[#allocation14 + $0x3b4] sm:$0xf]
    %v2989 = vld [vmem:[#allocation14 + $0x3b8] sm:$0xff]
    %v2990 = vld [vmem:[#allocation14 + $0x3c0] sm:$0xff]
    %v2991 = vld [vmem:[#allocation14 + $0x3c8] sm:$0xff]
    %v2992 = vld [vmem:[#allocation14 + $0x3d0] sm:$0xf]
    %v2993 = vld [vmem:[#allocation14 + $0x3d4] sm:$0xff]
    %v2994 = vld [vmem:[#allocation14 + $0x3dc] sm:$0xff]
    %v2995 = vld [vmem:[#allocation14 + $0x3e4] sm:$0xff]
    %v2996 = vld [vmem:[#allocation14 + $0x3ec] sm:$0xf]
    %v2997 = vld [vmem:[#allocation14 + $0x3f0] sm:$0xff]
    %v2998 = vld [vmem:[#allocation14 + $0x3f8] sm:$0xff]
    %v2999 = vld [vmem:[#allocation14 + $0x400] sm:$0xff]
    %v3000 = vld [vmem:[#allocation14 + $0x408] sm:$0xf]
    %v3001 = vld [vmem:[#allocation14 + $0x40c] sm:$0xff]
    %v3002 = vld [vmem:[#allocation14 + $0x414] sm:$0xff]
    %v3003 = vld [vmem:[#allocation14 + $0x41c] sm:$0xff]
    %v3004 = vld [vmem:[#allocation14 + $0x424] sm:$0xf]
    %v3005 = vld [vmem:[#allocation14 + $0x428] sm:$0xff]
    %v3006 = vld [vmem:[#allocation14 + $0x430] sm:$0xff]
    %v3007 = vld [vmem:[#allocation14 + $0x438] sm:$0xff]
    %v3008 = vld [vmem:[#allocation14 + $0x440] sm:$0xf]
    %v3009 = vld [vmem:[#allocation14 + $0x444] sm:$0xff]
    %v3010 = vld [vmem:[#allocation14 + $0x44c] sm:$0xff]
    %v3011 = vld [vmem:[#allocation14 + $0x454] sm:$0xff]
    %v3012 = vld [vmem:[#allocation14 + $0x45c] sm:$0xf]
    %v3013 = vld [vmem:[#allocation14 + $0x460] sm:$0xff]
    %v3014 = vld [vmem:[#allocation14 + $0x468] sm:$0xff]
    %v3015 = vld [vmem:[#allocation14 + $0x470] sm:$0xff]
    %v3016 = vld [vmem:[#allocation14 + $0x478] sm:$0xf]
    %v3017 = vld [vmem:[#allocation14 + $0x47c] sm:$0xff]
    %v3018 = vld [vmem:[#allocation14 + $0x484] sm:$0xff]
    %v3019 = vld [vmem:[#allocation14 + $0x48c] sm:$0xff]
    %v3020 = vld [vmem:[#allocation14 + $0x494] sm:$0xf]
    %v3021 = vld [vmem:[#allocation14 + $0x498] sm:$0xff]
    %v3022 = vld [vmem:[#allocation14 + $0x4a0] sm:$0xff]
    %v3023 = vld [vmem:[#allocation14 + $0x4a8] sm:$0xff]
    %v3024 = vld [vmem:[#allocation14 + $0x4b0] sm:$0xf]
    %v3025 = vld [vmem:[#allocation14 + $0x4b4] sm:$0xff]
    %v3026 = vld [vmem:[#allocation14 + $0x4bc] sm:$0xff]
    %v3027 = vld [vmem:[#allocation14 + $0x4c4] sm:$0xff]
    %v3028 = vld [vmem:[#allocation14 + $0x4cc] sm:$0xf]
    %v3029 = vld [vmem:[#allocation14 + $0x4d0] sm:$0xff]
    %v3030 = vld [vmem:[#allocation14 + $0x4d8] sm:$0xff]
    %v3031 = vld [vmem:[#allocation14 + $0x4e0] sm:$0xff]
    %v3032 = vld [vmem:[#allocation14 + $0x4e8] sm:$0xf]
    %v3033 = vld [vmem:[#allocation14 + $0x4ec] sm:$0xff]
    %v3034 = vld [vmem:[#allocation14 + $0x4f4] sm:$0xff]
    %v3035 = vld [vmem:[#allocation14 + $0x4fc] sm:$0xff]
    %v3036 = vld [vmem:[#allocation14 + $0x504] sm:$0xf]
    %v3037 = vld [vmem:[#allocation14 + $0x508] sm:$0xff]
    %v3038 = vld [vmem:[#allocation14 + $0x510] sm:$0xff]
    %v3039 = vld [vmem:[#allocation14 + $0x518] sm:$0xff]
    %v3040 = vld [vmem:[#allocation14 + $0x520] sm:$0xf]
    %v3041 = vld [vmem:[#allocation14 + $0x524] sm:$0xff]
    %v3042 = vld [vmem:[#allocation14 + $0x52c] sm:$0xff]
    %v3043 = vld [vmem:[#allocation14 + $0x534] sm:$0xff]
    %v3044 = vld [vmem:[#allocation14 + $0x53c] sm:$0xf]
    %v3045 = vld [vmem:[#allocation14 + $0x540] sm:$0xff]
    %v3046 = vld [vmem:[#allocation14 + $0x548] sm:$0xff]
    %v3047 = vld [vmem:[#allocation14 + $0x550] sm:$0xff]
    %v3048 = vld [vmem:[#allocation14 + $0x558] sm:$0xf]
    %v3049 = vld [vmem:[#allocation14 + $0x55c] sm:$0xff]
    %v3050 = vld [vmem:[#allocation14 + $0x564] sm:$0xff]
    %v3051 = vld [vmem:[#allocation14 + $0x56c] sm:$0xff]
    %v3052 = vld [vmem:[#allocation14 + $0x574] sm:$0xf]
    %v3053 = vld [vmem:[#allocation14 + $0x578] sm:$0xff]
    %v3054 = vld [vmem:[#allocation14 + $0x580] sm:$0xff]
    %v3055 = vld [vmem:[#allocation14 + $0x588] sm:$0xff]
    %v3056 = vld [vmem:[#allocation14 + $0x590] sm:$0xf]
    %v3057 = vld [vmem:[#allocation14 + $0x594] sm:$0xff]
    %v3058 = vld [vmem:[#allocation14 + $0x59c] sm:$0xff]
    %v3059 = vld [vmem:[#allocation14 + $0x5a4] sm:$0xff]
    %v3060 = vld [vmem:[#allocation14 + $0x5ac] sm:$0xf]
    %v3061 = vld [vmem:[#allocation14 + $0x5b0] sm:$0xff]
    %v3062 = vld [vmem:[#allocation14 + $0x5b8] sm:$0xff]
    %v3063 = vld [vmem:[#allocation14 + $0x5c0] sm:$0xff]
    %v3064 = vld [vmem:[#allocation14 + $0x5c8] sm:$0xf]
    %v3065 = vld [vmem:[#allocation14 + $0x5cc] sm:$0xff]
    %v3066 = vld [vmem:[#allocation14 + $0x5d4] sm:$0xff]
    %v3067 = vld [vmem:[#allocation14 + $0x5dc] sm:$0xff]
    %v3068 = vld [vmem:[#allocation14 + $0x5e4] sm:$0xf]
    %v3069 = vld [vmem:[#allocation14 + $0x5e8] sm:$0xff]
    %v3070 = vld [vmem:[#allocation14 + $0x5f0] sm:$0xff]
    %v3071 = vld [vmem:[#allocation14 + $0x5f8] sm:$0xff]
    %v3072 = vld [vmem:[#allocation14 + $0x600] sm:$0xf]
    %v3073 = vld [vmem:[#allocation14 + $0x604] sm:$0xff]
    %v3074 = vld [vmem:[#allocation14 + $0x60c] sm:$0xff]
    %v3075 = vld [vmem:[#allocation14 + $0x614] sm:$0xff]
    %v3076 = vld [vmem:[#allocation14 + $0x61c] sm:$0xf]
    %v3077 = vld [vmem:[#allocation14 + $0x620] sm:$0xff]
    %v3078 = vld [vmem:[#allocation14 + $0x628] sm:$0xff]
    %v3079 = vld [vmem:[#allocation14 + $0x630] sm:$0xff]
    %v3080 = vld [vmem:[#allocation14 + $0x638] sm:$0xf]
    %v3081 = vld [vmem:[#allocation14 + $0x63c] sm:$0xff]
    %v3082 = vld [vmem:[#allocation14 + $0x644] sm:$0xff]
    %v3083 = vld [vmem:[#allocation14 + $0x64c] sm:$0xff]
    %v3084 = vld [vmem:[#allocation14 + $0x654] sm:$0xf]
    %v3085 = vld [vmem:[#allocation14 + $0x658] sm:$0xff]
    %v3086 = vld [vmem:[#allocation14 + $0x660] sm:$0xff]
    %v3087 = vld [vmem:[#allocation14 + $0x668] sm:$0xff]
    %v3088 = vld [vmem:[#allocation14 + $0x670] sm:$0xf]
    %v3089 = vld [vmem:[#allocation14 + $0x674] sm:$0xff]
    %v3090 = vld [vmem:[#allocation14 + $0x67c] sm:$0xff]
    %v3091 = vld [vmem:[#allocation14 + $0x684] sm:$0xff]
    %v3092 = vld [vmem:[#allocation14 + $0x68c] sm:$0xf]
    %v3093 = vld [vmem:[#allocation14 + $0x690] sm:$0xff]
    %v3094 = vld [vmem:[#allocation14 + $0x698] sm:$0xff]
    %v3095 = vld [vmem:[#allocation14 + $0x6a0] sm:$0xff]
    %v3096 = vld [vmem:[#allocation14 + $0x6a8] sm:$0xf]
    %v3097 = vld [vmem:[#allocation14 + $0x6ac] sm:$0xff]
    %v3098 = vld [vmem:[#allocation14 + $0x6b4] sm:$0xff]
    %v3099 = vld [vmem:[#allocation14 + $0x6bc] sm:$0xff]
    %v3100 = vld [vmem:[#allocation14 + $0x6c4] sm:$0xf]
    %v3101 = vld [vmem:[#allocation14 + $0x6c8] sm:$0xff]
    %v3102 = vld [vmem:[#allocation14 + $0x6d0] sm:$0xff]
    %v3103 = vld [vmem:[#allocation14 + $0x6d8] sm:$0xff]
    %v3104 = vld [vmem:[#allocation14 + $0x6e0] sm:$0xf]
    %v3105 = vld [vmem:[#allocation14 + $0x6e4] sm:$0xff]
    %v3106 = vld [vmem:[#allocation14 + $0x6ec] sm:$0xff]
    %v3107 = vld [vmem:[#allocation14 + $0x6f4] sm:$0xff]
    %v3108 = vld [vmem:[#allocation14 + $0x6fc] sm:$0xf]
    %v3109 = vld [vmem:[#allocation14 + $0x700] sm:$0xff]
    %v3110 = vld [vmem:[#allocation14 + $0x708] sm:$0xff]
    %v3111 = vld [vmem:[#allocation14 + $0x710] sm:$0xff]
    %v3112 = vld [vmem:[#allocation14 + $0x718] sm:$0xf]
    %v3113 = vld [vmem:[#allocation14 + $0x71c] sm:$0xff]
    %v3114 = vld [vmem:[#allocation14 + $0x724] sm:$0xff]
    %v3115 = vld [vmem:[#allocation14 + $0x72c] sm:$0xff]
    %v3116 = vld [vmem:[#allocation14 + $0x734] sm:$0xf]
    %v3117 = vld [vmem:[#allocation14 + $0x738] sm:$0xff]
    %v3118 = vld [vmem:[#allocation14 + $0x740] sm:$0xff]
    %v3119 = vld [vmem:[#allocation14 + $0x748] sm:$0xff]
    %v3120 = vld [vmem:[#allocation14 + $0x750] sm:$0xf]
    %v3121 = vld [vmem:[#allocation14 + $0x754] sm:$0xff]
    %v3122 = vld [vmem:[#allocation14 + $0x75c] sm:$0xff]
    %v3123 = vld [vmem:[#allocation14 + $0x764] sm:$0xff]
    %v3124 = vld [vmem:[#allocation14 + $0x76c] sm:$0xf]
    %v3125 = vld [vmem:[#allocation14 + $0x770] sm:$0xff]
    %v3126 = vld [vmem:[#allocation14 + $0x778] sm:$0xff]
    %v3127 = vld [vmem:[#allocation14 + $0x780] sm:$0xff]
    %v3128 = vld [vmem:[#allocation14 + $0x788] sm:$0xf]
    %v3129 = vld [vmem:[#allocation14 + $0x78c] sm:$0xff]
    %v3130 = vld [vmem:[#allocation14 + $0x794] sm:$0xff]
    %v3131 = vld [vmem:[#allocation14 + $0x79c] sm:$0xff]
    %v3132 = vld [vmem:[#allocation14 + $0x7a4] sm:$0xf]
    %v3133 = vld [vmem:[#allocation14 + $0x7a8] sm:$0xff]
    %v3134 = vld [vmem:[#allocation14 + $0x7b0] sm:$0xff]
    %v3135 = vld [vmem:[#allocation14 + $0x7b8] sm:$0xff]
    %v3136 = vld [vmem:[#allocation14 + $0x7c0] sm:$0xf]
    %v3137 = vld [vmem:[#allocation14 + $0x7c4] sm:$0xff]
    %v3138 = vld [vmem:[#allocation14 + $0x7cc] sm:$0xff]
    %v3139 = vld [vmem:[#allocation14 + $0x7d4] sm:$0xff]
    %v3140 = vld [vmem:[#allocation14 + $0x7dc] sm:$0xf]
    %v3141 = vld [vmem:[#allocation14 + $0x7e0] sm:$0xff]
    %v3142 = vld [vmem:[#allocation14 + $0x7e8] sm:$0xff]
    %v3143 = vld [vmem:[#allocation14 + $0x7f0] sm:$0xff]
    %v3144 = vld [vmem:[#allocation14 + $0x7f8] sm:$0xf]
    %v3145 = vld [vmem:[#allocation14 + $0x7fc] sm:$0xff]
    %v3146 = vld [vmem:[#allocation14 + $0x804] sm:$0xff]
    %v3147 = vld [vmem:[#allocation14 + $0x80c] sm:$0xff]
    %v3148 = vld [vmem:[#allocation14 + $0x814] sm:$0xf]
    %v3149 = vld [vmem:[#allocation14 + $0x818] sm:$0xff]
    %v3150 = vld [vmem:[#allocation14 + $0x820] sm:$0xff]
    %v3151 = vld [vmem:[#allocation14 + $0x828] sm:$0xff]
    %v3152 = vld [vmem:[#allocation14 + $0x830] sm:$0xf]
    %v3153 = vld [vmem:[#allocation14 + $0x834] sm:$0xff]
    %v3154 = vld [vmem:[#allocation14 + $0x83c] sm:$0xff]
    %v3155 = vld [vmem:[#allocation14 + $0x844] sm:$0xff]
    %v3156 = vld [vmem:[#allocation14 + $0x84c] sm:$0xf]
    %v3157 = vld [vmem:[#allocation14 + $0x850] sm:$0xff]
    %v3158 = vld [vmem:[#allocation14 + $0x858] sm:$0xff]
    %v3159 = vld [vmem:[#allocation14 + $0x860] sm:$0xff]
    %v3160 = vld [vmem:[#allocation14 + $0x868] sm:$0xf]
    %v3161 = vld [vmem:[#allocation14 + $0x86c] sm:$0xff]
    %v3162 = vld [vmem:[#allocation14 + $0x874] sm:$0xff]
    %v3163 = vld [vmem:[#allocation14 + $0x87c] sm:$0xff]
    %v3164 = vld [vmem:[#allocation14 + $0x884] sm:$0xf]
    %v3165 = vld [vmem:[#allocation14 + $0x888] sm:$0xff]
    %v3166 = vld [vmem:[#allocation14 + $0x890] sm:$0xff]
    %v3167 = vld [vmem:[#allocation14 + $0x898] sm:$0xff]
    %v3168 = vld [vmem:[#allocation14 + $0x8a0] sm:$0xf]
    %v3169 = vld [vmem:[#allocation14 + $0x8a4] sm:$0xff]
    %v3170 = vld [vmem:[#allocation14 + $0x8ac] sm:$0xff]
    %v3171 = vld [vmem:[#allocation14 + $0x8b4] sm:$0xff]
    %v3172 = vld [vmem:[#allocation14 + $0x8bc] sm:$0xf]
    %v3173 = vld [vmem:[#allocation14 + $0x8c0] sm:$0xff]
    %v3174 = vld [vmem:[#allocation14 + $0x8c8] sm:$0xff]
    %v3175 = vld [vmem:[#allocation14 + $0x8d0] sm:$0xff]
    %v3176 = vld [vmem:[#allocation14 + $0x8d8] sm:$0xf]
    %v3177 = vld [vmem:[#allocation14 + $0x8dc] sm:$0xff]
    %v3178 = vld [vmem:[#allocation14 + $0x8e4] sm:$0xff]
    %v3179 = vld [vmem:[#allocation14 + $0x8ec] sm:$0xff]
    %v3180 = vld [vmem:[#allocation14 + $0x8f4] sm:$0xf]
    %v3181 = vld [vmem:[#allocation14 + $0x8f8] sm:$0xff]
    %v3182 = vld [vmem:[#allocation14 + $0x900] sm:$0xff]
    %v3183 = vld [vmem:[#allocation14 + $0x908] sm:$0xff]
    %v3184 = vld [vmem:[#allocation14 + $0x910] sm:$0xf]
    %v3185 = vld [vmem:[#allocation14 + $0x914] sm:$0xff]
    %v3186 = vld [vmem:[#allocation14 + $0x91c] sm:$0xff]
    %v3187 = vld [vmem:[#allocation14 + $0x924] sm:$0xff]
    %v3188 = vld [vmem:[#allocation14 + $0x92c] sm:$0xf]
    %v3189 = vld [vmem:[#allocation14 + $0x930] sm:$0xff]
    %v3190 = vld [vmem:[#allocation14 + $0x938] sm:$0xff]
    %v3191 = vld [vmem:[#allocation14 + $0x940] sm:$0xff]
    %v3192 = vld [vmem:[#allocation14 + $0x948] sm:$0xf]
    %v3193 = vld [vmem:[#allocation14 + $0x94c] sm:$0xff]
    %v3194 = vld [vmem:[#allocation14 + $0x954] sm:$0xff]
    %v3195 = vld [vmem:[#allocation14 + $0x95c] sm:$0xff]
    %v3196 = vld [vmem:[#allocation14 + $0x964] sm:$0xf]
    %v3197 = vld [vmem:[#allocation14 + $0x968] sm:$0xff]
    %v3198 = vld [vmem:[#allocation14 + $0x970] sm:$0xff]
    %v3199 = vld [vmem:[#allocation14 + $0x978] sm:$0xff]
    %v3200 = vld [vmem:[#allocation14 + $0x980] sm:$0xf]
    %v3201 = vld [vmem:[#allocation14 + $0x984] sm:$0xff]
    %v3202 = vld [vmem:[#allocation14 + $0x98c] sm:$0xff]
    %v3203 = vld [vmem:[#allocation14 + $0x994] sm:$0xff]
    %v3204 = vld [vmem:[#allocation14 + $0x99c] sm:$0xf]
    %v3205 = vld [vmem:[#allocation14 + $0x9a0] sm:$0xff]
    %v3206 = vld [vmem:[#allocation14 + $0x9a8] sm:$0xff]
    %v3207 = vld [vmem:[#allocation14 + $0x9b0] sm:$0xff]
    %v3208 = vld [vmem:[#allocation14 + $0x9b8] sm:$0xf]
    %v3209 = vld [vmem:[#allocation14 + $0x9bc] sm:$0xff]
    %v3210 = vld [vmem:[#allocation14 + $0x9c4] sm:$0xff]
    %v3211 = vld [vmem:[#allocation14 + $0x9cc] sm:$0xff]
    %v3212 = vld [vmem:[#allocation14 + $0x9d4] sm:$0xf]
    %v3213 = vld [vmem:[#allocation14 + $0x9d8] sm:$0xff]
    %v3214 = vld [vmem:[#allocation14 + $0x9e0] sm:$0xff]
    %v3215 = vld [vmem:[#allocation14 + $0x9e8] sm:$0xff]
    %v3216 = vld [vmem:[#allocation14 + $0x9f0] sm:$0xf]
    %v3217 = vld [vmem:[#allocation14 + $0x9f4] sm:$0xff]
    %v3218 = vld [vmem:[#allocation14 + $0x9fc] sm:$0xff]
    %v3219 = vld [vmem:[#allocation14 + $0xa04] sm:$0xff]
    %v3220 = vld [vmem:[#allocation14 + $0xa0c] sm:$0xf]
    %v3221 = vld [vmem:[#allocation14 + $0xa10] sm:$0xff]
    %v3222 = vld [vmem:[#allocation14 + $0xa18] sm:$0xff]
    %v3223 = vld [vmem:[#allocation14 + $0xa20] sm:$0xff]
    %v3224 = vld [vmem:[#allocation14 + $0xa28] sm:$0xf]
    %v3225 = vld [vmem:[#allocation14 + $0xa2c] sm:$0xff]
    %v3226 = vld [vmem:[#allocation14 + $0xa34] sm:$0xff]
    %v3227 = vld [vmem:[#allocation14 + $0xa3c] sm:$0xff]
    %v3228 = vld [vmem:[#allocation14 + $0xa44] sm:$0xf]
    %v3229 = vld [vmem:[#allocation14 + $0xa48] sm:$0xff]
    %v3230 = vld [vmem:[#allocation14 + $0xa50] sm:$0xff]
    %v3231 = vld [vmem:[#allocation14 + $0xa58] sm:$0xff]
    %v3232 = vld [vmem:[#allocation14 + $0xa60] sm:$0xf]
    %v3233 = vld [vmem:[#allocation14 + $0xa64] sm:$0xff]
    %v3234 = vld [vmem:[#allocation14 + $0xa6c] sm:$0xff]
    %v3235 = vld [vmem:[#allocation14 + $0xa74] sm:$0xff]
    %v3236 = vld [vmem:[#allocation14 + $0xa7c] sm:$0xf]
    %v3237 = vld [vmem:[#allocation14 + $0xa80] sm:$0xff]
    %v3238 = vld [vmem:[#allocation14 + $0xa88] sm:$0xff]
    %v3239 = vld [vmem:[#allocation14 + $0xa90] sm:$0xff]
    %v3240 = vld [vmem:[#allocation14 + $0xa98] sm:$0xf]
    %v3241 = vld [vmem:[#allocation14 + $0xa9c] sm:$0xff]
    %v3242 = vld [vmem:[#allocation14 + $0xaa4] sm:$0xff]
    %v3243 = vld [vmem:[#allocation14 + $0xaac] sm:$0xff]
    %v3244 = vld [vmem:[#allocation14 + $0xab4] sm:$0xf]
    %v3245 = vld [vmem:[#allocation14 + $0xab8] sm:$0xff]
    %v3246 = vld [vmem:[#allocation14 + $0xac0] sm:$0xff]
    %v3247 = vld [vmem:[#allocation14 + $0xac8] sm:$0xff]
    %v3248 = vld [vmem:[#allocation14 + $0xad0] sm:$0xf]
    %v3249 = vld [vmem:[#allocation14 + $0xad4] sm:$0xff]
    %v3250 = vld [vmem:[#allocation14 + $0xadc] sm:$0xff]
    %v3251 = vld [vmem:[#allocation14 + $0xae4] sm:$0xff]
    %v3252 = vld [vmem:[#allocation14 + $0xaec] sm:$0xf]
    %v3253 = vld [vmem:[#allocation14 + $0xaf0] sm:$0xff]
    %v3254 = vld [vmem:[#allocation14 + $0xaf8] sm:$0xff]
    %v3255 = vld [vmem:[#allocation14 + $0xb00] sm:$0xff]
    %v3256 = vld [vmem:[#allocation14 + $0xb08] sm:$0xf]
    %v3257 = vld [vmem:[#allocation14 + $0xb0c] sm:$0xff]
    %v3258 = vld [vmem:[#allocation14 + $0xb14] sm:$0xff]
    %v3259 = vld [vmem:[#allocation14 + $0xb1c] sm:$0xff]
    %v3260 = vld [vmem:[#allocation14 + $0xb24] sm:$0xf]
    %v3261 = vld [vmem:[#allocation14 + $0xb28] sm:$0xff]
    %v3262 = vld [vmem:[#allocation14 + $0xb30] sm:$0xff]
    %v3263 = vld [vmem:[#allocation14 + $0xb38] sm:$0xff]
    %v3264 = vld [vmem:[#allocation14 + $0xb40] sm:$0xf]
    %v3265 = vld [vmem:[#allocation14 + $0xb44] sm:$0xff]
    %v3266 = vld [vmem:[#allocation14 + $0xb4c] sm:$0xff]
    %v3267 = vld [vmem:[#allocation14 + $0xb54] sm:$0xff]
    %v3268 = vld [vmem:[#allocation14 + $0xb5c] sm:$0xf]
    %v3269 = vld [vmem:[#allocation14 + $0xb60] sm:$0xff]
    %v3270 = vld [vmem:[#allocation14 + $0xb68] sm:$0xff]
    %v3271 = vld [vmem:[#allocation14 + $0xb70] sm:$0xff]
    %v3272 = vld [vmem:[#allocation14 + $0xb78] sm:$0xf]
    %v3273 = vld [vmem:[#allocation14 + $0xb7c] sm:$0xff]
    %v3274 = vld [vmem:[#allocation14 + $0xb84] sm:$0xff]
    %v3275 = vld [vmem:[#allocation14 + $0xb8c] sm:$0xff]
    %v3276 = vld [vmem:[#allocation14 + $0xb94] sm:$0xf]
    %v3277 = vld [vmem:[#allocation14 + $0xb98] sm:$0xff]
    %v3278 = vld [vmem:[#allocation14 + $0xba0] sm:$0xff]
    %v3279 = vld [vmem:[#allocation14 + $0xba8] sm:$0xff]
    %v3280 = vld [vmem:[#allocation14 + $0xbb0] sm:$0xf]
    %v3281 = vld [vmem:[#allocation14 + $0xbb4] sm:$0xff]
    %v3282 = vld [vmem:[#allocation14 + $0xbbc] sm:$0xff]
    %v3283 = vld [vmem:[#allocation14 + $0xbc4] sm:$0xff]
    %v3284 = vld [vmem:[#allocation14 + $0xbcc] sm:$0xf]
    %v3285 = vld [vmem:[#allocation14 + $0xbd0] sm:$0xff]
    %v3286 = vld [vmem:[#allocation14 + $0xbd8] sm:$0xff]
    %v3287 = vld [vmem:[#allocation14 + $0xbe0] sm:$0xff]
    %v3288 = vld [vmem:[#allocation14 + $0xbe8] sm:$0xf]
    %v3289 = vld [vmem:[#allocation14 + $0xbec] sm:$0xff]
    %v3290 = vld [vmem:[#allocation14 + $0xbf4] sm:$0xff]
    %v3291 = vld [vmem:[#allocation14 + $0xbfc] sm:$0xff]
    %v3292 = vld [vmem:[#allocation14 + $0xc04] sm:$0xf]
    %v3293 = vld [vmem:[#allocation14 + $0xc08] sm:$0xff]
    %v3294 = vld [vmem:[#allocation14 + $0xc10] sm:$0xff]
    %v3295 = vld [vmem:[#allocation14 + $0xc18] sm:$0xff]
    %v3296 = vld [vmem:[#allocation14 + $0xc20] sm:$0xf]
    %v3297 = vld [vmem:[#allocation14 + $0xc24] sm:$0xff]
    %v3298 = vld [vmem:[#allocation14 + $0xc2c] sm:$0xff]
    %v3299 = vld [vmem:[#allocation14 + $0xc34] sm:$0xff]
    %v3300 = vld [vmem:[#allocation14 + $0xc3c] sm:$0xf]
    %v3301 = vld [vmem:[#allocation14 + $0xc40] sm:$0xff]
    %v3302 = vld [vmem:[#allocation14 + $0xc48] sm:$0xff]
    %v3303 = vld [vmem:[#allocation14 + $0xc50] sm:$0xff]
    %v3304 = vld [vmem:[#allocation14 + $0xc58] sm:$0xf]
    %v3305 = vld [vmem:[#allocation14 + $0xc5c] sm:$0xff]
    %v3306 = vld [vmem:[#allocation14 + $0xc64] sm:$0xff]
    %v3307 = vld [vmem:[#allocation14 + $0xc6c] sm:$0xff]
    %v3308 = vld [vmem:[#allocation14 + $0xc74] sm:$0xf]
    %v3309 = vld [vmem:[#allocation14 + $0xc78] sm:$0xff]
    %v3310 = vld [vmem:[#allocation14 + $0xc80] sm:$0xff]
    %v3311 = vld [vmem:[#allocation14 + $0xc88] sm:$0xff]
    %v3312 = vld [vmem:[#allocation14 + $0xc90] sm:$0xf]
    %v3313 = vld [vmem:[#allocation14 + $0xc94] sm:$0xff]
    %v3314 = vld [vmem:[#allocation14 + $0xc9c] sm:$0xff]
    %v3315 = vld [vmem:[#allocation14 + $0xca4] sm:$0xff]
    %v3316 = vld [vmem:[#allocation14 + $0xcac] sm:$0xf]
    %v3317 = vld [vmem:[#allocation14 + $0xcb0] sm:$0xff]
    %v3318 = vld [vmem:[#allocation14 + $0xcb8] sm:$0xff]
    %v3319 = vld [vmem:[#allocation14 + $0xcc0] sm:$0xff]
    %v3320 = vld [vmem:[#allocation14 + $0xcc8] sm:$0xf]
    %v3321 = vld [vmem:[#allocation14 + $0xccc] sm:$0xff]
    %v3322 = vld [vmem:[#allocation14 + $0xcd4] sm:$0xff]
    %v3323 = vld [vmem:[#allocation14 + $0xcdc] sm:$0xff]
    %v3324 = vld [vmem:[#allocation14 + $0xce4] sm:$0xf]
    %v3325 = vld [vmem:[#allocation14 + $0xce8] sm:$0xff]
    %v3326 = vld [vmem:[#allocation14 + $0xcf0] sm:$0xff]
    %v3327 = vld [vmem:[#allocation14 + $0xcf8] sm:$0xff]
    %v3328 = vld [vmem:[#allocation14 + $0xd00] sm:$0xf]
    %v3329 = vld [vmem:[#allocation14 + $0xd04] sm:$0xff]
    %v3330 = vld [vmem:[#allocation14 + $0xd0c] sm:$0xff]
    %v3331 = vld [vmem:[#allocation14 + $0xd14] sm:$0xff]
    %v3332 = vld [vmem:[#allocation14 + $0xd1c] sm:$0xf]
    %v3333 = vld [vmem:[#allocation14 + $0xd20] sm:$0xff]
    %v3334 = vld [vmem:[#allocation14 + $0xd28] sm:$0xff]
    %v3335 = vld [vmem:[#allocation14 + $0xd30] sm:$0xff]
    %v3336 = vld [vmem:[#allocation14 + $0xd38] sm:$0xf]
    %v3337 = vld [vmem:[#allocation14 + $0xd3c] sm:$0xff]
    %v3338 = vld [vmem:[#allocation14 + $0xd44] sm:$0xff]
    %v3339 = vld [vmem:[#allocation14 + $0xd4c] sm:$0xff]
    %v3340 = vld [vmem:[#allocation14 + $0xd54] sm:$0xf]
    %v3341 = vld [vmem:[#allocation14 + $0xd58] sm:$0xff]
    %v3342 = vld [vmem:[#allocation14 + $0xd60] sm:$0xff]
    %v3343 = vld [vmem:[#allocation14 + $0xd68] sm:$0xff]
    %v3344 = vld [vmem:[#allocation14 + $0xd70] sm:$0xf]
    %v3345 = vld [vmem:[#allocation14 + $0xd74] sm:$0xff]
    %v3346 = vld [vmem:[#allocation14 + $0xd7c] sm:$0xff]
    %v3347 = vld [vmem:[#allocation14 + $0xd84] sm:$0xff]
    %v3348 = vld [vmem:[#allocation14 + $0xd8c] sm:$0xf]
    %v3349 = vld [vmem:[#allocation14 + $0xd90] sm:$0xff]
    %v3350 = vld [vmem:[#allocation14 + $0xd98] sm:$0xff]
    %v3351 = vld [vmem:[#allocation14 + $0xda0] sm:$0xff]
    %v3352 = vld [vmem:[#allocation14 + $0xda8] sm:$0xf]
    %v3353 = vld [vmem:[#allocation14 + $0xdac] sm:$0xff]
    %v3354 = vld [vmem:[#allocation14 + $0xdb4] sm:$0xff]
    %v3355 = vld [vmem:[#allocation14 + $0xdbc] sm:$0xff]
    %v3356 = vld [vmem:[#allocation14 + $0xdc4] sm:$0xf]
    %v3357 = vld [vmem:[#allocation14 + $0xdc8] sm:$0xff]
    %v3358 = vld [vmem:[#allocation14 + $0xdd0] sm:$0xff]
    %v3359 = vld [vmem:[#allocation14 + $0xdd8] sm:$0xff]
    %v3360 = vld [vmem:[#allocation14 + $0xde0] sm:$0xf]
    %v3361 = vld [vmem:[#allocation14 + $0xde4] sm:$0xff]
    %v3362 = vld [vmem:[#allocation14 + $0xdec] sm:$0xff]
    %v3363 = vld [vmem:[#allocation14 + $0xdf4] sm:$0xff]
    %v3364 = vld [vmem:[#allocation14 + $0xdfc] sm:$0xf]
    %v3365 = vld [vmem:[#allocation16] sm:$0xff]
    %v3367 = vperm.slane %v3365, 0
    %v3368 = vperm.slane %v3365, 1
    %v3369 = vperm.slane %v3365, 2
    %v3370 = vperm.slane %v3365, 3
    %v3371 = vperm.slane %v3365, 4
    %v3372 = vperm.slane %v3365, 5
    %v3373 = vperm.slane %v3365, 6
    %v3893 = vunpack.c.l.b16 %v2853
    %v3894 = vunpack.c.h.b16 %v2853
    %v3895 = vunpack.c.l.b16 %v2854
    %v3896 = vunpack.c.h.b16 %v2854
    %v3897 = vunpack.c.l.b16 %v2855
    %v3898 = vunpack.c.h.b16 %v2855
    %v3899 = vunpack.c.l.b16 %v2856
    %v3900 = vunpack.c.l.b16 %v2857
    %v3901 = vunpack.c.h.b16 %v2857
    %v3902 = vunpack.c.l.b16 %v2858
    %v3903 = vunpack.c.h.b16 %v2858
    %v3904 = vunpack.c.l.b16 %v2859
    %v3905 = vunpack.c.h.b16 %v2859
    %v3906 = vunpack.c.l.b16 %v2860
    %v3907 = vunpack.c.l.b16 %v2861
    %v3908 = vunpack.c.h.b16 %v2861
    %v3909 = vunpack.c.l.b16 %v2862
    %v3910 = vunpack.c.h.b16 %v2862
    %v3911 = vunpack.c.l.b16 %v2863
    %v3912 = vunpack.c.h.b16 %v2863
    %v3913 = vunpack.c.l.b16 %v2864
    %v3914 = vunpack.c.l.b16 %v2865
    %v3915 = vunpack.c.h.b16 %v2865
    %v3916 = vunpack.c.l.b16 %v2866
    %v3917 = vunpack.c.h.b16 %v2866
    %v3918 = vunpack.c.l.b16 %v2867
    %v3919 = vunpack.c.h.b16 %v2867
    %v3920 = vunpack.c.l.b16 %v2868
    %v3921 = vunpack.c.l.b16 %v2869
    %v3922 = vunpack.c.h.b16 %v2869
    %v3923 = vunpack.c.l.b16 %v2870
    %v3924 = vunpack.c.h.b16 %v2870
    %v3925 = vunpack.c.l.b16 %v2871
    %v3926 = vunpack.c.h.b16 %v2871
    %v3927 = vunpack.c.l.b16 %v2872
    %v3928 = vunpack.c.l.b16 %v2873
    %v3929 = vunpack.c.h.b16 %v2873
    %v3930 = vunpack.c.l.b16 %v2874
    %v3931 = vunpack.c.h.b16 %v2874
    %v3932 = vunpack.c.l.b16 %v2875
    %v3933 = vunpack.c.h.b16 %v2875
    %v3934 = vunpack.c.l.b16 %v2876
    %v3935 = vunpack.c.l.b16 %v2877
    %v3936 = vunpack.c.h.b16 %v2877
    %v3937 = vunpack.c.l.b16 %v2878
    %v3938 = vunpack.c.h.b16 %v2878
    %v3939 = vunpack.c.l.b16 %v2879
    %v3940 = vunpack.c.h.b16 %v2879
    %v3941 = vunpack.c.l.b16 %v2880
    %v3942 = vunpack.c.l.b16 %v2881
    %v3943 = vunpack.c.h.b16 %v2881
    %v3944 = vunpack.c.l.b16 %v2882
    %v3945 = vunpack.c.h.b16 %v2882
    %v3946 = vunpack.c.l.b16 %v2883
    %v3947 = vunpack.c.h.b16 %v2883
    %v3948 = vunpack.c.l.b16 %v2884
    %v3949 = vunpack.c.l.b16 %v2885
    %v3950 = vunpack.c.h.b16 %v2885
    %v3951 = vunpack.c.l.b16 %v2886
    %v3952 = vunpack.c.h.b16 %v2886
    %v3953 = vunpack.c.l.b16 %v2887
    %v3954 = vunpack.c.h.b16 %v2887
    %v3955 = vunpack.c.l.b16 %v2888
    %v3956 = vunpack.c.l.b16 %v2889
    %v3957 = vunpack.c.h.b16 %v2889
    %v3958 = vunpack.c.l.b16 %v2890
    %v3959 = vunpack.c.h.b16 %v2890
    %v3960 = vunpack.c.l.b16 %v2891
    %v3961 = vunpack.c.h.b16 %v2891
    %v3962 = vunpack.c.l.b16 %v2892
    %v3963 = vunpack.c.l.b16 %v2893
    %v3964 = vunpack.c.h.b16 %v2893
    %v3965 = vunpack.c.l.b16 %v2894
    %v3966 = vunpack.c.h.b16 %v2894
    %v3967 = vunpack.c.l.b16 %v2895
    %v3968 = vunpack.c.h.b16 %v2895
    %v3969 = vunpack.c.l.b16 %v2896
    %v3970 = vunpack.c.l.b16 %v2897
    %v3971 = vunpack.c.h.b16 %v2897
    %v3972 = vunpack.c.l.b16 %v2898
    %v3973 = vunpack.c.h.b16 %v2898
    %v3974 = vunpack.c.l.b16 %v2899
    %v3975 = vunpack.c.h.b16 %v2899
    %v3976 = vunpack.c.l.b16 %v2900
    %v3977 = vunpack.c.l.b16 %v2901
    %v3978 = vunpack.c.h.b16 %v2901
    %v3979 = vunpack.c.l.b16 %v2902
    %v3980 = vunpack.c.h.b16 %v2902
    %v3981 = vunpack.c.l.b16 %v2903
    %v3982 = vunpack.c.h.b16 %v2903
    %v3983 = vunpack.c.l.b16 %v2904
    %v3984 = vunpack.c.l.b16 %v2905
    %v3985 = vunpack.c.h.b16 %v2905
    %v3986 = vunpack.c.l.b16 %v2906
    %v3987 = vunpack.c.h.b16 %v2906
    %v3988 = vunpack.c.l.b16 %v2907
    %v3989 = vunpack.c.h.b16 %v2907
    %v3990 = vunpack.c.l.b16 %v2908
    %v3991 = vunpack.c.l.b16 %v2909
    %v3992 = vunpack.c.h.b16 %v2909
    %v3993 = vunpack.c.l.b16 %v2910
    %v3994 = vunpack.c.h.b16 %v2910
    %v3995 = vunpack.c.l.b16 %v2911
    %v3996 = vunpack.c.h.b16 %v2911
    %v3997 = vunpack.c.l.b16 %v2912
    %v3998 = vunpack.c.l.b16 %v2913
    %v3999 = vunpack.c.h.b16 %v2913
    %v4000 = vunpack.c.l.b16 %v2914
    %v4001 = vunpack.c.h.b16 %v2914
    %v4002 = vunpack.c.l.b16 %v2915
    %v4003 = vunpack.c.h.b16 %v2915
    %v4004 = vunpack.c.l.b16 %v2916
    %v4005 = vunpack.c.l.b16 %v2917
    %v4006 = vunpack.c.h.b16 %v2917
    %v4007 = vunpack.c.l.b16 %v2918
    %v4008 = vunpack.c.h.b16 %v2918
    %v4009 = vunpack.c.l.b16 %v2919
    %v4010 = vunpack.c.h.b16 %v2919
    %v4011 = vunpack.c.l.b16 %v2920
    %v4012 = vunpack.c.l.b16 %v2921
    %v4013 = vunpack.c.h.b16 %v2921
    %v4014 = vunpack.c.l.b16 %v2922
    %v4015 = vunpack.c.h.b16 %v2922
    %v4016 = vunpack.c.l.b16 %v2923
    %v4017 = vunpack.c.h.b16 %v2923
    %v4018 = vunpack.c.l.b16 %v2924
    %v4019 = vunpack.c.l.b16 %v2925
    %v4020 = vunpack.c.h.b16 %v2925
    %v4021 = vunpack.c.l.b16 %v2926
    %v4022 = vunpack.c.h.b16 %v2926
    %v4023 = vunpack.c.l.b16 %v2927
    %v4024 = vunpack.c.h.b16 %v2927
    %v4025 = vunpack.c.l.b16 %v2928
    %v4026 = vunpack.c.l.b16 %v2929
    %v4027 = vunpack.c.h.b16 %v2929
    %v4028 = vunpack.c.l.b16 %v2930
    %v4029 = vunpack.c.h.b16 %v2930
    %v4030 = vunpack.c.l.b16 %v2931
    %v4031 = vunpack.c.h.b16 %v2931
    %v4032 = vunpack.c.l.b16 %v2932
    %v4033 = vunpack.c.l.b16 %v2933
    %v4034 = vunpack.c.h.b16 %v2933
    %v4035 = vunpack.c.l.b16 %v2934
    %v4036 = vunpack.c.h.b16 %v2934
    %v4037 = vunpack.c.l.b16 %v2935
    %v4038 = vunpack.c.h.b16 %v2935
    %v4039 = vunpack.c.l.b16 %v2936
    %v4040 = vunpack.c.l.b16 %v2937
    %v4041 = vunpack.c.h.b16 %v2937
    %v4042 = vunpack.c.l.b16 %v2938
    %v4043 = vunpack.c.h.b16 %v2938
    %v4044 = vunpack.c.l.b16 %v2939
    %v4045 = vunpack.c.h.b16 %v2939
    %v4046 = vunpack.c.l.b16 %v2940
    %v4047 = vunpack.c.l.b16 %v2941
    %v4048 = vunpack.c.h.b16 %v2941
    %v4049 = vunpack.c.l.b16 %v2942
    %v4050 = vunpack.c.h.b16 %v2942
    %v4051 = vunpack.c.l.b16 %v2943
    %v4052 = vunpack.c.h.b16 %v2943
    %v4053 = vunpack.c.l.b16 %v2944
    %v4054 = vunpack.c.l.b16 %v2945
    %v4055 = vunpack.c.h.b16 %v2945
    %v4056 = vunpack.c.l.b16 %v2946
    %v4057 = vunpack.c.h.b16 %v2946
    %v4058 = vunpack.c.l.b16 %v2947
    %v4059 = vunpack.c.h.b16 %v2947
    %v4060 = vunpack.c.l.b16 %v2948
    %v4061 = vunpack.c.l.b16 %v2949
    %v4062 = vunpack.c.h.b16 %v2949
    %v4063 = vunpack.c.l.b16 %v2950
    %v4064 = vunpack.c.h.b16 %v2950
    %v4065 = vunpack.c.l.b16 %v2951
    %v4066 = vunpack.c.h.b16 %v2951
    %v4067 = vunpack.c.l.b16 %v2952
    %v4068 = vunpack.c.l.b16 %v2953
    %v4069 = vunpack.c.h.b16 %v2953
    %v4070 = vunpack.c.l.b16 %v2954
    %v4071 = vunpack.c.h.b16 %v2954
    %v4072 = vunpack.c.l.b16 %v2955
    %v4073 = vunpack.c.h.b16 %v2955
    %v4074 = vunpack.c.l.b16 %v2956
    %v4075 = vunpack.c.l.b16 %v2957
    %v4076 = vunpack.c.h.b16 %v2957
    %v4077 = vunpack.c.l.b16 %v2958
    %v4078 = vunpack.c.h.b16 %v2958
    %v4079 = vunpack.c.l.b16 %v2959
    %v4080 = vunpack.c.h.b16 %v2959
    %v4081 = vunpack.c.l.b16 %v2960
    %v4082 = vunpack.c.l.b16 %v2961
    %v4083 = vunpack.c.h.b16 %v2961
    %v4084 = vunpack.c.l.b16 %v2962
    %v4085 = vunpack.c.h.b16 %v2962
    %v4086 = vunpack.c.l.b16 %v2963
    %v4087 = vunpack.c.h.b16 %v2963
    %v4088 = vunpack.c.l.b16 %v2964
    %v4089 = vunpack.c.l.b16 %v2965
    %v4090 = vunpack.c.h.b16 %v2965
    %v4091 = vunpack.c.l.b16 %v2966
    %v4092 = vunpack.c.h.b16 %v2966
    %v4093 = vunpack.c.l.b16 %v2967
    %v4094 = vunpack.c.h.b16 %v2967
    %v4095 = vunpack.c.l.b16 %v2968
    %v4096 = vunpack.c.l.b16 %v2969
    %v4097 = vunpack.c.h.b16 %v2969
    %v4098 = vunpack.c.l.b16 %v2970
    %v4099 = vunpack.c.h.b16 %v2970
    %v4100 = vunpack.c.l.b16 %v2971
    %v4101 = vunpack.c.h.b16 %v2971
    %v4102 = vunpack.c.l.b16 %v2972
    %v4103 = vunpack.c.l.b16 %v2973
    %v4104 = vunpack.c.h.b16 %v2973
    %v4105 = vunpack.c.l.b16 %v2974
    %v4106 = vunpack.c.h.b16 %v2974
    %v4107 = vunpack.c.l.b16 %v2975
    %v4108 = vunpack.c.h.b16 %v2975
    %v4109 = vunpack.c.l.b16 %v2976
    %v4110 = vunpack.c.l.b16 %v2977
    %v4111 = vunpack.c.h.b16 %v2977
    %v4112 = vunpack.c.l.b16 %v2978
    %v4113 = vunpack.c.h.b16 %v2978
    %v4114 = vunpack.c.l.b16 %v2979
    %v4115 = vunpack.c.h.b16 %v2979
    %v4116 = vunpack.c.l.b16 %v2980
    %v4117 = vunpack.c.l.b16 %v2981
    %v4118 = vunpack.c.h.b16 %v2981
    %v4119 = vunpack.c.l.b16 %v2982
    %v4120 = vunpack.c.h.b16 %v2982
    %v4121 = vunpack.c.l.b16 %v2983
    %v4122 = vunpack.c.h.b16 %v2983
    %v4123 = vunpack.c.l.b16 %v2984
    %v4124 = vunpack.c.l.b16 %v2985
    %v4125 = vunpack.c.h.b16 %v2985
    %v4126 = vunpack.c.l.b16 %v2986
    %v4127 = vunpack.c.h.b16 %v2986
    %v4128 = vunpack.c.l.b16 %v2987
    %v4129 = vunpack.c.h.b16 %v2987
    %v4130 = vunpack.c.l.b16 %v2988
    %v4131 = vunpack.c.l.b16 %v2989
    %v4132 = vunpack.c.h.b16 %v2989
    %v4133 = vunpack.c.l.b16 %v2990
    %v4134 = vunpack.c.h.b16 %v2990
    %v4135 = vunpack.c.l.b16 %v2991
    %v4136 = vunpack.c.h.b16 %v2991
    %v4137 = vunpack.c.l.b16 %v2992
    %v4138 = vunpack.c.l.b16 %v2993
    %v4139 = vunpack.c.h.b16 %v2993
    %v4140 = vunpack.c.l.b16 %v2994
    %v4141 = vunpack.c.h.b16 %v2994
    %v4142 = vunpack.c.l.b16 %v2995
    %v4143 = vunpack.c.h.b16 %v2995
    %v4144 = vunpack.c.l.b16 %v2996
    %v4145 = vunpack.c.l.b16 %v2997
    %v4146 = vunpack.c.h.b16 %v2997
    %v4147 = vunpack.c.l.b16 %v2998
    %v4148 = vunpack.c.h.b16 %v2998
    %v4149 = vunpack.c.l.b16 %v2999
    %v4150 = vunpack.c.h.b16 %v2999
    %v4151 = vunpack.c.l.b16 %v3000
    %v4152 = vunpack.c.l.b16 %v3001
    %v4153 = vunpack.c.h.b16 %v3001
    %v4154 = vunpack.c.l.b16 %v3002
    %v4155 = vunpack.c.h.b16 %v3002
    %v4156 = vunpack.c.l.b16 %v3003
    %v4157 = vunpack.c.h.b16 %v3003
    %v4158 = vunpack.c.l.b16 %v3004
    %v4159 = vunpack.c.l.b16 %v3005
    %v4160 = vunpack.c.h.b16 %v3005
    %v4161 = vunpack.c.l.b16 %v3006
    %v4162 = vunpack.c.h.b16 %v3006
    %v4163 = vunpack.c.l.b16 %v3007
    %v4164 = vunpack.c.h.b16 %v3007
    %v4165 = vunpack.c.l.b16 %v3008
    %v4166 = vunpack.c.l.b16 %v3009
    %v4167 = vunpack.c.h.b16 %v3009
    %v4168 = vunpack.c.l.b16 %v3010
    %v4169 = vunpack.c.h.b16 %v3010
    %v4170 = vunpack.c.l.b16 %v3011
    %v4171 = vunpack.c.h.b16 %v3011
    %v4172 = vunpack.c.l.b16 %v3012
    %v4173 = vunpack.c.l.b16 %v3013
    %v4174 = vunpack.c.h.b16 %v3013
    %v4175 = vunpack.c.l.b16 %v3014
    %v4176 = vunpack.c.h.b16 %v3014
    %v4177 = vunpack.c.l.b16 %v3015
    %v4178 = vunpack.c.h.b16 %v3015
    %v4179 = vunpack.c.l.b16 %v3016
    %v4180 = vunpack.c.l.b16 %v3017
    %v4181 = vunpack.c.h.b16 %v3017
    %v4182 = vunpack.c.l.b16 %v3018
    %v4183 = vunpack.c.h.b16 %v3018
    %v4184 = vunpack.c.l.b16 %v3019
    %v4185 = vunpack.c.h.b16 %v3019
    %v4186 = vunpack.c.l.b16 %v3020
    %v4187 = vunpack.c.l.b16 %v3021
    %v4188 = vunpack.c.h.b16 %v3021
    %v4189 = vunpack.c.l.b16 %v3022
    %v4190 = vunpack.c.h.b16 %v3022
    %v4191 = vunpack.c.l.b16 %v3023
    %v4192 = vunpack.c.h.b16 %v3023
    %v4193 = vunpack.c.l.b16 %v3024
    %v4194 = vunpack.c.l.b16 %v3025
    %v4195 = vunpack.c.h.b16 %v3025
    %v4196 = vunpack.c.l.b16 %v3026
    %v4197 = vunpack.c.h.b16 %v3026
    %v4198 = vunpack.c.l.b16 %v3027
    %v4199 = vunpack.c.h.b16 %v3027
    %v4200 = vunpack.c.l.b16 %v3028
    %v4201 = vunpack.c.l.b16 %v3029
    %v4202 = vunpack.c.h.b16 %v3029
    %v4203 = vunpack.c.l.b16 %v3030
    %v4204 = vunpack.c.h.b16 %v3030
    %v4205 = vunpack.c.l.b16 %v3031
    %v4206 = vunpack.c.h.b16 %v3031
    %v4207 = vunpack.c.l.b16 %v3032
    %v4208 = vunpack.c.l.b16 %v3033
    %v4209 = vunpack.c.h.b16 %v3033
    %v4210 = vunpack.c.l.b16 %v3034
    %v4211 = vunpack.c.h.b16 %v3034
    %v4212 = vunpack.c.l.b16 %v3035
    %v4213 = vunpack.c.h.b16 %v3035
    %v4214 = vunpack.c.l.b16 %v3036
    %v4215 = vunpack.c.l.b16 %v3037
    %v4216 = vunpack.c.h.b16 %v3037
    %v4217 = vunpack.c.l.b16 %v3038
    %v4218 = vunpack.c.h.b16 %v3038
    %v4219 = vunpack.c.l.b16 %v3039
    %v4220 = vunpack.c.h.b16 %v3039
    %v4221 = vunpack.c.l.b16 %v3040
    %v4222 = vunpack.c.l.b16 %v3041
    %v4223 = vunpack.c.h.b16 %v3041
    %v4224 = vunpack.c.l.b16 %v3042
    %v4225 = vunpack.c.h.b16 %v3042
    %v4226 = vunpack.c.l.b16 %v3043
    %v4227 = vunpack.c.h.b16 %v3043
    %v4228 = vunpack.c.l.b16 %v3044
    %v4229 = vunpack.c.l.b16 %v3045
    %v4230 = vunpack.c.h.b16 %v3045
    %v4231 = vunpack.c.l.b16 %v3046
    %v4232 = vunpack.c.h.b16 %v3046
    %v4233 = vunpack.c.l.b16 %v3047
    %v4234 = vunpack.c.h.b16 %v3047
    %v4235 = vunpack.c.l.b16 %v3048
    %v4236 = vunpack.c.l.b16 %v3049
    %v4237 = vunpack.c.h.b16 %v3049
    %v4238 = vunpack.c.l.b16 %v3050
    %v4239 = vunpack.c.h.b16 %v3050
    %v4240 = vunpack.c.l.b16 %v3051
    %v4241 = vunpack.c.h.b16 %v3051
    %v4242 = vunpack.c.l.b16 %v3052
    %v4243 = vunpack.c.l.b16 %v3053
    %v4244 = vunpack.c.h.b16 %v3053
    %v4245 = vunpack.c.l.b16 %v3054
    %v4246 = vunpack.c.h.b16 %v3054
    %v4247 = vunpack.c.l.b16 %v3055
    %v4248 = vunpack.c.h.b16 %v3055
    %v4249 = vunpack.c.l.b16 %v3056
    %v4250 = vunpack.c.l.b16 %v3057
    %v4251 = vunpack.c.h.b16 %v3057
    %v4252 = vunpack.c.l.b16 %v3058
    %v4253 = vunpack.c.h.b16 %v3058
    %v4254 = vunpack.c.l.b16 %v3059
    %v4255 = vunpack.c.h.b16 %v3059
    %v4256 = vunpack.c.l.b16 %v3060
    %v4257 = vunpack.c.l.b16 %v3061
    %v4258 = vunpack.c.h.b16 %v3061
    %v4259 = vunpack.c.l.b16 %v3062
    %v4260 = vunpack.c.h.b16 %v3062
    %v4261 = vunpack.c.l.b16 %v3063
    %v4262 = vunpack.c.h.b16 %v3063
    %v4263 = vunpack.c.l.b16 %v3064
    %v4264 = vunpack.c.l.b16 %v3065
    %v4265 = vunpack.c.h.b16 %v3065
    %v4266 = vunpack.c.l.b16 %v3066
    %v4267 = vunpack.c.h.b16 %v3066
    %v4268 = vunpack.c.l.b16 %v3067
    %v4269 = vunpack.c.h.b16 %v3067
    %v4270 = vunpack.c.l.b16 %v3068
    %v4271 = vunpack.c.l.b16 %v3069
    %v4272 = vunpack.c.h.b16 %v3069
    %v4273 = vunpack.c.l.b16 %v3070
    %v4274 = vunpack.c.h.b16 %v3070
    %v4275 = vunpack.c.l.b16 %v3071
    %v4276 = vunpack.c.h.b16 %v3071
    %v4277 = vunpack.c.l.b16 %v3072
    %v4278 = vunpack.c.l.b16 %v3073
    %v4279 = vunpack.c.h.b16 %v3073
    %v4280 = vunpack.c.l.b16 %v3074
    %v4281 = vunpack.c.h.b16 %v3074
    %v4282 = vunpack.c.l.b16 %v3075
    %v4283 = vunpack.c.h.b16 %v3075
    %v4284 = vunpack.c.l.b16 %v3076
    %v4285 = vunpack.c.l.b16 %v3077
    %v4286 = vunpack.c.h.b16 %v3077
    %v4287 = vunpack.c.l.b16 %v3078
    %v4288 = vunpack.c.h.b16 %v3078
    %v4289 = vunpack.c.l.b16 %v3079
    %v4290 = vunpack.c.h.b16 %v3079
    %v4291 = vunpack.c.l.b16 %v3080
    %v4292 = vunpack.c.l.b16 %v3081
    %v4293 = vunpack.c.h.b16 %v3081
    %v4294 = vunpack.c.l.b16 %v3082
    %v4295 = vunpack.c.h.b16 %v3082
    %v4296 = vunpack.c.l.b16 %v3083
    %v4297 = vunpack.c.h.b16 %v3083
    %v4298 = vunpack.c.l.b16 %v3084
    %v4299 = vunpack.c.l.b16 %v3085
    %v4300 = vunpack.c.h.b16 %v3085
    %v4301 = vunpack.c.l.b16 %v3086
    %v4302 = vunpack.c.h.b16 %v3086
    %v4303 = vunpack.c.l.b16 %v3087
    %v4304 = vunpack.c.h.b16 %v3087
    %v4305 = vunpack.c.l.b16 %v3088
    %v4306 = vunpack.c.l.b16 %v3089
    %v4307 = vunpack.c.h.b16 %v3089
    %v4308 = vunpack.c.l.b16 %v3090
    %v4309 = vunpack.c.h.b16 %v3090
    %v4310 = vunpack.c.l.b16 %v3091
    %v4311 = vunpack.c.h.b16 %v3091
    %v4312 = vunpack.c.l.b16 %v3092
    %v4313 = vunpack.c.l.b16 %v3093
    %v4314 = vunpack.c.h.b16 %v3093
    %v4315 = vunpack.c.l.b16 %v3094
    %v4316 = vunpack.c.h.b16 %v3094
    %v4317 = vunpack.c.l.b16 %v3095
    %v4318 = vunpack.c.h.b16 %v3095
    %v4319 = vunpack.c.l.b16 %v3096
    %v4320 = vunpack.c.l.b16 %v3097
    %v4321 = vunpack.c.h.b16 %v3097
    %v4322 = vunpack.c.l.b16 %v3098
    %v4323 = vunpack.c.h.b16 %v3098
    %v4324 = vunpack.c.l.b16 %v3099
    %v4325 = vunpack.c.h.b16 %v3099
    %v4326 = vunpack.c.l.b16 %v3100
    %v4327 = vunpack.c.l.b16 %v3101
    %v4328 = vunpack.c.h.b16 %v3101
    %v4329 = vunpack.c.l.b16 %v3102
    %v4330 = vunpack.c.h.b16 %v3102
    %v4331 = vunpack.c.l.b16 %v3103
    %v4332 = vunpack.c.h.b16 %v3103
    %v4333 = vunpack.c.l.b16 %v3104
    %v4334 = vunpack.c.l.b16 %v3105
    %v4335 = vunpack.c.h.b16 %v3105
    %v4336 = vunpack.c.l.b16 %v3106
    %v4337 = vunpack.c.h.b16 %v3106
    %v4338 = vunpack.c.l.b16 %v3107
    %v4339 = vunpack.c.h.b16 %v3107
    %v4340 = vunpack.c.l.b16 %v3108
    %v4341 = vunpack.c.l.b16 %v3109
    %v4342 = vunpack.c.h.b16 %v3109
    %v4343 = vunpack.c.l.b16 %v3110
    %v4344 = vunpack.c.h.b16 %v3110
    %v4345 = vunpack.c.l.b16 %v3111
    %v4346 = vunpack.c.h.b16 %v3111
    %v4347 = vunpack.c.l.b16 %v3112
    %v4348 = vunpack.c.l.b16 %v3113
    %v4349 = vunpack.c.h.b16 %v3113
    %v4350 = vunpack.c.l.b16 %v3114
    %v4351 = vunpack.c.h.b16 %v3114
    %v4352 = vunpack.c.l.b16 %v3115
    %v4353 = vunpack.c.h.b16 %v3115
    %v4354 = vunpack.c.l.b16 %v3116
    %v4355 = vunpack.c.l.b16 %v3117
    %v4356 = vunpack.c.h.b16 %v3117
    %v4357 = vunpack.c.l.b16 %v3118
    %v4358 = vunpack.c.h.b16 %v3118
    %v4359 = vunpack.c.l.b16 %v3119
    %v4360 = vunpack.c.h.b16 %v3119
    %v4361 = vunpack.c.l.b16 %v3120
    %v4362 = vunpack.c.l.b16 %v3121
    %v4363 = vunpack.c.h.b16 %v3121
    %v4364 = vunpack.c.l.b16 %v3122
    %v4365 = vunpack.c.h.b16 %v3122
    %v4366 = vunpack.c.l.b16 %v3123
    %v4367 = vunpack.c.h.b16 %v3123
    %v4368 = vunpack.c.l.b16 %v3124
    %v4369 = vunpack.c.l.b16 %v3125
    %v4370 = vunpack.c.h.b16 %v3125
    %v4371 = vunpack.c.l.b16 %v3126
    %v4372 = vunpack.c.h.b16 %v3126
    %v4373 = vunpack.c.l.b16 %v3127
    %v4374 = vunpack.c.h.b16 %v3127
    %v4375 = vunpack.c.l.b16 %v3128
    %v4376 = vunpack.c.l.b16 %v3129
    %v4377 = vunpack.c.h.b16 %v3129
    %v4378 = vunpack.c.l.b16 %v3130
    %v4379 = vunpack.c.h.b16 %v3130
    %v4380 = vunpack.c.l.b16 %v3131
    %v4381 = vunpack.c.h.b16 %v3131
    %v4382 = vunpack.c.l.b16 %v3132
    %v4383 = vunpack.c.l.b16 %v3133
    %v4384 = vunpack.c.h.b16 %v3133
    %v4385 = vunpack.c.l.b16 %v3134
    %v4386 = vunpack.c.h.b16 %v3134
    %v4387 = vunpack.c.l.b16 %v3135
    %v4388 = vunpack.c.h.b16 %v3135
    %v4389 = vunpack.c.l.b16 %v3136
    %v4390 = vunpack.c.l.b16 %v3137
    %v4391 = vunpack.c.h.b16 %v3137
    %v4392 = vunpack.c.l.b16 %v3138
    %v4393 = vunpack.c.h.b16 %v3138
    %v4394 = vunpack.c.l.b16 %v3139
    %v4395 = vunpack.c.h.b16 %v3139
    %v4396 = vunpack.c.l.b16 %v3140
    %v4397 = vunpack.c.l.b16 %v3141
    %v4398 = vunpack.c.h.b16 %v3141
    %v4399 = vunpack.c.l.b16 %v3142
    %v4400 = vunpack.c.h.b16 %v3142
    %v4401 = vunpack.c.l.b16 %v3143
    %v4402 = vunpack.c.h.b16 %v3143
    %v4403 = vunpack.c.l.b16 %v3144
    %v4404 = vunpack.c.l.b16 %v3145
    %v4405 = vunpack.c.h.b16 %v3145
    %v4406 = vunpack.c.l.b16 %v3146
    %v4407 = vunpack.c.h.b16 %v3146
    %v4408 = vunpack.c.l.b16 %v3147
    %v4409 = vunpack.c.h.b16 %v3147
    %v4410 = vunpack.c.l.b16 %v3148
    %v4411 = vunpack.c.l.b16 %v3149
    %v4412 = vunpack.c.h.b16 %v3149
    %v4413 = vunpack.c.l.b16 %v3150
    %v4414 = vunpack.c.h.b16 %v3150
    %v4415 = vunpack.c.l.b16 %v3151
    %v4416 = vunpack.c.h.b16 %v3151
    %v4417 = vunpack.c.l.b16 %v3152
    %v4418 = vunpack.c.l.b16 %v3153
    %v4419 = vunpack.c.h.b16 %v3153
    %v4420 = vunpack.c.l.b16 %v3154
    %v4421 = vunpack.c.h.b16 %v3154
    %v4422 = vunpack.c.l.b16 %v3155
    %v4423 = vunpack.c.h.b16 %v3155
    %v4424 = vunpack.c.l.b16 %v3156
    %v4425 = vunpack.c.l.b16 %v3157
    %v4426 = vunpack.c.h.b16 %v3157
    %v4427 = vunpack.c.l.b16 %v3158
    %v4428 = vunpack.c.h.b16 %v3158
    %v4429 = vunpack.c.l.b16 %v3159
    %v4430 = vunpack.c.h.b16 %v3159
    %v4431 = vunpack.c.l.b16 %v3160
    %v4432 = vunpack.c.l.b16 %v3161
    %v4433 = vunpack.c.h.b16 %v3161
    %v4434 = vunpack.c.l.b16 %v3162
    %v4435 = vunpack.c.h.b16 %v3162
    %v4436 = vunpack.c.l.b16 %v3163
    %v4437 = vunpack.c.h.b16 %v3163
    %v4438 = vunpack.c.l.b16 %v3164
    %v4439 = vunpack.c.l.b16 %v3165
    %v4440 = vunpack.c.h.b16 %v3165
    %v4441 = vunpack.c.l.b16 %v3166
    %v4442 = vunpack.c.h.b16 %v3166
    %v4443 = vunpack.c.l.b16 %v3167
    %v4444 = vunpack.c.h.b16 %v3167
    %v4445 = vunpack.c.l.b16 %v3168
    %v4446 = vunpack.c.l.b16 %v3169
    %v4447 = vunpack.c.h.b16 %v3169
    %v4448 = vunpack.c.l.b16 %v3170
    %v4449 = vunpack.c.h.b16 %v3170
    %v4450 = vunpack.c.l.b16 %v3171
    %v4451 = vunpack.c.h.b16 %v3171
    %v4452 = vunpack.c.l.b16 %v3172
    %v4453 = vunpack.c.l.b16 %v3173
    %v4454 = vunpack.c.h.b16 %v3173
    %v4455 = vunpack.c.l.b16 %v3174
    %v4456 = vunpack.c.h.b16 %v3174
    %v4457 = vunpack.c.l.b16 %v3175
    %v4458 = vunpack.c.h.b16 %v3175
    %v4459 = vunpack.c.l.b16 %v3176
    %v4460 = vunpack.c.l.b16 %v3177
    %v4461 = vunpack.c.h.b16 %v3177
    %v4462 = vunpack.c.l.b16 %v3178
    %v4463 = vunpack.c.h.b16 %v3178
    %v4464 = vunpack.c.l.b16 %v3179
    %v4465 = vunpack.c.h.b16 %v3179
    %v4466 = vunpack.c.l.b16 %v3180
    %v4467 = vunpack.c.l.b16 %v3181
    %v4468 = vunpack.c.h.b16 %v3181
    %v4469 = vunpack.c.l.b16 %v3182
    %v4470 = vunpack.c.h.b16 %v3182
    %v4471 = vunpack.c.l.b16 %v3183
    %v4472 = vunpack.c.h.b16 %v3183
    %v4473 = vunpack.c.l.b16 %v3184
    %v4474 = vunpack.c.l.b16 %v3185
    %v4475 = vunpack.c.h.b16 %v3185
    %v4476 = vunpack.c.l.b16 %v3186
    %v4477 = vunpack.c.h.b16 %v3186
    %v4478 = vunpack.c.l.b16 %v3187
    %v4479 = vunpack.c.h.b16 %v3187
    %v4480 = vunpack.c.l.b16 %v3188
    %v4481 = vunpack.c.l.b16 %v3189
    %v4482 = vunpack.c.h.b16 %v3189
    %v4483 = vunpack.c.l.b16 %v3190
    %v4484 = vunpack.c.h.b16 %v3190
    %v4485 = vunpack.c.l.b16 %v3191
    %v4486 = vunpack.c.h.b16 %v3191
    %v4487 = vunpack.c.l.b16 %v3192
    %v4488 = vunpack.c.l.b16 %v3193
    %v4489 = vunpack.c.h.b16 %v3193
    %v4490 = vunpack.c.l.b16 %v3194
    %v4491 = vunpack.c.h.b16 %v3194
    %v4492 = vunpack.c.l.b16 %v3195
    %v4493 = vunpack.c.h.b16 %v3195
    %v4494 = vunpack.c.l.b16 %v3196
    %v4495 = vunpack.c.l.b16 %v3197
    %v4496 = vunpack.c.h.b16 %v3197
    %v4497 = vunpack.c.l.b16 %v3198
    %v4498 = vunpack.c.h.b16 %v3198
    %v4499 = vunpack.c.l.b16 %v3199
    %v4500 = vunpack.c.h.b16 %v3199
    %v4501 = vunpack.c.l.b16 %v3200
    %v4502 = vunpack.c.l.b16 %v3201
    %v4503 = vunpack.c.h.b16 %v3201
    %v4504 = vunpack.c.l.b16 %v3202
    %v4505 = vunpack.c.h.b16 %v3202
    %v4506 = vunpack.c.l.b16 %v3203
    %v4507 = vunpack.c.h.b16 %v3203
    %v4508 = vunpack.c.l.b16 %v3204
    %v4509 = vunpack.c.l.b16 %v3205
    %v4510 = vunpack.c.h.b16 %v3205
    %v4511 = vunpack.c.l.b16 %v3206
    %v4512 = vunpack.c.h.b16 %v3206
    %v4513 = vunpack.c.l.b16 %v3207
    %v4514 = vunpack.c.h.b16 %v3207
    %v4515 = vunpack.c.l.b16 %v3208
    %v4516 = vunpack.c.l.b16 %v3209
    %v4517 = vunpack.c.h.b16 %v3209
    %v4518 = vunpack.c.l.b16 %v3210
    %v4519 = vunpack.c.h.b16 %v3210
    %v4520 = vunpack.c.l.b16 %v3211
    %v4521 = vunpack.c.h.b16 %v3211
    %v4522 = vunpack.c.l.b16 %v3212
    %v4523 = vunpack.c.l.b16 %v3213
    %v4524 = vunpack.c.h.b16 %v3213
    %v4525 = vunpack.c.l.b16 %v3214
    %v4526 = vunpack.c.h.b16 %v3214
    %v4527 = vunpack.c.l.b16 %v3215
    %v4528 = vunpack.c.h.b16 %v3215
    %v4529 = vunpack.c.l.b16 %v3216
    %v4530 = vunpack.c.l.b16 %v3217
    %v4531 = vunpack.c.h.b16 %v3217
    %v4532 = vunpack.c.l.b16 %v3218
    %v4533 = vunpack.c.h.b16 %v3218
    %v4534 = vunpack.c.l.b16 %v3219
    %v4535 = vunpack.c.h.b16 %v3219
    %v4536 = vunpack.c.l.b16 %v3220
    %v4537 = vunpack.c.l.b16 %v3221
    %v4538 = vunpack.c.h.b16 %v3221
    %v4539 = vunpack.c.l.b16 %v3222
    %v4540 = vunpack.c.h.b16 %v3222
    %v4541 = vunpack.c.l.b16 %v3223
    %v4542 = vunpack.c.h.b16 %v3223
    %v4543 = vunpack.c.l.b16 %v3224
    %v4544 = vunpack.c.l.b16 %v3225
    %v4545 = vunpack.c.h.b16 %v3225
    %v4546 = vunpack.c.l.b16 %v3226
    %v4547 = vunpack.c.h.b16 %v3226
    %v4548 = vunpack.c.l.b16 %v3227
    %v4549 = vunpack.c.h.b16 %v3227
    %v4550 = vunpack.c.l.b16 %v3228
    %v4551 = vunpack.c.l.b16 %v3229
    %v4552 = vunpack.c.h.b16 %v3229
    %v4553 = vunpack.c.l.b16 %v3230
    %v4554 = vunpack.c.h.b16 %v3230
    %v4555 = vunpack.c.l.b16 %v3231
    %v4556 = vunpack.c.h.b16 %v3231
    %v4557 = vunpack.c.l.b16 %v3232
    %v4558 = vunpack.c.l.b16 %v3233
    %v4559 = vunpack.c.h.b16 %v3233
    %v4560 = vunpack.c.l.b16 %v3234
    %v4561 = vunpack.c.h.b16 %v3234
    %v4562 = vunpack.c.l.b16 %v3235
    %v4563 = vunpack.c.h.b16 %v3235
    %v4564 = vunpack.c.l.b16 %v3236
    %v4565 = vunpack.c.l.b16 %v3237
    %v4566 = vunpack.c.h.b16 %v3237
    %v4567 = vunpack.c.l.b16 %v3238
    %v4568 = vunpack.c.h.b16 %v3238
    %v4569 = vunpack.c.l.b16 %v3239
    %v4570 = vunpack.c.h.b16 %v3239
    %v4571 = vunpack.c.l.b16 %v3240
    %v4572 = vunpack.c.l.b16 %v3241
    %v4573 = vunpack.c.h.b16 %v3241
    %v4574 = vunpack.c.l.b16 %v3242
    %v4575 = vunpack.c.h.b16 %v3242
    %v4576 = vunpack.c.l.b16 %v3243
    %v4577 = vunpack.c.h.b16 %v3243
    %v4578 = vunpack.c.l.b16 %v3244
    %v4579 = vunpack.c.l.b16 %v3245
    %v4580 = vunpack.c.h.b16 %v3245
    %v4581 = vunpack.c.l.b16 %v3246
    %v4582 = vunpack.c.h.b16 %v3246
    %v4583 = vunpack.c.l.b16 %v3247
    %v4584 = vunpack.c.h.b16 %v3247
    %v4585 = vunpack.c.l.b16 %v3248
    %v4586 = vunpack.c.l.b16 %v3249
    %v4587 = vunpack.c.h.b16 %v3249
    %v4588 = vunpack.c.l.b16 %v3250
    %v4589 = vunpack.c.h.b16 %v3250
    %v4590 = vunpack.c.l.b16 %v3251
    %v4591 = vunpack.c.h.b16 %v3251
    %v4592 = vunpack.c.l.b16 %v3252
    %v4593 = vunpack.c.l.b16 %v3253
    %v4594 = vunpack.c.h.b16 %v3253
    %v4595 = vunpack.c.l.b16 %v3254
    %v4596 = vunpack.c.h.b16 %v3254
    %v4597 = vunpack.c.l.b16 %v3255
    %v4598 = vunpack.c.h.b16 %v3255
    %v4599 = vunpack.c.l.b16 %v3256
    %v4600 = vunpack.c.l.b16 %v3257
    %v4601 = vunpack.c.h.b16 %v3257
    %v4602 = vunpack.c.l.b16 %v3258
    %v4603 = vunpack.c.h.b16 %v3258
    %v4604 = vunpack.c.l.b16 %v3259
    %v4605 = vunpack.c.h.b16 %v3259
    %v4606 = vunpack.c.l.b16 %v3260
    %v4607 = vunpack.c.l.b16 %v3261
    %v4608 = vunpack.c.h.b16 %v3261
    %v4609 = vunpack.c.l.b16 %v3262
    %v4610 = vunpack.c.h.b16 %v3262
    %v4611 = vunpack.c.l.b16 %v3263
    %v4612 = vunpack.c.h.b16 %v3263
    %v4613 = vunpack.c.l.b16 %v3264
    %v4614 = vunpack.c.l.b16 %v3265
    %v4615 = vunpack.c.h.b16 %v3265
    %v4616 = vunpack.c.l.b16 %v3266
    %v4617 = vunpack.c.h.b16 %v3266
    %v4618 = vunpack.c.l.b16 %v3267
    %v4619 = vunpack.c.h.b16 %v3267
    %v4620 = vunpack.c.l.b16 %v3268
    %v4621 = vunpack.c.l.b16 %v3269
    %v4622 = vunpack.c.h.b16 %v3269
    %v4623 = vunpack.c.l.b16 %v3270
    %v4624 = vunpack.c.h.b16 %v3270
    %v4625 = vunpack.c.l.b16 %v3271
    %v4626 = vunpack.c.h.b16 %v3271
    %v4627 = vunpack.c.l.b16 %v3272
    %v4628 = vunpack.c.l.b16 %v3273
    %v4629 = vunpack.c.h.b16 %v3273
    %v4630 = vunpack.c.l.b16 %v3274
    %v4631 = vunpack.c.h.b16 %v3274
    %v4632 = vunpack.c.l.b16 %v3275
    %v4633 = vunpack.c.h.b16 %v3275
    %v4634 = vunpack.c.l.b16 %v3276
    %v4635 = vunpack.c.l.b16 %v3277
    %v4636 = vunpack.c.h.b16 %v3277
    %v4637 = vunpack.c.l.b16 %v3278
    %v4638 = vunpack.c.h.b16 %v3278
    %v4639 = vunpack.c.l.b16 %v3279
    %v4640 = vunpack.c.h.b16 %v3279
    %v4641 = vunpack.c.l.b16 %v3280
    %v4642 = vunpack.c.l.b16 %v3281
    %v4643 = vunpack.c.h.b16 %v3281
    %v4644 = vunpack.c.l.b16 %v3282
    %v4645 = vunpack.c.h.b16 %v3282
    %v4646 = vunpack.c.l.b16 %v3283
    %v4647 = vunpack.c.h.b16 %v3283
    %v4648 = vunpack.c.l.b16 %v3284
    %v4649 = vunpack.c.l.b16 %v3285
    %v4650 = vunpack.c.h.b16 %v3285
    %v4651 = vunpack.c.l.b16 %v3286
    %v4652 = vunpack.c.h.b16 %v3286
    %v4653 = vunpack.c.l.b16 %v3287
    %v4654 = vunpack.c.h.b16 %v3287
    %v4655 = vunpack.c.l.b16 %v3288
    %v4656 = vunpack.c.l.b16 %v3289
    %v4657 = vunpack.c.h.b16 %v3289
    %v4658 = vunpack.c.l.b16 %v3290
    %v4659 = vunpack.c.h.b16 %v3290
    %v4660 = vunpack.c.l.b16 %v3291
    %v4661 = vunpack.c.h.b16 %v3291
    %v4662 = vunpack.c.l.b16 %v3292
    %v4663 = vunpack.c.l.b16 %v3293
    %v4664 = vunpack.c.h.b16 %v3293
    %v4665 = vunpack.c.l.b16 %v3294
    %v4666 = vunpack.c.h.b16 %v3294
    %v4667 = vunpack.c.l.b16 %v3295
    %v4668 = vunpack.c.h.b16 %v3295
    %v4669 = vunpack.c.l.b16 %v3296
    %v4670 = vunpack.c.l.b16 %v3297
    %v4671 = vunpack.c.h.b16 %v3297
    %v4672 = vunpack.c.l.b16 %v3298
    %v4673 = vunpack.c.h.b16 %v3298
    %v4674 = vunpack.c.l.b16 %v3299
    %v4675 = vunpack.c.h.b16 %v3299
    %v4676 = vunpack.c.l.b16 %v3300
    %v4677 = vunpack.c.l.b16 %v3301
    %v4678 = vunpack.c.h.b16 %v3301
    %v4679 = vunpack.c.l.b16 %v3302
    %v4680 = vunpack.c.h.b16 %v3302
    %v4681 = vunpack.c.l.b16 %v3303
    %v4682 = vunpack.c.h.b16 %v3303
    %v4683 = vunpack.c.l.b16 %v3304
    %v4684 = vunpack.c.l.b16 %v3305
    %v4685 = vunpack.c.h.b16 %v3305
    %v4686 = vunpack.c.l.b16 %v3306
    %v4687 = vunpack.c.h.b16 %v3306
    %v4688 = vunpack.c.l.b16 %v3307
    %v4689 = vunpack.c.h.b16 %v3307
    %v4690 = vunpack.c.l.b16 %v3308
    %v4691 = vunpack.c.l.b16 %v3309
    %v4692 = vunpack.c.h.b16 %v3309
    %v4693 = vunpack.c.l.b16 %v3310
    %v4694 = vunpack.c.h.b16 %v3310
    %v4695 = vunpack.c.l.b16 %v3311
    %v4696 = vunpack.c.h.b16 %v3311
    %v4697 = vunpack.c.l.b16 %v3312
    %v4698 = vunpack.c.l.b16 %v3313
    %v4699 = vunpack.c.h.b16 %v3313
    %v4700 = vunpack.c.l.b16 %v3314
    %v4701 = vunpack.c.h.b16 %v3314
    %v4702 = vunpack.c.l.b16 %v3315
    %v4703 = vunpack.c.h.b16 %v3315
    %v4704 = vunpack.c.l.b16 %v3316
    %v4705 = vunpack.c.l.b16 %v3317
    %v4706 = vunpack.c.h.b16 %v3317
    %v4707 = vunpack.c.l.b16 %v3318
    %v4708 = vunpack.c.h.b16 %v3318
    %v4709 = vunpack.c.l.b16 %v3319
    %v4710 = vunpack.c.h.b16 %v3319
    %v4711 = vunpack.c.l.b16 %v3320
    %v4712 = vunpack.c.l.b16 %v3321
    %v4713 = vunpack.c.h.b16 %v3321
    %v4714 = vunpack.c.l.b16 %v3322
    %v4715 = vunpack.c.h.b16 %v3322
    %v4716 = vunpack.c.l.b16 %v3323
    %v4717 = vunpack.c.h.b16 %v3323
    %v4718 = vunpack.c.l.b16 %v3324
    %v4719 = vunpack.c.l.b16 %v3325
    %v4720 = vunpack.c.h.b16 %v3325
    %v4721 = vunpack.c.l.b16 %v3326
    %v4722 = vunpack.c.h.b16 %v3326
    %v4723 = vunpack.c.l.b16 %v3327
    %v4724 = vunpack.c.h.b16 %v3327
    %v4725 = vunpack.c.l.b16 %v3328
    %v4726 = vunpack.c.l.b16 %v3329
    %v4727 = vunpack.c.h.b16 %v3329
    %v4728 = vunpack.c.l.b16 %v3330
    %v4729 = vunpack.c.h.b16 %v3330
    %v4730 = vunpack.c.l.b16 %v3331
    %v4731 = vunpack.c.h.b16 %v3331
    %v4732 = vunpack.c.l.b16 %v3332
    %v4733 = vunpack.c.l.b16 %v3333
    %v4734 = vunpack.c.h.b16 %v3333
    %v4735 = vunpack.c.l.b16 %v3334
    %v4736 = vunpack.c.h.b16 %v3334
    %v4737 = vunpack.c.l.b16 %v3335
    %v4738 = vunpack.c.h.b16 %v3335
    %v4739 = vunpack.c.l.b16 %v3336
    %v4740 = vunpack.c.l.b16 %v3337
    %v4741 = vunpack.c.h.b16 %v3337
    %v4742 = vunpack.c.l.b16 %v3338
    %v4743 = vunpack.c.h.b16 %v3338
    %v4744 = vunpack.c.l.b16 %v3339
    %v4745 = vunpack.c.h.b16 %v3339
    %v4746 = vunpack.c.l.b16 %v3340
    %v4747 = vunpack.c.l.b16 %v3341
    %v4748 = vunpack.c.h.b16 %v3341
    %v4749 = vunpack.c.l.b16 %v3342
    %v4750 = vunpack.c.h.b16 %v3342
    %v4751 = vunpack.c.l.b16 %v3343
    %v4752 = vunpack.c.h.b16 %v3343
    %v4753 = vunpack.c.l.b16 %v3344
    %v4754 = vunpack.c.l.b16 %v3345
    %v4755 = vunpack.c.h.b16 %v3345
    %v4756 = vunpack.c.l.b16 %v3346
    %v4757 = vunpack.c.h.b16 %v3346
    %v4758 = vunpack.c.l.b16 %v3347
    %v4759 = vunpack.c.h.b16 %v3347
    %v4760 = vunpack.c.l.b16 %v3348
    %v4761 = vunpack.c.l.b16 %v3349
    %v4762 = vunpack.c.h.b16 %v3349
    %v4763 = vunpack.c.l.b16 %v3350
    %v4764 = vunpack.c.h.b16 %v3350
    %v4765 = vunpack.c.l.b16 %v3351
    %v4766 = vunpack.c.h.b16 %v3351
    %v4767 = vunpack.c.l.b16 %v3352
    %v4768 = vunpack.c.l.b16 %v3353
    %v4769 = vunpack.c.h.b16 %v3353
    %v4770 = vunpack.c.l.b16 %v3354
    %v4771 = vunpack.c.h.b16 %v3354
    %v4772 = vunpack.c.l.b16 %v3355
    %v4773 = vunpack.c.h.b16 %v3355
    %v4774 = vunpack.c.l.b16 %v3356
    %v4775 = vunpack.c.l.b16 %v3357
    %v4776 = vunpack.c.h.b16 %v3357
    %v4777 = vunpack.c.l.b16 %v3358
    %v4778 = vunpack.c.h.b16 %v3358
    %v4779 = vunpack.c.l.b16 %v3359
    %v4780 = vunpack.c.h.b16 %v3359
    %v4781 = vunpack.c.l.b16 %v3360
    %v4782 = vunpack.c.l.b16 %v3361
    %v4783 = vunpack.c.h.b16 %v3361
    %v4784 = vunpack.c.l.b16 %v3362
    %v4785 = vunpack.c.h.b16 %v3362
    %v4786 = vunpack.c.l.b16 %v3363
    %v4787 = vunpack.c.h.b16 %v3363
    %v4788 = vunpack.c.l.b16 %v3364
    %v4789 = vpack.c.b16 %v3900, %v3893
    %v4790 = vpack.c.b16 %v3901, %v3894
    %v4791 = vpack.c.b16 %v3902, %v3895
    %v4792 = vpack.c.b16 %v3903, %v3896
    %v4793 = vpack.c.b16 %v3904, %v3897
    %v4794 = vpack.c.b16 %v3905, %v3898
    %v4795 = vpack.c.b16 %v3906, %v3899
    %v4796 = vpack.c.b16 %v3914, %v3907
    %v4797 = vpack.c.b16 %v3915, %v3908
    %v4798 = vpack.c.b16 %v3916, %v3909
    %v4799 = vpack.c.b16 %v3917, %v3910
    %v4800 = vpack.c.b16 %v3918, %v3911
    %v4801 = vpack.c.b16 %v3919, %v3912
    %v4802 = vpack.c.b16 %v3920, %v3913
    %v4803 = vpack.c.b16 %v3928, %v3921
    %v4804 = vpack.c.b16 %v3929, %v3922
    %v4805 = vpack.c.b16 %v3930, %v3923
    %v4806 = vpack.c.b16 %v3931, %v3924
    %v4807 = vpack.c.b16 %v3932, %v3925
    %v4808 = vpack.c.b16 %v3933, %v3926
    %v4809 = vpack.c.b16 %v3934, %v3927
    %v4810 = vpack.c.b16 %v3942, %v3935
    %v4811 = vpack.c.b16 %v3943, %v3936
    %v4812 = vpack.c.b16 %v3944, %v3937
    %v4813 = vpack.c.b16 %v3945, %v3938
    %v4814 = vpack.c.b16 %v3946, %v3939
    %v4815 = vpack.c.b16 %v3947, %v3940
    %v4816 = vpack.c.b16 %v3948, %v3941
    %v4817 = vpack.c.b16 %v3956, %v3949
    %v4818 = vpack.c.b16 %v3957, %v3950
    %v4819 = vpack.c.b16 %v3958, %v3951
    %v4820 = vpack.c.b16 %v3959, %v3952
    %v4821 = vpack.c.b16 %v3960, %v3953
    %v4822 = vpack.c.b16 %v3961, %v3954
    %v4823 = vpack.c.b16 %v3962, %v3955
    %v4824 = vpack.c.b16 %v3970, %v3963
    %v4825 = vpack.c.b16 %v3971, %v3964
    %v4826 = vpack.c.b16 %v3972, %v3965
    %v4827 = vpack.c.b16 %v3973, %v3966
    %v4828 = vpack.c.b16 %v3974, %v3967
    %v4829 = vpack.c.b16 %v3975, %v3968
    %v4830 = vpack.c.b16 %v3976, %v3969
    %v4831 = vpack.c.b16 %v3984, %v3977
    %v4832 = vpack.c.b16 %v3985, %v3978
    %v4833 = vpack.c.b16 %v3986, %v3979
    %v4834 = vpack.c.b16 %v3987, %v3980
    %v4835 = vpack.c.b16 %v3988, %v3981
    %v4836 = vpack.c.b16 %v3989, %v3982
    %v4837 = vpack.c.b16 %v3990, %v3983
    %v4838 = vpack.c.b16 %v3998, %v3991
    %v4839 = vpack.c.b16 %v3999, %v3992
    %v4840 = vpack.c.b16 %v4000, %v3993
    %v4841 = vpack.c.b16 %v4001, %v3994
    %v4842 = vpack.c.b16 %v4002, %v3995
    %v4843 = vpack.c.b16 %v4003, %v3996
    %v4844 = vpack.c.b16 %v4004, %v3997
    %v4845 = vpack.c.b16 %v4012, %v4005
    %v4846 = vpack.c.b16 %v4013, %v4006
    %v4847 = vpack.c.b16 %v4014, %v4007
    %v4848 = vpack.c.b16 %v4015, %v4008
    %v4849 = vpack.c.b16 %v4016, %v4009
    %v4850 = vpack.c.b16 %v4017, %v4010
    %v4851 = vpack.c.b16 %v4018, %v4011
    %v4852 = vpack.c.b16 %v4026, %v4019
    %v4853 = vpack.c.b16 %v4027, %v4020
    %v4854 = vpack.c.b16 %v4028, %v4021
    %v4855 = vpack.c.b16 %v4029, %v4022
    %v4856 = vpack.c.b16 %v4030, %v4023
    %v4857 = vpack.c.b16 %v4031, %v4024
    %v4858 = vpack.c.b16 %v4032, %v4025
    %v4859 = vpack.c.b16 %v4040, %v4033
    %v4860 = vpack.c.b16 %v4041, %v4034
    %v4861 = vpack.c.b16 %v4042, %v4035
    %v4862 = vpack.c.b16 %v4043, %v4036
    %v4863 = vpack.c.b16 %v4044, %v4037
    %v4864 = vpack.c.b16 %v4045, %v4038
    %v4865 = vpack.c.b16 %v4046, %v4039
    %v4866 = vpack.c.b16 %v4054, %v4047
    %v4867 = vpack.c.b16 %v4055, %v4048
    %v4868 = vpack.c.b16 %v4056, %v4049
    %v4869 = vpack.c.b16 %v4057, %v4050
    %v4870 = vpack.c.b16 %v4058, %v4051
    %v4871 = vpack.c.b16 %v4059, %v4052
    %v4872 = vpack.c.b16 %v4060, %v4053
    %v4873 = vpack.c.b16 %v4068, %v4061
    %v4874 = vpack.c.b16 %v4069, %v4062
    %v4875 = vpack.c.b16 %v4070, %v4063
    %v4876 = vpack.c.b16 %v4071, %v4064
    %v4877 = vpack.c.b16 %v4072, %v4065
    %v4878 = vpack.c.b16 %v4073, %v4066
    %v4879 = vpack.c.b16 %v4074, %v4067
    %v4880 = vpack.c.b16 %v4082, %v4075
    %v4881 = vpack.c.b16 %v4083, %v4076
    %v4882 = vpack.c.b16 %v4084, %v4077
    %v4883 = vpack.c.b16 %v4085, %v4078
    %v4884 = vpack.c.b16 %v4086, %v4079
    %v4885 = vpack.c.b16 %v4087, %v4080
    %v4886 = vpack.c.b16 %v4088, %v4081
    %v4887 = vpack.c.b16 %v4096, %v4089
    %v4888 = vpack.c.b16 %v4097, %v4090
    %v4889 = vpack.c.b16 %v4098, %v4091
    %v4890 = vpack.c.b16 %v4099, %v4092
    %v4891 = vpack.c.b16 %v4100, %v4093
    %v4892 = vpack.c.b16 %v4101, %v4094
    %v4893 = vpack.c.b16 %v4102, %v4095
    %v4894 = vpack.c.b16 %v4110, %v4103
    %v4895 = vpack.c.b16 %v4111, %v4104
    %v4896 = vpack.c.b16 %v4112, %v4105
    %v4897 = vpack.c.b16 %v4113, %v4106
    %v4898 = vpack.c.b16 %v4114, %v4107
    %v4899 = vpack.c.b16 %v4115, %v4108
    %v4900 = vpack.c.b16 %v4116, %v4109
    %v4901 = vpack.c.b16 %v4124, %v4117
    %v4902 = vpack.c.b16 %v4125, %v4118
    %v4903 = vpack.c.b16 %v4126, %v4119
    %v4904 = vpack.c.b16 %v4127, %v4120
    %v4905 = vpack.c.b16 %v4128, %v4121
    %v4906 = vpack.c.b16 %v4129, %v4122
    %v4907 = vpack.c.b16 %v4130, %v4123
    %v4908 = vpack.c.b16 %v4138, %v4131
    %v4909 = vpack.c.b16 %v4139, %v4132
    %v4910 = vpack.c.b16 %v4140, %v4133
    %v4911 = vpack.c.b16 %v4141, %v4134
    %v4912 = vpack.c.b16 %v4142, %v4135
    %v4913 = vpack.c.b16 %v4143, %v4136
    %v4914 = vpack.c.b16 %v4144, %v4137
    %v4915 = vpack.c.b16 %v4152, %v4145
    %v4916 = vpack.c.b16 %v4153, %v4146
    %v4917 = vpack.c.b16 %v4154, %v4147
    %v4918 = vpack.c.b16 %v4155, %v4148
    %v4919 = vpack.c.b16 %v4156, %v4149
    %v4920 = vpack.c.b16 %v4157, %v4150
    %v4921 = vpack.c.b16 %v4158, %v4151
    %v4922 = vpack.c.b16 %v4166, %v4159
    %v4923 = vpack.c.b16 %v4167, %v4160
    %v4924 = vpack.c.b16 %v4168, %v4161
    %v4925 = vpack.c.b16 %v4169, %v4162
    %v4926 = vpack.c.b16 %v4170, %v4163
    %v4927 = vpack.c.b16 %v4171, %v4164
    %v4928 = vpack.c.b16 %v4172, %v4165
    %v4929 = vpack.c.b16 %v4180, %v4173
    %v4930 = vpack.c.b16 %v4181, %v4174
    %v4931 = vpack.c.b16 %v4182, %v4175
    %v4932 = vpack.c.b16 %v4183, %v4176
    %v4933 = vpack.c.b16 %v4184, %v4177
    %v4934 = vpack.c.b16 %v4185, %v4178
    %v4935 = vpack.c.b16 %v4186, %v4179
    %v4936 = vpack.c.b16 %v4194, %v4187
    %v4937 = vpack.c.b16 %v4195, %v4188
    %v4938 = vpack.c.b16 %v4196, %v4189
    %v4939 = vpack.c.b16 %v4197, %v4190
    %v4940 = vpack.c.b16 %v4198, %v4191
    %v4941 = vpack.c.b16 %v4199, %v4192
    %v4942 = vpack.c.b16 %v4200, %v4193
    %v4943 = vpack.c.b16 %v4208, %v4201
    %v4944 = vpack.c.b16 %v4209, %v4202
    %v4945 = vpack.c.b16 %v4210, %v4203
    %v4946 = vpack.c.b16 %v4211, %v4204
    %v4947 = vpack.c.b16 %v4212, %v4205
    %v4948 = vpack.c.b16 %v4213, %v4206
    %v4949 = vpack.c.b16 %v4214, %v4207
    %v4950 = vpack.c.b16 %v4222, %v4215
    %v4951 = vpack.c.b16 %v4223, %v4216
    %v4952 = vpack.c.b16 %v4224, %v4217
    %v4953 = vpack.c.b16 %v4225, %v4218
    %v4954 = vpack.c.b16 %v4226, %v4219
    %v4955 = vpack.c.b16 %v4227, %v4220
    %v4956 = vpack.c.b16 %v4228, %v4221
    %v4957 = vpack.c.b16 %v4236, %v4229
    %v4958 = vpack.c.b16 %v4237, %v4230
    %v4959 = vpack.c.b16 %v4238, %v4231
    %v4960 = vpack.c.b16 %v4239, %v4232
    %v4961 = vpack.c.b16 %v4240, %v4233
    %v4962 = vpack.c.b16 %v4241, %v4234
    %v4963 = vpack.c.b16 %v4242, %v4235
    %v4964 = vpack.c.b16 %v4250, %v4243
    %v4965 = vpack.c.b16 %v4251, %v4244
    %v4966 = vpack.c.b16 %v4252, %v4245
    %v4967 = vpack.c.b16 %v4253, %v4246
    %v4968 = vpack.c.b16 %v4254, %v4247
    %v4969 = vpack.c.b16 %v4255, %v4248
    %v4970 = vpack.c.b16 %v4256, %v4249
    %v4971 = vpack.c.b16 %v4264, %v4257
    %v4972 = vpack.c.b16 %v4265, %v4258
    %v4973 = vpack.c.b16 %v4266, %v4259
    %v4974 = vpack.c.b16 %v4267, %v4260
    %v4975 = vpack.c.b16 %v4268, %v4261
    %v4976 = vpack.c.b16 %v4269, %v4262
    %v4977 = vpack.c.b16 %v4270, %v4263
    %v4978 = vpack.c.b16 %v4278, %v4271
    %v4979 = vpack.c.b16 %v4279, %v4272
    %v4980 = vpack.c.b16 %v4280, %v4273
    %v4981 = vpack.c.b16 %v4281, %v4274
    %v4982 = vpack.c.b16 %v4282, %v4275
    %v4983 = vpack.c.b16 %v4283, %v4276
    %v4984 = vpack.c.b16 %v4284, %v4277
    %v4985 = vpack.c.b16 %v4292, %v4285
    %v4986 = vpack.c.b16 %v4293, %v4286
    %v4987 = vpack.c.b16 %v4294, %v4287
    %v4988 = vpack.c.b16 %v4295, %v4288
    %v4989 = vpack.c.b16 %v4296, %v4289
    %v4990 = vpack.c.b16 %v4297, %v4290
    %v4991 = vpack.c.b16 %v4298, %v4291
    %v4992 = vpack.c.b16 %v4306, %v4299
    %v4993 = vpack.c.b16 %v4307, %v4300
    %v4994 = vpack.c.b16 %v4308, %v4301
    %v4995 = vpack.c.b16 %v4309, %v4302
    %v4996 = vpack.c.b16 %v4310, %v4303
    %v4997 = vpack.c.b16 %v4311, %v4304
    %v4998 = vpack.c.b16 %v4312, %v4305
    %v4999 = vpack.c.b16 %v4320, %v4313
    %v5000 = vpack.c.b16 %v4321, %v4314
    %v5001 = vpack.c.b16 %v4322, %v4315
    %v5002 = vpack.c.b16 %v4323, %v4316
    %v5003 = vpack.c.b16 %v4324, %v4317
    %v5004 = vpack.c.b16 %v4325, %v4318
    %v5005 = vpack.c.b16 %v4326, %v4319
    %v5006 = vpack.c.b16 %v4334, %v4327
    %v5007 = vpack.c.b16 %v4335, %v4328
    %v5008 = vpack.c.b16 %v4336, %v4329
    %v5009 = vpack.c.b16 %v4337, %v4330
    %v5010 = vpack.c.b16 %v4338, %v4331
    %v5011 = vpack.c.b16 %v4339, %v4332
    %v5012 = vpack.c.b16 %v4340, %v4333
    %v5013 = vpack.c.b16 %v4348, %v4341
    %v5014 = vpack.c.b16 %v4349, %v4342
    %v5015 = vpack.c.b16 %v4350, %v4343
    %v5016 = vpack.c.b16 %v4351, %v4344
    %v5017 = vpack.c.b16 %v4352, %v4345
    %v5018 = vpack.c.b16 %v4353, %v4346
    %v5019 = vpack.c.b16 %v4354, %v4347
    %v5020 = vpack.c.b16 %v4362, %v4355
    %v5021 = vpack.c.b16 %v4363, %v4356
    %v5022 = vpack.c.b16 %v4364, %v4357
    %v5023 = vpack.c.b16 %v4365, %v4358
    %v5024 = vpack.c.b16 %v4366, %v4359
    %v5025 = vpack.c.b16 %v4367, %v4360
    %v5026 = vpack.c.b16 %v4368, %v4361
    %v5027 = vpack.c.b16 %v4376, %v4369
    %v5028 = vpack.c.b16 %v4377, %v4370
    %v5029 = vpack.c.b16 %v4378, %v4371
    %v5030 = vpack.c.b16 %v4379, %v4372
    %v5031 = vpack.c.b16 %v4380, %v4373
    %v5032 = vpack.c.b16 %v4381, %v4374
    %v5033 = vpack.c.b16 %v4382, %v4375
    %v5034 = vpack.c.b16 %v4390, %v4383
    %v5035 = vpack.c.b16 %v4391, %v4384
    %v5036 = vpack.c.b16 %v4392, %v4385
    %v5037 = vpack.c.b16 %v4393, %v4386
    %v5038 = vpack.c.b16 %v4394, %v4387
    %v5039 = vpack.c.b16 %v4395, %v4388
    %v5040 = vpack.c.b16 %v4396, %v4389
    %v5041 = vpack.c.b16 %v4404, %v4397
    %v5042 = vpack.c.b16 %v4405, %v4398
    %v5043 = vpack.c.b16 %v4406, %v4399
    %v5044 = vpack.c.b16 %v4407, %v4400
    %v5045 = vpack.c.b16 %v4408, %v4401
    %v5046 = vpack.c.b16 %v4409, %v4402
    %v5047 = vpack.c.b16 %v4410, %v4403
    %v5048 = vpack.c.b16 %v4418, %v4411
    %v5049 = vpack.c.b16 %v4419, %v4412
    %v5050 = vpack.c.b16 %v4420, %v4413
    %v5051 = vpack.c.b16 %v4421, %v4414
    %v5052 = vpack.c.b16 %v4422, %v4415
    %v5053 = vpack.c.b16 %v4423, %v4416
    %v5054 = vpack.c.b16 %v4424, %v4417
    %v5055 = vpack.c.b16 %v4432, %v4425
    %v5056 = vpack.c.b16 %v4433, %v4426
    %v5057 = vpack.c.b16 %v4434, %v4427
    %v5058 = vpack.c.b16 %v4435, %v4428
    %v5059 = vpack.c.b16 %v4436, %v4429
    %v5060 = vpack.c.b16 %v4437, %v4430
    %v5061 = vpack.c.b16 %v4438, %v4431
    %v5062 = vpack.c.b16 %v4446, %v4439
    %v5063 = vpack.c.b16 %v4447, %v4440
    %v5064 = vpack.c.b16 %v4448, %v4441
    %v5065 = vpack.c.b16 %v4449, %v4442
    %v5066 = vpack.c.b16 %v4450, %v4443
    %v5067 = vpack.c.b16 %v4451, %v4444
    %v5068 = vpack.c.b16 %v4452, %v4445
    %v5069 = vpack.c.b16 %v4460, %v4453
    %v5070 = vpack.c.b16 %v4461, %v4454
    %v5071 = vpack.c.b16 %v4462, %v4455
    %v5072 = vpack.c.b16 %v4463, %v4456
    %v5073 = vpack.c.b16 %v4464, %v4457
    %v5074 = vpack.c.b16 %v4465, %v4458
    %v5075 = vpack.c.b16 %v4466, %v4459
    %v5076 = vpack.c.b16 %v4474, %v4467
    %v5077 = vpack.c.b16 %v4475, %v4468
    %v5078 = vpack.c.b16 %v4476, %v4469
    %v5079 = vpack.c.b16 %v4477, %v4470
    %v5080 = vpack.c.b16 %v4478, %v4471
    %v5081 = vpack.c.b16 %v4479, %v4472
    %v5082 = vpack.c.b16 %v4480, %v4473
    %v5083 = vpack.c.b16 %v4488, %v4481
    %v5084 = vpack.c.b16 %v4489, %v4482
    %v5085 = vpack.c.b16 %v4490, %v4483
    %v5086 = vpack.c.b16 %v4491, %v4484
    %v5087 = vpack.c.b16 %v4492, %v4485
    %v5088 = vpack.c.b16 %v4493, %v4486
    %v5089 = vpack.c.b16 %v4494, %v4487
    %v5090 = vpack.c.b16 %v4502, %v4495
    %v5091 = vpack.c.b16 %v4503, %v4496
    %v5092 = vpack.c.b16 %v4504, %v4497
    %v5093 = vpack.c.b16 %v4505, %v4498
    %v5094 = vpack.c.b16 %v4506, %v4499
    %v5095 = vpack.c.b16 %v4507, %v4500
    %v5096 = vpack.c.b16 %v4508, %v4501
    %v5097 = vpack.c.b16 %v4516, %v4509
    %v5098 = vpack.c.b16 %v4517, %v4510
    %v5099 = vpack.c.b16 %v4518, %v4511
    %v5100 = vpack.c.b16 %v4519, %v4512
    %v5101 = vpack.c.b16 %v4520, %v4513
    %v5102 = vpack.c.b16 %v4521, %v4514
    %v5103 = vpack.c.b16 %v4522, %v4515
    %v5104 = vpack.c.b16 %v4530, %v4523
    %v5105 = vpack.c.b16 %v4531, %v4524
    %v5106 = vpack.c.b16 %v4532, %v4525
    %v5107 = vpack.c.b16 %v4533, %v4526
    %v5108 = vpack.c.b16 %v4534, %v4527
    %v5109 = vpack.c.b16 %v4535, %v4528
    %v5110 = vpack.c.b16 %v4536, %v4529
    %v5111 = vpack.c.b16 %v4544, %v4537
    %v5112 = vpack.c.b16 %v4545, %v4538
    %v5113 = vpack.c.b16 %v4546, %v4539
    %v5114 = vpack.c.b16 %v4547, %v4540
    %v5115 = vpack.c.b16 %v4548, %v4541
    %v5116 = vpack.c.b16 %v4549, %v4542
    %v5117 = vpack.c.b16 %v4550, %v4543
    %v5118 = vpack.c.b16 %v4558, %v4551
    %v5119 = vpack.c.b16 %v4559, %v4552
    %v5120 = vpack.c.b16 %v4560, %v4553
    %v5121 = vpack.c.b16 %v4561, %v4554
    %v5122 = vpack.c.b16 %v4562, %v4555
    %v5123 = vpack.c.b16 %v4563, %v4556
    %v5124 = vpack.c.b16 %v4564, %v4557
    %v5125 = vpack.c.b16 %v4572, %v4565
    %v5126 = vpack.c.b16 %v4573, %v4566
    %v5127 = vpack.c.b16 %v4574, %v4567
    %v5128 = vpack.c.b16 %v4575, %v4568
    %v5129 = vpack.c.b16 %v4576, %v4569
    %v5130 = vpack.c.b16 %v4577, %v4570
    %v5131 = vpack.c.b16 %v4578, %v4571
    %v5132 = vpack.c.b16 %v4586, %v4579
    %v5133 = vpack.c.b16 %v4587, %v4580
    %v5134 = vpack.c.b16 %v4588, %v4581
    %v5135 = vpack.c.b16 %v4589, %v4582
    %v5136 = vpack.c.b16 %v4590, %v4583
    %v5137 = vpack.c.b16 %v4591, %v4584
    %v5138 = vpack.c.b16 %v4592, %v4585
    %v5139 = vpack.c.b16 %v4600, %v4593
    %v5140 = vpack.c.b16 %v4601, %v4594
    %v5141 = vpack.c.b16 %v4602, %v4595
    %v5142 = vpack.c.b16 %v4603, %v4596
    %v5143 = vpack.c.b16 %v4604, %v4597
    %v5144 = vpack.c.b16 %v4605, %v4598
    %v5145 = vpack.c.b16 %v4606, %v4599
    %v5146 = vpack.c.b16 %v4614, %v4607
    %v5147 = vpack.c.b16 %v4615, %v4608
    %v5148 = vpack.c.b16 %v4616, %v4609
    %v5149 = vpack.c.b16 %v4617, %v4610
    %v5150 = vpack.c.b16 %v4618, %v4611
    %v5151 = vpack.c.b16 %v4619, %v4612
    %v5152 = vpack.c.b16 %v4620, %v4613
    %v5153 = vpack.c.b16 %v4628, %v4621
    %v5154 = vpack.c.b16 %v4629, %v4622
    %v5155 = vpack.c.b16 %v4630, %v4623
    %v5156 = vpack.c.b16 %v4631, %v4624
    %v5157 = vpack.c.b16 %v4632, %v4625
    %v5158 = vpack.c.b16 %v4633, %v4626
    %v5159 = vpack.c.b16 %v4634, %v4627
    %v5160 = vpack.c.b16 %v4642, %v4635
    %v5161 = vpack.c.b16 %v4643, %v4636
    %v5162 = vpack.c.b16 %v4644, %v4637
    %v5163 = vpack.c.b16 %v4645, %v4638
    %v5164 = vpack.c.b16 %v4646, %v4639
    %v5165 = vpack.c.b16 %v4647, %v4640
    %v5166 = vpack.c.b16 %v4648, %v4641
    %v5167 = vpack.c.b16 %v4656, %v4649
    %v5168 = vpack.c.b16 %v4657, %v4650
    %v5169 = vpack.c.b16 %v4658, %v4651
    %v5170 = vpack.c.b16 %v4659, %v4652
    %v5171 = vpack.c.b16 %v4660, %v4653
    %v5172 = vpack.c.b16 %v4661, %v4654
    %v5173 = vpack.c.b16 %v4662, %v4655
    %v5174 = vpack.c.b16 %v4670, %v4663
    %v5175 = vpack.c.b16 %v4671, %v4664
    %v5176 = vpack.c.b16 %v4672, %v4665
    %v5177 = vpack.c.b16 %v4673, %v4666
    %v5178 = vpack.c.b16 %v4674, %v4667
    %v5179 = vpack.c.b16 %v4675, %v4668
    %v5180 = vpack.c.b16 %v4676, %v4669
    %v5181 = vpack.c.b16 %v4684, %v4677
    %v5182 = vpack.c.b16 %v4685, %v4678
    %v5183 = vpack.c.b16 %v4686, %v4679
    %v5184 = vpack.c.b16 %v4687, %v4680
    %v5185 = vpack.c.b16 %v4688, %v4681
    %v5186 = vpack.c.b16 %v4689, %v4682
    %v5187 = vpack.c.b16 %v4690, %v4683
    %v5188 = vpack.c.b16 %v4698, %v4691
    %v5189 = vpack.c.b16 %v4699, %v4692
    %v5190 = vpack.c.b16 %v4700, %v4693
    %v5191 = vpack.c.b16 %v4701, %v4694
    %v5192 = vpack.c.b16 %v4702, %v4695
    %v5193 = vpack.c.b16 %v4703, %v4696
    %v5194 = vpack.c.b16 %v4704, %v4697
    %v5195 = vpack.c.b16 %v4712, %v4705
    %v5196 = vpack.c.b16 %v4713, %v4706
    %v5197 = vpack.c.b16 %v4714, %v4707
    %v5198 = vpack.c.b16 %v4715, %v4708
    %v5199 = vpack.c.b16 %v4716, %v4709
    %v5200 = vpack.c.b16 %v4717, %v4710
    %v5201 = vpack.c.b16 %v4718, %v4711
    %v5202 = vpack.c.b16 %v4726, %v4719
    %v5203 = vpack.c.b16 %v4727, %v4720
    %v5204 = vpack.c.b16 %v4728, %v4721
    %v5205 = vpack.c.b16 %v4729, %v4722
    %v5206 = vpack.c.b16 %v4730, %v4723
    %v5207 = vpack.c.b16 %v4731, %v4724
    %v5208 = vpack.c.b16 %v4732, %v4725
    %v5209 = vpack.c.b16 %v4740, %v4733
    %v5210 = vpack.c.b16 %v4741, %v4734
    %v5211 = vpack.c.b16 %v4742, %v4735
    %v5212 = vpack.c.b16 %v4743, %v4736
    %v5213 = vpack.c.b16 %v4744, %v4737
    %v5214 = vpack.c.b16 %v4745, %v4738
    %v5215 = vpack.c.b16 %v4746, %v4739
    %v5216 = vpack.c.b16 %v4754, %v4747
    %v5217 = vpack.c.b16 %v4755, %v4748
    %v5218 = vpack.c.b16 %v4756, %v4749
    %v5219 = vpack.c.b16 %v4757, %v4750
    %v5220 = vpack.c.b16 %v4758, %v4751
    %v5221 = vpack.c.b16 %v4759, %v4752
    %v5222 = vpack.c.b16 %v4760, %v4753
    %v5223 = vpack.c.b16 %v4768, %v4761
    %v5224 = vpack.c.b16 %v4769, %v4762
    %v5225 = vpack.c.b16 %v4770, %v4763
    %v5226 = vpack.c.b16 %v4771, %v4764
    %v5227 = vpack.c.b16 %v4772, %v4765
    %v5228 = vpack.c.b16 %v4773, %v4766
    %v5229 = vpack.c.b16 %v4774, %v4767
    %v5230 = vpack.c.b16 %v4782, %v4775
    %v5231 = vpack.c.b16 %v4783, %v4776
    %v5232 = vpack.c.b16 %v4784, %v4777
    %v5233 = vpack.c.b16 %v4785, %v4778
    %v5234 = vpack.c.b16 %v4786, %v4779
    %v5235 = vpack.c.b16 %v4787, %v4780
    %v5236 = vpack.c.b16 %v4788, %v4781
    %5685 = vmatpush.bf16.msra.mxu0 %v4838
    %5686 = vmatpush.bf16.msra.mxu0 %v4831
    %5687 = vmatpush.bf16.msra.mxu0 %v4824
    %5688 = vmatpush.bf16.msra.mxu0 %v4817
    %5689 = vmatpush.bf16.msra.mxu0 %v4810
    %5690 = vmatpush.bf16.msra.mxu0 %v4803
    %5691 = vmatpush.bf16.msra.mxu0 %v4796
    %5692 = vmatpush.bf16.msra.mxu0 %v4789
    %5693 = vmatmul.bf16.gmra.mxu0 %v2845
    %v5694 = vpop.f32.mrf.mxu0
    %v5695 = vadd.f32 %v3367, %v5694
    %v5696 = vpop.f32.mrf.mxu0
    %v5697 = vadd.f32 %v3367, %v5696
    %5698 = vdwg.mxu0
    %5699 = vmatpush.bf16.msra.mxu0 %v4894
    %5700 = vmatpush.bf16.msra.mxu0 %v4887
    %5701 = vmatpush.bf16.msra.mxu0 %v4880
    %5702 = vmatpush.bf16.msra.mxu0 %v4873
    %5703 = vmatpush.bf16.msra.mxu0 %v4866
    %5704 = vmatpush.bf16.msra.mxu0 %v4859
    %5705 = vmatpush.bf16.msra.mxu0 %v4852
    %5706 = vmatpush.bf16.msra.mxu0 %v4845
    %5707 = vmatmul.bf16.gmra.mxu0 %v2846
    %v5708 = vpop.f32.mrf.mxu0
    %v5709 = vadd.f32 %v5695, %v5708
    %v5710 = vpop.f32.mrf.mxu0
    %v5711 = vadd.f32 %v5697, %v5710
    %5712 = vdwg.mxu0
    %5713 = vmatpush.bf16.msra.mxu0 %v4950
    %5714 = vmatpush.bf16.msra.mxu0 %v4943
    %5715 = vmatpush.bf16.msra.mxu0 %v4936
    %5716 = vmatpush.bf16.msra.mxu0 %v4929
    %5717 = vmatpush.bf16.msra.mxu0 %v4922
    %5718 = vmatpush.bf16.msra.mxu0 %v4915
    %5719 = vmatpush.bf16.msra.mxu0 %v4908
    %5720 = vmatpush.bf16.msra.mxu0 %v4901
    %5721 = vmatmul.bf16.gmra.mxu0 %v2847
    %v5722 = vpop.f32.mrf.mxu0
    %v5723 = vadd.f32 %v5709, %v5722
    %v5724 = vpop.f32.mrf.mxu0
    %v5725 = vadd.f32 %v5711, %v5724
    %5726 = vdwg.mxu0
    %5727 = vmatpush.bf16.msra.mxu0 %v5006
    %5728 = vmatpush.bf16.msra.mxu0 %v4999
    %5729 = vmatpush.bf16.msra.mxu0 %v4992
    %5730 = vmatpush.bf16.msra.mxu0 %v4985
    %5731 = vmatpush.bf16.msra.mxu0 %v4978
    %5732 = vmatpush.bf16.msra.mxu0 %v4971
    %5733 = vmatpush.bf16.msra.mxu0 %v4964
    %5734 = vmatpush.bf16.msra.mxu0 %v4957
    %5735 = vmatmul.bf16.gmra.mxu0 %v2848
    %v5736 = vpop.f32.mrf.mxu0
    %v5737 = vadd.f32 %v5723, %v5736
    %v5738 = vpop.f32.mrf.mxu0
    %v5739 = vadd.f32 %v5725, %v5738
    %5740 = vdwg.mxu0
    %5741 = vmatpush.bf16.msra.mxu0 %v5062
    %5742 = vmatpush.bf16.msra.mxu0 %v5055
    %5743 = vmatpush.bf16.msra.mxu0 %v5048
    %5744 = vmatpush.bf16.msra.mxu0 %v5041
    %5745 = vmatpush.bf16.msra.mxu0 %v5034
    %5746 = vmatpush.bf16.msra.mxu0 %v5027
    %5747 = vmatpush.bf16.msra.mxu0 %v5020
    %5748 = vmatpush.bf16.msra.mxu0 %v5013
    %5749 = vmatmul.bf16.gmra.mxu0 %v2849
    %v5750 = vpop.f32.mrf.mxu0
    %v5751 = vadd.f32 %v5737, %v5750
    %v5752 = vpop.f32.mrf.mxu0
    %v5753 = vadd.f32 %v5739, %v5752
    %5754 = vdwg.mxu0
    %5755 = vmatpush.bf16.msra.mxu0 %v5118
    %5756 = vmatpush.bf16.msra.mxu0 %v5111
    %5757 = vmatpush.bf16.msra.mxu0 %v5104
    %5758 = vmatpush.bf16.msra.mxu0 %v5097
    %5759 = vmatpush.bf16.msra.mxu0 %v5090
    %5760 = vmatpush.bf16.msra.mxu0 %v5083
    %5761 = vmatpush.bf16.msra.mxu0 %v5076
    %5762 = vmatpush.bf16.msra.mxu0 %v5069
    %5763 = vmatmul.bf16.gmra.mxu0 %v2850
    %v5764 = vpop.f32.mrf.mxu0
    %v5765 = vadd.f32 %v5751, %v5764
    %v5766 = vpop.f32.mrf.mxu0
    %v5767 = vadd.f32 %v5753, %v5766
    %5768 = vdwg.mxu0
    %5769 = vmatpush.bf16.msra.mxu0 %v5174
    %5770 = vmatpush.bf16.msra.mxu0 %v5167
    %5771 = vmatpush.bf16.msra.mxu0 %v5160
    %5772 = vmatpush.bf16.msra.mxu0 %v5153
    %5773 = vmatpush.bf16.msra.mxu0 %v5146
    %5774 = vmatpush.bf16.msra.mxu0 %v5139
    %5775 = vmatpush.bf16.msra.mxu0 %v5132
    %5776 = vmatpush.bf16.msra.mxu0 %v5125
    %5777 = vmatmul.bf16.gmra.mxu0 %v2851
    %v5778 = vpop.f32.mrf.mxu0
    %v5779 = vadd.f32 %v5765, %v5778
    %v5780 = vpop.f32.mrf.mxu0
    %v5781 = vadd.f32 %v5767, %v5780
    %5782 = vdwg.mxu0
    %5783 = vmatpush.bf16.msra.mxu0 %v5230
    %5784 = vmatpush.bf16.msra.mxu0 %v5223
    %5785 = vmatpush.bf16.msra.mxu0 %v5216
    %5786 = vmatpush.bf16.msra.mxu0 %v5209
    %5787 = vmatpush.bf16.msra.mxu0 %v5202
    %5788 = vmatpush.bf16.msra.mxu0 %v5195
    %5789 = vmatpush.bf16.msra.mxu0 %v5188
    %5790 = vmatpush.bf16.msra.mxu0 %v5181
    %5791 = vmatmul.bf16.gmra.mxu0 %v2852
    %v5792 = vpop.f32.mrf.mxu0
    %v5793 = vadd.f32 %v5779, %v5792
    %v5794 = vpop.f32.mrf.mxu0
    %v5795 = vadd.f32 %v5781, %v5794
    %5796 = vdwg.mxu0
    %5797 = vmatpush.bf16.msra.mxu0 %v4839
    %5798 = vmatpush.bf16.msra.mxu0 %v4832
    %5799 = vmatpush.bf16.msra.mxu0 %v4825
    %5800 = vmatpush.bf16.msra.mxu0 %v4818
    %5801 = vmatpush.bf16.msra.mxu0 %v4811
    %5802 = vmatpush.bf16.msra.mxu0 %v4804
    %5803 = vmatpush.bf16.msra.mxu0 %v4797
    %5804 = vmatpush.bf16.msra.mxu0 %v4790
    %5805 = vmatmul.bf16.gmra.mxu0 %v2845
    %v5806 = vpop.f32.mrf.mxu0
    %v5807 = vadd.f32 %v3368, %v5806
    %v5808 = vpop.f32.mrf.mxu0
    %v5809 = vadd.f32 %v3368, %v5808
    %5810 = vdwg.mxu0
    %5811 = vmatpush.bf16.msra.mxu0 %v4895
    %5812 = vmatpush.bf16.msra.mxu0 %v4888
    %5813 = vmatpush.bf16.msra.mxu0 %v4881
    %5814 = vmatpush.bf16.msra.mxu0 %v4874
    %5815 = vmatpush.bf16.msra.mxu0 %v4867
    %5816 = vmatpush.bf16.msra.mxu0 %v4860
    %5817 = vmatpush.bf16.msra.mxu0 %v4853
    %5818 = vmatpush.bf16.msra.mxu0 %v4846
    %5819 = vmatmul.bf16.gmra.mxu0 %v2846
    %v5820 = vpop.f32.mrf.mxu0
    %v5821 = vadd.f32 %v5807, %v5820
    %v5822 = vpop.f32.mrf.mxu0
    %v5823 = vadd.f32 %v5809, %v5822
    %5824 = vdwg.mxu0
    %5825 = vmatpush.bf16.msra.mxu0 %v4951
    %5826 = vmatpush.bf16.msra.mxu0 %v4944
    %5827 = vmatpush.bf16.msra.mxu0 %v4937
    %5828 = vmatpush.bf16.msra.mxu0 %v4930
    %5829 = vmatpush.bf16.msra.mxu0 %v4923
    %5830 = vmatpush.bf16.msra.mxu0 %v4916
    %5831 = vmatpush.bf16.msra.mxu0 %v4909
    %5832 = vmatpush.bf16.msra.mxu0 %v4902
    %5833 = vmatmul.bf16.gmra.mxu0 %v2847
    %v5834 = vpop.f32.mrf.mxu0
    %v5835 = vadd.f32 %v5821, %v5834
    %v5836 = vpop.f32.mrf.mxu0
    %v5837 = vadd.f32 %v5823, %v5836
    %5838 = vdwg.mxu0
    %5839 = vmatpush.bf16.msra.mxu0 %v5007
    %5840 = vmatpush.bf16.msra.mxu0 %v5000
    %5841 = vmatpush.bf16.msra.mxu0 %v4993
    %5842 = vmatpush.bf16.msra.mxu0 %v4986
    %5843 = vmatpush.bf16.msra.mxu0 %v4979
    %5844 = vmatpush.bf16.msra.mxu0 %v4972
    %5845 = vmatpush.bf16.msra.mxu0 %v4965
    %5846 = vmatpush.bf16.msra.mxu0 %v4958
    %5847 = vmatmul.bf16.gmra.mxu0 %v2848
    %v5848 = vpop.f32.mrf.mxu0
    %v5849 = vadd.f32 %v5835, %v5848
    %v5850 = vpop.f32.mrf.mxu0
    %v5851 = vadd.f32 %v5837, %v5850
    %5852 = vdwg.mxu0
    %5853 = vmatpush.bf16.msra.mxu0 %v5063
    %5854 = vmatpush.bf16.msra.mxu0 %v5056
    %5855 = vmatpush.bf16.msra.mxu0 %v5049
    %5856 = vmatpush.bf16.msra.mxu0 %v5042
    %5857 = vmatpush.bf16.msra.mxu0 %v5035
    %5858 = vmatpush.bf16.msra.mxu0 %v5028
    %5859 = vmatpush.bf16.msra.mxu0 %v5021
    %5860 = vmatpush.bf16.msra.mxu0 %v5014
    %5861 = vmatmul.bf16.gmra.mxu0 %v2849
    %v5862 = vpop.f32.mrf.mxu0
    %v5863 = vadd.f32 %v5849, %v5862
    %v5864 = vpop.f32.mrf.mxu0
    %v5865 = vadd.f32 %v5851, %v5864
    %5866 = vdwg.mxu0
    %5867 = vmatpush.bf16.msra.mxu0 %v5119
    %5868 = vmatpush.bf16.msra.mxu0 %v5112
    %5869 = vmatpush.bf16.msra.mxu0 %v5105
    %5870 = vmatpush.bf16.msra.mxu0 %v5098
    %5871 = vmatpush.bf16.msra.mxu0 %v5091
    %5872 = vmatpush.bf16.msra.mxu0 %v5084
    %5873 = vmatpush.bf16.msra.mxu0 %v5077
    %5874 = vmatpush.bf16.msra.mxu0 %v5070
    %5875 = vmatmul.bf16.gmra.mxu0 %v2850
    %v5876 = vpop.f32.mrf.mxu0
    %v5877 = vadd.f32 %v5863, %v5876
    %v5878 = vpop.f32.mrf.mxu0
    %v5879 = vadd.f32 %v5865, %v5878
    %5880 = vdwg.mxu0
    %5881 = vmatpush.bf16.msra.mxu0 %v5175
    %5882 = vmatpush.bf16.msra.mxu0 %v5168
    %5883 = vmatpush.bf16.msra.mxu0 %v5161
    %5884 = vmatpush.bf16.msra.mxu0 %v5154
    %5885 = vmatpush.bf16.msra.mxu0 %v5147
    %5886 = vmatpush.bf16.msra.mxu0 %v5140
    %5887 = vmatpush.bf16.msra.mxu0 %v5133
    %5888 = vmatpush.bf16.msra.mxu0 %v5126
    %5889 = vmatmul.bf16.gmra.mxu0 %v2851
    %v5890 = vpop.f32.mrf.mxu0
    %v5891 = vadd.f32 %v5877, %v5890
    %v5892 = vpop.f32.mrf.mxu0
    %v5893 = vadd.f32 %v5879, %v5892
    %5894 = vdwg.mxu0
    %5895 = vmatpush.bf16.msra.mxu0 %v5231
    %5896 = vmatpush.bf16.msra.mxu0 %v5224
    %5897 = vmatpush.bf16.msra.mxu0 %v5217
    %5898 = vmatpush.bf16.msra.mxu0 %v5210
    %5899 = vmatpush.bf16.msra.mxu0 %v5203
    %5900 = vmatpush.bf16.msra.mxu0 %v5196
    %5901 = vmatpush.bf16.msra.mxu0 %v5189
    %5902 = vmatpush.bf16.msra.mxu0 %v5182
    %5903 = vmatmul.bf16.gmra.mxu0 %v2852
    %v5904 = vpop.f32.mrf.mxu0
    %v5905 = vadd.f32 %v5891, %v5904
    %v5906 = vpop.f32.mrf.mxu0
    %v5907 = vadd.f32 %v5893, %v5906
    %5908 = vdwg.mxu0
    %5909 = vmatpush.bf16.msra.mxu0 %v4840
    %5910 = vmatpush.bf16.msra.mxu0 %v4833
    %5911 = vmatpush.bf16.msra.mxu0 %v4826
    %5912 = vmatpush.bf16.msra.mxu0 %v4819
    %5913 = vmatpush.bf16.msra.mxu0 %v4812
    %5914 = vmatpush.bf16.msra.mxu0 %v4805
    %5915 = vmatpush.bf16.msra.mxu0 %v4798
    %5916 = vmatpush.bf16.msra.mxu0 %v4791
    %5917 = vmatmul.bf16.gmra.mxu0 %v2845
    %v5918 = vpop.f32.mrf.mxu0
    %v5919 = vadd.f32 %v3369, %v5918
    %v5920 = vpop.f32.mrf.mxu0
    %v5921 = vadd.f32 %v3369, %v5920
    %5922 = vdwg.mxu0
    %5923 = vmatpush.bf16.msra.mxu0 %v4896
    %5924 = vmatpush.bf16.msra.mxu0 %v4889
    %5925 = vmatpush.bf16.msra.mxu0 %v4882
    %5926 = vmatpush.bf16.msra.mxu0 %v4875
    %5927 = vmatpush.bf16.msra.mxu0 %v4868
    %5928 = vmatpush.bf16.msra.mxu0 %v4861
    %5929 = vmatpush.bf16.msra.mxu0 %v4854
    %5930 = vmatpush.bf16.msra.mxu0 %v4847
    %5931 = vmatmul.bf16.gmra.mxu0 %v2846
    %v5932 = vpop.f32.mrf.mxu0
    %v5933 = vadd.f32 %v5919, %v5932
    %v5934 = vpop.f32.mrf.mxu0
    %v5935 = vadd.f32 %v5921, %v5934
    %5936 = vdwg.mxu0
    %5937 = vmatpush.bf16.msra.mxu0 %v4952
    %5938 = vmatpush.bf16.msra.mxu0 %v4945
    %5939 = vmatpush.bf16.msra.mxu0 %v4938
    %5940 = vmatpush.bf16.msra.mxu0 %v4931
    %5941 = vmatpush.bf16.msra.mxu0 %v4924
    %5942 = vmatpush.bf16.msra.mxu0 %v4917
    %5943 = vmatpush.bf16.msra.mxu0 %v4910
    %5944 = vmatpush.bf16.msra.mxu0 %v4903
    %5945 = vmatmul.bf16.gmra.mxu0 %v2847
    %v5946 = vpop.f32.mrf.mxu0
    %v5947 = vadd.f32 %v5933, %v5946
    %v5948 = vpop.f32.mrf.mxu0
    %v5949 = vadd.f32 %v5935, %v5948
    %5950 = vdwg.mxu0
    %5951 = vmatpush.bf16.msra.mxu0 %v5008
    %5952 = vmatpush.bf16.msra.mxu0 %v5001
    %5953 = vmatpush.bf16.msra.mxu0 %v4994
    %5954 = vmatpush.bf16.msra.mxu0 %v4987
    %5955 = vmatpush.bf16.msra.mxu0 %v4980
    %5956 = vmatpush.bf16.msra.mxu0 %v4973
    %5957 = vmatpush.bf16.msra.mxu0 %v4966
    %5958 = vmatpush.bf16.msra.mxu0 %v4959
    %5959 = vmatmul.bf16.gmra.mxu0 %v2848
    %v5960 = vpop.f32.mrf.mxu0
    %v5961 = vadd.f32 %v5947, %v5960
    %v5962 = vpop.f32.mrf.mxu0
    %v5963 = vadd.f32 %v5949, %v5962
    %5964 = vdwg.mxu0
    %5965 = vmatpush.bf16.msra.mxu0 %v5064
    %5966 = vmatpush.bf16.msra.mxu0 %v5057
    %5967 = vmatpush.bf16.msra.mxu0 %v5050
    %5968 = vmatpush.bf16.msra.mxu0 %v5043
    %5969 = vmatpush.bf16.msra.mxu0 %v5036
    %5970 = vmatpush.bf16.msra.mxu0 %v5029
    %5971 = vmatpush.bf16.msra.mxu0 %v5022
    %5972 = vmatpush.bf16.msra.mxu0 %v5015
    %5973 = vmatmul.bf16.gmra.mxu0 %v2849
    %v5974 = vpop.f32.mrf.mxu0
    %v5975 = vadd.f32 %v5961, %v5974
    %v5976 = vpop.f32.mrf.mxu0
    %v5977 = vadd.f32 %v5963, %v5976
    %5978 = vdwg.mxu0
    %5979 = vmatpush.bf16.msra.mxu0 %v5120
    %5980 = vmatpush.bf16.msra.mxu0 %v5113
    %5981 = vmatpush.bf16.msra.mxu0 %v5106
    %5982 = vmatpush.bf16.msra.mxu0 %v5099
    %5983 = vmatpush.bf16.msra.mxu0 %v5092
    %5984 = vmatpush.bf16.msra.mxu0 %v5085
    %5985 = vmatpush.bf16.msra.mxu0 %v5078
    %5986 = vmatpush.bf16.msra.mxu0 %v5071
    %5987 = vmatmul.bf16.gmra.mxu0 %v2850
    %v5988 = vpop.f32.mrf.mxu0
    %v5989 = vadd.f32 %v5975, %v5988
    %v5990 = vpop.f32.mrf.mxu0
    %v5991 = vadd.f32 %v5977, %v5990
    %5992 = vdwg.mxu0
    %5993 = vmatpush.bf16.msra.mxu0 %v5176
    %5994 = vmatpush.bf16.msra.mxu0 %v5169
    %5995 = vmatpush.bf16.msra.mxu0 %v5162
    %5996 = vmatpush.bf16.msra.mxu0 %v5155
    %5997 = vmatpush.bf16.msra.mxu0 %v5148
    %5998 = vmatpush.bf16.msra.mxu0 %v5141
    %5999 = vmatpush.bf16.msra.mxu0 %v5134
    %6000 = vmatpush.bf16.msra.mxu0 %v5127
    %6001 = vmatmul.bf16.gmra.mxu0 %v2851
    %v6002 = vpop.f32.mrf.mxu0
    %v6003 = vadd.f32 %v5989, %v6002
    %v6004 = vpop.f32.mrf.mxu0
    %v6005 = vadd.f32 %v5991, %v6004
    %6006 = vdwg.mxu0
    %6007 = vmatpush.bf16.msra.mxu0 %v5232
    %6008 = vmatpush.bf16.msra.mxu0 %v5225
    %6009 = vmatpush.bf16.msra.mxu0 %v5218
    %6010 = vmatpush.bf16.msra.mxu0 %v5211
    %6011 = vmatpush.bf16.msra.mxu0 %v5204
    %6012 = vmatpush.bf16.msra.mxu0 %v5197
    %6013 = vmatpush.bf16.msra.mxu0 %v5190
    %6014 = vmatpush.bf16.msra.mxu0 %v5183
    %6015 = vmatmul.bf16.gmra.mxu0 %v2852
    %v6016 = vpop.f32.mrf.mxu0
    %v6017 = vadd.f32 %v6003, %v6016
    %v6018 = vpop.f32.mrf.mxu0
    %v6019 = vadd.f32 %v6005, %v6018
    %6020 = vdwg.mxu0
    %6021 = vmatpush.bf16.msra.mxu0 %v4841
    %6022 = vmatpush.bf16.msra.mxu0 %v4834
    %6023 = vmatpush.bf16.msra.mxu0 %v4827
    %6024 = vmatpush.bf16.msra.mxu0 %v4820
    %6025 = vmatpush.bf16.msra.mxu0 %v4813
    %6026 = vmatpush.bf16.msra.mxu0 %v4806
    %6027 = vmatpush.bf16.msra.mxu0 %v4799
    %6028 = vmatpush.bf16.msra.mxu0 %v4792
    %6029 = vmatmul.bf16.gmra.mxu0 %v2845
    %v6030 = vpop.f32.mrf.mxu0
    %v6031 = vadd.f32 %v3370, %v6030
    %v6032 = vpop.f32.mrf.mxu0
    %v6033 = vadd.f32 %v3370, %v6032
    %6034 = vdwg.mxu0
    %6035 = vmatpush.bf16.msra.mxu0 %v4897
    %6036 = vmatpush.bf16.msra.mxu0 %v4890
    %6037 = vmatpush.bf16.msra.mxu0 %v4883
    %6038 = vmatpush.bf16.msra.mxu0 %v4876
    %6039 = vmatpush.bf16.msra.mxu0 %v4869
    %6040 = vmatpush.bf16.msra.mxu0 %v4862
    %6041 = vmatpush.bf16.msra.mxu0 %v4855
    %6042 = vmatpush.bf16.msra.mxu0 %v4848
    %6043 = vmatmul.bf16.gmra.mxu0 %v2846
    %v6044 = vpop.f32.mrf.mxu0
    %v6045 = vadd.f32 %v6031, %v6044
    %v6046 = vpop.f32.mrf.mxu0
    %v6047 = vadd.f32 %v6033, %v6046
    %6048 = vdwg.mxu0
    %6049 = vmatpush.bf16.msra.mxu0 %v4953
    %6050 = vmatpush.bf16.msra.mxu0 %v4946
    %6051 = vmatpush.bf16.msra.mxu0 %v4939
    %6052 = vmatpush.bf16.msra.mxu0 %v4932
    %6053 = vmatpush.bf16.msra.mxu0 %v4925
    %6054 = vmatpush.bf16.msra.mxu0 %v4918
    %6055 = vmatpush.bf16.msra.mxu0 %v4911
    %6056 = vmatpush.bf16.msra.mxu0 %v4904
    %6057 = vmatmul.bf16.gmra.mxu0 %v2847
    %v6058 = vpop.f32.mrf.mxu0
    %v6059 = vadd.f32 %v6045, %v6058
    %v6060 = vpop.f32.mrf.mxu0
    %v6061 = vadd.f32 %v6047, %v6060
    %6062 = vdwg.mxu0
    %6063 = vmatpush.bf16.msra.mxu0 %v5009
    %6064 = vmatpush.bf16.msra.mxu0 %v5002
    %6065 = vmatpush.bf16.msra.mxu0 %v4995
    %6066 = vmatpush.bf16.msra.mxu0 %v4988
    %6067 = vmatpush.bf16.msra.mxu0 %v4981
    %6068 = vmatpush.bf16.msra.mxu0 %v4974
    %6069 = vmatpush.bf16.msra.mxu0 %v4967
    %6070 = vmatpush.bf16.msra.mxu0 %v4960
    %6071 = vmatmul.bf16.gmra.mxu0 %v2848
    %v6072 = vpop.f32.mrf.mxu0
    %v6073 = vadd.f32 %v6059, %v6072
    %v6074 = vpop.f32.mrf.mxu0
    %v6075 = vadd.f32 %v6061, %v6074
    %6076 = vdwg.mxu0
    %6077 = vmatpush.bf16.msra.mxu0 %v5065
    %6078 = vmatpush.bf16.msra.mxu0 %v5058
    %6079 = vmatpush.bf16.msra.mxu0 %v5051
    %6080 = vmatpush.bf16.msra.mxu0 %v5044
    %6081 = vmatpush.bf16.msra.mxu0 %v5037
    %6082 = vmatpush.bf16.msra.mxu0 %v5030
    %6083 = vmatpush.bf16.msra.mxu0 %v5023
    %6084 = vmatpush.bf16.msra.mxu0 %v5016
    %6085 = vmatmul.bf16.gmra.mxu0 %v2849
    %v6086 = vpop.f32.mrf.mxu0
    %v6087 = vadd.f32 %v6073, %v6086
    %v6088 = vpop.f32.mrf.mxu0
    %v6089 = vadd.f32 %v6075, %v6088
    %6090 = vdwg.mxu0
    %6091 = vmatpush.bf16.msra.mxu0 %v5121
    %6092 = vmatpush.bf16.msra.mxu0 %v5114
    %6093 = vmatpush.bf16.msra.mxu0 %v5107
    %6094 = vmatpush.bf16.msra.mxu0 %v5100
    %6095 = vmatpush.bf16.msra.mxu0 %v5093
    %6096 = vmatpush.bf16.msra.mxu0 %v5086
    %6097 = vmatpush.bf16.msra.mxu0 %v5079
    %6098 = vmatpush.bf16.msra.mxu0 %v5072
    %6099 = vmatmul.bf16.gmra.mxu0 %v2850
    %v6100 = vpop.f32.mrf.mxu0
    %v6101 = vadd.f32 %v6087, %v6100
    %v6102 = vpop.f32.mrf.mxu0
    %v6103 = vadd.f32 %v6089, %v6102
    %6104 = vdwg.mxu0
    %6105 = vmatpush.bf16.msra.mxu0 %v5177
    %6106 = vmatpush.bf16.msra.mxu0 %v5170
    %6107 = vmatpush.bf16.msra.mxu0 %v5163
    %6108 = vmatpush.bf16.msra.mxu0 %v5156
    %6109 = vmatpush.bf16.msra.mxu0 %v5149
    %6110 = vmatpush.bf16.msra.mxu0 %v5142
    %6111 = vmatpush.bf16.msra.mxu0 %v5135
    %6112 = vmatpush.bf16.msra.mxu0 %v5128
    %6113 = vmatmul.bf16.gmra.mxu0 %v2851
    %v6114 = vpop.f32.mrf.mxu0
    %v6115 = vadd.f32 %v6101, %v6114
    %v6116 = vpop.f32.mrf.mxu0
    %v6117 = vadd.f32 %v6103, %v6116
    %6118 = vdwg.mxu0
    %6119 = vmatpush.bf16.msra.mxu0 %v5233
    %6120 = vmatpush.bf16.msra.mxu0 %v5226
    %6121 = vmatpush.bf16.msra.mxu0 %v5219
    %6122 = vmatpush.bf16.msra.mxu0 %v5212
    %6123 = vmatpush.bf16.msra.mxu0 %v5205
    %6124 = vmatpush.bf16.msra.mxu0 %v5198
    %6125 = vmatpush.bf16.msra.mxu0 %v5191
    %6126 = vmatpush.bf16.msra.mxu0 %v5184
    %6127 = vmatmul.bf16.gmra.mxu0 %v2852
    %v6128 = vpop.f32.mrf.mxu0
    %v6129 = vadd.f32 %v6115, %v6128
    %v6130 = vpop.f32.mrf.mxu0
    %v6131 = vadd.f32 %v6117, %v6130
    %6132 = vdwg.mxu0
    %6133 = vmatpush.bf16.msra.mxu0 %v4842
    %6134 = vmatpush.bf16.msra.mxu0 %v4835
    %6135 = vmatpush.bf16.msra.mxu0 %v4828
    %6136 = vmatpush.bf16.msra.mxu0 %v4821
    %6137 = vmatpush.bf16.msra.mxu0 %v4814
    %6138 = vmatpush.bf16.msra.mxu0 %v4807
    %6139 = vmatpush.bf16.msra.mxu0 %v4800
    %6140 = vmatpush.bf16.msra.mxu0 %v4793
    %6141 = vmatmul.bf16.gmra.mxu0 %v2845
    %v6142 = vpop.f32.mrf.mxu0
    %v6143 = vadd.f32 %v3371, %v6142
    %v6144 = vpop.f32.mrf.mxu0
    %v6145 = vadd.f32 %v3371, %v6144
    %6146 = vdwg.mxu0
    %6147 = vmatpush.bf16.msra.mxu0 %v4898
    %6148 = vmatpush.bf16.msra.mxu0 %v4891
    %6149 = vmatpush.bf16.msra.mxu0 %v4884
    %6150 = vmatpush.bf16.msra.mxu0 %v4877
    %6151 = vmatpush.bf16.msra.mxu0 %v4870
    %6152 = vmatpush.bf16.msra.mxu0 %v4863
    %6153 = vmatpush.bf16.msra.mxu0 %v4856
    %6154 = vmatpush.bf16.msra.mxu0 %v4849
    %6155 = vmatmul.bf16.gmra.mxu0 %v2846
    %v6156 = vpop.f32.mrf.mxu0
    %v6157 = vadd.f32 %v6143, %v6156
    %v6158 = vpop.f32.mrf.mxu0
    %v6159 = vadd.f32 %v6145, %v6158
    %6160 = vdwg.mxu0
    %6161 = vmatpush.bf16.msra.mxu0 %v4954
    %6162 = vmatpush.bf16.msra.mxu0 %v4947
    %6163 = vmatpush.bf16.msra.mxu0 %v4940
    %6164 = vmatpush.bf16.msra.mxu0 %v4933
    %6165 = vmatpush.bf16.msra.mxu0 %v4926
    %6166 = vmatpush.bf16.msra.mxu0 %v4919
    %6167 = vmatpush.bf16.msra.mxu0 %v4912
    %6168 = vmatpush.bf16.msra.mxu0 %v4905
    %6169 = vmatmul.bf16.gmra.mxu0 %v2847
    %v6170 = vpop.f32.mrf.mxu0
    %v6171 = vadd.f32 %v6157, %v6170
    %v6172 = vpop.f32.mrf.mxu0
    %v6173 = vadd.f32 %v6159, %v6172
    %6174 = vdwg.mxu0
    %6175 = vmatpush.bf16.msra.mxu0 %v5010
    %6176 = vmatpush.bf16.msra.mxu0 %v5003
    %6177 = vmatpush.bf16.msra.mxu0 %v4996
    %6178 = vmatpush.bf16.msra.mxu0 %v4989
    %6179 = vmatpush.bf16.msra.mxu0 %v4982
    %6180 = vmatpush.bf16.msra.mxu0 %v4975
    %6181 = vmatpush.bf16.msra.mxu0 %v4968
    %6182 = vmatpush.bf16.msra.mxu0 %v4961
    %6183 = vmatmul.bf16.gmra.mxu0 %v2848
    %v6184 = vpop.f32.mrf.mxu0
    %v6185 = vadd.f32 %v6171, %v6184
    %v6186 = vpop.f32.mrf.mxu0
    %v6187 = vadd.f32 %v6173, %v6186
    %6188 = vdwg.mxu0
    %6189 = vmatpush.bf16.msra.mxu0 %v5066
    %6190 = vmatpush.bf16.msra.mxu0 %v5059
    %6191 = vmatpush.bf16.msra.mxu0 %v5052
    %6192 = vmatpush.bf16.msra.mxu0 %v5045
    %6193 = vmatpush.bf16.msra.mxu0 %v5038
    %6194 = vmatpush.bf16.msra.mxu0 %v5031
    %6195 = vmatpush.bf16.msra.mxu0 %v5024
    %6196 = vmatpush.bf16.msra.mxu0 %v5017
    %6197 = vmatmul.bf16.gmra.mxu0 %v2849
    %v6198 = vpop.f32.mrf.mxu0
    %v6199 = vadd.f32 %v6185, %v6198
    %v6200 = vpop.f32.mrf.mxu0
    %v6201 = vadd.f32 %v6187, %v6200
    %6202 = vdwg.mxu0
    %6203 = vmatpush.bf16.msra.mxu0 %v5122
    %6204 = vmatpush.bf16.msra.mxu0 %v5115
    %6205 = vmatpush.bf16.msra.mxu0 %v5108
    %6206 = vmatpush.bf16.msra.mxu0 %v5101
    %6207 = vmatpush.bf16.msra.mxu0 %v5094
    %6208 = vmatpush.bf16.msra.mxu0 %v5087
    %6209 = vmatpush.bf16.msra.mxu0 %v5080
    %6210 = vmatpush.bf16.msra.mxu0 %v5073
    %6211 = vmatmul.bf16.gmra.mxu0 %v2850
    %v6212 = vpop.f32.mrf.mxu0
    %v6213 = vadd.f32 %v6199, %v6212
    %v6214 = vpop.f32.mrf.mxu0
    %v6215 = vadd.f32 %v6201, %v6214
    %6216 = vdwg.mxu0
    %6217 = vmatpush.bf16.msra.mxu0 %v5178
    %6218 = vmatpush.bf16.msra.mxu0 %v5171
    %6219 = vmatpush.bf16.msra.mxu0 %v5164
    %6220 = vmatpush.bf16.msra.mxu0 %v5157
    %6221 = vmatpush.bf16.msra.mxu0 %v5150
    %6222 = vmatpush.bf16.msra.mxu0 %v5143
    %6223 = vmatpush.bf16.msra.mxu0 %v5136
    %6224 = vmatpush.bf16.msra.mxu0 %v5129
    %6225 = vmatmul.bf16.gmra.mxu0 %v2851
    %v6226 = vpop.f32.mrf.mxu0
    %v6227 = vadd.f32 %v6213, %v6226
    %v6228 = vpop.f32.mrf.mxu0
    %v6229 = vadd.f32 %v6215, %v6228
    %6230 = vdwg.mxu0
    %6231 = vmatpush.bf16.msra.mxu0 %v5234
    %6232 = vmatpush.bf16.msra.mxu0 %v5227
    %6233 = vmatpush.bf16.msra.mxu0 %v5220
    %6234 = vmatpush.bf16.msra.mxu0 %v5213
    %6235 = vmatpush.bf16.msra.mxu0 %v5206
    %6236 = vmatpush.bf16.msra.mxu0 %v5199
    %6237 = vmatpush.bf16.msra.mxu0 %v5192
    %6238 = vmatpush.bf16.msra.mxu0 %v5185
    %6239 = vmatmul.bf16.gmra.mxu0 %v2852
    %v6240 = vpop.f32.mrf.mxu0
    %v6241 = vadd.f32 %v6227, %v6240
    %v6242 = vpop.f32.mrf.mxu0
    %v6243 = vadd.f32 %v6229, %v6242
    %6244 = vdwg.mxu0
    %6245 = vmatpush.bf16.msra.mxu0 %v4843
    %6246 = vmatpush.bf16.msra.mxu0 %v4836
    %6247 = vmatpush.bf16.msra.mxu0 %v4829
    %6248 = vmatpush.bf16.msra.mxu0 %v4822
    %6249 = vmatpush.bf16.msra.mxu0 %v4815
    %6250 = vmatpush.bf16.msra.mxu0 %v4808
    %6251 = vmatpush.bf16.msra.mxu0 %v4801
    %6252 = vmatpush.bf16.msra.mxu0 %v4794
    %6253 = vmatmul.bf16.gmra.mxu0 %v2845
    %v6254 = vpop.f32.mrf.mxu0
    %v6255 = vadd.f32 %v3372, %v6254
    %v6256 = vpop.f32.mrf.mxu0
    %v6257 = vadd.f32 %v3372, %v6256
    %6258 = vdwg.mxu0
    %6259 = vmatpush.bf16.msra.mxu0 %v4899
    %6260 = vmatpush.bf16.msra.mxu0 %v4892
    %6261 = vmatpush.bf16.msra.mxu0 %v4885
    %6262 = vmatpush.bf16.msra.mxu0 %v4878
    %6263 = vmatpush.bf16.msra.mxu0 %v4871
    %6264 = vmatpush.bf16.msra.mxu0 %v4864
    %6265 = vmatpush.bf16.msra.mxu0 %v4857
    %6266 = vmatpush.bf16.msra.mxu0 %v4850
    %6267 = vmatmul.bf16.gmra.mxu0 %v2846
    %v6268 = vpop.f32.mrf.mxu0
    %v6269 = vadd.f32 %v6255, %v6268
    %v6270 = vpop.f32.mrf.mxu0
    %v6271 = vadd.f32 %v6257, %v6270
    %6272 = vdwg.mxu0
    %6273 = vmatpush.bf16.msra.mxu0 %v4955
    %6274 = vmatpush.bf16.msra.mxu0 %v4948
    %6275 = vmatpush.bf16.msra.mxu0 %v4941
    %6276 = vmatpush.bf16.msra.mxu0 %v4934
    %6277 = vmatpush.bf16.msra.mxu0 %v4927
    %6278 = vmatpush.bf16.msra.mxu0 %v4920
    %6279 = vmatpush.bf16.msra.mxu0 %v4913
    %6280 = vmatpush.bf16.msra.mxu0 %v4906
    %6281 = vmatmul.bf16.gmra.mxu0 %v2847
    %v6282 = vpop.f32.mrf.mxu0
    %v6283 = vadd.f32 %v6269, %v6282
    %v6284 = vpop.f32.mrf.mxu0
    %v6285 = vadd.f32 %v6271, %v6284
    %6286 = vdwg.mxu0
    %6287 = vmatpush.bf16.msra.mxu0 %v5011
    %6288 = vmatpush.bf16.msra.mxu0 %v5004
    %6289 = vmatpush.bf16.msra.mxu0 %v4997
    %6290 = vmatpush.bf16.msra.mxu0 %v4990
    %6291 = vmatpush.bf16.msra.mxu0 %v4983
    %6292 = vmatpush.bf16.msra.mxu0 %v4976
    %6293 = vmatpush.bf16.msra.mxu0 %v4969
    %6294 = vmatpush.bf16.msra.mxu0 %v4962
    %6295 = vmatmul.bf16.gmra.mxu0 %v2848
    %v6296 = vpop.f32.mrf.mxu0
    %v6297 = vadd.f32 %v6283, %v6296
    %v6298 = vpop.f32.mrf.mxu0
    %v6299 = vadd.f32 %v6285, %v6298
    %6300 = vdwg.mxu0
    %6301 = vmatpush.bf16.msra.mxu0 %v5067
    %6302 = vmatpush.bf16.msra.mxu0 %v5060
    %6303 = vmatpush.bf16.msra.mxu0 %v5053
    %6304 = vmatpush.bf16.msra.mxu0 %v5046
    %6305 = vmatpush.bf16.msra.mxu0 %v5039
    %6306 = vmatpush.bf16.msra.mxu0 %v5032
    %6307 = vmatpush.bf16.msra.mxu0 %v5025
    %6308 = vmatpush.bf16.msra.mxu0 %v5018
    %6309 = vmatmul.bf16.gmra.mxu0 %v2849
    %v6310 = vpop.f32.mrf.mxu0
    %v6311 = vadd.f32 %v6297, %v6310
    %v6312 = vpop.f32.mrf.mxu0
    %v6313 = vadd.f32 %v6299, %v6312
    %6314 = vdwg.mxu0
    %6315 = vmatpush.bf16.msra.mxu0 %v5123
    %6316 = vmatpush.bf16.msra.mxu0 %v5116
    %6317 = vmatpush.bf16.msra.mxu0 %v5109
    %6318 = vmatpush.bf16.msra.mxu0 %v5102
    %6319 = vmatpush.bf16.msra.mxu0 %v5095
    %6320 = vmatpush.bf16.msra.mxu0 %v5088
    %6321 = vmatpush.bf16.msra.mxu0 %v5081
    %6322 = vmatpush.bf16.msra.mxu0 %v5074
    %6323 = vmatmul.bf16.gmra.mxu0 %v2850
    %v6324 = vpop.f32.mrf.mxu0
    %v6325 = vadd.f32 %v6311, %v6324
    %v6326 = vpop.f32.mrf.mxu0
    %v6327 = vadd.f32 %v6313, %v6326
    %6328 = vdwg.mxu0
    %6329 = vmatpush.bf16.msra.mxu0 %v5179
    %6330 = vmatpush.bf16.msra.mxu0 %v5172
    %6331 = vmatpush.bf16.msra.mxu0 %v5165
    %6332 = vmatpush.bf16.msra.mxu0 %v5158
    %6333 = vmatpush.bf16.msra.mxu0 %v5151
    %6334 = vmatpush.bf16.msra.mxu0 %v5144
    %6335 = vmatpush.bf16.msra.mxu0 %v5137
    %6336 = vmatpush.bf16.msra.mxu0 %v5130
    %6337 = vmatmul.bf16.gmra.mxu0 %v2851
    %v6338 = vpop.f32.mrf.mxu0
    %v6339 = vadd.f32 %v6325, %v6338
    %v6340 = vpop.f32.mrf.mxu0
    %v6341 = vadd.f32 %v6327, %v6340
    %6342 = vdwg.mxu0
    %6343 = vmatpush.bf16.msra.mxu0 %v5235
    %6344 = vmatpush.bf16.msra.mxu0 %v5228
    %6345 = vmatpush.bf16.msra.mxu0 %v5221
    %6346 = vmatpush.bf16.msra.mxu0 %v5214
    %6347 = vmatpush.bf16.msra.mxu0 %v5207
    %6348 = vmatpush.bf16.msra.mxu0 %v5200
    %6349 = vmatpush.bf16.msra.mxu0 %v5193
    %6350 = vmatpush.bf16.msra.mxu0 %v5186
    %6351 = vmatmul.bf16.gmra.mxu0 %v2852
    %v6352 = vpop.f32.mrf.mxu0
    %v6353 = vadd.f32 %v6339, %v6352
    %v6354 = vpop.f32.mrf.mxu0
    %v6355 = vadd.f32 %v6341, %v6354
    %6356 = vdwg.mxu0
    %6357 = vmatpush.bf16.msra.mxu0 %v4844
    %6358 = vmatpush.bf16.msra.mxu0 %v4837
    %6359 = vmatpush.bf16.msra.mxu0 %v4830
    %6360 = vmatpush.bf16.msra.mxu0 %v4823
    %6361 = vmatpush.bf16.msra.mxu0 %v4816
    %6362 = vmatpush.bf16.msra.mxu0 %v4809
    %6363 = vmatpush.bf16.msra.mxu0 %v4802
    %6364 = vmatpush.bf16.msra.mxu0 %v4795
    %6365 = vmatmul.bf16.gmra.mxu0 %v2845
    %v6366 = vpop.f32.mrf.mxu0
    %v6367 = vadd.f32 %v3373, %v6366
    %v6368 = vpop.f32.mrf.mxu0
    %v6369 = vadd.f32 %v3373, %v6368
    %6370 = vdwg.mxu0
    %6371 = vmatpush.bf16.msra.mxu0 %v4900
    %6372 = vmatpush.bf16.msra.mxu0 %v4893
    %6373 = vmatpush.bf16.msra.mxu0 %v4886
    %6374 = vmatpush.bf16.msra.mxu0 %v4879
    %6375 = vmatpush.bf16.msra.mxu0 %v4872
    %6376 = vmatpush.bf16.msra.mxu0 %v4865
    %6377 = vmatpush.bf16.msra.mxu0 %v4858
    %6378 = vmatpush.bf16.msra.mxu0 %v4851
    %6379 = vmatmul.bf16.gmra.mxu0 %v2846
    %v6380 = vpop.f32.mrf.mxu0
    %v6381 = vadd.f32 %v6367, %v6380
    %v6382 = vpop.f32.mrf.mxu0
    %v6383 = vadd.f32 %v6369, %v6382
    %6384 = vdwg.mxu0
    %6385 = vmatpush.bf16.msra.mxu0 %v4956
    %6386 = vmatpush.bf16.msra.mxu0 %v4949
    %6387 = vmatpush.bf16.msra.mxu0 %v4942
    %6388 = vmatpush.bf16.msra.mxu0 %v4935
    %6389 = vmatpush.bf16.msra.mxu0 %v4928
    %6390 = vmatpush.bf16.msra.mxu0 %v4921
    %6391 = vmatpush.bf16.msra.mxu0 %v4914
    %6392 = vmatpush.bf16.msra.mxu0 %v4907
    %6393 = vmatmul.bf16.gmra.mxu0 %v2847
    %v6394 = vpop.f32.mrf.mxu0
    %v6395 = vadd.f32 %v6381, %v6394
    %v6396 = vpop.f32.mrf.mxu0
    %v6397 = vadd.f32 %v6383, %v6396
    %6398 = vdwg.mxu0
    %6399 = vmatpush.bf16.msra.mxu0 %v5012
    %6400 = vmatpush.bf16.msra.mxu0 %v5005
    %6401 = vmatpush.bf16.msra.mxu0 %v4998
    %6402 = vmatpush.bf16.msra.mxu0 %v4991
    %6403 = vmatpush.bf16.msra.mxu0 %v4984
    %6404 = vmatpush.bf16.msra.mxu0 %v4977
    %6405 = vmatpush.bf16.msra.mxu0 %v4970
    %6406 = vmatpush.bf16.msra.mxu0 %v4963
    %6407 = vmatmul.bf16.gmra.mxu0 %v2848
    %v6408 = vpop.f32.mrf.mxu0
    %v6409 = vadd.f32 %v6395, %v6408
    %v6410 = vpop.f32.mrf.mxu0
    %v6411 = vadd.f32 %v6397, %v6410
    %6412 = vdwg.mxu0
    %6413 = vmatpush.bf16.msra.mxu0 %v5068
    %6414 = vmatpush.bf16.msra.mxu0 %v5061
    %6415 = vmatpush.bf16.msra.mxu0 %v5054
    %6416 = vmatpush.bf16.msra.mxu0 %v5047
    %6417 = vmatpush.bf16.msra.mxu0 %v5040
    %6418 = vmatpush.bf16.msra.mxu0 %v5033
    %6419 = vmatpush.bf16.msra.mxu0 %v5026
    %6420 = vmatpush.bf16.msra.mxu0 %v5019
    %6421 = vmatmul.bf16.gmra.mxu0 %v2849
    %v6422 = vpop.f32.mrf.mxu0
    %v6423 = vadd.f32 %v6409, %v6422
    %v6424 = vpop.f32.mrf.mxu0
    %v6425 = vadd.f32 %v6411, %v6424
    %6426 = vdwg.mxu0
    %6427 = vmatpush.bf16.msra.mxu0 %v5124
    %6428 = vmatpush.bf16.msra.mxu0 %v5117
    %6429 = vmatpush.bf16.msra.mxu0 %v5110
    %6430 = vmatpush.bf16.msra.mxu0 %v5103
    %6431 = vmatpush.bf16.msra.mxu0 %v5096
    %6432 = vmatpush.bf16.msra.mxu0 %v5089
    %6433 = vmatpush.bf16.msra.mxu0 %v5082
    %6434 = vmatpush.bf16.msra.mxu0 %v5075
    %6435 = vmatmul.bf16.gmra.mxu0 %v2850
    %v6436 = vpop.f32.mrf.mxu0
    %v6437 = vadd.f32 %v6423, %v6436
    %v6438 = vpop.f32.mrf.mxu0
    %v6439 = vadd.f32 %v6425, %v6438
    %6440 = vdwg.mxu0
    %6441 = vmatpush.bf16.msra.mxu0 %v5180
    %6442 = vmatpush.bf16.msra.mxu0 %v5173
    %6443 = vmatpush.bf16.msra.mxu0 %v5166
    %6444 = vmatpush.bf16.msra.mxu0 %v5159
    %6445 = vmatpush.bf16.msra.mxu0 %v5152
    %6446 = vmatpush.bf16.msra.mxu0 %v5145
    %6447 = vmatpush.bf16.msra.mxu0 %v5138
    %6448 = vmatpush.bf16.msra.mxu0 %v5131
    %6449 = vmatmul.bf16.gmra.mxu0 %v2851
    %v6450 = vpop.f32.mrf.mxu0
    %v6451 = vadd.f32 %v6437, %v6450
    %v6452 = vpop.f32.mrf.mxu0
    %v6453 = vadd.f32 %v6439, %v6452
    %6454 = vdwg.mxu0
    %6455 = vmatpush.bf16.msra.mxu0 %v5236
    %6456 = vmatpush.bf16.msra.mxu0 %v5229
    %6457 = vmatpush.bf16.msra.mxu0 %v5222
    %6458 = vmatpush.bf16.msra.mxu0 %v5215
    %6459 = vmatpush.bf16.msra.mxu0 %v5208
    %6460 = vmatpush.bf16.msra.mxu0 %v5201
    %6461 = vmatpush.bf16.msra.mxu0 %v5194
    %6462 = vmatpush.bf16.msra.mxu0 %v5187
    %6463 = vmatmul.bf16.gmra.mxu0 %v2852
    %v6464 = vpop.f32.mrf.mxu0
    %v6465 = vadd.f32 %v6451, %v6464
    %v6466 = vpop.f32.mrf.mxu0
    %v6467 = vadd.f32 %v6453, %v6466
    %6468 = vdwg.mxu0
    %v6469 = vtanh.pop %v5793
    %v6470 = vtanh.pop %v5905
    %v6471 = vtanh.pop %v6017
    %v6472 = vtanh.pop %v6129
    %v6473 = vtanh.pop %v6241
    %v6474 = vtanh.pop %v6353
    %v6475 = vtanh.pop %v6465
    %v6476 = vtanh.pop %v5795
    %v6477 = vtanh.pop %v5907
    %v6478 = vtanh.pop %v6019
    %v6479 = vtanh.pop %v6131
    %v6480 = vtanh.pop %v6243
    %v6481 = vtanh.pop %v6355
    %v6482 = vtanh.pop %v6467
    %v6483 = vpack.c.bf16 %v6470, %v6469
    %v6484 = vpack.c.bf16 %v6472, %v6471
    %v6485 = vpack.c.bf16 %v6474, %v6473
    %v6486 = vpack.c.bf16 %v6475, %v6475
    %v6487 = vpack.c.bf16 %v6477, %v6476
    %v6488 = vpack.c.bf16 %v6479, %v6478
    %v6489 = vpack.c.bf16 %v6481, %v6480
    %v6490 = vpack.c.bf16 %v6482, %v6482
    %6491 = vst [vmem:[#allocation17] sm:$0xff] %v6483
    %6492 = vst [vmem:[#allocation17 + $0x8] sm:$0xff] %v6484
    %6493 = vst [vmem:[#allocation17 + $0x10] sm:$0xff] %v6485
    %6494 = vst [vmem:[#allocation17 + $0x18] sm:$0xf] %v6486
    %6495 = vst [vmem:[#allocation17 + $0x1c] sm:$0xff] %v6487
    %6496 = vst [vmem:[#allocation17 + $0x24] sm:$0xff] %v6488
    %6497 = vst [vmem:[#allocation17 + $0x2c] sm:$0xff] %v6489
    %6498 = vst [vmem:[#allocation17 + $0x34] sm:$0xf] %v6490
    // Predicated region
    $region74: #{tpu_custom_call.1} parent=1 // pred_check
      _
    $region75: #{tpu_custom_call.1} parent=1 // pred_check_branch
      %6500 = sbr.rel (0) target = $region77
    $region76: #{tpu_custom_call.1} parent=1 // pred_region
      %6502 = vsyncadd [#allocation4], 0
      %s6503 = sshll.u32 [#allocation17], 4
      %s6504 = int_to_ptr.vmem [resolvable:$true] %s6503
      %s6505 = sshll.u32 %s9, 4
      %s6506 = int_to_ptr.hbm [resolvable:$true] %s6505
      %6511 = dma.vmem_to_hbm [thread:$0]  %s6504, 896, %s6506, [#allocation4], 448, 448, 28
    $region77: #{tpu_custom_call.1} parent=1 // pred_fallthru
      _
    // Predicated region
    $region78: #{tpu_custom_call.1} parent=1 // pred_check
      _
    $region79: #{tpu_custom_call.1} parent=1 // pred_check_branch
      %6513 = sbr.rel (0) target = $region81
    $region80: #{tpu_custom_call.1} parent=1 // pred_region
      %6515 = dma.done [#allocation4], 896
    $region81: #{tpu_custom_call.1} parent=1 // pred_fallthru
      _
    %6516 = vsyncpa [#allocation3], 1
    %6517 = vsyncpa [#allocation6], 1
    %6518 = vsyncpa [#allocation9], 1
    %6519 = vsyncpa [#allocation12], 1
    %6520 = vsyncpa [#allocation15], 1
    %6521 = vsyncpa [#allocation4], 1

// kernel: tpu_custom_call.1
$region0: #{tpu_custom_call.1}
  #allocation0 [shape = 'u32[]', space=smem, size = 0x4, offset = 0x4, fixed_abs, tag = 'smem constant byte address 0x4 - core index']
  #allocation1 [shape = 'u32[72,128]{1,0:T(1,128)}', space=vmem, size = 0x9000, scoped, tag = 'internal scratch']
  %s0 = inlined_call_operand.hbm [shape: bf16[16,128], index: 0, kind: input, shape index: {}]
  %s1 = inlined_call_operand.hbm [shape: bf16[128,256], index: 1, kind: input, shape index: {}]
  %s2 = inlined_call_operand.hbm [shape: f32[1,256], index: 2, kind: input, shape index: {}]
  %s3 = inlined_call_operand.hbm [shape: bf16[256,512], index: 3, kind: input, shape index: {}]
  %s4 = inlined_call_operand.hbm [shape: f32[1,512], index: 4, kind: input, shape index: {}]
  %s5 = inlined_call_operand.hbm [shape: bf16[512,1024], index: 5, kind: input, shape index: {}]
  %s6 = inlined_call_operand.hbm [shape: f32[1,1024], index: 6, kind: input, shape index: {}]
  %s7 = inlined_call_operand.hbm [shape: bf16[1024,896], index: 7, kind: input, shape index: {}]
  %s8 = inlined_call_operand.hbm [shape: f32[1,896], index: 8, kind: input, shape index: {}]
  %s9 = inlined_call_operand.hbm [shape: bf16[16,896], index: 9, kind: output, shape index: {}]
  %s10 = sld [smem:[#allocation0]]
  $region82: #{tpu_custom_call.1} parent=0
    _
  %s12 = ssub.s32 1, %s10
  %s13 = scalar_select 0, %s12, %s10
  $region1: #{tpu_custom_call.1} parent=0
    #allocation2 [shape = 'u8[4096]{0}', space=vmem, size = 0x1000, scoped, tag = 'input window, operand 0, single buffered']
    #allocation3 [shape = 's32[1]{0}', space=sflag, size = 0x4, scoped, tag = 'scoped memory for tpu_custom_call.1']
    #allocation4 [shape = 's32[1]{0}', space=sflag, size = 0x4, scoped, tag = 'scoped memory for tpu_custom_call.1']
    #allocation5 [shape = 'u8[65536]{0}', space=vmem, size = 0x10000, scoped, tag = 'input window, operand 1, single buffered']
    #allocation6 [shape = 's32[1]{0}', space=sflag, size = 0x4, scoped, tag = 'scoped memory for tpu_custom_call.1']
    #allocation7 [shape = 'u8[1024]{0}', space=vmem, size = 0x400, scoped, tag = 'input window, operand 2, single buffered']
    #allocation8 [shape = 'u8[262144]{0}', space=vmem, size = 0x40000, scoped, tag = 'input window, operand 3, single buffered']
    #allocation9 [shape = 's32[1]{0}', space=sflag, size = 0x4, scoped, tag = 'scoped memory for tpu_custom_call.1']
    #allocation10 [shape = 'u8[2048]{0}', space=vmem, size = 0x800, scoped, tag = 'input window, operand 4, single buffered']
    #allocation11 [shape = 'u8[1048576]{0}', space=vmem, size = 0x100000, scoped, tag = 'input window, operand 5, single buffered']
    #allocation12 [shape = 's32[1]{0}', space=sflag, size = 0x4, scoped, tag = 'scoped memory for tpu_custom_call.1']
    #allocation13 [shape = 'u8[4096]{0}', space=vmem, size = 0x1000, scoped, tag = 'input window, operand 6, single buffered']
    #allocation14 [shape = 'u8[1835008]{0}', space=vmem, size = 0x1c0000, scoped, tag = 'input window, operand 7, single buffered']
    #allocation15 [shape = 's32[1]{0}', space=sflag, size = 0x4, scoped, tag = 'scoped memory for tpu_custom_call.1']
    #allocation16 [shape = 'u8[3584]{0}', space=vmem, size = 0x1000, scoped, tag = 'input window, operand 8, single buffered']
    #allocation17 [shape = 'u8[28672]{0}', space=vmem, size = 0x7000, scoped, tag = 'output window, operand 0, single buffered']
    %14 = vsyncpa [#allocation3], 0
    %15 = vsyncpa [#allocation6], 0
    %16 = vsyncpa [#allocation9], 0
    %17 = vsyncpa [#allocation12], 0
    %18 = vsyncpa [#allocation15], 0
    %19 = vsyncpa [#allocation4], 0
    // Predicated region
    $region2: #{tpu_custom_call.1} parent=1 // pred_check
      _
    $region3: #{tpu_custom_call.1} parent=1 // pred_check_branch
      %21 = sbr.rel (0) target = $region5
    $region4: #{tpu_custom_call.1} parent=1 // pred_region
      %23 = vsyncadd [#allocation3], 0
      %s24 = sshll.u32 %s0, 4
      %s25 = int_to_ptr.hbm [resolvable:$true] %s24
      %s26 = sshll.u32 [#allocation2], 4
      %s27 = int_to_ptr.vmem [resolvable:$true] %s26
      %32 = dma.hbm_to_vmem [thread:$0]  %s25, 128, %s27, [#allocation3], 64, 64, 4
    $region5: #{tpu_custom_call.1} parent=1 // pred_fallthru
      _
    // Predicated region
    $region6: #{tpu_custom_call.1} parent=1 // pred_check
      _
    $region7: #{tpu_custom_call.1} parent=1 // pred_check_branch
      %34 = sbr.rel (0) target = $region9
    $region8: #{tpu_custom_call.1} parent=1 // pred_region
      %36 = vsyncadd [#allocation6], 0
      %s37 = sshll.u32 %s1, 4
      %s38 = int_to_ptr.hbm [resolvable:$true] %s37
      %s39 = sshll.u32 [#allocation5], 4
      %s40 = int_to_ptr.vmem [resolvable:$true] %s39
      %45 = dma.hbm_to_vmem [thread:$0]  %s38, 2048, %s40, [#allocation6], 128, 128, 8
    $region9: #{tpu_custom_call.1} parent=1 // pred_fallthru
      _
    // Predicated region
    $region10: #{tpu_custom_call.1} parent=1 // pred_check
      _
    $region11: #{tpu_custom_call.1} parent=1 // pred_check_branch
      %47 = sbr.rel (0) target = $region13
    $region12: #{tpu_custom_call.1} parent=1 // pred_region
      %49 = vsyncadd [#allocation6], 0
      %s51 = sshll.u32 %s2, 4
      %s52 = int_to_ptr.hbm [resolvable:$true] %s51
      %s53 = sshll.u32 [#allocation7], 4
      %s54 = int_to_ptr.vmem [resolvable:$true] %s53
      %56 = dma.hbm_to_vmem [thread:$0]  %s52, 32, %s54, [#allocation6]
    $region13: #{tpu_custom_call.1} parent=1 // pred_fallthru
      _
    // Predicated region
    $region14: #{tpu_custom_call.1} parent=1 // pred_check
      _
    $region15: #{tpu_custom_call.1} parent=1 // pred_check_branch
      %58 = sbr.rel (0) target = $region17
    $region16: #{tpu_custom_call.1} parent=1 // pred_region
      %60 = vsyncadd [#allocation9], 0
      %s61 = sshll.u32 %s3, 4
      %s62 = int_to_ptr.hbm [resolvable:$true] %s61
      %s63 = sshll.u32 [#allocation8], 4
      %s64 = int_to_ptr.vmem [resolvable:$true] %s63
      %69 = dma.hbm_to_vmem [thread:$0]  %s62, 8192, %s64, [#allocation9], 256, 256, 16
    $region17: #{tpu_custom_call.1} parent=1 // pred_fallthru
      _
    // Predicated region
    $region18: #{tpu_custom_call.1} parent=1 // pred_check
      _
    $region19: #{tpu_custom_call.1} parent=1 // pred_check_branch
      %71 = sbr.rel (0) target = $region21
    $region20: #{tpu_custom_call.1} parent=1 // pred_region
      %73 = vsyncadd [#allocation9], 0
      %s75 = sshll.u32 %s4, 4
      %s76 = int_to_ptr.hbm [resolvable:$true] %s75
      %s77 = sshll.u32 [#allocation10], 4
      %s78 = int_to_ptr.vmem [resolvable:$true] %s77
      %80 = dma.hbm_to_vmem [thread:$0]  %s76, 64, %s78, [#allocation9]
    $region21: #{tpu_custom_call.1} parent=1 // pred_fallthru
      _
    // Predicated region
    $region22: #{tpu_custom_call.1} parent=1 // pred_check
      _
    $region23: #{tpu_custom_call.1} parent=1 // pred_check_branch
      %82 = sbr.rel (0) target = $region25
    $region24: #{tpu_custom_call.1} parent=1 // pred_region
      %84 = vsyncadd [#allocation12], 0
      %s85 = sshll.u32 %s5, 4
      %s86 = int_to_ptr.hbm [resolvable:$true] %s85
      %s87 = sshll.u32 [#allocation11], 4
      %s88 = int_to_ptr.vmem [resolvable:$true] %s87
      %93 = dma.hbm_to_vmem [thread:$0]  %s86, 32768, %s88, [#allocation12], 512, 512, 32
    $region25: #{tpu_custom_call.1} parent=1 // pred_fallthru
      _
    // Predicated region
    $region26: #{tpu_custom_call.1} parent=1 // pred_check
      _
    $region27: #{tpu_custom_call.1} parent=1 // pred_check_branch
      %95 = sbr.rel (0) target = $region29
    $region28: #{tpu_custom_call.1} parent=1 // pred_region
      %97 = vsyncadd [#allocation12], 0
      %s99 = sshll.u32 %s6, 4
      %s100 = int_to_ptr.hbm [resolvable:$true] %s99
      %s101 = sshll.u32 [#allocation13], 4
      %s102 = int_to_ptr.vmem [resolvable:$true] %s101
      %104 = dma.hbm_to_vmem [thread:$0]  %s100, 128, %s102, [#allocation12]
    $region29: #{tpu_custom_call.1} parent=1 // pred_fallthru
      _
    // Predicated region
    $region30: #{tpu_custom_call.1} parent=1 // pred_check
      _
    $region31: #{tpu_custom_call.1} parent=1 // pred_check_branch
      %106 = sbr.rel (0) target = $region33
    $region32: #{tpu_custom_call.1} parent=1 // pred_region
      %108 = vsyncadd [#allocation15], 0
      %s109 = sshll.u32 %s7, 4
      %s110 = int_to_ptr.hbm [resolvable:$true] %s109
      %s111 = sshll.u32 [#allocation14], 4
      %s112 = int_to_ptr.vmem [resolvable:$true] %s111
      %117 = dma.hbm_to_vmem [thread:$0]  %s110, 57344, %s112, [#allocation15], 448, 448, 28
    $region33: #{tpu_custom_call.1} parent=1 // pred_fallthru
      _
    // Predicated region
    $region34: #{tpu_custom_call.1} parent=1 // pred_check
      _
    $region35: #{tpu_custom_call.1} parent=1 // pred_check_branch
      %119 = sbr.rel (0) target = $region37
    $region36: #{tpu_custom_call.1} parent=1 // pred_region
      %121 = vsyncadd [#allocation15], 0
      %s123 = sshll.u32 %s8, 4
      %s124 = int_to_ptr.hbm [resolvable:$true] %s123
      %s125 = sshll.u32 [#allocation16], 4
      %s126 = int_to_ptr.vmem [resolvable:$true] %s125
      %128 = dma.hbm_to_vmem [thread:$0]  %s124, 112, %s126, [#allocation15]
    $region37: #{tpu_custom_call.1} parent=1 // pred_fallthru
      _
    // Predicated region
    $region38: #{tpu_custom_call.1} parent=1 // pred_check
      _
    $region39: #{tpu_custom_call.1} parent=1 // pred_check_branch
      %130 = sbr.rel (0) target = $region41
    $region40: #{tpu_custom_call.1} parent=1 // pred_region
      %132 = dma.done [#allocation3], 128
    $region41: #{tpu_custom_call.1} parent=1 // pred_fallthru
      _
    // Predicated region
    $region42: #{tpu_custom_call.1} parent=1 // pred_check
      _
    $region43: #{tpu_custom_call.1} parent=1 // pred_check_branch
      %134 = sbr.rel (0) target = $region45
    $region44: #{tpu_custom_call.1} parent=1 // pred_region
      %136 = dma.done [#allocation6], 2048
    $region45: #{tpu_custom_call.1} parent=1 // pred_fallthru
      _
    // Predicated region
    $region46: #{tpu_custom_call.1} parent=1 // pred_check
      _
    $region47: #{tpu_custom_call.1} parent=1 // pred_check_branch
      %138 = sbr.rel (0) target = $region49
    $region48: #{tpu_custom_call.1} parent=1 // pred_region
      %140 = dma.done [#allocation6], 32
    $region49: #{tpu_custom_call.1} parent=1 // pred_fallthru
      _
    // Predicated region
    $region50: #{tpu_custom_call.1} parent=1 // pred_check
      _
    $region51: #{tpu_custom_call.1} parent=1 // pred_check_branch
      %142 = sbr.rel (0) target = $region53
    $region52: #{tpu_custom_call.1} parent=1 // pred_region
      %144 = dma.done [#allocation9], 8192
    $region53: #{tpu_custom_call.1} parent=1 // pred_fallthru
      _
    // Predicated region
    $region54: #{tpu_custom_call.1} parent=1 // pred_check
      _
    $region55: #{tpu_custom_call.1} parent=1 // pred_check_branch
      %146 = sbr.rel (0) target = $region57
    $region56: #{tpu_custom_call.1} parent=1 // pred_region
      %148 = dma.done [#allocation9], 64
    $region57: #{tpu_custom_call.1} parent=1 // pred_fallthru
      _
    // Predicated region
    $region58: #{tpu_custom_call.1} parent=1 // pred_check
      _
    $region59: #{tpu_custom_call.1} parent=1 // pred_check_branch
      %150 = sbr.rel (0) target = $region61
    $region60: #{tpu_custom_call.1} parent=1 // pred_region
      %152 = dma.done [#allocation12], 32768
    $region61: #{tpu_custom_call.1} parent=1 // pred_fallthru
      _
    // Predicated region
    $region62: #{tpu_custom_call.1} parent=1 // pred_check
      _
    $region63: #{tpu_custom_call.1} parent=1 // pred_check_branch
      %154 = sbr.rel (0) target = $region65
    $region64: #{tpu_custom_call.1} parent=1 // pred_region
      %156 = dma.done [#allocation12], 128
    $region65: #{tpu_custom_call.1} parent=1 // pred_fallthru
      _
    // Predicated region
    $region66: #{tpu_custom_call.1} parent=1 // pred_check
      _
    $region67: #{tpu_custom_call.1} parent=1 // pred_check_branch
      %158 = sbr.rel (0) target = $region69
    $region68: #{tpu_custom_call.1} parent=1 // pred_region
      %160 = dma.done [#allocation15], 57344
    $region69: #{tpu_custom_call.1} parent=1 // pred_fallthru
      _
    // Predicated region
    $region70: #{tpu_custom_call.1} parent=1 // pred_check
      _
    $region71: #{tpu_custom_call.1} parent=1 // pred_check_branch
      %162 = sbr.rel (0) target = $region73
    $region72: #{tpu_custom_call.1} parent=1 // pred_region
      %164 = dma.done [#allocation15], 112
    $region73: #{tpu_custom_call.1} parent=1 // pred_fallthru
      _
    %v165 = vld [vmem:[#allocation2] sm:$0xf]
    %v166 = vld [vmem:[#allocation2 + $0x4] sm:$0xf]
    %v167 = vld [vmem:[#allocation5] sm:$0xff]
    %v168 = vld [vmem:[#allocation5 + $0x8] sm:$0xff]
    %v169 = vld [vmem:[#allocation5 + $0x10] sm:$0xff]
    %v170 = vld [vmem:[#allocation5 + $0x18] sm:$0xff]
    %v171 = vld [vmem:[#allocation5 + $0x20] sm:$0xff]
    %v172 = vld [vmem:[#allocation5 + $0x28] sm:$0xff]
    %v173 = vld [vmem:[#allocation5 + $0x30] sm:$0xff]
    %v174 = vld [vmem:[#allocation5 + $0x38] sm:$0xff]
    %v175 = vld [vmem:[#allocation5 + $0x40] sm:$0xff]
    %v176 = vld [vmem:[#allocation5 + $0x48] sm:$0xff]
    %v177 = vld [vmem:[#allocation5 + $0x50] sm:$0xff]
    %v178 = vld [vmem:[#allocation5 + $0x58] sm:$0xff]
    %v179 = vld [vmem:[#allocation5 + $0x60] sm:$0xff]
    %v180 = vld [vmem:[#allocation5 + $0x68] sm:$0xff]
    %v181 = vld [vmem:[#allocation5 + $0x70] sm:$0xff]
    %v182 = vld [vmem:[#allocation5 + $0x78] sm:$0xff]
    %v183 = vld [vmem:[#allocation7] sm:$0x3]
    %v185 = vperm.slane %v183, 0
    %v186 = vperm.slane %v183, 1
    %v191 = vunpack.c.l.b16 %v165
    %v192 = vunpack.c.l.b16 %v166
    %v193 = vpack.c.b16 %v192, %v191
    %v211 = vunpack.c.l.b16 %v167
    %v212 = vunpack.c.h.b16 %v167
    %v213 = vunpack.c.l.b16 %v168
    %v214 = vunpack.c.h.b16 %v168
    %v215 = vunpack.c.l.b16 %v169
    %v216 = vunpack.c.h.b16 %v169
    %v217 = vunpack.c.l.b16 %v170
    %v218 = vunpack.c.h.b16 %v170
    %v219 = vunpack.c.l.b16 %v171
    %v220 = vunpack.c.h.b16 %v171
    %v221 = vunpack.c.l.b16 %v172
    %v222 = vunpack.c.h.b16 %v172
    %v223 = vunpack.c.l.b16 %v173
    %v224 = vunpack.c.h.b16 %v173
    %v225 = vunpack.c.l.b16 %v174
    %v226 = vunpack.c.h.b16 %v174
    %v227 = vunpack.c.l.b16 %v175
    %v228 = vunpack.c.h.b16 %v175
    %v229 = vunpack.c.l.b16 %v176
    %v230 = vunpack.c.h.b16 %v176
    %v231 = vunpack.c.l.b16 %v177
    %v232 = vunpack.c.h.b16 %v177
    %v233 = vunpack.c.l.b16 %v178
    %v234 = vunpack.c.h.b16 %v178
    %v235 = vunpack.c.l.b16 %v179
    %v236 = vunpack.c.h.b16 %v179
    %v237 = vunpack.c.l.b16 %v180
    %v238 = vunpack.c.h.b16 %v180
    %v239 = vunpack.c.l.b16 %v181
    %v240 = vunpack.c.h.b16 %v181
    %v241 = vunpack.c.l.b16 %v182
    %v242 = vunpack.c.h.b16 %v182
    %v243 = vpack.c.b16 %v213, %v211
    %v244 = vpack.c.b16 %v214, %v212
    %v245 = vpack.c.b16 %v217, %v215
    %v246 = vpack.c.b16 %v218, %v216
    %v247 = vpack.c.b16 %v221, %v219
    %v248 = vpack.c.b16 %v222, %v220
    %v249 = vpack.c.b16 %v225, %v223
    %v250 = vpack.c.b16 %v226, %v224
    %v251 = vpack.c.b16 %v229, %v227
    %v252 = vpack.c.b16 %v230, %v228
    %v253 = vpack.c.b16 %v233, %v231
    %v254 = vpack.c.b16 %v234, %v232
    %v255 = vpack.c.b16 %v237, %v235
    %v256 = vpack.c.b16 %v238, %v236
    %v257 = vpack.c.b16 %v241, %v239
    %v258 = vpack.c.b16 %v242, %v240
    %275 = vmatpush.bf16.msra.mxu0 %v257
    %276 = vmatpush.bf16.msra.mxu0 %v255
    %277 = vmatpush.bf16.msra.mxu0 %v253
    %278 = vmatpush.bf16.msra.mxu0 %v251
    %279 = vmatpush.bf16.msra.mxu0 %v249
    %280 = vmatpush.bf16.msra.mxu0 %v247
    %281 = vmatpush.bf16.msra.mxu0 %v245
    %282 = vmatpush.bf16.msra.mxu0 %v243
    %283 = vmatmul.bf16.gmra.mxu0 %v193
    %v284 = vpop.f32.mrf.mxu0
    %v285 = vadd.f32 %v185, %v284
    %v286 = vpop.f32.mrf.mxu0
    %v287 = vadd.f32 %v185, %v286
    %288 = vdwg.mxu0
    %289 = vmatpush.bf16.msra.mxu0 %v258
    %290 = vmatpush.bf16.msra.mxu0 %v256
    %291 = vmatpush.bf16.msra.mxu0 %v254
    %292 = vmatpush.bf16.msra.mxu0 %v252
    %293 = vmatpush.bf16.msra.mxu0 %v250
    %294 = vmatpush.bf16.msra.mxu0 %v248
    %295 = vmatpush.bf16.msra.mxu0 %v246
    %296 = vmatpush.bf16.msra.mxu0 %v244
    %297 = vmatmul.bf16.gmra.mxu0 %v193
    %v298 = vpop.f32.mrf.mxu0
    %v299 = vadd.f32 %v186, %v298
    %v300 = vpop.f32.mrf.mxu0
    %v301 = vadd.f32 %v186, %v300
    %302 = vdwg.mxu0
    %v303 = vmax.f32 %v285, 0.0
    %v304 = vmax.f32 %v299, 0.0
    %v305 = vmax.f32 %v287, 0.0
    %v306 = vmax.f32 %v301, 0.0
    %v307 = vpack.c.bf16 %v305, %v303
    %v308 = vpack.c.bf16 %v306, %v304
    %v309 = vld [vmem:[#allocation8] sm:$0xff]
    %v310 = vld [vmem:[#allocation8 + $0x8] sm:$0xff]
    %v311 = vld [vmem:[#allocation8 + $0x10] sm:$0xff]
    %v312 = vld [vmem:[#allocation8 + $0x18] sm:$0xff]
    %v313 = vld [vmem:[#allocation8 + $0x20] sm:$0xff]
    %v314 = vld [vmem:[#allocation8 + $0x28] sm:$0xff]
    %v315 = vld [vmem:[#allocation8 + $0x30] sm:$0xff]
    %v316 = vld [vmem:[#allocation8 + $0x38] sm:$0xff]
    %v317 = vld [vmem:[#allocation8 + $0x40] sm:$0xff]
    %v318 = vld [vmem:[#allocation8 + $0x48] sm:$0xff]
    %v319 = vld [vmem:[#allocation8 + $0x50] sm:$0xff]
    %v320 = vld [vmem:[#allocation8 + $0x58] sm:$0xff]
    %v321 = vld [vmem:[#allocation8 + $0x60] sm:$0xff]
    %v322 = vld [vmem:[#allocation8 + $0x68] sm:$0xff]
    %v323 = vld [vmem:[#allocation8 + $0x70] sm:$0xff]
    %v324 = vld [vmem:[#allocation8 + $0x78] sm:$0xff]
    %v325 = vld [vmem:[#allocation8 + $0x80] sm:$0xff]
    %v326 = vld [vmem:[#allocation8 + $0x88] sm:$0xff]
    %v327 = vld [vmem:[#allocation8 + $0x90] sm:$0xff]
    %v328 = vld [vmem:[#allocation8 + $0x98] sm:$0xff]
    %v329 = vld [vmem:[#allocation8 + $0xa0] sm:$0xff]
    %v330 = vld [vmem:[#allocation8 + $0xa8] sm:$0xff]
    %v331 = vld [vmem:[#allocation8 + $0xb0] sm:$0xff]
    %v332 = vld [vmem:[#allocation8 + $0xb8] sm:$0xff]
    %v333 = vld [vmem:[#allocation8 + $0xc0] sm:$0xff]
    %v334 = vld [vmem:[#allocation8 + $0xc8] sm:$0xff]
    %v335 = vld [vmem:[#allocation8 + $0xd0] sm:$0xff]
    %v336 = vld [vmem:[#allocation8 + $0xd8] sm:$0xff]
    %v337 = vld [vmem:[#allocation8 + $0xe0] sm:$0xff]
    %v338 = vld [vmem:[#allocation8 + $0xe8] sm:$0xff]
    %v339 = vld [vmem:[#allocation8 + $0xf0] sm:$0xff]
    %v340 = vld [vmem:[#allocation8 + $0xf8] sm:$0xff]
    %v341 = vld [vmem:[#allocation8 + $0x100] sm:$0xff]
    %v342 = vld [vmem:[#allocation8 + $0x108] sm:$0xff]
    %v343 = vld [vmem:[#allocation8 + $0x110] sm:$0xff]
    %v344 = vld [vmem:[#allocation8 + $0x118] sm:$0xff]
    %v345 = vld [vmem:[#allocation8 + $0x120] sm:$0xff]
    %v346 = vld [vmem:[#allocation8 + $0x128] sm:$0xff]
    %v347 = vld [vmem:[#allocation8 + $0x130] sm:$0xff]
    %v348 = vld [vmem:[#allocation8 + $0x138] sm:$0xff]
    %v349 = vld [vmem:[#allocation8 + $0x140] sm:$0xff]
    %v350 = vld [vmem:[#allocation8 + $0x148] sm:$0xff]
    %v351 = vld [vmem:[#allocation8 + $0x150] sm:$0xff]
    %v352 = vld [vmem:[#allocation8 + $0x158] sm:$0xff]
    %v353 = vld [vmem:[#allocation8 + $0x160] sm:$0xff]
    %v354 = vld [vmem:[#allocation8 + $0x168] sm:$0xff]
    %v355 = vld [vmem:[#allocation8 + $0x170] sm:$0xff]
    %v356 = vld [vmem:[#allocation8 + $0x178] sm:$0xff]
    %v357 = vld [vmem:[#allocation8 + $0x180] sm:$0xff]
    %v358 = vld [vmem:[#allocation8 + $0x188] sm:$0xff]
    %v359 = vld [vmem:[#allocation8 + $0x190] sm:$0xff]
    %v360 = vld [vmem:[#allocation8 + $0x198] sm:$0xff]
    %v361 = vld [vmem:[#allocation8 + $0x1a0] sm:$0xff]
    %v362 = vld [vmem:[#allocation8 + $0x1a8] sm:$0xff]
    %v363 = vld [vmem:[#allocation8 + $0x1b0] sm:$0xff]
    %v364 = vld [vmem:[#allocation8 + $0x1b8] sm:$0xff]
    %v365 = vld [vmem:[#allocation8 + $0x1c0] sm:$0xff]
    %v366 = vld [vmem:[#allocation8 + $0x1c8] sm:$0xff]
    %v367 = vld [vmem:[#allocation8 + $0x1d0] sm:$0xff]
    %v368 = vld [vmem:[#allocation8 + $0x1d8] sm:$0xff]
    %v369 = vld [vmem:[#allocation8 + $0x1e0] sm:$0xff]
    %v370 = vld [vmem:[#allocation8 + $0x1e8] sm:$0xff]
    %v371 = vld [vmem:[#allocation8 + $0x1f0] sm:$0xff]
    %v372 = vld [vmem:[#allocation8 + $0x1f8] sm:$0xff]
    %v373 = vld [vmem:[#allocation10] sm:$0xf]
    %v375 = vperm.slane %v373, 0
    %v376 = vperm.slane %v373, 1
    %v377 = vperm.slane %v373, 2
    %v378 = vperm.slane %v373, 3
    %v447 = vunpack.c.l.b16 %v309
    %v448 = vunpack.c.h.b16 %v309
    %v449 = vunpack.c.l.b16 %v310
    %v450 = vunpack.c.h.b16 %v310
    %v451 = vunpack.c.l.b16 %v311
    %v452 = vunpack.c.h.b16 %v311
    %v453 = vunpack.c.l.b16 %v312
    %v454 = vunpack.c.h.b16 %v312
    %v455 = vunpack.c.l.b16 %v313
    %v456 = vunpack.c.h.b16 %v313
    %v457 = vunpack.c.l.b16 %v314
    %v458 = vunpack.c.h.b16 %v314
    %v459 = vunpack.c.l.b16 %v315
    %v460 = vunpack.c.h.b16 %v315
    %v461 = vunpack.c.l.b16 %v316
    %v462 = vunpack.c.h.b16 %v316
    %v463 = vunpack.c.l.b16 %v317
    %v464 = vunpack.c.h.b16 %v317
    %v465 = vunpack.c.l.b16 %v318
    %v466 = vunpack.c.h.b16 %v318
    %v467 = vunpack.c.l.b16 %v319
    %v468 = vunpack.c.h.b16 %v319
    %v469 = vunpack.c.l.b16 %v320
    %v470 = vunpack.c.h.b16 %v320
    %v471 = vunpack.c.l.b16 %v321
    %v472 = vunpack.c.h.b16 %v321
    %v473 = vunpack.c.l.b16 %v322
    %v474 = vunpack.c.h.b16 %v322
    %v475 = vunpack.c.l.b16 %v323
    %v476 = vunpack.c.h.b16 %v323
    %v477 = vunpack.c.l.b16 %v324
    %v478 = vunpack.c.h.b16 %v324
    %v479 = vunpack.c.l.b16 %v325
    %v480 = vunpack.c.h.b16 %v325
    %v481 = vunpack.c.l.b16 %v326
    %v482 = vunpack.c.h.b16 %v326
    %v483 = vunpack.c.l.b16 %v327
    %v484 = vunpack.c.h.b16 %v327
    %v485 = vunpack.c.l.b16 %v328
    %v486 = vunpack.c.h.b16 %v328
    %v487 = vunpack.c.l.b16 %v329
    %v488 = vunpack.c.h.b16 %v329
    %v489 = vunpack.c.l.b16 %v330
    %v490 = vunpack.c.h.b16 %v330
    %v491 = vunpack.c.l.b16 %v331
    %v492 = vunpack.c.h.b16 %v331
    %v493 = vunpack.c.l.b16 %v332
    %v494 = vunpack.c.h.b16 %v332
    %v495 = vunpack.c.l.b16 %v333
    %v496 = vunpack.c.h.b16 %v333
    %v497 = vunpack.c.l.b16 %v334
    %v498 = vunpack.c.h.b16 %v334
    %v499 = vunpack.c.l.b16 %v335
    %v500 = vunpack.c.h.b16 %v335
    %v501 = vunpack.c.l.b16 %v336
    %v502 = vunpack.c.h.b16 %v336
    %v503 = vunpack.c.l.b16 %v337
    %v504 = vunpack.c.h.b16 %v337
    %v505 = vunpack.c.l.b16 %v338
    %v506 = vunpack.c.h.b16 %v338
    %v507 = vunpack.c.l.b16 %v339
    %v508 = vunpack.c.h.b16 %v339
    %v509 = vunpack.c.l.b16 %v340
    %v510 = vunpack.c.h.b16 %v340
    %v511 = vunpack.c.l.b16 %v341
    %v512 = vunpack.c.h.b16 %v341
    %v513 = vunpack.c.l.b16 %v342
    %v514 = vunpack.c.h.b16 %v342
    %v515 = vunpack.c.l.b16 %v343
    %v516 = vunpack.c.h.b16 %v343
    %v517 = vunpack.c.l.b16 %v344
    %v518 = vunpack.c.h.b16 %v344
    %v519 = vunpack.c.l.b16 %v345
    %v520 = vunpack.c.h.b16 %v345
    %v521 = vunpack.c.l.b16 %v346
    %v522 = vunpack.c.h.b16 %v346
    %v523 = vunpack.c.l.b16 %v347
    %v524 = vunpack.c.h.b16 %v347
    %v525 = vunpack.c.l.b16 %v348
    %v526 = vunpack.c.h.b16 %v348
    %v527 = vunpack.c.l.b16 %v349
    %v528 = vunpack.c.h.b16 %v349
    %v529 = vunpack.c.l.b16 %v350
    %v530 = vunpack.c.h.b16 %v350
    %v531 = vunpack.c.l.b16 %v351
    %v532 = vunpack.c.h.b16 %v351
    %v533 = vunpack.c.l.b16 %v352
    %v534 = vunpack.c.h.b16 %v352
    %v535 = vunpack.c.l.b16 %v353
    %v536 = vunpack.c.h.b16 %v353
    %v537 = vunpack.c.l.b16 %v354
    %v538 = vunpack.c.h.b16 %v354
    %v539 = vunpack.c.l.b16 %v355
    %v540 = vunpack.c.h.b16 %v355
    %v541 = vunpack.c.l.b16 %v356
    %v542 = vunpack.c.h.b16 %v356
    %v543 = vunpack.c.l.b16 %v357
    %v544 = vunpack.c.h.b16 %v357
    %v545 = vunpack.c.l.b16 %v358
    %v546 = vunpack.c.h.b16 %v358
    %v547 = vunpack.c.l.b16 %v359
    %v548 = vunpack.c.h.b16 %v359
    %v549 = vunpack.c.l.b16 %v360
    %v550 = vunpack.c.h.b16 %v360
    %v551 = vunpack.c.l.b16 %v361
    %v552 = vunpack.c.h.b16 %v361
    %v553 = vunpack.c.l.b16 %v362
    %v554 = vunpack.c.h.b16 %v362
    %v555 = vunpack.c.l.b16 %v363
    %v556 = vunpack.c.h.b16 %v363
    %v557 = vunpack.c.l.b16 %v364
    %v558 = vunpack.c.h.b16 %v364
    %v559 = vunpack.c.l.b16 %v365
    %v560 = vunpack.c.h.b16 %v365
    %v561 = vunpack.c.l.b16 %v366
    %v562 = vunpack.c.h.b16 %v366
    %v563 = vunpack.c.l.b16 %v367
    %v564 = vunpack.c.h.b16 %v367
    %v565 = vunpack.c.l.b16 %v368
    %v566 = vunpack.c.h.b16 %v368
    %v567 = vunpack.c.l.b16 %v369
    %v568 = vunpack.c.h.b16 %v369
    %v569 = vunpack.c.l.b16 %v370
    %v570 = vunpack.c.h.b16 %v370
    %v571 = vunpack.c.l.b16 %v371
    %v572 = vunpack.c.h.b16 %v371
    %v573 = vunpack.c.l.b16 %v372
    %v574 = vunpack.c.h.b16 %v372
    %v575 = vpack.c.b16 %v451, %v447
    %v576 = vpack.c.b16 %v452, %v448
    %v577 = vpack.c.b16 %v453, %v449
    %v578 = vpack.c.b16 %v454, %v450
    %v579 = vpack.c.b16 %v459, %v455
    %v580 = vpack.c.b16 %v460, %v456
    %v581 = vpack.c.b16 %v461, %v457
    %v582 = vpack.c.b16 %v462, %v458
    %v583 = vpack.c.b16 %v467, %v463
    %v584 = vpack.c.b16 %v468, %v464
    %v585 = vpack.c.b16 %v469, %v465
    %v586 = vpack.c.b16 %v470, %v466
    %v587 = vpack.c.b16 %v475, %v471
    %v588 = vpack.c.b16 %v476, %v472
    %v589 = vpack.c.b16 %v477, %v473
    %v590 = vpack.c.b16 %v478, %v474
    %v591 = vpack.c.b16 %v483, %v479
    %v592 = vpack.c.b16 %v484, %v480
    %v593 = vpack.c.b16 %v485, %v481
    %v594 = vpack.c.b16 %v486, %v482
    %v595 = vpack.c.b16 %v491, %v487
    %v596 = vpack.c.b16 %v492, %v488
    %v597 = vpack.c.b16 %v493, %v489
    %v598 = vpack.c.b16 %v494, %v490
    %v599 = vpack.c.b16 %v499, %v495
    %v600 = vpack.c.b16 %v500, %v496
    %v601 = vpack.c.b16 %v501, %v497
    %v602 = vpack.c.b16 %v502, %v498
    %v603 = vpack.c.b16 %v507, %v503
    %v604 = vpack.c.b16 %v508, %v504
    %v605 = vpack.c.b16 %v509, %v505
    %v606 = vpack.c.b16 %v510, %v506
    %v607 = vpack.c.b16 %v515, %v511
    %v608 = vpack.c.b16 %v516, %v512
    %v609 = vpack.c.b16 %v517, %v513
    %v610 = vpack.c.b16 %v518, %v514
    %v611 = vpack.c.b16 %v523, %v519
    %v612 = vpack.c.b16 %v524, %v520
    %v613 = vpack.c.b16 %v525, %v521
    %v614 = vpack.c.b16 %v526, %v522
    %v615 = vpack.c.b16 %v531, %v527
    %v616 = vpack.c.b16 %v532, %v528
    %v617 = vpack.c.b16 %v533, %v529
    %v618 = vpack.c.b16 %v534, %v530
    %v619 = vpack.c.b16 %v539, %v535
    %v620 = vpack.c.b16 %v540, %v536
    %v621 = vpack.c.b16 %v541, %v537
    %v622 = vpack.c.b16 %v542, %v538
    %v623 = vpack.c.b16 %v547, %v543
    %v624 = vpack.c.b16 %v548, %v544
    %v625 = vpack.c.b16 %v549, %v545
    %v626 = vpack.c.b16 %v550, %v546
    %v627 = vpack.c.b16 %v555, %v551
    %v628 = vpack.c.b16 %v556, %v552
    %v629 = vpack.c.b16 %v557, %v553
    %v630 = vpack.c.b16 %v558, %v554
    %v631 = vpack.c.b16 %v563, %v559
    %v632 = vpack.c.b16 %v564, %v560
    %v633 = vpack.c.b16 %v565, %v561
    %v634 = vpack.c.b16 %v566, %v562
    %v635 = vpack.c.b16 %v571, %v567
    %v636 = vpack.c.b16 %v572, %v568
    %v637 = vpack.c.b16 %v573, %v569
    %v638 = vpack.c.b16 %v574, %v570
    %703 = vmatpush.bf16.msra.mxu0 %v603
    %704 = vmatpush.bf16.msra.mxu0 %v599
    %705 = vmatpush.bf16.msra.mxu0 %v595
    %706 = vmatpush.bf16.msra.mxu0 %v591
    %707 = vmatpush.bf16.msra.mxu0 %v587
    %708 = vmatpush.bf16.msra.mxu0 %v583
    %709 = vmatpush.bf16.msra.mxu0 %v579
    %710 = vmatpush.bf16.msra.mxu0 %v575
    %711 = vmatmul.bf16.gmra.mxu0 %v307
    %v712 = vpop.f32.mrf.mxu0
    %v713 = vadd.f32 %v375, %v712
    %v714 = vpop.f32.mrf.mxu0
    %v715 = vadd.f32 %v375, %v714
    %716 = vdwg.mxu0
    %717 = vmatpush.bf16.msra.mxu0 %v635
    %718 = vmatpush.bf16.msra.mxu0 %v631
    %719 = vmatpush.bf16.msra.mxu0 %v627
    %720 = vmatpush.bf16.msra.mxu0 %v623
    %721 = vmatpush.bf16.msra.mxu0 %v619
    %722 = vmatpush.bf16.msra.mxu0 %v615
    %723 = vmatpush.bf16.msra.mxu0 %v611
    %724 = vmatpush.bf16.msra.mxu0 %v607
    %725 = vmatmul.bf16.gmra.mxu0 %v308
    %v726 = vpop.f32.mrf.mxu0
    %v727 = vadd.f32 %v713, %v726
    %v728 = vpop.f32.mrf.mxu0
    %v729 = vadd.f32 %v715, %v728
    %730 = vdwg.mxu0
    %731 = vmatpush.bf16.msra.mxu0 %v604
    %732 = vmatpush.bf16.msra.mxu0 %v600
    %733 = vmatpush.bf16.msra.mxu0 %v596
    %734 = vmatpush.bf16.msra.mxu0 %v592
    %735 = vmatpush.bf16.msra.mxu0 %v588
    %736 = vmatpush.bf16.msra.mxu0 %v584
    %737 = vmatpush.bf16.msra.mxu0 %v580
    %738 = vmatpush.bf16.msra.mxu0 %v576
    %739 = vmatmul.bf16.gmra.mxu0 %v307
    %v740 = vpop.f32.mrf.mxu0
    %v741 = vadd.f32 %v376, %v740
    %v742 = vpop.f32.mrf.mxu0
    %v743 = vadd.f32 %v376, %v742
    %744 = vdwg.mxu0
    %745 = vmatpush.bf16.msra.mxu0 %v636
    %746 = vmatpush.bf16.msra.mxu0 %v632
    %747 = vmatpush.bf16.msra.mxu0 %v628
    %748 = vmatpush.bf16.msra.mxu0 %v624
    %749 = vmatpush.bf16.msra.mxu0 %v620
    %750 = vmatpush.bf16.msra.mxu0 %v616
    %751 = vmatpush.bf16.msra.mxu0 %v612
    %752 = vmatpush.bf16.msra.mxu0 %v608
    %753 = vmatmul.bf16.gmra.mxu0 %v308
    %v754 = vpop.f32.mrf.mxu0
    %v755 = vadd.f32 %v741, %v754
    %v756 = vpop.f32.mrf.mxu0
    %v757 = vadd.f32 %v743, %v756
    %758 = vdwg.mxu0
    %759 = vmatpush.bf16.msra.mxu0 %v605
    %760 = vmatpush.bf16.msra.mxu0 %v601
    %761 = vmatpush.bf16.msra.mxu0 %v597
    %762 = vmatpush.bf16.msra.mxu0 %v593
    %763 = vmatpush.bf16.msra.mxu0 %v589
    %764 = vmatpush.bf16.msra.mxu0 %v585
    %765 = vmatpush.bf16.msra.mxu0 %v581
    %766 = vmatpush.bf16.msra.mxu0 %v577
    %767 = vmatmul.bf16.gmra.mxu0 %v307
    %v768 = vpop.f32.mrf.mxu0
    %v769 = vadd.f32 %v377, %v768
    %v770 = vpop.f32.mrf.mxu0
    %v771 = vadd.f32 %v377, %v770
    %772 = vdwg.mxu0
    %773 = vmatpush.bf16.msra.mxu0 %v637
    %774 = vmatpush.bf16.msra.mxu0 %v633
    %775 = vmatpush.bf16.msra.mxu0 %v629
    %776 = vmatpush.bf16.msra.mxu0 %v625
    %777 = vmatpush.bf16.msra.mxu0 %v621
    %778 = vmatpush.bf16.msra.mxu0 %v617
    %779 = vmatpush.bf16.msra.mxu0 %v613
    %780 = vmatpush.bf16.msra.mxu0 %v609
    %781 = vmatmul.bf16.gmra.mxu0 %v308
    %v782 = vpop.f32.mrf.mxu0
    %v783 = vadd.f32 %v769, %v782
    %v784 = vpop.f32.mrf.mxu0
    %v785 = vadd.f32 %v771, %v784
    %786 = vdwg.mxu0
    %787 = vmatpush.bf16.msra.mxu0 %v606
    %788 = vmatpush.bf16.msra.mxu0 %v602
    %789 = vmatpush.bf16.msra.mxu0 %v598
    %790 = vmatpush.bf16.msra.mxu0 %v594
    %791 = vmatpush.bf16.msra.mxu0 %v590
    %792 = vmatpush.bf16.msra.mxu0 %v586
    %793 = vmatpush.bf16.msra.mxu0 %v582
    %794 = vmatpush.bf16.msra.mxu0 %v578
    %795 = vmatmul.bf16.gmra.mxu0 %v307
    %v796 = vpop.f32.mrf.mxu0
    %v797 = vadd.f32 %v378, %v796
    %v798 = vpop.f32.mrf.mxu0
    %v799 = vadd.f32 %v378, %v798
    %800 = vdwg.mxu0
    %801 = vmatpush.bf16.msra.mxu0 %v638
    %802 = vmatpush.bf16.msra.mxu0 %v634
    %803 = vmatpush.bf16.msra.mxu0 %v630
    %804 = vmatpush.bf16.msra.mxu0 %v626
    %805 = vmatpush.bf16.msra.mxu0 %v622
    %806 = vmatpush.bf16.msra.mxu0 %v618
    %807 = vmatpush.bf16.msra.mxu0 %v614
    %808 = vmatpush.bf16.msra.mxu0 %v610
    %809 = vmatmul.bf16.gmra.mxu0 %v308
    %v810 = vpop.f32.mrf.mxu0
    %v811 = vadd.f32 %v797, %v810
    %v812 = vpop.f32.mrf.mxu0
    %v813 = vadd.f32 %v799, %v812
    %814 = vdwg.mxu0
    %v815 = vmax.f32 %v727, 0.0
    %v816 = vmax.f32 %v755, 0.0
    %v817 = vmax.f32 %v783, 0.0
    %v818 = vmax.f32 %v811, 0.0
    %v819 = vmax.f32 %v729, 0.0
    %v820 = vmax.f32 %v757, 0.0
    %v821 = vmax.f32 %v785, 0.0
    %v822 = vmax.f32 %v813, 0.0
    %v823 = vpack.c.bf16 %v819, %v815
    %v824 = vpack.c.bf16 %v820, %v816
    %v825 = vpack.c.bf16 %v821, %v817
    %v826 = vpack.c.bf16 %v822, %v818
    %v827 = vld [vmem:[#allocation11] sm:$0xff]
    %v828 = vld [vmem:[#allocation11 + $0x8] sm:$0xff]
    %v829 = vld [vmem:[#allocation11 + $0x10] sm:$0xff]
    %v830 = vld [vmem:[#allocation11 + $0x18] sm:$0xff]
    %v831 = vld [vmem:[#allocation11 + $0x20] sm:$0xff]
    %v832 = vld [vmem:[#allocation11 + $0x28] sm:$0xff]
    %v833 = vld [vmem:[#allocation11 + $0x30] sm:$0xff]
    %v834 = vld [vmem:[#allocation11 + $0x38] sm:$0xff]
    %v835 = vld [vmem:[#allocation11 + $0x40] sm:$0xff]
    %v836 = vld [vmem:[#allocation11 + $0x48] sm:$0xff]
    %v837 = vld [vmem:[#allocation11 + $0x50] sm:$0xff]
    %v838 = vld [vmem:[#allocation11 + $0x58] sm:$0xff]
    %v839 = vld [vmem:[#allocation11 + $0x60] sm:$0xff]
    %v840 = vld [vmem:[#allocation11 + $0x68] sm:$0xff]
    %v841 = vld [vmem:[#allocation11 + $0x70] sm:$0xff]
    %v842 = vld [vmem:[#allocation11 + $0x78] sm:$0xff]
    %v843 = vld [vmem:[#allocation11 + $0x80] sm:$0xff]
    %v844 = vld [vmem:[#allocation11 + $0x88] sm:$0xff]
    %v845 = vld [vmem:[#allocation11 + $0x90] sm:$0xff]
    %v846 = vld [vmem:[#allocation11 + $0x98] sm:$0xff]
    %v847 = vld [vmem:[#allocation11 + $0xa0] sm:$0xff]
    %v848 = vld [vmem:[#allocation11 + $0xa8] sm:$0xff]
    %v849 = vld [vmem:[#allocation11 + $0xb0] sm:$0xff]
    %v850 = vld [vmem:[#allocation11 + $0xb8] sm:$0xff]
    %v851 = vld [vmem:[#allocation11 + $0xc0] sm:$0xff]
    %v852 = vld [vmem:[#allocation11 + $0xc8] sm:$0xff]
    %v853 = vld [vmem:[#allocation11 + $0xd0] sm:$0xff]
    %v854 = vld [vmem:[#allocation11 + $0xd8] sm:$0xff]
    %v855 = vld [vmem:[#allocation11 + $0xe0] sm:$0xff]
    %v856 = vld [vmem:[#allocation11 + $0xe8] sm:$0xff]
    %v857 = vld [vmem:[#allocation11 + $0xf0] sm:$0xff]
    %v858 = vld [vmem:[#allocation11 + $0xf8] sm:$0xff]
    %v859 = vld [vmem:[#allocation11 + $0x100] sm:$0xff]
    %v860 = vld [vmem:[#allocation11 + $0x108] sm:$0xff]
    %v861 = vld [vmem:[#allocation11 + $0x110] sm:$0xff]
    %v862 = vld [vmem:[#allocation11 + $0x118] sm:$0xff]
    %v863 = vld [vmem:[#allocation11 + $0x120] sm:$0xff]
    %v864 = vld [vmem:[#allocation11 + $0x128] sm:$0xff]
    %v865 = vld [vmem:[#allocation11 + $0x130] sm:$0xff]
    %v866 = vld [vmem:[#allocation11 + $0x138] sm:$0xff]
    %v867 = vld [vmem:[#allocation11 + $0x140] sm:$0xff]
    %v868 = vld [vmem:[#allocation11 + $0x148] sm:$0xff]
    %v869 = vld [vmem:[#allocation11 + $0x150] sm:$0xff]
    %v870 = vld [vmem:[#allocation11 + $0x158] sm:$0xff]
    %v871 = vld [vmem:[#allocation11 + $0x160] sm:$0xff]
    %v872 = vld [vmem:[#allocation11 + $0x168] sm:$0xff]
    %v873 = vld [vmem:[#allocation11 + $0x170] sm:$0xff]
    %v874 = vld [vmem:[#allocation11 + $0x178] sm:$0xff]
    %v875 = vld [vmem:[#allocation11 + $0x180] sm:$0xff]
    %v876 = vld [vmem:[#allocation11 + $0x188] sm:$0xff]
    %v877 = vld [vmem:[#allocation11 + $0x190] sm:$0xff]
    %v878 = vld [vmem:[#allocation11 + $0x198] sm:$0xff]
    %v879 = vld [vmem:[#allocation11 + $0x1a0] sm:$0xff]
    %v880 = vld [vmem:[#allocation11 + $0x1a8] sm:$0xff]
    %v881 = vld [vmem:[#allocation11 + $0x1b0] sm:$0xff]
    %v882 = vld [vmem:[#allocation11 + $0x1b8] sm:$0xff]
    %v883 = vld [vmem:[#allocation11 + $0x1c0] sm:$0xff]
    %v884 = vld [vmem:[#allocation11 + $0x1c8] sm:$0xff]
    %v885 = vld [vmem:[#allocation11 + $0x1d0] sm:$0xff]
    %v886 = vld [vmem:[#allocation11 + $0x1d8] sm:$0xff]
    %v887 = vld [vmem:[#allocation11 + $0x1e0] sm:$0xff]
    %v888 = vld [vmem:[#allocation11 + $0x1e8] sm:$0xff]
    %v889 = vld [vmem:[#allocation11 + $0x1f0] sm:$0xff]
    %v890 = vld [vmem:[#allocation11 + $0x1f8] sm:$0xff]
    %v891 = vld [vmem:[#allocation11 + $0x200] sm:$0xff]
    %v892 = vld [vmem:[#allocation11 + $0x208] sm:$0xff]
    %v893 = vld [vmem:[#allocation11 + $0x210] sm:$0xff]
    %v894 = vld [vmem:[#allocation11 + $0x218] sm:$0xff]
    %v895 = vld [vmem:[#allocation11 + $0x220] sm:$0xff]
    %v896 = vld [vmem:[#allocation11 + $0x228] sm:$0xff]
    %v897 = vld [vmem:[#allocation11 + $0x230] sm:$0xff]
    %v898 = vld [vmem:[#allocation11 + $0x238] sm:$0xff]
    %v899 = vld [vmem:[#allocation11 + $0x240] sm:$0xff]
    %v900 = vld [vmem:[#allocation11 + $0x248] sm:$0xff]
    %v901 = vld [vmem:[#allocation11 + $0x250] sm:$0xff]
    %v902 = vld [vmem:[#allocation11 + $0x258] sm:$0xff]
    %v903 = vld [vmem:[#allocation11 + $0x260] sm:$0xff]
    %v904 = vld [vmem:[#allocation11 + $0x268] sm:$0xff]
    %v905 = vld [vmem:[#allocation11 + $0x270] sm:$0xff]
    %v906 = vld [vmem:[#allocation11 + $0x278] sm:$0xff]
    %v907 = vld [vmem:[#allocation11 + $0x280] sm:$0xff]
    %v908 = vld [vmem:[#allocation11 + $0x288] sm:$0xff]
    %v909 = vld [vmem:[#allocation11 + $0x290] sm:$0xff]
    %v910 = vld [vmem:[#allocation11 + $0x298] sm:$0xff]
    %v911 = vld [vmem:[#allocation11 + $0x2a0] sm:$0xff]
    %v912 = vld [vmem:[#allocation11 + $0x2a8] sm:$0xff]
    %v913 = vld [vmem:[#allocation11 + $0x2b0] sm:$0xff]
    %v914 = vld [vmem:[#allocation11 + $0x2b8] sm:$0xff]
    %v915 = vld [vmem:[#allocation11 + $0x2c0] sm:$0xff]
    %v916 = vld [vmem:[#allocation11 + $0x2c8] sm:$0xff]
    %v917 = vld [vmem:[#allocation11 + $0x2d0] sm:$0xff]
    %v918 = vld [vmem:[#allocation11 + $0x2d8] sm:$0xff]
    %v919 = vld [vmem:[#allocation11 + $0x2e0] sm:$0xff]
    %v920 = vld [vmem:[#allocation11 + $0x2e8] sm:$0xff]
    %v921 = vld [vmem:[#allocation11 + $0x2f0] sm:$0xff]
    %v922 = vld [vmem:[#allocation11 + $0x2f8] sm:$0xff]
    %v923 = vld [vmem:[#allocation11 + $0x300] sm:$0xff]
    %v924 = vld [vmem:[#allocation11 + $0x308] sm:$0xff]
    %v925 = vld [vmem:[#allocation11 + $0x310] sm:$0xff]
    %v926 = vld [vmem:[#allocation11 + $0x318] sm:$0xff]
    %v927 = vld [vmem:[#allocation11 + $0x320] sm:$0xff]
    %v928 = vld [vmem:[#allocation11 + $0x328] sm:$0xff]
    %v929 = vld [vmem:[#allocation11 + $0x330] sm:$0xff]
    %v930 = vld [vmem:[#allocation11 + $0x338] sm:$0xff]
    %v931 = vld [vmem:[#allocation11 + $0x340] sm:$0xff]
    %v932 = vld [vmem:[#allocation11 + $0x348] sm:$0xff]
    %v933 = vld [vmem:[#allocation11 + $0x350] sm:$0xff]
    %v934 = vld [vmem:[#allocation11 + $0x358] sm:$0xff]
    %v935 = vld [vmem:[#allocation11 + $0x360] sm:$0xff]
    %v936 = vld [vmem:[#allocation11 + $0x368] sm:$0xff]
    %v937 = vld [vmem:[#allocation11 + $0x370] sm:$0xff]
    %v938 = vld [vmem:[#allocation11 + $0x378] sm:$0xff]
    %v939 = vld [vmem:[#allocation11 + $0x380] sm:$0xff]
    %v940 = vld [vmem:[#allocation11 + $0x388] sm:$0xff]
    %v941 = vld [vmem:[#allocation11 + $0x390] sm:$0xff]
    %v942 = vld [vmem:[#allocation11 + $0x398] sm:$0xff]
    %v943 = vld [vmem:[#allocation11 + $0x3a0] sm:$0xff]
    %v944 = vld [vmem:[#allocation11 + $0x3a8] sm:$0xff]
    %v945 = vld [vmem:[#allocation11 + $0x3b0] sm:$0xff]
    %v946 = vld [vmem:[#allocation11 + $0x3b8] sm:$0xff]
    %v947 = vld [vmem:[#allocation11 + $0x3c0] sm:$0xff]
    %v948 = vld [vmem:[#allocation11 + $0x3c8] sm:$0xff]
    %v949 = vld [vmem:[#allocation11 + $0x3d0] sm:$0xff]
    %v950 = vld [vmem:[#allocation11 + $0x3d8] sm:$0xff]
    %v951 = vld [vmem:[#allocation11 + $0x3e0] sm:$0xff]
    %v952 = vld [vmem:[#allocation11 + $0x3e8] sm:$0xff]
    %v953 = vld [vmem:[#allocation11 + $0x3f0] sm:$0xff]
    %v954 = vld [vmem:[#allocation11 + $0x3f8] sm:$0xff]
    %v955 = vld [vmem:[#allocation11 + $0x400] sm:$0xff]
    %v956 = vld [vmem:[#allocation11 + $0x408] sm:$0xff]
    %v957 = vld [vmem:[#allocation11 + $0x410] sm:$0xff]
    %v958 = vld [vmem:[#allocation11 + $0x418] sm:$0xff]
    %v959 = vld [vmem:[#allocation11 + $0x420] sm:$0xff]
    %v960 = vld [vmem:[#allocation11 + $0x428] sm:$0xff]
    %v961 = vld [vmem:[#allocation11 + $0x430] sm:$0xff]
    %v962 = vld [vmem:[#allocation11 + $0x438] sm:$0xff]
    %v963 = vld [vmem:[#allocation11 + $0x440] sm:$0xff]
    %v964 = vld [vmem:[#allocation11 + $0x448] sm:$0xff]
    %v965 = vld [vmem:[#allocation11 + $0x450] sm:$0xff]
    %v966 = vld [vmem:[#allocation11 + $0x458] sm:$0xff]
    %v967 = vld [vmem:[#allocation11 + $0x460] sm:$0xff]
    %v968 = vld [vmem:[#allocation11 + $0x468] sm:$0xff]
    %v969 = vld [vmem:[#allocation11 + $0x470] sm:$0xff]
    %v970 = vld [vmem:[#allocation11 + $0x478] sm:$0xff]
    %v971 = vld [vmem:[#allocation11 + $0x480] sm:$0xff]
    %v972 = vld [vmem:[#allocation11 + $0x488] sm:$0xff]
    %v973 = vld [vmem:[#allocation11 + $0x490] sm:$0xff]
    %v974 = vld [vmem:[#allocation11 + $0x498] sm:$0xff]
    %v975 = vld [vmem:[#allocation11 + $0x4a0] sm:$0xff]
    %v976 = vld [vmem:[#allocation11 + $0x4a8] sm:$0xff]
    %v977 = vld [vmem:[#allocation11 + $0x4b0] sm:$0xff]
    %v978 = vld [vmem:[#allocation11 + $0x4b8] sm:$0xff]
    %v979 = vld [vmem:[#allocation11 + $0x4c0] sm:$0xff]
    %v980 = vld [vmem:[#allocation11 + $0x4c8] sm:$0xff]
    %v981 = vld [vmem:[#allocation11 + $0x4d0] sm:$0xff]
    %v982 = vld [vmem:[#allocation11 + $0x4d8] sm:$0xff]
    %v983 = vld [vmem:[#allocation11 + $0x4e0] sm:$0xff]
    %v984 = vld [vmem:[#allocation11 + $0x4e8] sm:$0xff]
    %v985 = vld [vmem:[#allocation11 + $0x4f0] sm:$0xff]
    %v986 = vld [vmem:[#allocation11 + $0x4f8] sm:$0xff]
    %v987 = vld [vmem:[#allocation11 + $0x500] sm:$0xff]
    %v988 = vld [vmem:[#allocation11 + $0x508] sm:$0xff]
    %v989 = vld [vmem:[#allocation11 + $0x510] sm:$0xff]
    %v990 = vld [vmem:[#allocation11 + $0x518] sm:$0xff]
    %v991 = vld [vmem:[#allocation11 + $0x520] sm:$0xff]
    %v992 = vld [vmem:[#allocation11 + $0x528] sm:$0xff]
    %v993 = vld [vmem:[#allocation11 + $0x530] sm:$0xff]
    %v994 = vld [vmem:[#allocation11 + $0x538] sm:$0xff]
    %v995 = vld [vmem:[#allocation11 + $0x540] sm:$0xff]
    %v996 = vld [vmem:[#allocation11 + $0x548] sm:$0xff]
    %v997 = vld [vmem:[#allocation11 + $0x550] sm:$0xff]
    %v998 = vld [vmem:[#allocation11 + $0x558] sm:$0xff]
    %v999 = vld [vmem:[#allocation11 + $0x560] sm:$0xff]
    %v1000 = vld [vmem:[#allocation11 + $0x568] sm:$0xff]
    %v1001 = vld [vmem:[#allocation11 + $0x570] sm:$0xff]
    %v1002 = vld [vmem:[#allocation11 + $0x578] sm:$0xff]
    %v1003 = vld [vmem:[#allocation11 + $0x580] sm:$0xff]
    %v1004 = vld [vmem:[#allocation11 + $0x588] sm:$0xff]
    %v1005 = vld [vmem:[#allocation11 + $0x590] sm:$0xff]
    %v1006 = vld [vmem:[#allocation11 + $0x598] sm:$0xff]
    %v1007 = vld [vmem:[#allocation11 + $0x5a0] sm:$0xff]
    %v1008 = vld [vmem:[#allocation11 + $0x5a8] sm:$0xff]
    %v1009 = vld [vmem:[#allocation11 + $0x5b0] sm:$0xff]
    %v1010 = vld [vmem:[#allocation11 + $0x5b8] sm:$0xff]
    %v1011 = vld [vmem:[#allocation11 + $0x5c0] sm:$0xff]
    %v1012 = vld [vmem:[#allocation11 + $0x5c8] sm:$0xff]
    %v1013 = vld [vmem:[#allocation11 + $0x5d0] sm:$0xff]
    %v1014 = vld [vmem:[#allocation11 + $0x5d8] sm:$0xff]
    %v1015 = vld [vmem:[#allocation11 + $0x5e0] sm:$0xff]
    %v1016 = vld [vmem:[#allocation11 + $0x5e8] sm:$0xff]
    %v1017 = vld [vmem:[#allocation11 + $0x5f0] sm:$0xff]
    %v1018 = vld [vmem:[#allocation11 + $0x5f8] sm:$0xff]
    %v1019 = vld [vmem:[#allocation11 + $0x600] sm:$0xff]
    %v1020 = vld [vmem:[#allocation11 + $0x608] sm:$0xff]
    %v1021 = vld [vmem:[#allocation11 + $0x610] sm:$0xff]
    %v1022 = vld [vmem:[#allocation11 + $0x618] sm:$0xff]
    %v1023 = vld [vmem:[#allocation11 + $0x620] sm:$0xff]
    %v1024 = vld [vmem:[#allocation11 + $0x628] sm:$0xff]
    %v1025 = vld [vmem:[#allocation11 + $0x630] sm:$0xff]
    %v1026 = vld [vmem:[#allocation11 + $0x638] sm:$0xff]
    %v1027 = vld [vmem:[#allocation11 + $0x640] sm:$0xff]
    %v1028 = vld [vmem:[#allocation11 + $0x648] sm:$0xff]
    %v1029 = vld [vmem:[#allocation11 + $0x650] sm:$0xff]
    %v1030 = vld [vmem:[#allocation11 + $0x658] sm:$0xff]
    %v1031 = vld [vmem:[#allocation11 + $0x660] sm:$0xff]
    %v1032 = vld [vmem:[#allocation11 + $0x668] sm:$0xff]
    %v1033 = vld [vmem:[#allocation11 + $0x670] sm:$0xff]
    %v1034 = vld [vmem:[#allocation11 + $0x678] sm:$0xff]
    %v1035 = vld [vmem:[#allocation11 + $0x680] sm:$0xff]
    %v1036 = vld [vmem:[#allocation11 + $0x688] sm:$0xff]
    %v1037 = vld [vmem:[#allocation11 + $0x690] sm:$0xff]
    %v1038 = vld [vmem:[#allocation11 + $0x698] sm:$0xff]
    %v1039 = vld [vmem:[#allocation11 + $0x6a0] sm:$0xff]
    %v1040 = vld [vmem:[#allocation11 + $0x6a8] sm:$0xff]
    %v1041 = vld [vmem:[#allocation11 + $0x6b0] sm:$0xff]
    %v1042 = vld [vmem:[#allocation11 + $0x6b8] sm:$0xff]
    %v1043 = vld [vmem:[#allocation11 + $0x6c0] sm:$0xff]
    %v1044 = vld [vmem:[#allocation11 + $0x6c8] sm:$0xff]
    %v1045 = vld [vmem:[#allocation11 + $0x6d0] sm:$0xff]
    %v1046 = vld [vmem:[#allocation11 + $0x6d8] sm:$0xff]
    %v1047 = vld [vmem:[#allocation11 + $0x6e0] sm:$0xff]
    %v1048 = vld [vmem:[#allocation11 + $0x6e8] sm:$0xff]
    %v1049 = vld [vmem:[#allocation11 + $0x6f0] sm:$0xff]
    %v1050 = vld [vmem:[#allocation11 + $0x6f8] sm:$0xff]
    %v1051 = vld [vmem:[#allocation11 + $0x700] sm:$0xff]
    %v1052 = vld [vmem:[#allocation11 + $0x708] sm:$0xff]
    %v1053 = vld [vmem:[#allocation11 + $0x710] sm:$0xff]
    %v1054 = vld [vmem:[#allocation11 + $0x718] sm:$0xff]
    %v1055 = vld [vmem:[#allocation11 + $0x720] sm:$0xff]
    %v1056 = vld [vmem:[#allocation11 + $0x728] sm:$0xff]
    %v1057 = vld [vmem:[#allocation11 + $0x730] sm:$0xff]
    %v1058 = vld [vmem:[#allocation11 + $0x738] sm:$0xff]
    %v1059 = vld [vmem:[#allocation11 + $0x740] sm:$0xff]
    %v1060 = vld [vmem:[#allocation11 + $0x748] sm:$0xff]
    %v1061 = vld [vmem:[#allocation11 + $0x750] sm:$0xff]
    %v1062 = vld [vmem:[#allocation11 + $0x758] sm:$0xff]
    %v1063 = vld [vmem:[#allocation11 + $0x760] sm:$0xff]
    %v1064 = vld [vmem:[#allocation11 + $0x768] sm:$0xff]
    %v1065 = vld [vmem:[#allocation11 + $0x770] sm:$0xff]
    %v1066 = vld [vmem:[#allocation11 + $0x778] sm:$0xff]
    %v1067 = vld [vmem:[#allocation11 + $0x780] sm:$0xff]
    %v1068 = vld [vmem:[#allocation11 + $0x788] sm:$0xff]
    %v1069 = vld [vmem:[#allocation11 + $0x790] sm:$0xff]
    %v1070 = vld [vmem:[#allocation11 + $0x798] sm:$0xff]
    %v1071 = vld [vmem:[#allocation11 + $0x7a0] sm:$0xff]
    %v1072 = vld [vmem:[#allocation11 + $0x7a8] sm:$0xff]
    %v1073 = vld [vmem:[#allocation11 + $0x7b0] sm:$0xff]
    %v1074 = vld [vmem:[#allocation11 + $0x7b8] sm:$0xff]
    %v1075 = vld [vmem:[#allocation11 + $0x7c0] sm:$0xff]
    %v1076 = vld [vmem:[#allocation11 + $0x7c8] sm:$0xff]
    %v1077 = vld [vmem:[#allocation11 + $0x7d0] sm:$0xff]
    %v1078 = vld [vmem:[#allocation11 + $0x7d8] sm:$0xff]
    %v1079 = vld [vmem:[#allocation11 + $0x7e0] sm:$0xff]
    %v1080 = vld [vmem:[#allocation11 + $0x7e8] sm:$0xff]
    %v1081 = vld [vmem:[#allocation11 + $0x7f0] sm:$0xff]
    %v1082 = vld [vmem:[#allocation11 + $0x7f8] sm:$0xff]
    %v1083 = vld [vmem:[#allocation13] sm:$0xff]
    %v1085 = vperm.slane %v1083, 0
    %v1086 = vperm.slane %v1083, 1
    %v1087 = vperm.slane %v1083, 2
    %v1088 = vperm.slane %v1083, 3
    %v1089 = vperm.slane %v1083, 4
    %v1090 = vperm.slane %v1083, 5
    %v1091 = vperm.slane %v1083, 6
    %v1092 = vperm.slane %v1083, 7
    %v1357 = vunpack.c.l.b16 %v827
    %v1358 = vunpack.c.h.b16 %v827
    %v1359 = vunpack.c.l.b16 %v828
    %v1360 = vunpack.c.h.b16 %v828
    %v1361 = vunpack.c.l.b16 %v829
    %v1362 = vunpack.c.h.b16 %v829
    %v1363 = vunpack.c.l.b16 %v830
    %v1364 = vunpack.c.h.b16 %v830
    %v1365 = vunpack.c.l.b16 %v831
    %v1366 = vunpack.c.h.b16 %v831
    %v1367 = vunpack.c.l.b16 %v832
    %v1368 = vunpack.c.h.b16 %v832
    %v1369 = vunpack.c.l.b16 %v833
    %v1370 = vunpack.c.h.b16 %v833
    %v1371 = vunpack.c.l.b16 %v834
    %v1372 = vunpack.c.h.b16 %v834
    %v1373 = vunpack.c.l.b16 %v835
    %v1374 = vunpack.c.h.b16 %v835
    %v1375 = vunpack.c.l.b16 %v836
    %v1376 = vunpack.c.h.b16 %v836
    %v1377 = vunpack.c.l.b16 %v837
    %v1378 = vunpack.c.h.b16 %v837
    %v1379 = vunpack.c.l.b16 %v838
    %v1380 = vunpack.c.h.b16 %v838
    %v1381 = vunpack.c.l.b16 %v839
    %v1382 = vunpack.c.h.b16 %v839
    %v1383 = vunpack.c.l.b16 %v840
    %v1384 = vunpack.c.h.b16 %v840
    %v1385 = vunpack.c.l.b16 %v841
    %v1386 = vunpack.c.h.b16 %v841
    %v1387 = vunpack.c.l.b16 %v842
    %v1388 = vunpack.c.h.b16 %v842
    %v1389 = vunpack.c.l.b16 %v843
    %v1390 = vunpack.c.h.b16 %v843
    %v1391 = vunpack.c.l.b16 %v844
    %v1392 = vunpack.c.h.b16 %v844
    %v1393 = vunpack.c.l.b16 %v845
    %v1394 = vunpack.c.h.b16 %v845
    %v1395 = vunpack.c.l.b16 %v846
    %v1396 = vunpack.c.h.b16 %v846
    %v1397 = vunpack.c.l.b16 %v847
    %v1398 = vunpack.c.h.b16 %v847
    %v1399 = vunpack.c.l.b16 %v848
    %v1400 = vunpack.c.h.b16 %v848
    %v1401 = vunpack.c.l.b16 %v849
    %v1402 = vunpack.c.h.b16 %v849
    %v1403 = vunpack.c.l.b16 %v850
    %v1404 = vunpack.c.h.b16 %v850
    %v1405 = vunpack.c.l.b16 %v851
    %v1406 = vunpack.c.h.b16 %v851
    %v1407 = vunpack.c.l.b16 %v852
    %v1408 = vunpack.c.h.b16 %v852
    %v1409 = vunpack.c.l.b16 %v853
    %v1410 = vunpack.c.h.b16 %v853
    %v1411 = vunpack.c.l.b16 %v854
    %v1412 = vunpack.c.h.b16 %v854
    %v1413 = vunpack.c.l.b16 %v855
    %v1414 = vunpack.c.h.b16 %v855
    %v1415 = vunpack.c.l.b16 %v856
    %v1416 = vunpack.c.h.b16 %v856
    %v1417 = vunpack.c.l.b16 %v857
    %v1418 = vunpack.c.h.b16 %v857
    %v1419 = vunpack.c.l.b16 %v858
    %v1420 = vunpack.c.h.b16 %v858
    %v1421 = vunpack.c.l.b16 %v859
    %v1422 = vunpack.c.h.b16 %v859
    %v1423 = vunpack.c.l.b16 %v860
    %v1424 = vunpack.c.h.b16 %v860
    %v1425 = vunpack.c.l.b16 %v861
    %v1426 = vunpack.c.h.b16 %v861
    %v1427 = vunpack.c.l.b16 %v862
    %v1428 = vunpack.c.h.b16 %v862
    %v1429 = vunpack.c.l.b16 %v863
    %v1430 = vunpack.c.h.b16 %v863
    %v1431 = vunpack.c.l.b16 %v864
    %v1432 = vunpack.c.h.b16 %v864
    %v1433 = vunpack.c.l.b16 %v865
    %v1434 = vunpack.c.h.b16 %v865
    %v1435 = vunpack.c.l.b16 %v866
    %v1436 = vunpack.c.h.b16 %v866
    %v1437 = vunpack.c.l.b16 %v867
    %v1438 = vunpack.c.h.b16 %v867
    %v1439 = vunpack.c.l.b16 %v868
    %v1440 = vunpack.c.h.b16 %v868
    %v1441 = vunpack.c.l.b16 %v869
    %v1442 = vunpack.c.h.b16 %v869
    %v1443 = vunpack.c.l.b16 %v870
    %v1444 = vunpack.c.h.b16 %v870
    %v1445 = vunpack.c.l.b16 %v871
    %v1446 = vunpack.c.h.b16 %v871
    %v1447 = vunpack.c.l.b16 %v872
    %v1448 = vunpack.c.h.b16 %v872
    %v1449 = vunpack.c.l.b16 %v873
    %v1450 = vunpack.c.h.b16 %v873
    %v1451 = vunpack.c.l.b16 %v874
    %v1452 = vunpack.c.h.b16 %v874
    %v1453 = vunpack.c.l.b16 %v875
    %v1454 = vunpack.c.h.b16 %v875
    %v1455 = vunpack.c.l.b16 %v876
    %v1456 = vunpack.c.h.b16 %v876
    %v1457 = vunpack.c.l.b16 %v877
    %v1458 = vunpack.c.h.b16 %v877
    %v1459 = vunpack.c.l.b16 %v878
    %v1460 = vunpack.c.h.b16 %v878
    %v1461 = vunpack.c.l.b16 %v879
    %v1462 = vunpack.c.h.b16 %v879
    %v1463 = vunpack.c.l.b16 %v880
    %v1464 = vunpack.c.h.b16 %v880
    %v1465 = vunpack.c.l.b16 %v881
    %v1466 = vunpack.c.h.b16 %v881
    %v1467 = vunpack.c.l.b16 %v882
    %v1468 = vunpack.c.h.b16 %v882
    %v1469 = vunpack.c.l.b16 %v883
    %v1470 = vunpack.c.h.b16 %v883
    %v1471 = vunpack.c.l.b16 %v884
    %v1472 = vunpack.c.h.b16 %v884
    %v1473 = vunpack.c.l.b16 %v885
    %v1474 = vunpack.c.h.b16 %v885
    %v1475 = vunpack.c.l.b16 %v886
    %v1476 = vunpack.c.h.b16 %v886
    %v1477 = vunpack.c.l.b16 %v887
    %v1478 = vunpack.c.h.b16 %v887
    %v1479 = vunpack.c.l.b16 %v888
    %v1480 = vunpack.c.h.b16 %v888
    %v1481 = vunpack.c.l.b16 %v889
    %v1482 = vunpack.c.h.b16 %v889
    %v1483 = vunpack.c.l.b16 %v890
    %v1484 = vunpack.c.h.b16 %v890
    %v1485 = vunpack.c.l.b16 %v891
    %v1486 = vunpack.c.h.b16 %v891
    %v1487 = vunpack.c.l.b16 %v892
    %v1488 = vunpack.c.h.b16 %v892
    %v1489 = vunpack.c.l.b16 %v893
    %v1490 = vunpack.c.h.b16 %v893
    %v1491 = vunpack.c.l.b16 %v894
    %v1492 = vunpack.c.h.b16 %v894
    %v1493 = vunpack.c.l.b16 %v895
    %v1494 = vunpack.c.h.b16 %v895
    %v1495 = vunpack.c.l.b16 %v896
    %v1496 = vunpack.c.h.b16 %v896
    %v1497 = vunpack.c.l.b16 %v897
    %v1498 = vunpack.c.h.b16 %v897
    %v1499 = vunpack.c.l.b16 %v898
    %v1500 = vunpack.c.h.b16 %v898
    %v1501 = vunpack.c.l.b16 %v899
    %v1502 = vunpack.c.h.b16 %v899
    %v1503 = vunpack.c.l.b16 %v900
    %v1504 = vunpack.c.h.b16 %v900
    %v1505 = vunpack.c.l.b16 %v901
    %v1506 = vunpack.c.h.b16 %v901
    %v1507 = vunpack.c.l.b16 %v902
    %v1508 = vunpack.c.h.b16 %v902
    %v1509 = vunpack.c.l.b16 %v903
    %v1510 = vunpack.c.h.b16 %v903
    %v1511 = vunpack.c.l.b16 %v904
    %v1512 = vunpack.c.h.b16 %v904
    %v1513 = vunpack.c.l.b16 %v905
    %v1514 = vunpack.c.h.b16 %v905
    %v1515 = vunpack.c.l.b16 %v906
    %v1516 = vunpack.c.h.b16 %v906
    %v1517 = vunpack.c.l.b16 %v907
    %v1518 = vunpack.c.h.b16 %v907
    %v1519 = vunpack.c.l.b16 %v908
    %v1520 = vunpack.c.h.b16 %v908
    %v1521 = vunpack.c.l.b16 %v909
    %v1522 = vunpack.c.h.b16 %v909
    %v1523 = vunpack.c.l.b16 %v910
    %v1524 = vunpack.c.h.b16 %v910
    %v1525 = vunpack.c.l.b16 %v911
    %v1526 = vunpack.c.h.b16 %v911
    %v1527 = vunpack.c.l.b16 %v912
    %v1528 = vunpack.c.h.b16 %v912
    %v1529 = vunpack.c.l.b16 %v913
    %v1530 = vunpack.c.h.b16 %v913
    %v1531 = vunpack.c.l.b16 %v914
    %v1532 = vunpack.c.h.b16 %v914
    %v1533 = vunpack.c.l.b16 %v915
    %v1534 = vunpack.c.h.b16 %v915
    %v1535 = vunpack.c.l.b16 %v916
    %v1536 = vunpack.c.h.b16 %v916
    %v1537 = vunpack.c.l.b16 %v917
    %v1538 = vunpack.c.h.b16 %v917
    %v1539 = vunpack.c.l.b16 %v918
    %v1540 = vunpack.c.h.b16 %v918
    %v1541 = vunpack.c.l.b16 %v919
    %v1542 = vunpack.c.h.b16 %v919
    %v1543 = vunpack.c.l.b16 %v920
    %v1544 = vunpack.c.h.b16 %v920
    %v1545 = vunpack.c.l.b16 %v921
    %v1546 = vunpack.c.h.b16 %v921
    %v1547 = vunpack.c.l.b16 %v922
    %v1548 = vunpack.c.h.b16 %v922
    %v1549 = vunpack.c.l.b16 %v923
    %v1550 = vunpack.c.h.b16 %v923
    %v1551 = vunpack.c.l.b16 %v924
    %v1552 = vunpack.c.h.b16 %v924
    %v1553 = vunpack.c.l.b16 %v925
    %v1554 = vunpack.c.h.b16 %v925
    %v1555 = vunpack.c.l.b16 %v926
    %v1556 = vunpack.c.h.b16 %v926
    %v1557 = vunpack.c.l.b16 %v927
    %v1558 = vunpack.c.h.b16 %v927
    %v1559 = vunpack.c.l.b16 %v928
    %v1560 = vunpack.c.h.b16 %v928
    %v1561 = vunpack.c.l.b16 %v929
    %v1562 = vunpack.c.h.b16 %v929
    %v1563 = vunpack.c.l.b16 %v930
    %v1564 = vunpack.c.h.b16 %v930
    %v1565 = vunpack.c.l.b16 %v931
    %v1566 = vunpack.c.h.b16 %v931
    %v1567 = vunpack.c.l.b16 %v932
    %v1568 = vunpack.c.h.b16 %v932
    %v1569 = vunpack.c.l.b16 %v933
    %v1570 = vunpack.c.h.b16 %v933
    %v1571 = vunpack.c.l.b16 %v934
    %v1572 = vunpack.c.h.b16 %v934
    %v1573 = vunpack.c.l.b16 %v935
    %v1574 = vunpack.c.h.b16 %v935
    %v1575 = vunpack.c.l.b16 %v936
    %v1576 = vunpack.c.h.b16 %v936
    %v1577 = vunpack.c.l.b16 %v937
    %v1578 = vunpack.c.h.b16 %v937
    %v1579 = vunpack.c.l.b16 %v938
    %v1580 = vunpack.c.h.b16 %v938
    %v1581 = vunpack.c.l.b16 %v939
    %v1582 = vunpack.c.h.b16 %v939
    %v1583 = vunpack.c.l.b16 %v940
    %v1584 = vunpack.c.h.b16 %v940
    %v1585 = vunpack.c.l.b16 %v941
    %v1586 = vunpack.c.h.b16 %v941
    %v1587 = vunpack.c.l.b16 %v942
    %v1588 = vunpack.c.h.b16 %v942
    %v1589 = vunpack.c.l.b16 %v943
    %v1590 = vunpack.c.h.b16 %v943
    %v1591 = vunpack.c.l.b16 %v944
    %v1592 = vunpack.c.h.b16 %v944
    %v1593 = vunpack.c.l.b16 %v945
    %v1594 = vunpack.c.h.b16 %v945
    %v1595 = vunpack.c.l.b16 %v946
    %v1596 = vunpack.c.h.b16 %v946
    %v1597 = vunpack.c.l.b16 %v947
    %v1598 = vunpack.c.h.b16 %v947
    %v1599 = vunpack.c.l.b16 %v948
    %v1600 = vunpack.c.h.b16 %v948
    %v1601 = vunpack.c.l.b16 %v949
    %v1602 = vunpack.c.h.b16 %v949
    %v1603 = vunpack.c.l.b16 %v950
    %v1604 = vunpack.c.h.b16 %v950
    %v1605 = vunpack.c.l.b16 %v951
    %v1606 = vunpack.c.h.b16 %v951
    %v1607 = vunpack.c.l.b16 %v952
    %v1608 = vunpack.c.h.b16 %v952
    %v1609 = vunpack.c.l.b16 %v953
    %v1610 = vunpack.c.h.b16 %v953
    %v1611 = vunpack.c.l.b16 %v954
    %v1612 = vunpack.c.h.b16 %v954
    %v1613 = vunpack.c.l.b16 %v955
    %v1614 = vunpack.c.h.b16 %v955
    %v1615 = vunpack.c.l.b16 %v956
    %v1616 = vunpack.c.h.b16 %v956
    %v1617 = vunpack.c.l.b16 %v957
    %v1618 = vunpack.c.h.b16 %v957
    %v1619 = vunpack.c.l.b16 %v958
    %v1620 = vunpack.c.h.b16 %v958
    %v1621 = vunpack.c.l.b16 %v959
    %v1622 = vunpack.c.h.b16 %v959
    %v1623 = vunpack.c.l.b16 %v960
    %v1624 = vunpack.c.h.b16 %v960
    %v1625 = vunpack.c.l.b16 %v961
    %v1626 = vunpack.c.h.b16 %v961
    %v1627 = vunpack.c.l.b16 %v962
    %v1628 = vunpack.c.h.b16 %v962
    %v1629 = vunpack.c.l.b16 %v963
    %v1630 = vunpack.c.h.b16 %v963
    %v1631 = vunpack.c.l.b16 %v964
    %v1632 = vunpack.c.h.b16 %v964
    %v1633 = vunpack.c.l.b16 %v965
    %v1634 = vunpack.c.h.b16 %v965
    %v1635 = vunpack.c.l.b16 %v966
    %v1636 = vunpack.c.h.b16 %v966
    %v1637 = vunpack.c.l.b16 %v967
    %v1638 = vunpack.c.h.b16 %v967
    %v1639 = vunpack.c.l.b16 %v968
    %v1640 = vunpack.c.h.b16 %v968
    %v1641 = vunpack.c.l.b16 %v969
    %v1642 = vunpack.c.h.b16 %v969
    %v1643 = vunpack.c.l.b16 %v970
    %v1644 = vunpack.c.h.b16 %v970
    %v1645 = vunpack.c.l.b16 %v971
    %v1646 = vunpack.c.h.b16 %v971
    %v1647 = vunpack.c.l.b16 %v972
    %v1648 = vunpack.c.h.b16 %v972
    %v1649 = vunpack.c.l.b16 %v973
    %v1650 = vunpack.c.h.b16 %v973
    %v1651 = vunpack.c.l.b16 %v974
    %v1652 = vunpack.c.h.b16 %v974
    %v1653 = vunpack.c.l.b16 %v975
    %v1654 = vunpack.c.h.b16 %v975
    %v1655 = vunpack.c.l.b16 %v976
    %v1656 = vunpack.c.h.b16 %v976
    %v1657 = vunpack.c.l.b16 %v977
    %v1658 = vunpack.c.h.b16 %v977
    %v1659 = vunpack.c.l.b16 %v978
    %v1660 = vunpack.c.h.b16 %v978
    %v1661 = vunpack.c.l.b16 %v979
    %v1662 = vunpack.c.h.b16 %v979
    %v1663 = vunpack.c.l.b16 %v980
    %v1664 = vunpack.c.h.b16 %v980
    %v1665 = vunpack.c.l.b16 %v981
    %v1666 = vunpack.c.h.b16 %v981
    %v1667 = vunpack.c.l.b16 %v982
    %v1668 = vunpack.c.h.b16 %v982
    %v1669 = vunpack.c.l.b16 %v983
    %v1670 = vunpack.c.h.b16 %v983
    %v1671 = vunpack.c.l.b16 %v984
    %v1672 = vunpack.c.h.b16 %v984
    %v1673 = vunpack.c.l.b16 %v985
    %v1674 = vunpack.c.h.b16 %v985
    %v1675 = vunpack.c.l.b16 %v986
    %v1676 = vunpack.c.h.b16 %v986
    %v1677 = vunpack.c.l.b16 %v987
    %v1678 = vunpack.c.h.b16 %v987
    %v1679 = vunpack.c.l.b16 %v988
    %v1680 = vunpack.c.h.b16 %v988
    %v1681 = vunpack.c.l.b16 %v989
    %v1682 = vunpack.c.h.b16 %v989
    %v1683 = vunpack.c.l.b16 %v990
    %v1684 = vunpack.c.h.b16 %v990
    %v1685 = vunpack.c.l.b16 %v991
    %v1686 = vunpack.c.h.b16 %v991
    %v1687 = vunpack.c.l.b16 %v992
    %v1688 = vunpack.c.h.b16 %v992
    %v1689 = vunpack.c.l.b16 %v993
    %v1690 = vunpack.c.h.b16 %v993
    %v1691 = vunpack.c.l.b16 %v994
    %v1692 = vunpack.c.h.b16 %v994
    %v1693 = vunpack.c.l.b16 %v995
    %v1694 = vunpack.c.h.b16 %v995
    %v1695 = vunpack.c.l.b16 %v996
    %v1696 = vunpack.c.h.b16 %v996
    %v1697 = vunpack.c.l.b16 %v997
    %v1698 = vunpack.c.h.b16 %v997
    %v1699 = vunpack.c.l.b16 %v998
    %v1700 = vunpack.c.h.b16 %v998
    %v1701 = vunpack.c.l.b16 %v999
    %v1702 = vunpack.c.h.b16 %v999
    %v1703 = vunpack.c.l.b16 %v1000
    %v1704 = vunpack.c.h.b16 %v1000
    %v1705 = vunpack.c.l.b16 %v1001
    %v1706 = vunpack.c.h.b16 %v1001
    %v1707 = vunpack.c.l.b16 %v1002
    %v1708 = vunpack.c.h.b16 %v1002
    %v1709 = vunpack.c.l.b16 %v1003
    %v1710 = vunpack.c.h.b16 %v1003
    %v1711 = vunpack.c.l.b16 %v1004
    %v1712 = vunpack.c.h.b16 %v1004
    %v1713 = vunpack.c.l.b16 %v1005
    %v1714 = vunpack.c.h.b16 %v1005
    %v1715 = vunpack.c.l.b16 %v1006
    %v1716 = vunpack.c.h.b16 %v1006
    %v1717 = vunpack.c.l.b16 %v1007
    %v1718 = vunpack.c.h.b16 %v1007
    %v1719 = vunpack.c.l.b16 %v1008
    %v1720 = vunpack.c.h.b16 %v1008
    %v1721 = vunpack.c.l.b16 %v1009
    %v1722 = vunpack.c.h.b16 %v1009
    %v1723 = vunpack.c.l.b16 %v1010
    %v1724 = vunpack.c.h.b16 %v1010
    %v1725 = vunpack.c.l.b16 %v1011
    %v1726 = vunpack.c.h.b16 %v1011
    %v1727 = vunpack.c.l.b16 %v1012
    %v1728 = vunpack.c.h.b16 %v1012
    %v1729 = vunpack.c.l.b16 %v1013
    %v1730 = vunpack.c.h.b16 %v1013
    %v1731 = vunpack.c.l.b16 %v1014
    %v1732 = vunpack.c.h.b16 %v1014
    %v1733 = vunpack.c.l.b16 %v1015
    %v1734 = vunpack.c.h.b16 %v1015
    %v1735 = vunpack.c.l.b16 %v1016
    %v1736 = vunpack.c.h.b16 %v1016
    %v1737 = vunpack.c.l.b16 %v1017
    %v1738 = vunpack.c.h.b16 %v1017
    %v1739 = vunpack.c.l.b16 %v1018
    %v1740 = vunpack.c.h.b16 %v1018
    %v1741 = vunpack.c.l.b16 %v1019
    %v1742 = vunpack.c.h.b16 %v1019
    %v1743 = vunpack.c.l.b16 %v1020
    %v1744 = vunpack.c.h.b16 %v1020
    %v1745 = vunpack.c.l.b16 %v1021
    %v1746 = vunpack.c.h.b16 %v1021
    %v1747 = vunpack.c.l.b16 %v1022
    %v1748 = vunpack.c.h.b16 %v1022
    %v1749 = vunpack.c.l.b16 %v1023
    %v1750 = vunpack.c.h.b16 %v1023
    %v1751 = vunpack.c.l.b16 %v1024
    %v1752 = vunpack.c.h.b16 %v1024
    %v1753 = vunpack.c.l.b16 %v1025
    %v1754 = vunpack.c.h.b16 %v1025
    %v1755 = vunpack.c.l.b16 %v1026
    %v1756 = vunpack.c.h.b16 %v1026
    %v1757 = vunpack.c.l.b16 %v1027
    %v1758 = vunpack.c.h.b16 %v1027
    %v1759 = vunpack.c.l.b16 %v1028
    %v1760 = vunpack.c.h.b16 %v1028
    %v1761 = vunpack.c.l.b16 %v1029
    %v1762 = vunpack.c.h.b16 %v1029
    %v1763 = vunpack.c.l.b16 %v1030
    %v1764 = vunpack.c.h.b16 %v1030
    %v1765 = vunpack.c.l.b16 %v1031
    %v1766 = vunpack.c.h.b16 %v1031
    %v1767 = vunpack.c.l.b16 %v1032
    %v1768 = vunpack.c.h.b16 %v1032
    %v1769 = vunpack.c.l.b16 %v1033
    %v1770 = vunpack.c.h.b16 %v1033
    %v1771 = vunpack.c.l.b16 %v1034
    %v1772 = vunpack.c.h.b16 %v1034
    %v1773 = vunpack.c.l.b16 %v1035
    %v1774 = vunpack.c.h.b16 %v1035
    %v1775 = vunpack.c.l.b16 %v1036
    %v1776 = vunpack.c.h.b16 %v1036
    %v1777 = vunpack.c.l.b16 %v1037
    %v1778 = vunpack.c.h.b16 %v1037
    %v1779 = vunpack.c.l.b16 %v1038
    %v1780 = vunpack.c.h.b16 %v1038
    %v1781 = vunpack.c.l.b16 %v1039
    %v1782 = vunpack.c.h.b16 %v1039
    %v1783 = vunpack.c.l.b16 %v1040
    %v1784 = vunpack.c.h.b16 %v1040
    %v1785 = vunpack.c.l.b16 %v1041
    %v1786 = vunpack.c.h.b16 %v1041
    %v1787 = vunpack.c.l.b16 %v1042
    %v1788 = vunpack.c.h.b16 %v1042
    %v1789 = vunpack.c.l.b16 %v1043
    %v1790 = vunpack.c.h.b16 %v1043
    %v1791 = vunpack.c.l.b16 %v1044
    %v1792 = vunpack.c.h.b16 %v1044
    %v1793 = vunpack.c.l.b16 %v1045
    %v1794 = vunpack.c.h.b16 %v1045
    %v1795 = vunpack.c.l.b16 %v1046
    %v1796 = vunpack.c.h.b16 %v1046
    %v1797 = vunpack.c.l.b16 %v1047
    %v1798 = vunpack.c.h.b16 %v1047
    %v1799 = vunpack.c.l.b16 %v1048
    %v1800 = vunpack.c.h.b16 %v1048
    %v1801 = vunpack.c.l.b16 %v1049
    %v1802 = vunpack.c.h.b16 %v1049
    %v1803 = vunpack.c.l.b16 %v1050
    %v1804 = vunpack.c.h.b16 %v1050
    %v1805 = vunpack.c.l.b16 %v1051
    %v1806 = vunpack.c.h.b16 %v1051
    %v1807 = vunpack.c.l.b16 %v1052
    %v1808 = vunpack.c.h.b16 %v1052
    %v1809 = vunpack.c.l.b16 %v1053
    %v1810 = vunpack.c.h.b16 %v1053
    %v1811 = vunpack.c.l.b16 %v1054
    %v1812 = vunpack.c.h.b16 %v1054
    %v1813 = vunpack.c.l.b16 %v1055
    %v1814 = vunpack.c.h.b16 %v1055
    %v1815 = vunpack.c.l.b16 %v1056
    %v1816 = vunpack.c.h.b16 %v1056
    %v1817 = vunpack.c.l.b16 %v1057
    %v1818 = vunpack.c.h.b16 %v1057
    %v1819 = vunpack.c.l.b16 %v1058
    %v1820 = vunpack.c.h.b16 %v1058
    %v1821 = vunpack.c.l.b16 %v1059
    %v1822 = vunpack.c.h.b16 %v1059
    %v1823 = vunpack.c.l.b16 %v1060
    %v1824 = vunpack.c.h.b16 %v1060
    %v1825 = vunpack.c.l.b16 %v1061
    %v1826 = vunpack.c.h.b16 %v1061
    %v1827 = vunpack.c.l.b16 %v1062
    %v1828 = vunpack.c.h.b16 %v1062
    %v1829 = vunpack.c.l.b16 %v1063
    %v1830 = vunpack.c.h.b16 %v1063
    %v1831 = vunpack.c.l.b16 %v1064
    %v1832 = vunpack.c.h.b16 %v1064
    %v1833 = vunpack.c.l.b16 %v1065
    %v1834 = vunpack.c.h.b16 %v1065
    %v1835 = vunpack.c.l.b16 %v1066
    %v1836 = vunpack.c.h.b16 %v1066
    %v1837 = vunpack.c.l.b16 %v1067
    %v1838 = vunpack.c.h.b16 %v1067
    %v1839 = vunpack.c.l.b16 %v1068
    %v1840 = vunpack.c.h.b16 %v1068
    %v1841 = vunpack.c.l.b16 %v1069
    %v1842 = vunpack.c.h.b16 %v1069
    %v1843 = vunpack.c.l.b16 %v1070
    %v1844 = vunpack.c.h.b16 %v1070
    %v1845 = vunpack.c.l.b16 %v1071
    %v1846 = vunpack.c.h.b16 %v1071
    %v1847 = vunpack.c.l.b16 %v1072
    %v1848 = vunpack.c.h.b16 %v1072
    %v1849 = vunpack.c.l.b16 %v1073
    %v1850 = vunpack.c.h.b16 %v1073
    %v1851 = vunpack.c.l.b16 %v1074
    %v1852 = vunpack.c.h.b16 %v1074
    %v1853 = vunpack.c.l.b16 %v1075
    %v1854 = vunpack.c.h.b16 %v1075
    %v1855 = vunpack.c.l.b16 %v1076
    %v1856 = vunpack.c.h.b16 %v1076
    %v1857 = vunpack.c.l.b16 %v1077
    %v1858 = vunpack.c.h.b16 %v1077
    %v1859 = vunpack.c.l.b16 %v1078
    %v1860 = vunpack.c.h.b16 %v1078
    %v1861 = vunpack.c.l.b16 %v1079
    %v1862 = vunpack.c.h.b16 %v1079
    %v1863 = vunpack.c.l.b16 %v1080
    %v1864 = vunpack.c.h.b16 %v1080
    %v1865 = vunpack.c.l.b16 %v1081
    %v1866 = vunpack.c.h.b16 %v1081
    %v1867 = vunpack.c.l.b16 %v1082
    %v1868 = vunpack.c.h.b16 %v1082
    %v1869 = vpack.c.b16 %v1365, %v1357
    %v1870 = vpack.c.b16 %v1366, %v1358
    %v1871 = vpack.c.b16 %v1367, %v1359
    %v1872 = vpack.c.b16 %v1368, %v1360
    %v1873 = vpack.c.b16 %v1369, %v1361
    %v1874 = vpack.c.b16 %v1370, %v1362
    %v1875 = vpack.c.b16 %v1371, %v1363
    %v1876 = vpack.c.b16 %v1372, %v1364
    %v1877 = vpack.c.b16 %v1381, %v1373
    %v1878 = vpack.c.b16 %v1382, %v1374
    %v1879 = vpack.c.b16 %v1383, %v1375
    %v1880 = vpack.c.b16 %v1384, %v1376
    %v1881 = vpack.c.b16 %v1385, %v1377
    %v1882 = vpack.c.b16 %v1386, %v1378
    %v1883 = vpack.c.b16 %v1387, %v1379
    %v1884 = vpack.c.b16 %v1388, %v1380
    %v1885 = vpack.c.b16 %v1397, %v1389
    %v1886 = vpack.c.b16 %v1398, %v1390
    %v1887 = vpack.c.b16 %v1399, %v1391
    %v1888 = vpack.c.b16 %v1400, %v1392
    %v1889 = vpack.c.b16 %v1401, %v1393
    %v1890 = vpack.c.b16 %v1402, %v1394
    %v1891 = vpack.c.b16 %v1403, %v1395
    %v1892 = vpack.c.b16 %v1404, %v1396
    %v1893 = vpack.c.b16 %v1413, %v1405
    %v1894 = vpack.c.b16 %v1414, %v1406
    %v1895 = vpack.c.b16 %v1415, %v1407
    %v1896 = vpack.c.b16 %v1416, %v1408
    %v1897 = vpack.c.b16 %v1417, %v1409
    %v1898 = vpack.c.b16 %v1418, %v1410
    %v1899 = vpack.c.b16 %v1419, %v1411
    %v1900 = vpack.c.b16 %v1420, %v1412
    %v1901 = vpack.c.b16 %v1429, %v1421
    %v1902 = vpack.c.b16 %v1430, %v1422
    %v1903 = vpack.c.b16 %v1431, %v1423
    %v1904 = vpack.c.b16 %v1432, %v1424
    %v1905 = vpack.c.b16 %v1433, %v1425
    %v1906 = vpack.c.b16 %v1434, %v1426
    %v1907 = vpack.c.b16 %v1435, %v1427
    %v1908 = vpack.c.b16 %v1436, %v1428
    %v1909 = vpack.c.b16 %v1445, %v1437
    %v1910 = vpack.c.b16 %v1446, %v1438
    %v1911 = vpack.c.b16 %v1447, %v1439
    %v1912 = vpack.c.b16 %v1448, %v1440
    %v1913 = vpack.c.b16 %v1449, %v1441
    %v1914 = vpack.c.b16 %v1450, %v1442
    %v1915 = vpack.c.b16 %v1451, %v1443
    %v1916 = vpack.c.b16 %v1452, %v1444
    %v1917 = vpack.c.b16 %v1461, %v1453
    %v1918 = vpack.c.b16 %v1462, %v1454
    %v1919 = vpack.c.b16 %v1463, %v1455
    %v1920 = vpack.c.b16 %v1464, %v1456
    %v1921 = vpack.c.b16 %v1465, %v1457
    %v1922 = vpack.c.b16 %v1466, %v1458
    %v1923 = vpack.c.b16 %v1467, %v1459
    %v1924 = vpack.c.b16 %v1468, %v1460
    %v1925 = vpack.c.b16 %v1477, %v1469
    %v1926 = vpack.c.b16 %v1478, %v1470
    %v1927 = vpack.c.b16 %v1479, %v1471
    %v1928 = vpack.c.b16 %v1480, %v1472
    %v1929 = vpack.c.b16 %v1481, %v1473
    %v1930 = vpack.c.b16 %v1482, %v1474
    %v1931 = vpack.c.b16 %v1483, %v1475
    %v1932 = vpack.c.b16 %v1484, %v1476
    %v1933 = vpack.c.b16 %v1493, %v1485
    %v1934 = vpack.c.b16 %v1494, %v1486
    %v1935 = vpack.c.b16 %v1495, %v1487
    %v1936 = vpack.c.b16 %v1496, %v1488
    %v1937 = vpack.c.b16 %v1497, %v1489
    %v1938 = vpack.c.b16 %v1498, %v1490
    %v1939 = vpack.c.b16 %v1499, %v1491
    %v1940 = vpack.c.b16 %v1500, %v1492
    %v1941 = vpack.c.b16 %v1509, %v1501
    %v1942 = vpack.c.b16 %v1510, %v1502
    %v1943 = vpack.c.b16 %v1511, %v1503
    %v1944 = vpack.c.b16 %v1512, %v1504
    %v1945 = vpack.c.b16 %v1513, %v1505
    %v1946 = vpack.c.b16 %v1514, %v1506
    %v1947 = vpack.c.b16 %v1515, %v1507
    %v1948 = vpack.c.b16 %v1516, %v1508
    %v1949 = vpack.c.b16 %v1525, %v1517
    %v1950 = vpack.c.b16 %v1526, %v1518
    %v1951 = vpack.c.b16 %v1527, %v1519
    %v1952 = vpack.c.b16 %v1528, %v1520
    %v1953 = vpack.c.b16 %v1529, %v1521
    %v1954 = vpack.c.b16 %v1530, %v1522
    %v1955 = vpack.c.b16 %v1531, %v1523
    %v1956 = vpack.c.b16 %v1532, %v1524
    %v1957 = vpack.c.b16 %v1541, %v1533
    %v1958 = vpack.c.b16 %v1542, %v1534
    %v1959 = vpack.c.b16 %v1543, %v1535
    %v1960 = vpack.c.b16 %v1544, %v1536
    %v1961 = vpack.c.b16 %v1545, %v1537
    %v1962 = vpack.c.b16 %v1546, %v1538
    %v1963 = vpack.c.b16 %v1547, %v1539
    %v1964 = vpack.c.b16 %v1548, %v1540
    %v1965 = vpack.c.b16 %v1557, %v1549
    %v1966 = vpack.c.b16 %v1558, %v1550
    %v1967 = vpack.c.b16 %v1559, %v1551
    %v1968 = vpack.c.b16 %v1560, %v1552
    %v1969 = vpack.c.b16 %v1561, %v1553
    %v1970 = vpack.c.b16 %v1562, %v1554
    %v1971 = vpack.c.b16 %v1563, %v1555
    %v1972 = vpack.c.b16 %v1564, %v1556
    %v1973 = vpack.c.b16 %v1573, %v1565
    %v1974 = vpack.c.b16 %v1574, %v1566
    %v1975 = vpack.c.b16 %v1575, %v1567
    %v1976 = vpack.c.b16 %v1576, %v1568
    %v1977 = vpack.c.b16 %v1577, %v1569
    %v1978 = vpack.c.b16 %v1578, %v1570
    %v1979 = vpack.c.b16 %v1579, %v1571
    %v1980 = vpack.c.b16 %v1580, %v1572
    %v1981 = vpack.c.b16 %v1589, %v1581
    %v1982 = vpack.c.b16 %v1590, %v1582
    %v1983 = vpack.c.b16 %v1591, %v1583
    %v1984 = vpack.c.b16 %v1592, %v1584
    %v1985 = vpack.c.b16 %v1593, %v1585
    %v1986 = vpack.c.b16 %v1594, %v1586
    %v1987 = vpack.c.b16 %v1595, %v1587
    %v1988 = vpack.c.b16 %v1596, %v1588
    %v1989 = vpack.c.b16 %v1605, %v1597
    %v1990 = vpack.c.b16 %v1606, %v1598
    %v1991 = vpack.c.b16 %v1607, %v1599
    %v1992 = vpack.c.b16 %v1608, %v1600
    %v1993 = vpack.c.b16 %v1609, %v1601
    %v1994 = vpack.c.b16 %v1610, %v1602
    %v1995 = vpack.c.b16 %v1611, %v1603
    %v1996 = vpack.c.b16 %v1612, %v1604
    %v1997 = vpack.c.b16 %v1621, %v1613
    %v1998 = vpack.c.b16 %v1622, %v1614
    %v1999 = vpack.c.b16 %v1623, %v1615
    %v2000 = vpack.c.b16 %v1624, %v1616
    %v2001 = vpack.c.b16 %v1625, %v1617
    %v2002 = vpack.c.b16 %v1626, %v1618
    %v2003 = vpack.c.b16 %v1627, %v1619
    %v2004 = vpack.c.b16 %v1628, %v1620
    %v2005 = vpack.c.b16 %v1637, %v1629
    %v2006 = vpack.c.b16 %v1638, %v1630
    %v2007 = vpack.c.b16 %v1639, %v1631
    %v2008 = vpack.c.b16 %v1640, %v1632
    %v2009 = vpack.c.b16 %v1641, %v1633
    %v2010 = vpack.c.b16 %v1642, %v1634
    %v2011 = vpack.c.b16 %v1643, %v1635
    %v2012 = vpack.c.b16 %v1644, %v1636
    %v2013 = vpack.c.b16 %v1653, %v1645
    %v2014 = vpack.c.b16 %v1654, %v1646
    %v2015 = vpack.c.b16 %v1655, %v1647
    %v2016 = vpack.c.b16 %v1656, %v1648
    %v2017 = vpack.c.b16 %v1657, %v1649
    %v2018 = vpack.c.b16 %v1658, %v1650
    %v2019 = vpack.c.b16 %v1659, %v1651
    %v2020 = vpack.c.b16 %v1660, %v1652
    %v2021 = vpack.c.b16 %v1669, %v1661
    %v2022 = vpack.c.b16 %v1670, %v1662
    %v2023 = vpack.c.b16 %v1671, %v1663
    %v2024 = vpack.c.b16 %v1672, %v1664
    %v2025 = vpack.c.b16 %v1673, %v1665
    %v2026 = vpack.c.b16 %v1674, %v1666
    %v2027 = vpack.c.b16 %v1675, %v1667
    %v2028 = vpack.c.b16 %v1676, %v1668
    %v2029 = vpack.c.b16 %v1685, %v1677
    %v2030 = vpack.c.b16 %v1686, %v1678
    %v2031 = vpack.c.b16 %v1687, %v1679
    %v2032 = vpack.c.b16 %v1688, %v1680
    %v2033 = vpack.c.b16 %v1689, %v1681
    %v2034 = vpack.c.b16 %v1690, %v1682
    %v2035 = vpack.c.b16 %v1691, %v1683
    %v2036 = vpack.c.b16 %v1692, %v1684
    %v2037 = vpack.c.b16 %v1701, %v1693
    %v2038 = vpack.c.b16 %v1702, %v1694
    %v2039 = vpack.c.b16 %v1703, %v1695
    %v2040 = vpack.c.b16 %v1704, %v1696
    %v2041 = vpack.c.b16 %v1705, %v1697
    %v2042 = vpack.c.b16 %v1706, %v1698
    %v2043 = vpack.c.b16 %v1707, %v1699
    %v2044 = vpack.c.b16 %v1708, %v1700
    %v2045 = vpack.c.b16 %v1717, %v1709
    %v2046 = vpack.c.b16 %v1718, %v1710
    %v2047 = vpack.c.b16 %v1719, %v1711
    %v2048 = vpack.c.b16 %v1720, %v1712
    %v2049 = vpack.c.b16 %v1721, %v1713
    %v2050 = vpack.c.b16 %v1722, %v1714
    %v2051 = vpack.c.b16 %v1723, %v1715
    %v2052 = vpack.c.b16 %v1724, %v1716
    %v2053 = vpack.c.b16 %v1733, %v1725
    %v2054 = vpack.c.b16 %v1734, %v1726
    %v2055 = vpack.c.b16 %v1735, %v1727
    %v2056 = vpack.c.b16 %v1736, %v1728
    %v2057 = vpack.c.b16 %v1737, %v1729
    %v2058 = vpack.c.b16 %v1738, %v1730
    %v2059 = vpack.c.b16 %v1739, %v1731
    %v2060 = vpack.c.b16 %v1740, %v1732
    %v2061 = vpack.c.b16 %v1749, %v1741
    %v2062 = vpack.c.b16 %v1750, %v1742
    %v2063 = vpack.c.b16 %v1751, %v1743
    %v2064 = vpack.c.b16 %v1752, %v1744
    %v2065 = vpack.c.b16 %v1753, %v1745
    %v2066 = vpack.c.b16 %v1754, %v1746
    %v2067 = vpack.c.b16 %v1755, %v1747
    %v2068 = vpack.c.b16 %v1756, %v1748
    %v2069 = vpack.c.b16 %v1765, %v1757
    %v2070 = vpack.c.b16 %v1766, %v1758
    %v2071 = vpack.c.b16 %v1767, %v1759
    %v2072 = vpack.c.b16 %v1768, %v1760
    %v2073 = vpack.c.b16 %v1769, %v1761
    %v2074 = vpack.c.b16 %v1770, %v1762
    %v2075 = vpack.c.b16 %v1771, %v1763
    %v2076 = vpack.c.b16 %v1772, %v1764
    %v2077 = vpack.c.b16 %v1781, %v1773
    %v2078 = vpack.c.b16 %v1782, %v1774
    %v2079 = vpack.c.b16 %v1783, %v1775
    %v2080 = vpack.c.b16 %v1784, %v1776
    %v2081 = vpack.c.b16 %v1785, %v1777
    %v2082 = vpack.c.b16 %v1786, %v1778
    %v2083 = vpack.c.b16 %v1787, %v1779
    %v2084 = vpack.c.b16 %v1788, %v1780
    %v2085 = vpack.c.b16 %v1797, %v1789
    %v2086 = vpack.c.b16 %v1798, %v1790
    %v2087 = vpack.c.b16 %v1799, %v1791
    %v2088 = vpack.c.b16 %v1800, %v1792
    %v2089 = vpack.c.b16 %v1801, %v1793
    %v2090 = vpack.c.b16 %v1802, %v1794
    %v2091 = vpack.c.b16 %v1803, %v1795
    %v2092 = vpack.c.b16 %v1804, %v1796
    %v2093 = vpack.c.b16 %v1813, %v1805
    %v2094 = vpack.c.b16 %v1814, %v1806
    %v2095 = vpack.c.b16 %v1815, %v1807
    %v2096 = vpack.c.b16 %v1816, %v1808
    %v2097 = vpack.c.b16 %v1817, %v1809
    %v2098 = vpack.c.b16 %v1818, %v1810
    %v2099 = vpack.c.b16 %v1819, %v1811
    %v2100 = vpack.c.b16 %v1820, %v1812
    %v2101 = vpack.c.b16 %v1829, %v1821
    %v2102 = vpack.c.b16 %v1830, %v1822
    %v2103 = vpack.c.b16 %v1831, %v1823
    %v2104 = vpack.c.b16 %v1832, %v1824
    %v2105 = vpack.c.b16 %v1833, %v1825
    %v2106 = vpack.c.b16 %v1834, %v1826
    %v2107 = vpack.c.b16 %v1835, %v1827
    %v2108 = vpack.c.b16 %v1836, %v1828
    %v2109 = vpack.c.b16 %v1845, %v1837
    %v2110 = vpack.c.b16 %v1846, %v1838
    %v2111 = vpack.c.b16 %v1847, %v1839
    %v2112 = vpack.c.b16 %v1848, %v1840
    %v2113 = vpack.c.b16 %v1849, %v1841
    %v2114 = vpack.c.b16 %v1850, %v1842
    %v2115 = vpack.c.b16 %v1851, %v1843
    %v2116 = vpack.c.b16 %v1852, %v1844
    %v2117 = vpack.c.b16 %v1861, %v1853
    %v2118 = vpack.c.b16 %v1862, %v1854
    %v2119 = vpack.c.b16 %v1863, %v1855
    %v2120 = vpack.c.b16 %v1864, %v1856
    %v2121 = vpack.c.b16 %v1865, %v1857
    %v2122 = vpack.c.b16 %v1866, %v1858
    %v2123 = vpack.c.b16 %v1867, %v1859
    %v2124 = vpack.c.b16 %v1868, %v1860
    %2381 = vmatpush.bf16.msra.mxu0 %v1925
    %2382 = vmatpush.bf16.msra.mxu0 %v1917
    %2383 = vmatpush.bf16.msra.mxu0 %v1909
    %2384 = vmatpush.bf16.msra.mxu0 %v1901
    %2385 = vmatpush.bf16.msra.mxu0 %v1893
    %2386 = vmatpush.bf16.msra.mxu0 %v1885
    %2387 = vmatpush.bf16.msra.mxu0 %v1877
    %2388 = vmatpush.bf16.msra.mxu0 %v1869
    %2389 = vmatmul.bf16.gmra.mxu0 %v823
    %v2390 = vpop.f32.mrf.mxu0
    %v2391 = vadd.f32 %v1085, %v2390
    %v2392 = vpop.f32.mrf.mxu0
    %v2393 = vadd.f32 %v1085, %v2392
    %2394 = vdwg.mxu0
    %2395 = vmatpush.bf16.msra.mxu0 %v1989
    %2396 = vmatpush.bf16.msra.mxu0 %v1981
    %2397 = vmatpush.bf16.msra.mxu0 %v1973
    %2398 = vmatpush.bf16.msra.mxu0 %v1965
    %2399 = vmatpush.bf16.msra.mxu0 %v1957
    %2400 = vmatpush.bf16.msra.mxu0 %v1949
    %2401 = vmatpush.bf16.msra.mxu0 %v1941
    %2402 = vmatpush.bf16.msra.mxu0 %v1933
    %2403 = vmatmul.bf16.gmra.mxu0 %v824
    %v2404 = vpop.f32.mrf.mxu0
    %v2405 = vadd.f32 %v2391, %v2404
    %v2406 = vpop.f32.mrf.mxu0
    %v2407 = vadd.f32 %v2393, %v2406
    %2408 = vdwg.mxu0
    %2409 = vmatpush.bf16.msra.mxu0 %v2053
    %2410 = vmatpush.bf16.msra.mxu0 %v2045
    %2411 = vmatpush.bf16.msra.mxu0 %v2037
    %2412 = vmatpush.bf16.msra.mxu0 %v2029
    %2413 = vmatpush.bf16.msra.mxu0 %v2021
    %2414 = vmatpush.bf16.msra.mxu0 %v2013
    %2415 = vmatpush.bf16.msra.mxu0 %v2005
    %2416 = vmatpush.bf16.msra.mxu0 %v1997
    %2417 = vmatmul.bf16.gmra.mxu0 %v825
    %v2418 = vpop.f32.mrf.mxu0
    %v2419 = vadd.f32 %v2405, %v2418
    %v2420 = vpop.f32.mrf.mxu0
    %v2421 = vadd.f32 %v2407, %v2420
    %2422 = vdwg.mxu0
    %2423 = vmatpush.bf16.msra.mxu0 %v2117
    %2424 = vmatpush.bf16.msra.mxu0 %v2109
    %2425 = vmatpush.bf16.msra.mxu0 %v2101
    %2426 = vmatpush.bf16.msra.mxu0 %v2093
    %2427 = vmatpush.bf16.msra.mxu0 %v2085
    %2428 = vmatpush.bf16.msra.mxu0 %v2077
    %2429 = vmatpush.bf16.msra.mxu0 %v2069
    %2430 = vmatpush.bf16.msra.mxu0 %v2061
    %2431 = vmatmul.bf16.gmra.mxu0 %v826
    %v2432 = vpop.f32.mrf.mxu0
    %v2433 = vadd.f32 %v2419, %v2432
    %v2434 = vpop.f32.mrf.mxu0
    %v2435 = vadd.f32 %v2421, %v2434
    %2436 = vdwg.mxu0
    %2437 = vmatpush.bf16.msra.mxu0 %v1926
    %2438 = vmatpush.bf16.msra.mxu0 %v1918
    %2439 = vmatpush.bf16.msra.mxu0 %v1910
    %2440 = vmatpush.bf16.msra.mxu0 %v1902
    %2441 = vmatpush.bf16.msra.mxu0 %v1894
    %2442 = vmatpush.bf16.msra.mxu0 %v1886
    %2443 = vmatpush.bf16.msra.mxu0 %v1878
    %2444 = vmatpush.bf16.msra.mxu0 %v1870
    %2445 = vmatmul.bf16.gmra.mxu0 %v823
    %v2446 = vpop.f32.mrf.mxu0
    %v2447 = vadd.f32 %v1086, %v2446
    %v2448 = vpop.f32.mrf.mxu0
    %v2449 = vadd.f32 %v1086, %v2448
    %2450 = vdwg.mxu0
    %2451 = vmatpush.bf16.msra.mxu0 %v1990
    %2452 = vmatpush.bf16.msra.mxu0 %v1982
    %2453 = vmatpush.bf16.msra.mxu0 %v1974
    %2454 = vmatpush.bf16.msra.mxu0 %v1966
    %2455 = vmatpush.bf16.msra.mxu0 %v1958
    %2456 = vmatpush.bf16.msra.mxu0 %v1950
    %2457 = vmatpush.bf16.msra.mxu0 %v1942
    %2458 = vmatpush.bf16.msra.mxu0 %v1934
    %2459 = vmatmul.bf16.gmra.mxu0 %v824
    %v2460 = vpop.f32.mrf.mxu0
    %v2461 = vadd.f32 %v2447, %v2460
    %v2462 = vpop.f32.mrf.mxu0
    %v2463 = vadd.f32 %v2449, %v2462
    %2464 = vdwg.mxu0
    %2465 = vmatpush.bf16.msra.mxu0 %v2054
    %2466 = vmatpush.bf16.msra.mxu0 %v2046
    %2467 = vmatpush.bf16.msra.mxu0 %v2038
    %2468 = vmatpush.bf16.msra.mxu0 %v2030
    %2469 = vmatpush.bf16.msra.mxu0 %v2022
    %2470 = vmatpush.bf16.msra.mxu0 %v2014
    %2471 = vmatpush.bf16.msra.mxu0 %v2006
    %2472 = vmatpush.bf16.msra.mxu0 %v1998
    %2473 = vmatmul.bf16.gmra.mxu0 %v825
    %v2474 = vpop.f32.mrf.mxu0
    %v2475 = vadd.f32 %v2461, %v2474
    %v2476 = vpop.f32.mrf.mxu0
    %v2477 = vadd.f32 %v2463, %v2476
    %2478 = vdwg.mxu0
    %2479 = vmatpush.bf16.msra.mxu0 %v2118
    %2480 = vmatpush.bf16.msra.mxu0 %v2110
    %2481 = vmatpush.bf16.msra.mxu0 %v2102
    %2482 = vmatpush.bf16.msra.mxu0 %v2094
    %2483 = vmatpush.bf16.msra.mxu0 %v2086
    %2484 = vmatpush.bf16.msra.mxu0 %v2078
    %2485 = vmatpush.bf16.msra.mxu0 %v2070
    %2486 = vmatpush.bf16.msra.mxu0 %v2062
    %2487 = vmatmul.bf16.gmra.mxu0 %v826
    %v2488 = vpop.f32.mrf.mxu0
    %v2489 = vadd.f32 %v2475, %v2488
    %v2490 = vpop.f32.mrf.mxu0
    %v2491 = vadd.f32 %v2477, %v2490
    %2492 = vdwg.mxu0
    %2493 = vmatpush.bf16.msra.mxu0 %v1927
    %2494 = vmatpush.bf16.msra.mxu0 %v1919
    %2495 = vmatpush.bf16.msra.mxu0 %v1911
    %2496 = vmatpush.bf16.msra.mxu0 %v1903
    %2497 = vmatpush.bf16.msra.mxu0 %v1895
    %2498 = vmatpush.bf16.msra.mxu0 %v1887
    %2499 = vmatpush.bf16.msra.mxu0 %v1879
    %2500 = vmatpush.bf16.msra.mxu0 %v1871
    %2501 = vmatmul.bf16.gmra.mxu0 %v823
    %v2502 = vpop.f32.mrf.mxu0
    %v2503 = vadd.f32 %v1087, %v2502
    %v2504 = vpop.f32.mrf.mxu0
    %v2505 = vadd.f32 %v1087, %v2504
    %2506 = vdwg.mxu0
    %2507 = vmatpush.bf16.msra.mxu0 %v1991
    %2508 = vmatpush.bf16.msra.mxu0 %v1983
    %2509 = vmatpush.bf16.msra.mxu0 %v1975
    %2510 = vmatpush.bf16.msra.mxu0 %v1967
    %2511 = vmatpush.bf16.msra.mxu0 %v1959
    %2512 = vmatpush.bf16.msra.mxu0 %v1951
    %2513 = vmatpush.bf16.msra.mxu0 %v1943
    %2514 = vmatpush.bf16.msra.mxu0 %v1935
    %2515 = vmatmul.bf16.gmra.mxu0 %v824
    %v2516 = vpop.f32.mrf.mxu0
    %v2517 = vadd.f32 %v2503, %v2516
    %v2518 = vpop.f32.mrf.mxu0
    %v2519 = vadd.f32 %v2505, %v2518
    %2520 = vdwg.mxu0
    %2521 = vmatpush.bf16.msra.mxu0 %v2055
    %2522 = vmatpush.bf16.msra.mxu0 %v2047
    %2523 = vmatpush.bf16.msra.mxu0 %v2039
    %2524 = vmatpush.bf16.msra.mxu0 %v2031
    %2525 = vmatpush.bf16.msra.mxu0 %v2023
    %2526 = vmatpush.bf16.msra.mxu0 %v2015
    %2527 = vmatpush.bf16.msra.mxu0 %v2007
    %2528 = vmatpush.bf16.msra.mxu0 %v1999
    %2529 = vmatmul.bf16.gmra.mxu0 %v825
    %v2530 = vpop.f32.mrf.mxu0
    %v2531 = vadd.f32 %v2517, %v2530
    %v2532 = vpop.f32.mrf.mxu0
    %v2533 = vadd.f32 %v2519, %v2532
    %2534 = vdwg.mxu0
    %2535 = vmatpush.bf16.msra.mxu0 %v2119
    %2536 = vmatpush.bf16.msra.mxu0 %v2111
    %2537 = vmatpush.bf16.msra.mxu0 %v2103
    %2538 = vmatpush.bf16.msra.mxu0 %v2095
    %2539 = vmatpush.bf16.msra.mxu0 %v2087
    %2540 = vmatpush.bf16.msra.mxu0 %v2079
    %2541 = vmatpush.bf16.msra.mxu0 %v2071
    %2542 = vmatpush.bf16.msra.mxu0 %v2063
    %2543 = vmatmul.bf16.gmra.mxu0 %v826
    %v2544 = vpop.f32.mrf.mxu0
    %v2545 = vadd.f32 %v2531, %v2544
    %v2546 = vpop.f32.mrf.mxu0
    %v2547 = vadd.f32 %v2533, %v2546
    %2548 = vdwg.mxu0
    %2549 = vmatpush.bf16.msra.mxu0 %v1928
    %2550 = vmatpush.bf16.msra.mxu0 %v1920
    %2551 = vmatpush.bf16.msra.mxu0 %v1912
    %2552 = vmatpush.bf16.msra.mxu0 %v1904
    %2553 = vmatpush.bf16.msra.mxu0 %v1896
    %2554 = vmatpush.bf16.msra.mxu0 %v1888
    %2555 = vmatpush.bf16.msra.mxu0 %v1880
    %2556 = vmatpush.bf16.msra.mxu0 %v1872
    %2557 = vmatmul.bf16.gmra.mxu0 %v823
    %v2558 = vpop.f32.mrf.mxu0
    %v2559 = vadd.f32 %v1088, %v2558
    %v2560 = vpop.f32.mrf.mxu0
    %v2561 = vadd.f32 %v1088, %v2560
    %2562 = vdwg.mxu0
    %2563 = vmatpush.bf16.msra.mxu0 %v1992
    %2564 = vmatpush.bf16.msra.mxu0 %v1984
    %2565 = vmatpush.bf16.msra.mxu0 %v1976
    %2566 = vmatpush.bf16.msra.mxu0 %v1968
    %2567 = vmatpush.bf16.msra.mxu0 %v1960
    %2568 = vmatpush.bf16.msra.mxu0 %v1952
    %2569 = vmatpush.bf16.msra.mxu0 %v1944
    %2570 = vmatpush.bf16.msra.mxu0 %v1936
    %2571 = vmatmul.bf16.gmra.mxu0 %v824
    %v2572 = vpop.f32.mrf.mxu0
    %v2573 = vadd.f32 %v2559, %v2572
    %v2574 = vpop.f32.mrf.mxu0
    %v2575 = vadd.f32 %v2561, %v2574
    %2576 = vdwg.mxu0
    %2577 = vmatpush.bf16.msra.mxu0 %v2056
    %2578 = vmatpush.bf16.msra.mxu0 %v2048
    %2579 = vmatpush.bf16.msra.mxu0 %v2040
    %2580 = vmatpush.bf16.msra.mxu0 %v2032
    %2581 = vmatpush.bf16.msra.mxu0 %v2024
    %2582 = vmatpush.bf16.msra.mxu0 %v2016
    %2583 = vmatpush.bf16.msra.mxu0 %v2008
    %2584 = vmatpush.bf16.msra.mxu0 %v2000
    %2585 = vmatmul.bf16.gmra.mxu0 %v825
    %v2586 = vpop.f32.mrf.mxu0
    %v2587 = vadd.f32 %v2573, %v2586
    %v2588 = vpop.f32.mrf.mxu0
    %v2589 = vadd.f32 %v2575, %v2588
    %2590 = vdwg.mxu0
    %2591 = vmatpush.bf16.msra.mxu0 %v2120
    %2592 = vmatpush.bf16.msra.mxu0 %v2112
    %2593 = vmatpush.bf16.msra.mxu0 %v2104
    %2594 = vmatpush.bf16.msra.mxu0 %v2096
    %2595 = vmatpush.bf16.msra.mxu0 %v2088
    %2596 = vmatpush.bf16.msra.mxu0 %v2080
    %2597 = vmatpush.bf16.msra.mxu0 %v2072
    %2598 = vmatpush.bf16.msra.mxu0 %v2064
    %2599 = vmatmul.bf16.gmra.mxu0 %v826
    %v2600 = vpop.f32.mrf.mxu0
    %v2601 = vadd.f32 %v2587, %v2600
    %v2602 = vpop.f32.mrf.mxu0
    %v2603 = vadd.f32 %v2589, %v2602
    %2604 = vdwg.mxu0
    %2605 = vmatpush.bf16.msra.mxu0 %v1929
    %2606 = vmatpush.bf16.msra.mxu0 %v1921
    %2607 = vmatpush.bf16.msra.mxu0 %v1913
    %2608 = vmatpush.bf16.msra.mxu0 %v1905
    %2609 = vmatpush.bf16.msra.mxu0 %v1897
    %2610 = vmatpush.bf16.msra.mxu0 %v1889
    %2611 = vmatpush.bf16.msra.mxu0 %v1881
    %2612 = vmatpush.bf16.msra.mxu0 %v1873
    %2613 = vmatmul.bf16.gmra.mxu0 %v823
    %v2614 = vpop.f32.mrf.mxu0
    %v2615 = vadd.f32 %v1089, %v2614
    %v2616 = vpop.f32.mrf.mxu0
    %v2617 = vadd.f32 %v1089, %v2616
    %2618 = vdwg.mxu0
    %2619 = vmatpush.bf16.msra.mxu0 %v1993
    %2620 = vmatpush.bf16.msra.mxu0 %v1985
    %2621 = vmatpush.bf16.msra.mxu0 %v1977
    %2622 = vmatpush.bf16.msra.mxu0 %v1969
    %2623 = vmatpush.bf16.msra.mxu0 %v1961
    %2624 = vmatpush.bf16.msra.mxu0 %v1953
    %2625 = vmatpush.bf16.msra.mxu0 %v1945
    %2626 = vmatpush.bf16.msra.mxu0 %v1937
    %2627 = vmatmul.bf16.gmra.mxu0 %v824
    %v2628 = vpop.f32.mrf.mxu0
    %v2629 = vadd.f32 %v2615, %v2628
    %v2630 = vpop.f32.mrf.mxu0
    %v2631 = vadd.f32 %v2617, %v2630
    %2632 = vdwg.mxu0
    %2633 = vmatpush.bf16.msra.mxu0 %v2057
    %2634 = vmatpush.bf16.msra.mxu0 %v2049
    %2635 = vmatpush.bf16.msra.mxu0 %v2041
    %2636 = vmatpush.bf16.msra.mxu0 %v2033
    %2637 = vmatpush.bf16.msra.mxu0 %v2025
    %2638 = vmatpush.bf16.msra.mxu0 %v2017
    %2639 = vmatpush.bf16.msra.mxu0 %v2009
    %2640 = vmatpush.bf16.msra.mxu0 %v2001
    %2641 = vmatmul.bf16.gmra.mxu0 %v825
    %v2642 = vpop.f32.mrf.mxu0
    %v2643 = vadd.f32 %v2629, %v2642
    %v2644 = vpop.f32.mrf.mxu0
    %v2645 = vadd.f32 %v2631, %v2644
    %2646 = vdwg.mxu0
    %2647 = vmatpush.bf16.msra.mxu0 %v2121
    %2648 = vmatpush.bf16.msra.mxu0 %v2113
    %2649 = vmatpush.bf16.msra.mxu0 %v2105
    %2650 = vmatpush.bf16.msra.mxu0 %v2097
    %2651 = vmatpush.bf16.msra.mxu0 %v2089
    %2652 = vmatpush.bf16.msra.mxu0 %v2081
    %2653 = vmatpush.bf16.msra.mxu0 %v2073
    %2654 = vmatpush.bf16.msra.mxu0 %v2065
    %2655 = vmatmul.bf16.gmra.mxu0 %v826
    %v2656 = vpop.f32.mrf.mxu0
    %v2657 = vadd.f32 %v2643, %v2656
    %v2658 = vpop.f32.mrf.mxu0
    %v2659 = vadd.f32 %v2645, %v2658
    %2660 = vdwg.mxu0
    %2661 = vmatpush.bf16.msra.mxu0 %v1930
    %2662 = vmatpush.bf16.msra.mxu0 %v1922
    %2663 = vmatpush.bf16.msra.mxu0 %v1914
    %2664 = vmatpush.bf16.msra.mxu0 %v1906
    %2665 = vmatpush.bf16.msra.mxu0 %v1898
    %2666 = vmatpush.bf16.msra.mxu0 %v1890
    %2667 = vmatpush.bf16.msra.mxu0 %v1882
    %2668 = vmatpush.bf16.msra.mxu0 %v1874
    %2669 = vmatmul.bf16.gmra.mxu0 %v823
    %v2670 = vpop.f32.mrf.mxu0
    %v2671 = vadd.f32 %v1090, %v2670
    %v2672 = vpop.f32.mrf.mxu0
    %v2673 = vadd.f32 %v1090, %v2672
    %2674 = vdwg.mxu0
    %2675 = vmatpush.bf16.msra.mxu0 %v1994
    %2676 = vmatpush.bf16.msra.mxu0 %v1986
    %2677 = vmatpush.bf16.msra.mxu0 %v1978
    %2678 = vmatpush.bf16.msra.mxu0 %v1970
    %2679 = vmatpush.bf16.msra.mxu0 %v1962
    %2680 = vmatpush.bf16.msra.mxu0 %v1954
    %2681 = vmatpush.bf16.msra.mxu0 %v1946
    %2682 = vmatpush.bf16.msra.mxu0 %v1938
    %2683 = vmatmul.bf16.gmra.mxu0 %v824
    %v2684 = vpop.f32.mrf.mxu0
    %v2685 = vadd.f32 %v2671, %v2684
    %v2686 = vpop.f32.mrf.mxu0
    %v2687 = vadd.f32 %v2673, %v2686
    %2688 = vdwg.mxu0
    %2689 = vmatpush.bf16.msra.mxu0 %v2058
    %2690 = vmatpush.bf16.msra.mxu0 %v2050
    %2691 = vmatpush.bf16.msra.mxu0 %v2042
    %2692 = vmatpush.bf16.msra.mxu0 %v2034
    %2693 = vmatpush.bf16.msra.mxu0 %v2026
    %2694 = vmatpush.bf16.msra.mxu0 %v2018
    %2695 = vmatpush.bf16.msra.mxu0 %v2010
    %2696 = vmatpush.bf16.msra.mxu0 %v2002
    %2697 = vmatmul.bf16.gmra.mxu0 %v825
    %v2698 = vpop.f32.mrf.mxu0
    %v2699 = vadd.f32 %v2685, %v2698
    %v2700 = vpop.f32.mrf.mxu0
    %v2701 = vadd.f32 %v2687, %v2700
    %2702 = vdwg.mxu0
    %2703 = vmatpush.bf16.msra.mxu0 %v2122
    %2704 = vmatpush.bf16.msra.mxu0 %v2114
    %2705 = vmatpush.bf16.msra.mxu0 %v2106
    %2706 = vmatpush.bf16.msra.mxu0 %v2098
    %2707 = vmatpush.bf16.msra.mxu0 %v2090
    %2708 = vmatpush.bf16.msra.mxu0 %v2082
    %2709 = vmatpush.bf16.msra.mxu0 %v2074
    %2710 = vmatpush.bf16.msra.mxu0 %v2066
    %2711 = vmatmul.bf16.gmra.mxu0 %v826
    %v2712 = vpop.f32.mrf.mxu0
    %v2713 = vadd.f32 %v2699, %v2712
    %v2714 = vpop.f32.mrf.mxu0
    %v2715 = vadd.f32 %v2701, %v2714
    %2716 = vdwg.mxu0
    %2717 = vmatpush.bf16.msra.mxu0 %v1931
    %2718 = vmatpush.bf16.msra.mxu0 %v1923
    %2719 = vmatpush.bf16.msra.mxu0 %v1915
    %2720 = vmatpush.bf16.msra.mxu0 %v1907
    %2721 = vmatpush.bf16.msra.mxu0 %v1899
    %2722 = vmatpush.bf16.msra.mxu0 %v1891
    %2723 = vmatpush.bf16.msra.mxu0 %v1883
    %2724 = vmatpush.bf16.msra.mxu0 %v1875
    %2725 = vmatmul.bf16.gmra.mxu0 %v823
    %v2726 = vpop.f32.mrf.mxu0
    %v2727 = vadd.f32 %v1091, %v2726
    %v2728 = vpop.f32.mrf.mxu0
    %v2729 = vadd.f32 %v1091, %v2728
    %2730 = vdwg.mxu0
    %2731 = vmatpush.bf16.msra.mxu0 %v1995
    %2732 = vmatpush.bf16.msra.mxu0 %v1987
    %2733 = vmatpush.bf16.msra.mxu0 %v1979
    %2734 = vmatpush.bf16.msra.mxu0 %v1971
    %2735 = vmatpush.bf16.msra.mxu0 %v1963
    %2736 = vmatpush.bf16.msra.mxu0 %v1955
    %2737 = vmatpush.bf16.msra.mxu0 %v1947
    %2738 = vmatpush.bf16.msra.mxu0 %v1939
    %2739 = vmatmul.bf16.gmra.mxu0 %v824
    %v2740 = vpop.f32.mrf.mxu0
    %v2741 = vadd.f32 %v2727, %v2740
    %v2742 = vpop.f32.mrf.mxu0
    %v2743 = vadd.f32 %v2729, %v2742
    %2744 = vdwg.mxu0
    %2745 = vmatpush.bf16.msra.mxu0 %v2059
    %2746 = vmatpush.bf16.msra.mxu0 %v2051
    %2747 = vmatpush.bf16.msra.mxu0 %v2043
    %2748 = vmatpush.bf16.msra.mxu0 %v2035
    %2749 = vmatpush.bf16.msra.mxu0 %v2027
    %2750 = vmatpush.bf16.msra.mxu0 %v2019
    %2751 = vmatpush.bf16.msra.mxu0 %v2011
    %2752 = vmatpush.bf16.msra.mxu0 %v2003
    %2753 = vmatmul.bf16.gmra.mxu0 %v825
    %v2754 = vpop.f32.mrf.mxu0
    %v2755 = vadd.f32 %v2741, %v2754
    %v2756 = vpop.f32.mrf.mxu0
    %v2757 = vadd.f32 %v2743, %v2756
    %2758 = vdwg.mxu0
    %2759 = vmatpush.bf16.msra.mxu0 %v2123
    %2760 = vmatpush.bf16.msra.mxu0 %v2115
    %2761 = vmatpush.bf16.msra.mxu0 %v2107
    %2762 = vmatpush.bf16.msra.mxu0 %v2099
    %2763 = vmatpush.bf16.msra.mxu0 %v2091
    %2764 = vmatpush.bf16.msra.mxu0 %v2083
    %2765 = vmatpush.bf16.msra.mxu0 %v2075
    %2766 = vmatpush.bf16.msra.mxu0 %v2067
    %2767 = vmatmul.bf16.gmra.mxu0 %v826
    %v2768 = vpop.f32.mrf.mxu0
    %v2769 = vadd.f32 %v2755, %v2768
    %v2770 = vpop.f32.mrf.mxu0
    %v2771 = vadd.f32 %v2757, %v2770
    %2772 = vdwg.mxu0
    %2773 = vmatpush.bf16.msra.mxu0 %v1932
    %2774 = vmatpush.bf16.msra.mxu0 %v1924
    %2775 = vmatpush.bf16.msra.mxu0 %v1916
    %2776 = vmatpush.bf16.msra.mxu0 %v1908
    %2777 = vmatpush.bf16.msra.mxu0 %v1900
    %2778 = vmatpush.bf16.msra.mxu0 %v1892
    %2779 = vmatpush.bf16.msra.mxu0 %v1884
    %2780 = vmatpush.bf16.msra.mxu0 %v1876
    %2781 = vmatmul.bf16.gmra.mxu0 %v823
    %v2782 = vpop.f32.mrf.mxu0
    %v2783 = vadd.f32 %v1092, %v2782
    %v2784 = vpop.f32.mrf.mxu0
    %v2785 = vadd.f32 %v1092, %v2784
    %2786 = vdwg.mxu0
    %2787 = vmatpush.bf16.msra.mxu0 %v1996
    %2788 = vmatpush.bf16.msra.mxu0 %v1988
    %2789 = vmatpush.bf16.msra.mxu0 %v1980
    %2790 = vmatpush.bf16.msra.mxu0 %v1972
    %2791 = vmatpush.bf16.msra.mxu0 %v1964
    %2792 = vmatpush.bf16.msra.mxu0 %v1956
    %2793 = vmatpush.bf16.msra.mxu0 %v1948
    %2794 = vmatpush.bf16.msra.mxu0 %v1940
    %2795 = vmatmul.bf16.gmra.mxu0 %v824
    %v2796 = vpop.f32.mrf.mxu0
    %v2797 = vadd.f32 %v2783, %v2796
    %v2798 = vpop.f32.mrf.mxu0
    %v2799 = vadd.f32 %v2785, %v2798
    %2800 = vdwg.mxu0
    %2801 = vmatpush.bf16.msra.mxu0 %v2060
    %2802 = vmatpush.bf16.msra.mxu0 %v2052
    %2803 = vmatpush.bf16.msra.mxu0 %v2044
    %2804 = vmatpush.bf16.msra.mxu0 %v2036
    %2805 = vmatpush.bf16.msra.mxu0 %v2028
    %2806 = vmatpush.bf16.msra.mxu0 %v2020
    %2807 = vmatpush.bf16.msra.mxu0 %v2012
    %2808 = vmatpush.bf16.msra.mxu0 %v2004
    %2809 = vmatmul.bf16.gmra.mxu0 %v825
    %v2810 = vpop.f32.mrf.mxu0
    %v2811 = vadd.f32 %v2797, %v2810
    %v2812 = vpop.f32.mrf.mxu0
    %v2813 = vadd.f32 %v2799, %v2812
    %2814 = vdwg.mxu0
    %2815 = vmatpush.bf16.msra.mxu0 %v2124
    %2816 = vmatpush.bf16.msra.mxu0 %v2116
    %2817 = vmatpush.bf16.msra.mxu0 %v2108
    %2818 = vmatpush.bf16.msra.mxu0 %v2100
    %2819 = vmatpush.bf16.msra.mxu0 %v2092
    %2820 = vmatpush.bf16.msra.mxu0 %v2084
    %2821 = vmatpush.bf16.msra.mxu0 %v2076
    %2822 = vmatpush.bf16.msra.mxu0 %v2068
    %2823 = vmatmul.bf16.gmra.mxu0 %v826
    %v2824 = vpop.f32.mrf.mxu0
    %v2825 = vadd.f32 %v2811, %v2824
    %v2826 = vpop.f32.mrf.mxu0
    %v2827 = vadd.f32 %v2813, %v2826
    %2828 = vdwg.mxu0
    %v2829 = vmax.f32 %v2433, 0.0
    %v2830 = vmax.f32 %v2489, 0.0
    %v2831 = vmax.f32 %v2545, 0.0
    %v2832 = vmax.f32 %v2601, 0.0
    %v2833 = vmax.f32 %v2657, 0.0
    %v2834 = vmax.f32 %v2713, 0.0
    %v2835 = vmax.f32 %v2769, 0.0
    %v2836 = vmax.f32 %v2825, 0.0
    %v2837 = vmax.f32 %v2435, 0.0
    %v2838 = vmax.f32 %v2491, 0.0
    %v2839 = vmax.f32 %v2547, 0.0
    %v2840 = vmax.f32 %v2603, 0.0
    %v2841 = vmax.f32 %v2659, 0.0
    %v2842 = vmax.f32 %v2715, 0.0
    %v2843 = vmax.f32 %v2771, 0.0
    %v2844 = vmax.f32 %v2827, 0.0
    %v2845 = vpack.c.bf16 %v2837, %v2829
    %v2846 = vpack.c.bf16 %v2838, %v2830
    %v2847 = vpack.c.bf16 %v2839, %v2831
    %v2848 = vpack.c.bf16 %v2840, %v2832
    %v2849 = vpack.c.bf16 %v2841, %v2833
    %v2850 = vpack.c.bf16 %v2842, %v2834
    %v2851 = vpack.c.bf16 %v2843, %v2835
    %v2852 = vpack.c.bf16 %v2844, %v2836
    %v2853 = vld [vmem:[#allocation14] sm:$0xff]
    %v2854 = vld [vmem:[#allocation14 + $0x8] sm:$0xff]
    %v2855 = vld [vmem:[#allocation14 + $0x10] sm:$0xff]
    %v2856 = vld [vmem:[#allocation14 + $0x18] sm:$0xf]
    %v2857 = vld [vmem:[#allocation14 + $0x1c] sm:$0xff]
    %v2858 = vld [vmem:[#allocation14 + $0x24] sm:$0xff]
    %v2859 = vld [vmem:[#allocation14 + $0x2c] sm:$0xff]
    %v2860 = vld [vmem:[#allocation14 + $0x34] sm:$0xf]
    %v2861 = vld [vmem:[#allocation14 + $0x38] sm:$0xff]
    %v2862 = vld [vmem:[#allocation14 + $0x40] sm:$0xff]
    %v2863 = vld [vmem:[#allocation14 + $0x48] sm:$0xff]
    %v2864 = vld [vmem:[#allocation14 + $0x50] sm:$0xf]
    %v2865 = vld [vmem:[#allocation14 + $0x54] sm:$0xff]
    %v2866 = vld [vmem:[#allocation14 + $0x5c] sm:$0xff]
    %v2867 = vld [vmem:[#allocation14 + $0x64] sm:$0xff]
    %v2868 = vld [vmem:[#allocation14 + $0x6c] sm:$0xf]
    %v2869 = vld [vmem:[#allocation14 + $0x70] sm:$0xff]
    %v2870 = vld [vmem:[#allocation14 + $0x78] sm:$0xff]
    %v2871 = vld [vmem:[#allocation14 + $0x80] sm:$0xff]
    %v2872 = vld [vmem:[#allocation14 + $0x88] sm:$0xf]
    %v2873 = vld [vmem:[#allocation14 + $0x8c] sm:$0xff]
    %v2874 = vld [vmem:[#allocation14 + $0x94] sm:$0xff]
    %v2875 = vld [vmem:[#allocation14 + $0x9c] sm:$0xff]
    %v2876 = vld [vmem:[#allocation14 + $0xa4] sm:$0xf]
    %v2877 = vld [vmem:[#allocation14 + $0xa8] sm:$0xff]
    %v2878 = vld [vmem:[#allocation14 + $0xb0] sm:$0xff]
    %v2879 = vld [vmem:[#allocation14 + $0xb8] sm:$0xff]
    %v2880 = vld [vmem:[#allocation14 + $0xc0] sm:$0xf]
    %v2881 = vld [vmem:[#allocation14 + $0xc4] sm:$0xff]
    %v2882 = vld [vmem:[#allocation14 + $0xcc] sm:$0xff]
    %v2883 = vld [vmem:[#allocation14 + $0xd4] sm:$0xff]
    %v2884 = vld [vmem:[#allocation14 + $0xdc] sm:$0xf]
    %v2885 = vld [vmem:[#allocation14 + $0xe0] sm:$0xff]
    %v2886 = vld [vmem:[#allocation14 + $0xe8] sm:$0xff]
    %v2887 = vld [vmem:[#allocation14 + $0xf0] sm:$0xff]
    %v2888 = vld [vmem:[#allocation14 + $0xf8] sm:$0xf]
    %v2889 = vld [vmem:[#allocation14 + $0xfc] sm:$0xff]
    %v2890 = vld [vmem:[#allocation14 + $0x104] sm:$0xff]
    %v2891 = vld [vmem:[#allocation14 + $0x10c] sm:$0xff]
    %v2892 = vld [vmem:[#allocation14 + $0x114] sm:$0xf]
    %v2893 = vld [vmem:[#allocation14 + $0x118] sm:$0xff]
    %v2894 = vld [vmem:[#allocation14 + $0x120] sm:$0xff]
    %v2895 = vld [vmem:[#allocation14 + $0x128] sm:$0xff]
    %v2896 = vld [vmem:[#allocation14 + $0x130] sm:$0xf]
    %v2897 = vld [vmem:[#allocation14 + $0x134] sm:$0xff]
    %v2898 = vld [vmem:[#allocation14 + $0x13c] sm:$0xff]
    %v2899 = vld [vmem:[#allocation14 + $0x144] sm:$0xff]
    %v2900 = vld [vmem:[#allocation14 + $0x14c] sm:$0xf]
    %v2901 = vld [vmem:[#allocation14 + $0x150] sm:$0xff]
    %v2902 = vld [vmem:[#allocation14 + $0x158] sm:$0xff]
    %v2903 = vld [vmem:[#allocation14 + $0x160] sm:$0xff]
    %v2904 = vld [vmem:[#allocation14 + $0x168] sm:$0xf]
    %v2905 = vld [vmem:[#allocation14 + $0x16c] sm:$0xff]
    %v2906 = vld [vmem:[#allocation14 + $0x174] sm:$0xff]
    %v2907 = vld [vmem:[#allocation14 + $0x17c] sm:$0xff]
    %v2908 = vld [vmem:[#allocation14 + $0x184] sm:$0xf]
    %v2909 = vld [vmem:[#allocation14 + $0x188] sm:$0xff]
    %v2910 = vld [vmem:[#allocation14 + $0x190] sm:$0xff]
    %v2911 = vld [vmem:[#allocation14 + $0x198] sm:$0xff]
    %v2912 = vld [vmem:[#allocation14 + $0x1a0] sm:$0xf]
    %v2913 = vld [vmem:[#allocation14 + $0x1a4] sm:$0xff]
    %v2914 = vld [vmem:[#allocation14 + $0x1ac] sm:$0xff]
    %v2915 = vld [vmem:[#allocation14 + $0x1b4] sm:$0xff]
    %v2916 = vld [vmem:[#allocation14 + $0x1bc] sm:$0xf]
    %v2917 = vld [vmem:[#allocation14 + $0x1c0] sm:$0xff]
    %v2918 = vld [vmem:[#allocation14 + $0x1c8] sm:$0xff]
    %v2919 = vld [vmem:[#allocation14 + $0x1d0] sm:$0xff]
    %v2920 = vld [vmem:[#allocation14 + $0x1d8] sm:$0xf]
    %v2921 = vld [vmem:[#allocation14 + $0x1dc] sm:$0xff]
    %v2922 = vld [vmem:[#allocation14 + $0x1e4] sm:$0xff]
    %v2923 = vld [vmem:[#allocation14 + $0x1ec] sm:$0xff]
    %v2924 = vld [vmem:[#allocation14 + $0x1f4] sm:$0xf]
    %v2925 = vld [vmem:[#allocation14 + $0x1f8] sm:$0xff]
    %v2926 = vld [vmem:[#allocation14 + $0x200] sm:$0xff]
    %v2927 = vld [vmem:[#allocation14 + $0x208] sm:$0xff]
    %v2928 = vld [vmem:[#allocation14 + $0x210] sm:$0xf]
    %v2929 = vld [vmem:[#allocation14 + $0x214] sm:$0xff]
    %v2930 = vld [vmem:[#allocation14 + $0x21c] sm:$0xff]
    %v2931 = vld [vmem:[#allocation14 + $0x224] sm:$0xff]
    %v2932 = vld [vmem:[#allocation14 + $0x22c] sm:$0xf]
    %v2933 = vld [vmem:[#allocation14 + $0x230] sm:$0xff]
    %v2934 = vld [vmem:[#allocation14 + $0x238] sm:$0xff]
    %v2935 = vld [vmem:[#allocation14 + $0x240] sm:$0xff]
    %v2936 = vld [vmem:[#allocation14 + $0x248] sm:$0xf]
    %v2937 = vld [vmem:[#allocation14 + $0x24c] sm:$0xff]
    %v2938 = vld [vmem:[#allocation14 + $0x254] sm:$0xff]
    %v2939 = vld [vmem:[#allocation14 + $0x25c] sm:$0xff]
    %v2940 = vld [vmem:[#allocation14 + $0x264] sm:$0xf]
    %v2941 = vld [vmem:[#allocation14 + $0x268] sm:$0xff]
    %v2942 = vld [vmem:[#allocation14 + $0x270] sm:$0xff]
    %v2943 = vld [vmem:[#allocation14 + $0x278] sm:$0xff]
    %v2944 = vld [vmem:[#allocation14 + $0x280] sm:$0xf]
    %v2945 = vld [vmem:[#allocation14 + $0x284] sm:$0xff]
    %v2946 = vld [vmem:[#allocation14 + $0x28c] sm:$0xff]
    %v2947 = vld [vmem:[#allocation14 + $0x294] sm:$0xff]
    %v2948 = vld [vmem:[#allocation14 + $0x29c] sm:$0xf]
    %v2949 = vld [vmem:[#allocation14 + $0x2a0] sm:$0xff]
    %v2950 = vld [vmem:[#allocation14 + $0x2a8] sm:$0xff]
    %v2951 = vld [vmem:[#allocation14 + $0x2b0] sm:$0xff]
    %v2952 = vld [vmem:[#allocation14 + $0x2b8] sm:$0xf]
    %v2953 = vld [vmem:[#allocation14 + $0x2bc] sm:$0xff]
    %v2954 = vld [vmem:[#allocation14 + $0x2c4] sm:$0xff]
    %v2955 = vld [vmem:[#allocation14 + $0x2cc] sm:$0xff]
    %v2956 = vld [vmem:[#allocation14 + $0x2d4] sm:$0xf]
    %v2957 = vld [vmem:[#allocation14 + $0x2d8] sm:$0xff]
    %v2958 = vld [vmem:[#allocation14 + $0x2e0] sm:$0xff]
    %v2959 = vld [vmem:[#allocation14 + $0x2e8] sm:$0xff]
    %v2960 = vld [vmem:[#allocation14 + $0x2f0] sm:$0xf]
    %v2961 = vld [vmem:[#allocation14 + $0x2f4] sm:$0xff]
    %v2962 = vld [vmem:[#allocation14 + $0x2fc] sm:$0xff]
    %v2963 = vld [vmem:[#allocation14 + $0x304] sm:$0xff]
    %v2964 = vld [vmem:[#allocation14 + $0x30c] sm:$0xf]
    %v2965 = vld [vmem:[#allocation14 + $0x310] sm:$0xff]
    %v2966 = vld [vmem:[#allocation14 + $0x318] sm:$0xff]
    %v2967 = vld [vmem:[#allocation14 + $0x320] sm:$0xff]
    %v2968 = vld [vmem:[#allocation14 + $0x328] sm:$0xf]
    %v2969 = vld [vmem:[#allocation14 + $0x32c] sm:$0xff]
    %v2970 = vld [vmem:[#allocation14 + $0x334] sm:$0xff]
    %v2971 = vld [vmem:[#allocation14 + $0x33c] sm:$0xff]
    %v2972 = vld [vmem:[#allocation14 + $0x344] sm:$0xf]
    %v2973 = vld [vmem:[#allocation14 + $0x348] sm:$0xff]
    %v2974 = vld [vmem:[#allocation14 + $0x350] sm:$0xff]
    %v2975 = vld [vmem:[#allocation14 + $0x358] sm:$0xff]
    %v2976 = vld [vmem:[#allocation14 + $0x360] sm:$0xf]
    %v2977 = vld [vmem:[#allocation14 + $0x364] sm:$0xff]
    %v2978 = vld [vmem:[#allocation14 + $0x36c] sm:$0xff]
    %v2979 = vld [vmem:[#allocation14 + $0x374] sm:$0xff]
    %v2980 = vld [vmem:[#allocation14 + $0x37c] sm:$0xf]
    %v2981 = vld [vmem:[#allocation14 + $0x380] sm:$0xff]
    %v2982 = vld [vmem:[#allocation14 + $0x388] sm:$0xff]
    %v2983 = vld [vmem:[#allocation14 + $0x390] sm:$0xff]
    %v2984 = vld [vmem:[#allocation14 + $0x398] sm:$0xf]
    %v2985 = vld [vmem:[#allocation14 + $0x39c] sm:$0xff]
    %v2986 = vld [vmem:[#allocation14 + $0x3a4] sm:$0xff]
    %v2987 = vld [vmem:[#allocation14 + $0x3ac] sm:$0xff]
    %v2988 = vld [vmem:[#allocation14 + $0x3b4] sm:$0xf]
    %v2989 = vld [vmem:[#allocation14 + $0x3b8] sm:$0xff]
    %v2990 = vld [vmem:[#allocation14 + $0x3c0] sm:$0xff]
    %v2991 = vld [vmem:[#allocation14 + $0x3c8] sm:$0xff]
    %v2992 = vld [vmem:[#allocation14 + $0x3d0] sm:$0xf]
    %v2993 = vld [vmem:[#allocation14 + $0x3d4] sm:$0xff]
    %v2994 = vld [vmem:[#allocation14 + $0x3dc] sm:$0xff]
    %v2995 = vld [vmem:[#allocation14 + $0x3e4] sm:$0xff]
    %v2996 = vld [vmem:[#allocation14 + $0x3ec] sm:$0xf]
    %v2997 = vld [vmem:[#allocation14 + $0x3f0] sm:$0xff]
    %v2998 = vld [vmem:[#allocation14 + $0x3f8] sm:$0xff]
    %v2999 = vld [vmem:[#allocation14 + $0x400] sm:$0xff]
    %v3000 = vld [vmem:[#allocation14 + $0x408] sm:$0xf]
    %v3001 = vld [vmem:[#allocation14 + $0x40c] sm:$0xff]
    %v3002 = vld [vmem:[#allocation14 + $0x414] sm:$0xff]
    %v3003 = vld [vmem:[#allocation14 + $0x41c] sm:$0xff]
    %v3004 = vld [vmem:[#allocation14 + $0x424] sm:$0xf]
    %v3005 = vld [vmem:[#allocation14 + $0x428] sm:$0xff]
    %v3006 = vld [vmem:[#allocation14 + $0x430] sm:$0xff]
    %v3007 = vld [vmem:[#allocation14 + $0x438] sm:$0xff]
    %v3008 = vld [vmem:[#allocation14 + $0x440] sm:$0xf]
    %v3009 = vld [vmem:[#allocation14 + $0x444] sm:$0xff]
    %v3010 = vld [vmem:[#allocation14 + $0x44c] sm:$0xff]
    %v3011 = vld [vmem:[#allocation14 + $0x454] sm:$0xff]
    %v3012 = vld [vmem:[#allocation14 + $0x45c] sm:$0xf]
    %v3013 = vld [vmem:[#allocation14 + $0x460] sm:$0xff]
    %v3014 = vld [vmem:[#allocation14 + $0x468] sm:$0xff]
    %v3015 = vld [vmem:[#allocation14 + $0x470] sm:$0xff]
    %v3016 = vld [vmem:[#allocation14 + $0x478] sm:$0xf]
    %v3017 = vld [vmem:[#allocation14 + $0x47c] sm:$0xff]
    %v3018 = vld [vmem:[#allocation14 + $0x484] sm:$0xff]
    %v3019 = vld [vmem:[#allocation14 + $0x48c] sm:$0xff]
    %v3020 = vld [vmem:[#allocation14 + $0x494] sm:$0xf]
    %v3021 = vld [vmem:[#allocation14 + $0x498] sm:$0xff]
    %v3022 = vld [vmem:[#allocation14 + $0x4a0] sm:$0xff]
    %v3023 = vld [vmem:[#allocation14 + $0x4a8] sm:$0xff]
    %v3024 = vld [vmem:[#allocation14 + $0x4b0] sm:$0xf]
    %v3025 = vld [vmem:[#allocation14 + $0x4b4] sm:$0xff]
    %v3026 = vld [vmem:[#allocation14 + $0x4bc] sm:$0xff]
    %v3027 = vld [vmem:[#allocation14 + $0x4c4] sm:$0xff]
    %v3028 = vld [vmem:[#allocation14 + $0x4cc] sm:$0xf]
    %v3029 = vld [vmem:[#allocation14 + $0x4d0] sm:$0xff]
    %v3030 = vld [vmem:[#allocation14 + $0x4d8] sm:$0xff]
    %v3031 = vld [vmem:[#allocation14 + $0x4e0] sm:$0xff]
    %v3032 = vld [vmem:[#allocation14 + $0x4e8] sm:$0xf]
    %v3033 = vld [vmem:[#allocation14 + $0x4ec] sm:$0xff]
    %v3034 = vld [vmem:[#allocation14 + $0x4f4] sm:$0xff]
    %v3035 = vld [vmem:[#allocation14 + $0x4fc] sm:$0xff]
    %v3036 = vld [vmem:[#allocation14 + $0x504] sm:$0xf]
    %v3037 = vld [vmem:[#allocation14 + $0x508] sm:$0xff]
    %v3038 = vld [vmem:[#allocation14 + $0x510] sm:$0xff]
    %v3039 = vld [vmem:[#allocation14 + $0x518] sm:$0xff]
    %v3040 = vld [vmem:[#allocation14 + $0x520] sm:$0xf]
    %v3041 = vld [vmem:[#allocation14 + $0x524] sm:$0xff]
    %v3042 = vld [vmem:[#allocation14 + $0x52c] sm:$0xff]
    %v3043 = vld [vmem:[#allocation14 + $0x534] sm:$0xff]
    %v3044 = vld [vmem:[#allocation14 + $0x53c] sm:$0xf]
    %v3045 = vld [vmem:[#allocation14 + $0x540] sm:$0xff]
    %v3046 = vld [vmem:[#allocation14 + $0x548] sm:$0xff]
    %v3047 = vld [vmem:[#allocation14 + $0x550] sm:$0xff]
    %v3048 = vld [vmem:[#allocation14 + $0x558] sm:$0xf]
    %v3049 = vld [vmem:[#allocation14 + $0x55c] sm:$0xff]
    %v3050 = vld [vmem:[#allocation14 + $0x564] sm:$0xff]
    %v3051 = vld [vmem:[#allocation14 + $0x56c] sm:$0xff]
    %v3052 = vld [vmem:[#allocation14 + $0x574] sm:$0xf]
    %v3053 = vld [vmem:[#allocation14 + $0x578] sm:$0xff]
    %v3054 = vld [vmem:[#allocation14 + $0x580] sm:$0xff]
    %v3055 = vld [vmem:[#allocation14 + $0x588] sm:$0xff]
    %v3056 = vld [vmem:[#allocation14 + $0x590] sm:$0xf]
    %v3057 = vld [vmem:[#allocation14 + $0x594] sm:$0xff]
    %v3058 = vld [vmem:[#allocation14 + $0x59c] sm:$0xff]
    %v3059 = vld [vmem:[#allocation14 + $0x5a4] sm:$0xff]
    %v3060 = vld [vmem:[#allocation14 + $0x5ac] sm:$0xf]
    %v3061 = vld [vmem:[#allocation14 + $0x5b0] sm:$0xff]
    %v3062 = vld [vmem:[#allocation14 + $0x5b8] sm:$0xff]
    %v3063 = vld [vmem:[#allocation14 + $0x5c0] sm:$0xff]
    %v3064 = vld [vmem:[#allocation14 + $0x5c8] sm:$0xf]
    %v3065 = vld [vmem:[#allocation14 + $0x5cc] sm:$0xff]
    %v3066 = vld [vmem:[#allocation14 + $0x5d4] sm:$0xff]
    %v3067 = vld [vmem:[#allocation14 + $0x5dc] sm:$0xff]
    %v3068 = vld [vmem:[#allocation14 + $0x5e4] sm:$0xf]
    %v3069 = vld [vmem:[#allocation14 + $0x5e8] sm:$0xff]
    %v3070 = vld [vmem:[#allocation14 + $0x5f0] sm:$0xff]
    %v3071 = vld [vmem:[#allocation14 + $0x5f8] sm:$0xff]
    %v3072 = vld [vmem:[#allocation14 + $0x600] sm:$0xf]
    %v3073 = vld [vmem:[#allocation14 + $0x604] sm:$0xff]
    %v3074 = vld [vmem:[#allocation14 + $0x60c] sm:$0xff]
    %v3075 = vld [vmem:[#allocation14 + $0x614] sm:$0xff]
    %v3076 = vld [vmem:[#allocation14 + $0x61c] sm:$0xf]
    %v3077 = vld [vmem:[#allocation14 + $0x620] sm:$0xff]
    %v3078 = vld [vmem:[#allocation14 + $0x628] sm:$0xff]
    %v3079 = vld [vmem:[#allocation14 + $0x630] sm:$0xff]
    %v3080 = vld [vmem:[#allocation14 + $0x638] sm:$0xf]
    %v3081 = vld [vmem:[#allocation14 + $0x63c] sm:$0xff]
    %v3082 = vld [vmem:[#allocation14 + $0x644] sm:$0xff]
    %v3083 = vld [vmem:[#allocation14 + $0x64c] sm:$0xff]
    %v3084 = vld [vmem:[#allocation14 + $0x654] sm:$0xf]
    %v3085 = vld [vmem:[#allocation14 + $0x658] sm:$0xff]
    %v3086 = vld [vmem:[#allocation14 + $0x660] sm:$0xff]
    %v3087 = vld [vmem:[#allocation14 + $0x668] sm:$0xff]
    %v3088 = vld [vmem:[#allocation14 + $0x670] sm:$0xf]
    %v3089 = vld [vmem:[#allocation14 + $0x674] sm:$0xff]
    %v3090 = vld [vmem:[#allocation14 + $0x67c] sm:$0xff]
    %v3091 = vld [vmem:[#allocation14 + $0x684] sm:$0xff]
    %v3092 = vld [vmem:[#allocation14 + $0x68c] sm:$0xf]
    %v3093 = vld [vmem:[#allocation14 + $0x690] sm:$0xff]
    %v3094 = vld [vmem:[#allocation14 + $0x698] sm:$0xff]
    %v3095 = vld [vmem:[#allocation14 + $0x6a0] sm:$0xff]
    %v3096 = vld [vmem:[#allocation14 + $0x6a8] sm:$0xf]
    %v3097 = vld [vmem:[#allocation14 + $0x6ac] sm:$0xff]
    %v3098 = vld [vmem:[#allocation14 + $0x6b4] sm:$0xff]
    %v3099 = vld [vmem:[#allocation14 + $0x6bc] sm:$0xff]
    %v3100 = vld [vmem:[#allocation14 + $0x6c4] sm:$0xf]
    %v3101 = vld [vmem:[#allocation14 + $0x6c8] sm:$0xff]
    %v3102 = vld [vmem:[#allocation14 + $0x6d0] sm:$0xff]
    %v3103 = vld [vmem:[#allocation14 + $0x6d8] sm:$0xff]
    %v3104 = vld [vmem:[#allocation14 + $0x6e0] sm:$0xf]
    %v3105 = vld [vmem:[#allocation14 + $0x6e4] sm:$0xff]
    %v3106 = vld [vmem:[#allocation14 + $0x6ec] sm:$0xff]
    %v3107 = vld [vmem:[#allocation14 + $0x6f4] sm:$0xff]
    %v3108 = vld [vmem:[#allocation14 + $0x6fc] sm:$0xf]
    %v3109 = vld [vmem:[#allocation14 + $0x700] sm:$0xff]
    %v3110 = vld [vmem:[#allocation14 + $0x708] sm:$0xff]
    %v3111 = vld [vmem:[#allocation14 + $0x710] sm:$0xff]
    %v3112 = vld [vmem:[#allocation14 + $0x718] sm:$0xf]
    %v3113 = vld [vmem:[#allocation14 + $0x71c] sm:$0xff]
    %v3114 = vld [vmem:[#allocation14 + $0x724] sm:$0xff]
    %v3115 = vld [vmem:[#allocation14 + $0x72c] sm:$0xff]
    %v3116 = vld [vmem:[#allocation14 + $0x734] sm:$0xf]
    %v3117 = vld [vmem:[#allocation14 + $0x738] sm:$0xff]
    %v3118 = vld [vmem:[#allocation14 + $0x740] sm:$0xff]
    %v3119 = vld [vmem:[#allocation14 + $0x748] sm:$0xff]
    %v3120 = vld [vmem:[#allocation14 + $0x750] sm:$0xf]
    %v3121 = vld [vmem:[#allocation14 + $0x754] sm:$0xff]
    %v3122 = vld [vmem:[#allocation14 + $0x75c] sm:$0xff]
    %v3123 = vld [vmem:[#allocation14 + $0x764] sm:$0xff]
    %v3124 = vld [vmem:[#allocation14 + $0x76c] sm:$0xf]
    %v3125 = vld [vmem:[#allocation14 + $0x770] sm:$0xff]
    %v3126 = vld [vmem:[#allocation14 + $0x778] sm:$0xff]
    %v3127 = vld [vmem:[#allocation14 + $0x780] sm:$0xff]
    %v3128 = vld [vmem:[#allocation14 + $0x788] sm:$0xf]
    %v3129 = vld [vmem:[#allocation14 + $0x78c] sm:$0xff]
    %v3130 = vld [vmem:[#allocation14 + $0x794] sm:$0xff]
    %v3131 = vld [vmem:[#allocation14 + $0x79c] sm:$0xff]
    %v3132 = vld [vmem:[#allocation14 + $0x7a4] sm:$0xf]
    %v3133 = vld [vmem:[#allocation14 + $0x7a8] sm:$0xff]
    %v3134 = vld [vmem:[#allocation14 + $0x7b0] sm:$0xff]
    %v3135 = vld [vmem:[#allocation14 + $0x7b8] sm:$0xff]
    %v3136 = vld [vmem:[#allocation14 + $0x7c0] sm:$0xf]
    %v3137 = vld [vmem:[#allocation14 + $0x7c4] sm:$0xff]
    %v3138 = vld [vmem:[#allocation14 + $0x7cc] sm:$0xff]
    %v3139 = vld [vmem:[#allocation14 + $0x7d4] sm:$0xff]
    %v3140 = vld [vmem:[#allocation14 + $0x7dc] sm:$0xf]
    %v3141 = vld [vmem:[#allocation14 + $0x7e0] sm:$0xff]
    %v3142 = vld [vmem:[#allocation14 + $0x7e8] sm:$0xff]
    %v3143 = vld [vmem:[#allocation14 + $0x7f0] sm:$0xff]
    %v3144 = vld [vmem:[#allocation14 + $0x7f8] sm:$0xf]
    %v3145 = vld [vmem:[#allocation14 + $0x7fc] sm:$0xff]
    %v3146 = vld [vmem:[#allocation14 + $0x804] sm:$0xff]
    %v3147 = vld [vmem:[#allocation14 + $0x80c] sm:$0xff]
    %v3148 = vld [vmem:[#allocation14 + $0x814] sm:$0xf]
    %v3149 = vld [vmem:[#allocation14 + $0x818] sm:$0xff]
    %v3150 = vld [vmem:[#allocation14 + $0x820] sm:$0xff]
    %v3151 = vld [vmem:[#allocation14 + $0x828] sm:$0xff]
    %v3152 = vld [vmem:[#allocation14 + $0x830] sm:$0xf]
    %v3153 = vld [vmem:[#allocation14 + $0x834] sm:$0xff]
    %v3154 = vld [vmem:[#allocation14 + $0x83c] sm:$0xff]
    %v3155 = vld [vmem:[#allocation14 + $0x844] sm:$0xff]
    %v3156 = vld [vmem:[#allocation14 + $0x84c] sm:$0xf]
    %v3157 = vld [vmem:[#allocation14 + $0x850] sm:$0xff]
    %v3158 = vld [vmem:[#allocation14 + $0x858] sm:$0xff]
    %v3159 = vld [vmem:[#allocation14 + $0x860] sm:$0xff]
    %v3160 = vld [vmem:[#allocation14 + $0x868] sm:$0xf]
    %v3161 = vld [vmem:[#allocation14 + $0x86c] sm:$0xff]
    %v3162 = vld [vmem:[#allocation14 + $0x874] sm:$0xff]
    %v3163 = vld [vmem:[#allocation14 + $0x87c] sm:$0xff]
    %v3164 = vld [vmem:[#allocation14 + $0x884] sm:$0xf]
    %v3165 = vld [vmem:[#allocation14 + $0x888] sm:$0xff]
    %v3166 = vld [vmem:[#allocation14 + $0x890] sm:$0xff]
    %v3167 = vld [vmem:[#allocation14 + $0x898] sm:$0xff]
    %v3168 = vld [vmem:[#allocation14 + $0x8a0] sm:$0xf]
    %v3169 = vld [vmem:[#allocation14 + $0x8a4] sm:$0xff]
    %v3170 = vld [vmem:[#allocation14 + $0x8ac] sm:$0xff]
    %v3171 = vld [vmem:[#allocation14 + $0x8b4] sm:$0xff]
    %v3172 = vld [vmem:[#allocation14 + $0x8bc] sm:$0xf]
    %v3173 = vld [vmem:[#allocation14 + $0x8c0] sm:$0xff]
    %v3174 = vld [vmem:[#allocation14 + $0x8c8] sm:$0xff]
    %v3175 = vld [vmem:[#allocation14 + $0x8d0] sm:$0xff]
    %v3176 = vld [vmem:[#allocation14 + $0x8d8] sm:$0xf]
    %v3177 = vld [vmem:[#allocation14 + $0x8dc] sm:$0xff]
    %v3178 = vld [vmem:[#allocation14 + $0x8e4] sm:$0xff]
    %v3179 = vld [vmem:[#allocation14 + $0x8ec] sm:$0xff]
    %v3180 = vld [vmem:[#allocation14 + $0x8f4] sm:$0xf]
    %v3181 = vld [vmem:[#allocation14 + $0x8f8] sm:$0xff]
    %v3182 = vld [vmem:[#allocation14 + $0x900] sm:$0xff]
    %v3183 = vld [vmem:[#allocation14 + $0x908] sm:$0xff]
    %v3184 = vld [vmem:[#allocation14 + $0x910] sm:$0xf]
    %v3185 = vld [vmem:[#allocation14 + $0x914] sm:$0xff]
    %v3186 = vld [vmem:[#allocation14 + $0x91c] sm:$0xff]
    %v3187 = vld [vmem:[#allocation14 + $0x924] sm:$0xff]
    %v3188 = vld [vmem:[#allocation14 + $0x92c] sm:$0xf]
    %v3189 = vld [vmem:[#allocation14 + $0x930] sm:$0xff]
    %v3190 = vld [vmem:[#allocation14 + $0x938] sm:$0xff]
    %v3191 = vld [vmem:[#allocation14 + $0x940] sm:$0xff]
    %v3192 = vld [vmem:[#allocation14 + $0x948] sm:$0xf]
    %v3193 = vld [vmem:[#allocation14 + $0x94c] sm:$0xff]
    %v3194 = vld [vmem:[#allocation14 + $0x954] sm:$0xff]
    %v3195 = vld [vmem:[#allocation14 + $0x95c] sm:$0xff]
    %v3196 = vld [vmem:[#allocation14 + $0x964] sm:$0xf]
    %v3197 = vld [vmem:[#allocation14 + $0x968] sm:$0xff]
    %v3198 = vld [vmem:[#allocation14 + $0x970] sm:$0xff]
    %v3199 = vld [vmem:[#allocation14 + $0x978] sm:$0xff]
    %v3200 = vld [vmem:[#allocation14 + $0x980] sm:$0xf]
    %v3201 = vld [vmem:[#allocation14 + $0x984] sm:$0xff]
    %v3202 = vld [vmem:[#allocation14 + $0x98c] sm:$0xff]
    %v3203 = vld [vmem:[#allocation14 + $0x994] sm:$0xff]
    %v3204 = vld [vmem:[#allocation14 + $0x99c] sm:$0xf]
    %v3205 = vld [vmem:[#allocation14 + $0x9a0] sm:$0xff]
    %v3206 = vld [vmem:[#allocation14 + $0x9a8] sm:$0xff]
    %v3207 = vld [vmem:[#allocation14 + $0x9b0] sm:$0xff]
    %v3208 = vld [vmem:[#allocation14 + $0x9b8] sm:$0xf]
    %v3209 = vld [vmem:[#allocation14 + $0x9bc] sm:$0xff]
    %v3210 = vld [vmem:[#allocation14 + $0x9c4] sm:$0xff]
    %v3211 = vld [vmem:[#allocation14 + $0x9cc] sm:$0xff]
    %v3212 = vld [vmem:[#allocation14 + $0x9d4] sm:$0xf]
    %v3213 = vld [vmem:[#allocation14 + $0x9d8] sm:$0xff]
    %v3214 = vld [vmem:[#allocation14 + $0x9e0] sm:$0xff]
    %v3215 = vld [vmem:[#allocation14 + $0x9e8] sm:$0xff]
    %v3216 = vld [vmem:[#allocation14 + $0x9f0] sm:$0xf]
    %v3217 = vld [vmem:[#allocation14 + $0x9f4] sm:$0xff]
    %v3218 = vld [vmem:[#allocation14 + $0x9fc] sm:$0xff]
    %v3219 = vld [vmem:[#allocation14 + $0xa04] sm:$0xff]
    %v3220 = vld [vmem:[#allocation14 + $0xa0c] sm:$0xf]
    %v3221 = vld [vmem:[#allocation14 + $0xa10] sm:$0xff]
    %v3222 = vld [vmem:[#allocation14 + $0xa18] sm:$0xff]
    %v3223 = vld [vmem:[#allocation14 + $0xa20] sm:$0xff]
    %v3224 = vld [vmem:[#allocation14 + $0xa28] sm:$0xf]
    %v3225 = vld [vmem:[#allocation14 + $0xa2c] sm:$0xff]
    %v3226 = vld [vmem:[#allocation14 + $0xa34] sm:$0xff]
    %v3227 = vld [vmem:[#allocation14 + $0xa3c] sm:$0xff]
    %v3228 = vld [vmem:[#allocation14 + $0xa44] sm:$0xf]
    %v3229 = vld [vmem:[#allocation14 + $0xa48] sm:$0xff]
    %v3230 = vld [vmem:[#allocation14 + $0xa50] sm:$0xff]
    %v3231 = vld [vmem:[#allocation14 + $0xa58] sm:$0xff]
    %v3232 = vld [vmem:[#allocation14 + $0xa60] sm:$0xf]
    %v3233 = vld [vmem:[#allocation14 + $0xa64] sm:$0xff]
    %v3234 = vld [vmem:[#allocation14 + $0xa6c] sm:$0xff]
    %v3235 = vld [vmem:[#allocation14 + $0xa74] sm:$0xff]
    %v3236 = vld [vmem:[#allocation14 + $0xa7c] sm:$0xf]
    %v3237 = vld [vmem:[#allocation14 + $0xa80] sm:$0xff]
    %v3238 = vld [vmem:[#allocation14 + $0xa88] sm:$0xff]
    %v3239 = vld [vmem:[#allocation14 + $0xa90] sm:$0xff]
    %v3240 = vld [vmem:[#allocation14 + $0xa98] sm:$0xf]
    %v3241 = vld [vmem:[#allocation14 + $0xa9c] sm:$0xff]
    %v3242 = vld [vmem:[#allocation14 + $0xaa4] sm:$0xff]
    %v3243 = vld [vmem:[#allocation14 + $0xaac] sm:$0xff]
    %v3244 = vld [vmem:[#allocation14 + $0xab4] sm:$0xf]
    %v3245 = vld [vmem:[#allocation14 + $0xab8] sm:$0xff]
    %v3246 = vld [vmem:[#allocation14 + $0xac0] sm:$0xff]
    %v3247 = vld [vmem:[#allocation14 + $0xac8] sm:$0xff]
    %v3248 = vld [vmem:[#allocation14 + $0xad0] sm:$0xf]
    %v3249 = vld [vmem:[#allocation14 + $0xad4] sm:$0xff]
    %v3250 = vld [vmem:[#allocation14 + $0xadc] sm:$0xff]
    %v3251 = vld [vmem:[#allocation14 + $0xae4] sm:$0xff]
    %v3252 = vld [vmem:[#allocation14 + $0xaec] sm:$0xf]
    %v3253 = vld [vmem:[#allocation14 + $0xaf0] sm:$0xff]
    %v3254 = vld [vmem:[#allocation14 + $0xaf8] sm:$0xff]
    %v3255 = vld [vmem:[#allocation14 + $0xb00] sm:$0xff]
    %v3256 = vld [vmem:[#allocation14 + $0xb08] sm:$0xf]
    %v3257 = vld [vmem:[#allocation14 + $0xb0c] sm:$0xff]
    %v3258 = vld [vmem:[#allocation14 + $0xb14] sm:$0xff]
    %v3259 = vld [vmem:[#allocation14 + $0xb1c] sm:$0xff]
    %v3260 = vld [vmem:[#allocation14 + $0xb24] sm:$0xf]
    %v3261 = vld [vmem:[#allocation14 + $0xb28] sm:$0xff]
    %v3262 = vld [vmem:[#allocation14 + $0xb30] sm:$0xff]
    %v3263 = vld [vmem:[#allocation14 + $0xb38] sm:$0xff]
    %v3264 = vld [vmem:[#allocation14 + $0xb40] sm:$0xf]
    %v3265 = vld [vmem:[#allocation14 + $0xb44] sm:$0xff]
    %v3266 = vld [vmem:[#allocation14 + $0xb4c] sm:$0xff]
    %v3267 = vld [vmem:[#allocation14 + $0xb54] sm:$0xff]
    %v3268 = vld [vmem:[#allocation14 + $0xb5c] sm:$0xf]
    %v3269 = vld [vmem:[#allocation14 + $0xb60] sm:$0xff]
    %v3270 = vld [vmem:[#allocation14 + $0xb68] sm:$0xff]
    %v3271 = vld [vmem:[#allocation14 + $0xb70] sm:$0xff]
    %v3272 = vld [vmem:[#allocation14 + $0xb78] sm:$0xf]
    %v3273 = vld [vmem:[#allocation14 + $0xb7c] sm:$0xff]
    %v3274 = vld [vmem:[#allocation14 + $0xb84] sm:$0xff]
    %v3275 = vld [vmem:[#allocation14 + $0xb8c] sm:$0xff]
    %v3276 = vld [vmem:[#allocation14 + $0xb94] sm:$0xf]
    %v3277 = vld [vmem:[#allocation14 + $0xb98] sm:$0xff]
    %v3278 = vld [vmem:[#allocation14 + $0xba0] sm:$0xff]
    %v3279 = vld [vmem:[#allocation14 + $0xba8] sm:$0xff]
    %v3280 = vld [vmem:[#allocation14 + $0xbb0] sm:$0xf]
    %v3281 = vld [vmem:[#allocation14 + $0xbb4] sm:$0xff]
    %v3282 = vld [vmem:[#allocation14 + $0xbbc] sm:$0xff]
    %v3283 = vld [vmem:[#allocation14 + $0xbc4] sm:$0xff]
    %v3284 = vld [vmem:[#allocation14 + $0xbcc] sm:$0xf]
    %v3285 = vld [vmem:[#allocation14 + $0xbd0] sm:$0xff]
    %v3286 = vld [vmem:[#allocation14 + $0xbd8] sm:$0xff]
    %v3287 = vld [vmem:[#allocation14 + $0xbe0] sm:$0xff]
    %v3288 = vld [vmem:[#allocation14 + $0xbe8] sm:$0xf]
    %v3289 = vld [vmem:[#allocation14 + $0xbec] sm:$0xff]
    %v3290 = vld [vmem:[#allocation14 + $0xbf4] sm:$0xff]
    %v3291 = vld [vmem:[#allocation14 + $0xbfc] sm:$0xff]
    %v3292 = vld [vmem:[#allocation14 + $0xc04] sm:$0xf]
    %v3293 = vld [vmem:[#allocation14 + $0xc08] sm:$0xff]
    %v3294 = vld [vmem:[#allocation14 + $0xc10] sm:$0xff]
    %v3295 = vld [vmem:[#allocation14 + $0xc18] sm:$0xff]
    %v3296 = vld [vmem:[#allocation14 + $0xc20] sm:$0xf]
    %v3297 = vld [vmem:[#allocation14 + $0xc24] sm:$0xff]
    %v3298 = vld [vmem:[#allocation14 + $0xc2c] sm:$0xff]
    %v3299 = vld [vmem:[#allocation14 + $0xc34] sm:$0xff]
    %v3300 = vld [vmem:[#allocation14 + $0xc3c] sm:$0xf]
    %v3301 = vld [vmem:[#allocation14 + $0xc40] sm:$0xff]
    %v3302 = vld [vmem:[#allocation14 + $0xc48] sm:$0xff]
    %v3303 = vld [vmem:[#allocation14 + $0xc50] sm:$0xff]
    %v3304 = vld [vmem:[#allocation14 + $0xc58] sm:$0xf]
    %v3305 = vld [vmem:[#allocation14 + $0xc5c] sm:$0xff]
    %v3306 = vld [vmem:[#allocation14 + $0xc64] sm:$0xff]
    %v3307 = vld [vmem:[#allocation14 + $0xc6c] sm:$0xff]
    %v3308 = vld [vmem:[#allocation14 + $0xc74] sm:$0xf]
    %v3309 = vld [vmem:[#allocation14 + $0xc78] sm:$0xff]
    %v3310 = vld [vmem:[#allocation14 + $0xc80] sm:$0xff]
    %v3311 = vld [vmem:[#allocation14 + $0xc88] sm:$0xff]
    %v3312 = vld [vmem:[#allocation14 + $0xc90] sm:$0xf]
    %v3313 = vld [vmem:[#allocation14 + $0xc94] sm:$0xff]
    %v3314 = vld [vmem:[#allocation14 + $0xc9c] sm:$0xff]
    %v3315 = vld [vmem:[#allocation14 + $0xca4] sm:$0xff]
    %v3316 = vld [vmem:[#allocation14 + $0xcac] sm:$0xf]
    %v3317 = vld [vmem:[#allocation14 + $0xcb0] sm:$0xff]
    %v3318 = vld [vmem:[#allocation14 + $0xcb8] sm:$0xff]
    %v3319 = vld [vmem:[#allocation14 + $0xcc0] sm:$0xff]
    %v3320 = vld [vmem:[#allocation14 + $0xcc8] sm:$0xf]
    %v3321 = vld [vmem:[#allocation14 + $0xccc] sm:$0xff]
    %v3322 = vld [vmem:[#allocation14 + $0xcd4] sm:$0xff]
    %v3323 = vld [vmem:[#allocation14 + $0xcdc] sm:$0xff]
    %v3324 = vld [vmem:[#allocation14 + $0xce4] sm:$0xf]
    %v3325 = vld [vmem:[#allocation14 + $0xce8] sm:$0xff]
    %v3326 = vld [vmem:[#allocation14 + $0xcf0] sm:$0xff]
    %v3327 = vld [vmem:[#allocation14 + $0xcf8] sm:$0xff]
    %v3328 = vld [vmem:[#allocation14 + $0xd00] sm:$0xf]
    %v3329 = vld [vmem:[#allocation14 + $0xd04] sm:$0xff]
    %v3330 = vld [vmem:[#allocation14 + $0xd0c] sm:$0xff]
    %v3331 = vld [vmem:[#allocation14 + $0xd14] sm:$0xff]
    %v3332 = vld [vmem:[#allocation14 + $0xd1c] sm:$0xf]
    %v3333 = vld [vmem:[#allocation14 + $0xd20] sm:$0xff]
    %v3334 = vld [vmem:[#allocation14 + $0xd28] sm:$0xff]
    %v3335 = vld [vmem:[#allocation14 + $0xd30] sm:$0xff]
    %v3336 = vld [vmem:[#allocation14 + $0xd38] sm:$0xf]
    %v3337 = vld [vmem:[#allocation14 + $0xd3c] sm:$0xff]
    %v3338 = vld [vmem:[#allocation14 + $0xd44] sm:$0xff]
    %v3339 = vld [vmem:[#allocation14 + $0xd4c] sm:$0xff]
    %v3340 = vld [vmem:[#allocation14 + $0xd54] sm:$0xf]
    %v3341 = vld [vmem:[#allocation14 + $0xd58] sm:$0xff]
    %v3342 = vld [vmem:[#allocation14 + $0xd60] sm:$0xff]
    %v3343 = vld [vmem:[#allocation14 + $0xd68] sm:$0xff]
    %v3344 = vld [vmem:[#allocation14 + $0xd70] sm:$0xf]
    %v3345 = vld [vmem:[#allocation14 + $0xd74] sm:$0xff]
    %v3346 = vld [vmem:[#allocation14 + $0xd7c] sm:$0xff]
    %v3347 = vld [vmem:[#allocation14 + $0xd84] sm:$0xff]
    %v3348 = vld [vmem:[#allocation14 + $0xd8c] sm:$0xf]
    %v3349 = vld [vmem:[#allocation14 + $0xd90] sm:$0xff]
    %v3350 = vld [vmem:[#allocation14 + $0xd98] sm:$0xff]
    %v3351 = vld [vmem:[#allocation14 + $0xda0] sm:$0xff]
    %v3352 = vld [vmem:[#allocation14 + $0xda8] sm:$0xf]
    %v3353 = vld [vmem:[#allocation14 + $0xdac] sm:$0xff]
    %v3354 = vld [vmem:[#allocation14 + $0xdb4] sm:$0xff]
    %v3355 = vld [vmem:[#allocation14 + $0xdbc] sm:$0xff]
    %v3356 = vld [vmem:[#allocation14 + $0xdc4] sm:$0xf]
    %v3357 = vld [vmem:[#allocation14 + $0xdc8] sm:$0xff]
    %v3358 = vld [vmem:[#allocation14 + $0xdd0] sm:$0xff]
    %v3359 = vld [vmem:[#allocation14 + $0xdd8] sm:$0xff]
    %v3360 = vld [vmem:[#allocation14 + $0xde0] sm:$0xf]
    %v3361 = vld [vmem:[#allocation14 + $0xde4] sm:$0xff]
    %v3362 = vld [vmem:[#allocation14 + $0xdec] sm:$0xff]
    %v3363 = vld [vmem:[#allocation14 + $0xdf4] sm:$0xff]
    %v3364 = vld [vmem:[#allocation14 + $0xdfc] sm:$0xf]
    %v3365 = vld [vmem:[#allocation16] sm:$0xff]
    %v3367 = vperm.slane %v3365, 0
    %v3368 = vperm.slane %v3365, 1
    %v3369 = vperm.slane %v3365, 2
    %v3370 = vperm.slane %v3365, 3
    %v3371 = vperm.slane %v3365, 4
    %v3372 = vperm.slane %v3365, 5
    %v3373 = vperm.slane %v3365, 6
    %v3893 = vunpack.c.l.b16 %v2853
    %v3894 = vunpack.c.h.b16 %v2853
    %v3895 = vunpack.c.l.b16 %v2854
    %v3896 = vunpack.c.h.b16 %v2854
    %v3897 = vunpack.c.l.b16 %v2855
    %v3898 = vunpack.c.h.b16 %v2855
    %v3899 = vunpack.c.l.b16 %v2856
    %v3900 = vunpack.c.l.b16 %v2857
    %v3901 = vunpack.c.h.b16 %v2857
    %v3902 = vunpack.c.l.b16 %v2858
    %v3903 = vunpack.c.h.b16 %v2858
    %v3904 = vunpack.c.l.b16 %v2859
    %v3905 = vunpack.c.h.b16 %v2859
    %v3906 = vunpack.c.l.b16 %v2860
    %v3907 = vunpack.c.l.b16 %v2861
    %v3908 = vunpack.c.h.b16 %v2861
    %v3909 = vunpack.c.l.b16 %v2862
    %v3910 = vunpack.c.h.b16 %v2862
    %v3911 = vunpack.c.l.b16 %v2863
    %v3912 = vunpack.c.h.b16 %v2863
    %v3913 = vunpack.c.l.b16 %v2864
    %v3914 = vunpack.c.l.b16 %v2865
    %v3915 = vunpack.c.h.b16 %v2865
    %v3916 = vunpack.c.l.b16 %v2866
    %v3917 = vunpack.c.h.b16 %v2866
    %v3918 = vunpack.c.l.b16 %v2867
    %v3919 = vunpack.c.h.b16 %v2867
    %v3920 = vunpack.c.l.b16 %v2868
    %v3921 = vunpack.c.l.b16 %v2869
    %v3922 = vunpack.c.h.b16 %v2869
    %v3923 = vunpack.c.l.b16 %v2870
    %v3924 = vunpack.c.h.b16 %v2870
    %v3925 = vunpack.c.l.b16 %v2871
    %v3926 = vunpack.c.h.b16 %v2871
    %v3927 = vunpack.c.l.b16 %v2872
    %v3928 = vunpack.c.l.b16 %v2873
    %v3929 = vunpack.c.h.b16 %v2873
    %v3930 = vunpack.c.l.b16 %v2874
    %v3931 = vunpack.c.h.b16 %v2874
    %v3932 = vunpack.c.l.b16 %v2875
    %v3933 = vunpack.c.h.b16 %v2875
    %v3934 = vunpack.c.l.b16 %v2876
    %v3935 = vunpack.c.l.b16 %v2877
    %v3936 = vunpack.c.h.b16 %v2877
    %v3937 = vunpack.c.l.b16 %v2878
    %v3938 = vunpack.c.h.b16 %v2878
    %v3939 = vunpack.c.l.b16 %v2879
    %v3940 = vunpack.c.h.b16 %v2879
    %v3941 = vunpack.c.l.b16 %v2880
    %v3942 = vunpack.c.l.b16 %v2881
    %v3943 = vunpack.c.h.b16 %v2881
    %v3944 = vunpack.c.l.b16 %v2882
    %v3945 = vunpack.c.h.b16 %v2882
    %v3946 = vunpack.c.l.b16 %v2883
    %v3947 = vunpack.c.h.b16 %v2883
    %v3948 = vunpack.c.l.b16 %v2884
    %v3949 = vunpack.c.l.b16 %v2885
    %v3950 = vunpack.c.h.b16 %v2885
    %v3951 = vunpack.c.l.b16 %v2886
    %v3952 = vunpack.c.h.b16 %v2886
    %v3953 = vunpack.c.l.b16 %v2887
    %v3954 = vunpack.c.h.b16 %v2887
    %v3955 = vunpack.c.l.b16 %v2888
    %v3956 = vunpack.c.l.b16 %v2889
    %v3957 = vunpack.c.h.b16 %v2889
    %v3958 = vunpack.c.l.b16 %v2890
    %v3959 = vunpack.c.h.b16 %v2890
    %v3960 = vunpack.c.l.b16 %v2891
    %v3961 = vunpack.c.h.b16 %v2891
    %v3962 = vunpack.c.l.b16 %v2892
    %v3963 = vunpack.c.l.b16 %v2893
    %v3964 = vunpack.c.h.b16 %v2893
    %v3965 = vunpack.c.l.b16 %v2894
    %v3966 = vunpack.c.h.b16 %v2894
    %v3967 = vunpack.c.l.b16 %v2895
    %v3968 = vunpack.c.h.b16 %v2895
    %v3969 = vunpack.c.l.b16 %v2896
    %v3970 = vunpack.c.l.b16 %v2897
    %v3971 = vunpack.c.h.b16 %v2897
    %v3972 = vunpack.c.l.b16 %v2898
    %v3973 = vunpack.c.h.b16 %v2898
    %v3974 = vunpack.c.l.b16 %v2899
    %v3975 = vunpack.c.h.b16 %v2899
    %v3976 = vunpack.c.l.b16 %v2900
    %v3977 = vunpack.c.l.b16 %v2901
    %v3978 = vunpack.c.h.b16 %v2901
    %v3979 = vunpack.c.l.b16 %v2902
    %v3980 = vunpack.c.h.b16 %v2902
    %v3981 = vunpack.c.l.b16 %v2903
    %v3982 = vunpack.c.h.b16 %v2903
    %v3983 = vunpack.c.l.b16 %v2904
    %v3984 = vunpack.c.l.b16 %v2905
    %v3985 = vunpack.c.h.b16 %v2905
    %v3986 = vunpack.c.l.b16 %v2906
    %v3987 = vunpack.c.h.b16 %v2906
    %v3988 = vunpack.c.l.b16 %v2907
    %v3989 = vunpack.c.h.b16 %v2907
    %v3990 = vunpack.c.l.b16 %v2908
    %v3991 = vunpack.c.l.b16 %v2909
    %v3992 = vunpack.c.h.b16 %v2909
    %v3993 = vunpack.c.l.b16 %v2910
    %v3994 = vunpack.c.h.b16 %v2910
    %v3995 = vunpack.c.l.b16 %v2911
    %v3996 = vunpack.c.h.b16 %v2911
    %v3997 = vunpack.c.l.b16 %v2912
    %v3998 = vunpack.c.l.b16 %v2913
    %v3999 = vunpack.c.h.b16 %v2913
    %v4000 = vunpack.c.l.b16 %v2914
    %v4001 = vunpack.c.h.b16 %v2914
    %v4002 = vunpack.c.l.b16 %v2915
    %v4003 = vunpack.c.h.b16 %v2915
    %v4004 = vunpack.c.l.b16 %v2916
    %v4005 = vunpack.c.l.b16 %v2917
    %v4006 = vunpack.c.h.b16 %v2917
    %v4007 = vunpack.c.l.b16 %v2918
    %v4008 = vunpack.c.h.b16 %v2918
    %v4009 = vunpack.c.l.b16 %v2919
    %v4010 = vunpack.c.h.b16 %v2919
    %v4011 = vunpack.c.l.b16 %v2920
    %v4012 = vunpack.c.l.b16 %v2921
    %v4013 = vunpack.c.h.b16 %v2921
    %v4014 = vunpack.c.l.b16 %v2922
    %v4015 = vunpack.c.h.b16 %v2922
    %v4016 = vunpack.c.l.b16 %v2923
    %v4017 = vunpack.c.h.b16 %v2923
    %v4018 = vunpack.c.l.b16 %v2924
    %v4019 = vunpack.c.l.b16 %v2925
    %v4020 = vunpack.c.h.b16 %v2925
    %v4021 = vunpack.c.l.b16 %v2926
    %v4022 = vunpack.c.h.b16 %v2926
    %v4023 = vunpack.c.l.b16 %v2927
    %v4024 = vunpack.c.h.b16 %v2927
    %v4025 = vunpack.c.l.b16 %v2928
    %v4026 = vunpack.c.l.b16 %v2929
    %v4027 = vunpack.c.h.b16 %v2929
    %v4028 = vunpack.c.l.b16 %v2930
    %v4029 = vunpack.c.h.b16 %v2930
    %v4030 = vunpack.c.l.b16 %v2931
    %v4031 = vunpack.c.h.b16 %v2931
    %v4032 = vunpack.c.l.b16 %v2932
    %v4033 = vunpack.c.l.b16 %v2933
    %v4034 = vunpack.c.h.b16 %v2933
    %v4035 = vunpack.c.l.b16 %v2934
    %v4036 = vunpack.c.h.b16 %v2934
    %v4037 = vunpack.c.l.b16 %v2935
    %v4038 = vunpack.c.h.b16 %v2935
    %v4039 = vunpack.c.l.b16 %v2936
    %v4040 = vunpack.c.l.b16 %v2937
    %v4041 = vunpack.c.h.b16 %v2937
    %v4042 = vunpack.c.l.b16 %v2938
    %v4043 = vunpack.c.h.b16 %v2938
    %v4044 = vunpack.c.l.b16 %v2939
    %v4045 = vunpack.c.h.b16 %v2939
    %v4046 = vunpack.c.l.b16 %v2940
    %v4047 = vunpack.c.l.b16 %v2941
    %v4048 = vunpack.c.h.b16 %v2941
    %v4049 = vunpack.c.l.b16 %v2942
    %v4050 = vunpack.c.h.b16 %v2942
    %v4051 = vunpack.c.l.b16 %v2943
    %v4052 = vunpack.c.h.b16 %v2943
    %v4053 = vunpack.c.l.b16 %v2944
    %v4054 = vunpack.c.l.b16 %v2945
    %v4055 = vunpack.c.h.b16 %v2945
    %v4056 = vunpack.c.l.b16 %v2946
    %v4057 = vunpack.c.h.b16 %v2946
    %v4058 = vunpack.c.l.b16 %v2947
    %v4059 = vunpack.c.h.b16 %v2947
    %v4060 = vunpack.c.l.b16 %v2948
    %v4061 = vunpack.c.l.b16 %v2949
    %v4062 = vunpack.c.h.b16 %v2949
    %v4063 = vunpack.c.l.b16 %v2950
    %v4064 = vunpack.c.h.b16 %v2950
    %v4065 = vunpack.c.l.b16 %v2951
    %v4066 = vunpack.c.h.b16 %v2951
    %v4067 = vunpack.c.l.b16 %v2952
    %v4068 = vunpack.c.l.b16 %v2953
    %v4069 = vunpack.c.h.b16 %v2953
    %v4070 = vunpack.c.l.b16 %v2954
    %v4071 = vunpack.c.h.b16 %v2954
    %v4072 = vunpack.c.l.b16 %v2955
    %v4073 = vunpack.c.h.b16 %v2955
    %v4074 = vunpack.c.l.b16 %v2956
    %v4075 = vunpack.c.l.b16 %v2957
    %v4076 = vunpack.c.h.b16 %v2957
    %v4077 = vunpack.c.l.b16 %v2958
    %v4078 = vunpack.c.h.b16 %v2958
    %v4079 = vunpack.c.l.b16 %v2959
    %v4080 = vunpack.c.h.b16 %v2959
    %v4081 = vunpack.c.l.b16 %v2960
    %v4082 = vunpack.c.l.b16 %v2961
    %v4083 = vunpack.c.h.b16 %v2961
    %v4084 = vunpack.c.l.b16 %v2962
    %v4085 = vunpack.c.h.b16 %v2962
    %v4086 = vunpack.c.l.b16 %v2963
    %v4087 = vunpack.c.h.b16 %v2963
    %v4088 = vunpack.c.l.b16 %v2964
    %v4089 = vunpack.c.l.b16 %v2965
    %v4090 = vunpack.c.h.b16 %v2965
    %v4091 = vunpack.c.l.b16 %v2966
    %v4092 = vunpack.c.h.b16 %v2966
    %v4093 = vunpack.c.l.b16 %v2967
    %v4094 = vunpack.c.h.b16 %v2967
    %v4095 = vunpack.c.l.b16 %v2968
    %v4096 = vunpack.c.l.b16 %v2969
    %v4097 = vunpack.c.h.b16 %v2969
    %v4098 = vunpack.c.l.b16 %v2970
    %v4099 = vunpack.c.h.b16 %v2970
    %v4100 = vunpack.c.l.b16 %v2971
    %v4101 = vunpack.c.h.b16 %v2971
    %v4102 = vunpack.c.l.b16 %v2972
    %v4103 = vunpack.c.l.b16 %v2973
    %v4104 = vunpack.c.h.b16 %v2973
    %v4105 = vunpack.c.l.b16 %v2974
    %v4106 = vunpack.c.h.b16 %v2974
    %v4107 = vunpack.c.l.b16 %v2975
    %v4108 = vunpack.c.h.b16 %v2975
    %v4109 = vunpack.c.l.b16 %v2976
    %v4110 = vunpack.c.l.b16 %v2977
    %v4111 = vunpack.c.h.b16 %v2977
    %v4112 = vunpack.c.l.b16 %v2978
    %v4113 = vunpack.c.h.b16 %v2978
    %v4114 = vunpack.c.l.b16 %v2979
    %v4115 = vunpack.c.h.b16 %v2979
    %v4116 = vunpack.c.l.b16 %v2980
    %v4117 = vunpack.c.l.b16 %v2981
    %v4118 = vunpack.c.h.b16 %v2981
    %v4119 = vunpack.c.l.b16 %v2982
    %v4120 = vunpack.c.h.b16 %v2982
    %v4121 = vunpack.c.l.b16 %v2983
    %v4122 = vunpack.c.h.b16 %v2983
    %v4123 = vunpack.c.l.b16 %v2984
    %v4124 = vunpack.c.l.b16 %v2985
    %v4125 = vunpack.c.h.b16 %v2985
    %v4126 = vunpack.c.l.b16 %v2986
    %v4127 = vunpack.c.h.b16 %v2986
    %v4128 = vunpack.c.l.b16 %v2987
    %v4129 = vunpack.c.h.b16 %v2987
    %v4130 = vunpack.c.l.b16 %v2988
    %v4131 = vunpack.c.l.b16 %v2989
    %v4132 = vunpack.c.h.b16 %v2989
    %v4133 = vunpack.c.l.b16 %v2990
    %v4134 = vunpack.c.h.b16 %v2990
    %v4135 = vunpack.c.l.b16 %v2991
    %v4136 = vunpack.c.h.b16 %v2991
    %v4137 = vunpack.c.l.b16 %v2992
    %v4138 = vunpack.c.l.b16 %v2993
    %v4139 = vunpack.c.h.b16 %v2993
    %v4140 = vunpack.c.l.b16 %v2994
    %v4141 = vunpack.c.h.b16 %v2994
    %v4142 = vunpack.c.l.b16 %v2995
    %v4143 = vunpack.c.h.b16 %v2995
    %v4144 = vunpack.c.l.b16 %v2996
    %v4145 = vunpack.c.l.b16 %v2997
    %v4146 = vunpack.c.h.b16 %v2997
    %v4147 = vunpack.c.l.b16 %v2998
    %v4148 = vunpack.c.h.b16 %v2998
    %v4149 = vunpack.c.l.b16 %v2999
    %v4150 = vunpack.c.h.b16 %v2999
    %v4151 = vunpack.c.l.b16 %v3000
    %v4152 = vunpack.c.l.b16 %v3001
    %v4153 = vunpack.c.h.b16 %v3001
    %v4154 = vunpack.c.l.b16 %v3002
    %v4155 = vunpack.c.h.b16 %v3002
    %v4156 = vunpack.c.l.b16 %v3003
    %v4157 = vunpack.c.h.b16 %v3003
    %v4158 = vunpack.c.l.b16 %v3004
    %v4159 = vunpack.c.l.b16 %v3005
    %v4160 = vunpack.c.h.b16 %v3005
    %v4161 = vunpack.c.l.b16 %v3006
    %v4162 = vunpack.c.h.b16 %v3006
    %v4163 = vunpack.c.l.b16 %v3007
    %v4164 = vunpack.c.h.b16 %v3007
    %v4165 = vunpack.c.l.b16 %v3008
    %v4166 = vunpack.c.l.b16 %v3009
    %v4167 = vunpack.c.h.b16 %v3009
    %v4168 = vunpack.c.l.b16 %v3010
    %v4169 = vunpack.c.h.b16 %v3010
    %v4170 = vunpack.c.l.b16 %v3011
    %v4171 = vunpack.c.h.b16 %v3011
    %v4172 = vunpack.c.l.b16 %v3012
    %v4173 = vunpack.c.l.b16 %v3013
    %v4174 = vunpack.c.h.b16 %v3013
    %v4175 = vunpack.c.l.b16 %v3014
    %v4176 = vunpack.c.h.b16 %v3014
    %v4177 = vunpack.c.l.b16 %v3015
    %v4178 = vunpack.c.h.b16 %v3015
    %v4179 = vunpack.c.l.b16 %v3016
    %v4180 = vunpack.c.l.b16 %v3017
    %v4181 = vunpack.c.h.b16 %v3017
    %v4182 = vunpack.c.l.b16 %v3018
    %v4183 = vunpack.c.h.b16 %v3018
    %v4184 = vunpack.c.l.b16 %v3019
    %v4185 = vunpack.c.h.b16 %v3019
    %v4186 = vunpack.c.l.b16 %v3020
    %v4187 = vunpack.c.l.b16 %v3021
    %v4188 = vunpack.c.h.b16 %v3021
    %v4189 = vunpack.c.l.b16 %v3022
    %v4190 = vunpack.c.h.b16 %v3022
    %v4191 = vunpack.c.l.b16 %v3023
    %v4192 = vunpack.c.h.b16 %v3023
    %v4193 = vunpack.c.l.b16 %v3024
    %v4194 = vunpack.c.l.b16 %v3025
    %v4195 = vunpack.c.h.b16 %v3025
    %v4196 = vunpack.c.l.b16 %v3026
    %v4197 = vunpack.c.h.b16 %v3026
    %v4198 = vunpack.c.l.b16 %v3027
    %v4199 = vunpack.c.h.b16 %v3027
    %v4200 = vunpack.c.l.b16 %v3028
    %v4201 = vunpack.c.l.b16 %v3029
    %v4202 = vunpack.c.h.b16 %v3029
    %v4203 = vunpack.c.l.b16 %v3030
    %v4204 = vunpack.c.h.b16 %v3030
    %v4205 = vunpack.c.l.b16 %v3031
    %v4206 = vunpack.c.h.b16 %v3031
    %v4207 = vunpack.c.l.b16 %v3032
    %v4208 = vunpack.c.l.b16 %v3033
    %v4209 = vunpack.c.h.b16 %v3033
    %v4210 = vunpack.c.l.b16 %v3034
    %v4211 = vunpack.c.h.b16 %v3034
    %v4212 = vunpack.c.l.b16 %v3035
    %v4213 = vunpack.c.h.b16 %v3035
    %v4214 = vunpack.c.l.b16 %v3036
    %v4215 = vunpack.c.l.b16 %v3037
    %v4216 = vunpack.c.h.b16 %v3037
    %v4217 = vunpack.c.l.b16 %v3038
    %v4218 = vunpack.c.h.b16 %v3038
    %v4219 = vunpack.c.l.b16 %v3039
    %v4220 = vunpack.c.h.b16 %v3039
    %v4221 = vunpack.c.l.b16 %v3040
    %v4222 = vunpack.c.l.b16 %v3041
    %v4223 = vunpack.c.h.b16 %v3041
    %v4224 = vunpack.c.l.b16 %v3042
    %v4225 = vunpack.c.h.b16 %v3042
    %v4226 = vunpack.c.l.b16 %v3043
    %v4227 = vunpack.c.h.b16 %v3043
    %v4228 = vunpack.c.l.b16 %v3044
    %v4229 = vunpack.c.l.b16 %v3045
    %v4230 = vunpack.c.h.b16 %v3045
    %v4231 = vunpack.c.l.b16 %v3046
    %v4232 = vunpack.c.h.b16 %v3046
    %v4233 = vunpack.c.l.b16 %v3047
    %v4234 = vunpack.c.h.b16 %v3047
    %v4235 = vunpack.c.l.b16 %v3048
    %v4236 = vunpack.c.l.b16 %v3049
    %v4237 = vunpack.c.h.b16 %v3049
    %v4238 = vunpack.c.l.b16 %v3050
    %v4239 = vunpack.c.h.b16 %v3050
    %v4240 = vunpack.c.l.b16 %v3051
    %v4241 = vunpack.c.h.b16 %v3051
    %v4242 = vunpack.c.l.b16 %v3052
    %v4243 = vunpack.c.l.b16 %v3053
    %v4244 = vunpack.c.h.b16 %v3053
    %v4245 = vunpack.c.l.b16 %v3054
    %v4246 = vunpack.c.h.b16 %v3054
    %v4247 = vunpack.c.l.b16 %v3055
    %v4248 = vunpack.c.h.b16 %v3055
    %v4249 = vunpack.c.l.b16 %v3056
    %v4250 = vunpack.c.l.b16 %v3057
    %v4251 = vunpack.c.h.b16 %v3057
    %v4252 = vunpack.c.l.b16 %v3058
    %v4253 = vunpack.c.h.b16 %v3058
    %v4254 = vunpack.c.l.b16 %v3059
    %v4255 = vunpack.c.h.b16 %v3059
    %v4256 = vunpack.c.l.b16 %v3060
    %v4257 = vunpack.c.l.b16 %v3061
    %v4258 = vunpack.c.h.b16 %v3061
    %v4259 = vunpack.c.l.b16 %v3062
    %v4260 = vunpack.c.h.b16 %v3062
    %v4261 = vunpack.c.l.b16 %v3063
    %v4262 = vunpack.c.h.b16 %v3063
    %v4263 = vunpack.c.l.b16 %v3064
    %v4264 = vunpack.c.l.b16 %v3065
    %v4265 = vunpack.c.h.b16 %v3065
    %v4266 = vunpack.c.l.b16 %v3066
    %v4267 = vunpack.c.h.b16 %v3066
    %v4268 = vunpack.c.l.b16 %v3067
    %v4269 = vunpack.c.h.b16 %v3067
    %v4270 = vunpack.c.l.b16 %v3068
    %v4271 = vunpack.c.l.b16 %v3069
    %v4272 = vunpack.c.h.b16 %v3069
    %v4273 = vunpack.c.l.b16 %v3070
    %v4274 = vunpack.c.h.b16 %v3070
    %v4275 = vunpack.c.l.b16 %v3071
    %v4276 = vunpack.c.h.b16 %v3071
    %v4277 = vunpack.c.l.b16 %v3072
    %v4278 = vunpack.c.l.b16 %v3073
    %v4279 = vunpack.c.h.b16 %v3073
    %v4280 = vunpack.c.l.b16 %v3074
    %v4281 = vunpack.c.h.b16 %v3074
    %v4282 = vunpack.c.l.b16 %v3075
    %v4283 = vunpack.c.h.b16 %v3075
    %v4284 = vunpack.c.l.b16 %v3076
    %v4285 = vunpack.c.l.b16 %v3077
    %v4286 = vunpack.c.h.b16 %v3077
    %v4287 = vunpack.c.l.b16 %v3078
    %v4288 = vunpack.c.h.b16 %v3078
    %v4289 = vunpack.c.l.b16 %v3079
    %v4290 = vunpack.c.h.b16 %v3079
    %v4291 = vunpack.c.l.b16 %v3080
    %v4292 = vunpack.c.l.b16 %v3081
    %v4293 = vunpack.c.h.b16 %v3081
    %v4294 = vunpack.c.l.b16 %v3082
    %v4295 = vunpack.c.h.b16 %v3082
    %v4296 = vunpack.c.l.b16 %v3083
    %v4297 = vunpack.c.h.b16 %v3083
    %v4298 = vunpack.c.l.b16 %v3084
    %v4299 = vunpack.c.l.b16 %v3085
    %v4300 = vunpack.c.h.b16 %v3085
    %v4301 = vunpack.c.l.b16 %v3086
    %v4302 = vunpack.c.h.b16 %v3086
    %v4303 = vunpack.c.l.b16 %v3087
    %v4304 = vunpack.c.h.b16 %v3087
    %v4305 = vunpack.c.l.b16 %v3088
    %v4306 = vunpack.c.l.b16 %v3089
    %v4307 = vunpack.c.h.b16 %v3089
    %v4308 = vunpack.c.l.b16 %v3090
    %v4309 = vunpack.c.h.b16 %v3090
    %v4310 = vunpack.c.l.b16 %v3091
    %v4311 = vunpack.c.h.b16 %v3091
    %v4312 = vunpack.c.l.b16 %v3092
    %v4313 = vunpack.c.l.b16 %v3093
    %v4314 = vunpack.c.h.b16 %v3093
    %v4315 = vunpack.c.l.b16 %v3094
    %v4316 = vunpack.c.h.b16 %v3094
    %v4317 = vunpack.c.l.b16 %v3095
    %v4318 = vunpack.c.h.b16 %v3095
    %v4319 = vunpack.c.l.b16 %v3096
    %v4320 = vunpack.c.l.b16 %v3097
    %v4321 = vunpack.c.h.b16 %v3097
    %v4322 = vunpack.c.l.b16 %v3098
    %v4323 = vunpack.c.h.b16 %v3098
    %v4324 = vunpack.c.l.b16 %v3099
    %v4325 = vunpack.c.h.b16 %v3099
    %v4326 = vunpack.c.l.b16 %v3100
    %v4327 = vunpack.c.l.b16 %v3101
    %v4328 = vunpack.c.h.b16 %v3101
    %v4329 = vunpack.c.l.b16 %v3102
    %v4330 = vunpack.c.h.b16 %v3102
    %v4331 = vunpack.c.l.b16 %v3103
    %v4332 = vunpack.c.h.b16 %v3103
    %v4333 = vunpack.c.l.b16 %v3104
    %v4334 = vunpack.c.l.b16 %v3105
    %v4335 = vunpack.c.h.b16 %v3105
    %v4336 = vunpack.c.l.b16 %v3106
    %v4337 = vunpack.c.h.b16 %v3106
    %v4338 = vunpack.c.l.b16 %v3107
    %v4339 = vunpack.c.h.b16 %v3107
    %v4340 = vunpack.c.l.b16 %v3108
    %v4341 = vunpack.c.l.b16 %v3109
    %v4342 = vunpack.c.h.b16 %v3109
    %v4343 = vunpack.c.l.b16 %v3110
    %v4344 = vunpack.c.h.b16 %v3110
    %v4345 = vunpack.c.l.b16 %v3111
    %v4346 = vunpack.c.h.b16 %v3111
    %v4347 = vunpack.c.l.b16 %v3112
    %v4348 = vunpack.c.l.b16 %v3113
    %v4349 = vunpack.c.h.b16 %v3113
    %v4350 = vunpack.c.l.b16 %v3114
    %v4351 = vunpack.c.h.b16 %v3114
    %v4352 = vunpack.c.l.b16 %v3115
    %v4353 = vunpack.c.h.b16 %v3115
    %v4354 = vunpack.c.l.b16 %v3116
    %v4355 = vunpack.c.l.b16 %v3117
    %v4356 = vunpack.c.h.b16 %v3117
    %v4357 = vunpack.c.l.b16 %v3118
    %v4358 = vunpack.c.h.b16 %v3118
    %v4359 = vunpack.c.l.b16 %v3119
    %v4360 = vunpack.c.h.b16 %v3119
    %v4361 = vunpack.c.l.b16 %v3120
    %v4362 = vunpack.c.l.b16 %v3121
    %v4363 = vunpack.c.h.b16 %v3121
    %v4364 = vunpack.c.l.b16 %v3122
    %v4365 = vunpack.c.h.b16 %v3122
    %v4366 = vunpack.c.l.b16 %v3123
    %v4367 = vunpack.c.h.b16 %v3123
    %v4368 = vunpack.c.l.b16 %v3124
    %v4369 = vunpack.c.l.b16 %v3125
    %v4370 = vunpack.c.h.b16 %v3125
    %v4371 = vunpack.c.l.b16 %v3126
    %v4372 = vunpack.c.h.b16 %v3126
    %v4373 = vunpack.c.l.b16 %v3127
    %v4374 = vunpack.c.h.b16 %v3127
    %v4375 = vunpack.c.l.b16 %v3128
    %v4376 = vunpack.c.l.b16 %v3129
    %v4377 = vunpack.c.h.b16 %v3129
    %v4378 = vunpack.c.l.b16 %v3130
    %v4379 = vunpack.c.h.b16 %v3130
    %v4380 = vunpack.c.l.b16 %v3131
    %v4381 = vunpack.c.h.b16 %v3131
    %v4382 = vunpack.c.l.b16 %v3132
    %v4383 = vunpack.c.l.b16 %v3133
    %v4384 = vunpack.c.h.b16 %v3133
    %v4385 = vunpack.c.l.b16 %v3134
    %v4386 = vunpack.c.h.b16 %v3134
    %v4387 = vunpack.c.l.b16 %v3135
    %v4388 = vunpack.c.h.b16 %v3135
    %v4389 = vunpack.c.l.b16 %v3136
    %v4390 = vunpack.c.l.b16 %v3137
    %v4391 = vunpack.c.h.b16 %v3137
    %v4392 = vunpack.c.l.b16 %v3138
    %v4393 = vunpack.c.h.b16 %v3138
    %v4394 = vunpack.c.l.b16 %v3139
    %v4395 = vunpack.c.h.b16 %v3139
    %v4396 = vunpack.c.l.b16 %v3140
    %v4397 = vunpack.c.l.b16 %v3141
    %v4398 = vunpack.c.h.b16 %v3141
    %v4399 = vunpack.c.l.b16 %v3142
    %v4400 = vunpack.c.h.b16 %v3142
    %v4401 = vunpack.c.l.b16 %v3143
    %v4402 = vunpack.c.h.b16 %v3143
    %v4403 = vunpack.c.l.b16 %v3144
    %v4404 = vunpack.c.l.b16 %v3145
    %v4405 = vunpack.c.h.b16 %v3145
    %v4406 = vunpack.c.l.b16 %v3146
    %v4407 = vunpack.c.h.b16 %v3146
    %v4408 = vunpack.c.l.b16 %v3147
    %v4409 = vunpack.c.h.b16 %v3147
    %v4410 = vunpack.c.l.b16 %v3148
    %v4411 = vunpack.c.l.b16 %v3149
    %v4412 = vunpack.c.h.b16 %v3149
    %v4413 = vunpack.c.l.b16 %v3150
    %v4414 = vunpack.c.h.b16 %v3150
    %v4415 = vunpack.c.l.b16 %v3151
    %v4416 = vunpack.c.h.b16 %v3151
    %v4417 = vunpack.c.l.b16 %v3152
    %v4418 = vunpack.c.l.b16 %v3153
    %v4419 = vunpack.c.h.b16 %v3153
    %v4420 = vunpack.c.l.b16 %v3154
    %v4421 = vunpack.c.h.b16 %v3154
    %v4422 = vunpack.c.l.b16 %v3155
    %v4423 = vunpack.c.h.b16 %v3155
    %v4424 = vunpack.c.l.b16 %v3156
    %v4425 = vunpack.c.l.b16 %v3157
    %v4426 = vunpack.c.h.b16 %v3157
    %v4427 = vunpack.c.l.b16 %v3158
    %v4428 = vunpack.c.h.b16 %v3158
    %v4429 = vunpack.c.l.b16 %v3159
    %v4430 = vunpack.c.h.b16 %v3159
    %v4431 = vunpack.c.l.b16 %v3160
    %v4432 = vunpack.c.l.b16 %v3161
    %v4433 = vunpack.c.h.b16 %v3161
    %v4434 = vunpack.c.l.b16 %v3162
    %v4435 = vunpack.c.h.b16 %v3162
    %v4436 = vunpack.c.l.b16 %v3163
    %v4437 = vunpack.c.h.b16 %v3163
    %v4438 = vunpack.c.l.b16 %v3164
    %v4439 = vunpack.c.l.b16 %v3165
    %v4440 = vunpack.c.h.b16 %v3165
    %v4441 = vunpack.c.l.b16 %v3166
    %v4442 = vunpack.c.h.b16 %v3166
    %v4443 = vunpack.c.l.b16 %v3167
    %v4444 = vunpack.c.h.b16 %v3167
    %v4445 = vunpack.c.l.b16 %v3168
    %v4446 = vunpack.c.l.b16 %v3169
    %v4447 = vunpack.c.h.b16 %v3169
    %v4448 = vunpack.c.l.b16 %v3170
    %v4449 = vunpack.c.h.b16 %v3170
    %v4450 = vunpack.c.l.b16 %v3171
    %v4451 = vunpack.c.h.b16 %v3171
    %v4452 = vunpack.c.l.b16 %v3172
    %v4453 = vunpack.c.l.b16 %v3173
    %v4454 = vunpack.c.h.b16 %v3173
    %v4455 = vunpack.c.l.b16 %v3174
    %v4456 = vunpack.c.h.b16 %v3174
    %v4457 = vunpack.c.l.b16 %v3175
    %v4458 = vunpack.c.h.b16 %v3175
    %v4459 = vunpack.c.l.b16 %v3176
    %v4460 = vunpack.c.l.b16 %v3177
    %v4461 = vunpack.c.h.b16 %v3177
    %v4462 = vunpack.c.l.b16 %v3178
    %v4463 = vunpack.c.h.b16 %v3178
    %v4464 = vunpack.c.l.b16 %v3179
    %v4465 = vunpack.c.h.b16 %v3179
    %v4466 = vunpack.c.l.b16 %v3180
    %v4467 = vunpack.c.l.b16 %v3181
    %v4468 = vunpack.c.h.b16 %v3181
    %v4469 = vunpack.c.l.b16 %v3182
    %v4470 = vunpack.c.h.b16 %v3182
    %v4471 = vunpack.c.l.b16 %v3183
    %v4472 = vunpack.c.h.b16 %v3183
    %v4473 = vunpack.c.l.b16 %v3184
    %v4474 = vunpack.c.l.b16 %v3185
    %v4475 = vunpack.c.h.b16 %v3185
    %v4476 = vunpack.c.l.b16 %v3186
    %v4477 = vunpack.c.h.b16 %v3186
    %v4478 = vunpack.c.l.b16 %v3187
    %v4479 = vunpack.c.h.b16 %v3187
    %v4480 = vunpack.c.l.b16 %v3188
    %v4481 = vunpack.c.l.b16 %v3189
    %v4482 = vunpack.c.h.b16 %v3189
    %v4483 = vunpack.c.l.b16 %v3190
    %v4484 = vunpack.c.h.b16 %v3190
    %v4485 = vunpack.c.l.b16 %v3191
    %v4486 = vunpack.c.h.b16 %v3191
    %v4487 = vunpack.c.l.b16 %v3192
    %v4488 = vunpack.c.l.b16 %v3193
    %v4489 = vunpack.c.h.b16 %v3193
    %v4490 = vunpack.c.l.b16 %v3194
    %v4491 = vunpack.c.h.b16 %v3194
    %v4492 = vunpack.c.l.b16 %v3195
    %v4493 = vunpack.c.h.b16 %v3195
    %v4494 = vunpack.c.l.b16 %v3196
    %v4495 = vunpack.c.l.b16 %v3197
    %v4496 = vunpack.c.h.b16 %v3197
    %v4497 = vunpack.c.l.b16 %v3198
    %v4498 = vunpack.c.h.b16 %v3198
    %v4499 = vunpack.c.l.b16 %v3199
    %v4500 = vunpack.c.h.b16 %v3199
    %v4501 = vunpack.c.l.b16 %v3200
    %v4502 = vunpack.c.l.b16 %v3201
    %v4503 = vunpack.c.h.b16 %v3201
    %v4504 = vunpack.c.l.b16 %v3202
    %v4505 = vunpack.c.h.b16 %v3202
    %v4506 = vunpack.c.l.b16 %v3203
    %v4507 = vunpack.c.h.b16 %v3203
    %v4508 = vunpack.c.l.b16 %v3204
    %v4509 = vunpack.c.l.b16 %v3205
    %v4510 = vunpack.c.h.b16 %v3205
    %v4511 = vunpack.c.l.b16 %v3206
    %v4512 = vunpack.c.h.b16 %v3206
    %v4513 = vunpack.c.l.b16 %v3207
    %v4514 = vunpack.c.h.b16 %v3207
    %v4515 = vunpack.c.l.b16 %v3208
    %v4516 = vunpack.c.l.b16 %v3209
    %v4517 = vunpack.c.h.b16 %v3209
    %v4518 = vunpack.c.l.b16 %v3210
    %v4519 = vunpack.c.h.b16 %v3210
    %v4520 = vunpack.c.l.b16 %v3211
    %v4521 = vunpack.c.h.b16 %v3211
    %v4522 = vunpack.c.l.b16 %v3212
    %v4523 = vunpack.c.l.b16 %v3213
    %v4524 = vunpack.c.h.b16 %v3213
    %v4525 = vunpack.c.l.b16 %v3214
    %v4526 = vunpack.c.h.b16 %v3214
    %v4527 = vunpack.c.l.b16 %v3215
    %v4528 = vunpack.c.h.b16 %v3215
    %v4529 = vunpack.c.l.b16 %v3216
    %v4530 = vunpack.c.l.b16 %v3217
    %v4531 = vunpack.c.h.b16 %v3217
    %v4532 = vunpack.c.l.b16 %v3218
    %v4533 = vunpack.c.h.b16 %v3218
    %v4534 = vunpack.c.l.b16 %v3219
    %v4535 = vunpack.c.h.b16 %v3219
    %v4536 = vunpack.c.l.b16 %v3220
    %v4537 = vunpack.c.l.b16 %v3221
    %v4538 = vunpack.c.h.b16 %v3221
    %v4539 = vunpack.c.l.b16 %v3222
    %v4540 = vunpack.c.h.b16 %v3222
    %v4541 = vunpack.c.l.b16 %v3223
    %v4542 = vunpack.c.h.b16 %v3223
    %v4543 = vunpack.c.l.b16 %v3224
    %v4544 = vunpack.c.l.b16 %v3225
    %v4545 = vunpack.c.h.b16 %v3225
    %v4546 = vunpack.c.l.b16 %v3226
    %v4547 = vunpack.c.h.b16 %v3226
    %v4548 = vunpack.c.l.b16 %v3227
    %v4549 = vunpack.c.h.b16 %v3227
    %v4550 = vunpack.c.l.b16 %v3228
    %v4551 = vunpack.c.l.b16 %v3229
    %v4552 = vunpack.c.h.b16 %v3229
    %v4553 = vunpack.c.l.b16 %v3230
    %v4554 = vunpack.c.h.b16 %v3230
    %v4555 = vunpack.c.l.b16 %v3231
    %v4556 = vunpack.c.h.b16 %v3231
    %v4557 = vunpack.c.l.b16 %v3232
    %v4558 = vunpack.c.l.b16 %v3233
    %v4559 = vunpack.c.h.b16 %v3233
    %v4560 = vunpack.c.l.b16 %v3234
    %v4561 = vunpack.c.h.b16 %v3234
    %v4562 = vunpack.c.l.b16 %v3235
    %v4563 = vunpack.c.h.b16 %v3235
    %v4564 = vunpack.c.l.b16 %v3236
    %v4565 = vunpack.c.l.b16 %v3237
    %v4566 = vunpack.c.h.b16 %v3237
    %v4567 = vunpack.c.l.b16 %v3238
    %v4568 = vunpack.c.h.b16 %v3238
    %v4569 = vunpack.c.l.b16 %v3239
    %v4570 = vunpack.c.h.b16 %v3239
    %v4571 = vunpack.c.l.b16 %v3240
    %v4572 = vunpack.c.l.b16 %v3241
    %v4573 = vunpack.c.h.b16 %v3241
    %v4574 = vunpack.c.l.b16 %v3242
    %v4575 = vunpack.c.h.b16 %v3242
    %v4576 = vunpack.c.l.b16 %v3243
    %v4577 = vunpack.c.h.b16 %v3243
    %v4578 = vunpack.c.l.b16 %v3244
    %v4579 = vunpack.c.l.b16 %v3245
    %v4580 = vunpack.c.h.b16 %v3245
    %v4581 = vunpack.c.l.b16 %v3246
    %v4582 = vunpack.c.h.b16 %v3246
    %v4583 = vunpack.c.l.b16 %v3247
    %v4584 = vunpack.c.h.b16 %v3247
    %v4585 = vunpack.c.l.b16 %v3248
    %v4586 = vunpack.c.l.b16 %v3249
    %v4587 = vunpack.c.h.b16 %v3249
    %v4588 = vunpack.c.l.b16 %v3250
    %v4589 = vunpack.c.h.b16 %v3250
    %v4590 = vunpack.c.l.b16 %v3251
    %v4591 = vunpack.c.h.b16 %v3251
    %v4592 = vunpack.c.l.b16 %v3252
    %v4593 = vunpack.c.l.b16 %v3253
    %v4594 = vunpack.c.h.b16 %v3253
    %v4595 = vunpack.c.l.b16 %v3254
    %v4596 = vunpack.c.h.b16 %v3254
    %v4597 = vunpack.c.l.b16 %v3255
    %v4598 = vunpack.c.h.b16 %v3255
    %v4599 = vunpack.c.l.b16 %v3256
    %v4600 = vunpack.c.l.b16 %v3257
    %v4601 = vunpack.c.h.b16 %v3257
    %v4602 = vunpack.c.l.b16 %v3258
    %v4603 = vunpack.c.h.b16 %v3258
    %v4604 = vunpack.c.l.b16 %v3259
    %v4605 = vunpack.c.h.b16 %v3259
    %v4606 = vunpack.c.l.b16 %v3260
    %v4607 = vunpack.c.l.b16 %v3261
    %v4608 = vunpack.c.h.b16 %v3261
    %v4609 = vunpack.c.l.b16 %v3262
    %v4610 = vunpack.c.h.b16 %v3262
    %v4611 = vunpack.c.l.b16 %v3263
    %v4612 = vunpack.c.h.b16 %v3263
    %v4613 = vunpack.c.l.b16 %v3264
    %v4614 = vunpack.c.l.b16 %v3265
    %v4615 = vunpack.c.h.b16 %v3265
    %v4616 = vunpack.c.l.b16 %v3266
    %v4617 = vunpack.c.h.b16 %v3266
    %v4618 = vunpack.c.l.b16 %v3267
    %v4619 = vunpack.c.h.b16 %v3267
    %v4620 = vunpack.c.l.b16 %v3268
    %v4621 = vunpack.c.l.b16 %v3269
    %v4622 = vunpack.c.h.b16 %v3269
    %v4623 = vunpack.c.l.b16 %v3270
    %v4624 = vunpack.c.h.b16 %v3270
    %v4625 = vunpack.c.l.b16 %v3271
    %v4626 = vunpack.c.h.b16 %v3271
    %v4627 = vunpack.c.l.b16 %v3272
    %v4628 = vunpack.c.l.b16 %v3273
    %v4629 = vunpack.c.h.b16 %v3273
    %v4630 = vunpack.c.l.b16 %v3274
    %v4631 = vunpack.c.h.b16 %v3274
    %v4632 = vunpack.c.l.b16 %v3275
    %v4633 = vunpack.c.h.b16 %v3275
    %v4634 = vunpack.c.l.b16 %v3276
    %v4635 = vunpack.c.l.b16 %v3277
    %v4636 = vunpack.c.h.b16 %v3277
    %v4637 = vunpack.c.l.b16 %v3278
    %v4638 = vunpack.c.h.b16 %v3278
    %v4639 = vunpack.c.l.b16 %v3279
    %v4640 = vunpack.c.h.b16 %v3279
    %v4641 = vunpack.c.l.b16 %v3280
    %v4642 = vunpack.c.l.b16 %v3281
    %v4643 = vunpack.c.h.b16 %v3281
    %v4644 = vunpack.c.l.b16 %v3282
    %v4645 = vunpack.c.h.b16 %v3282
    %v4646 = vunpack.c.l.b16 %v3283
    %v4647 = vunpack.c.h.b16 %v3283
    %v4648 = vunpack.c.l.b16 %v3284
    %v4649 = vunpack.c.l.b16 %v3285
    %v4650 = vunpack.c.h.b16 %v3285
    %v4651 = vunpack.c.l.b16 %v3286
    %v4652 = vunpack.c.h.b16 %v3286
    %v4653 = vunpack.c.l.b16 %v3287
    %v4654 = vunpack.c.h.b16 %v3287
    %v4655 = vunpack.c.l.b16 %v3288
    %v4656 = vunpack.c.l.b16 %v3289
    %v4657 = vunpack.c.h.b16 %v3289
    %v4658 = vunpack.c.l.b16 %v3290
    %v4659 = vunpack.c.h.b16 %v3290
    %v4660 = vunpack.c.l.b16 %v3291
    %v4661 = vunpack.c.h.b16 %v3291
    %v4662 = vunpack.c.l.b16 %v3292
    %v4663 = vunpack.c.l.b16 %v3293
    %v4664 = vunpack.c.h.b16 %v3293
    %v4665 = vunpack.c.l.b16 %v3294
    %v4666 = vunpack.c.h.b16 %v3294
    %v4667 = vunpack.c.l.b16 %v3295
    %v4668 = vunpack.c.h.b16 %v3295
    %v4669 = vunpack.c.l.b16 %v3296
    %v4670 = vunpack.c.l.b16 %v3297
    %v4671 = vunpack.c.h.b16 %v3297
    %v4672 = vunpack.c.l.b16 %v3298
    %v4673 = vunpack.c.h.b16 %v3298
    %v4674 = vunpack.c.l.b16 %v3299
    %v4675 = vunpack.c.h.b16 %v3299
    %v4676 = vunpack.c.l.b16 %v3300
    %v4677 = vunpack.c.l.b16 %v3301
    %v4678 = vunpack.c.h.b16 %v3301
    %v4679 = vunpack.c.l.b16 %v3302
    %v4680 = vunpack.c.h.b16 %v3302
    %v4681 = vunpack.c.l.b16 %v3303
    %v4682 = vunpack.c.h.b16 %v3303
    %v4683 = vunpack.c.l.b16 %v3304
    %v4684 = vunpack.c.l.b16 %v3305
    %v4685 = vunpack.c.h.b16 %v3305
    %v4686 = vunpack.c.l.b16 %v3306
    %v4687 = vunpack.c.h.b16 %v3306
    %v4688 = vunpack.c.l.b16 %v3307
    %v4689 = vunpack.c.h.b16 %v3307
    %v4690 = vunpack.c.l.b16 %v3308
    %v4691 = vunpack.c.l.b16 %v3309
    %v4692 = vunpack.c.h.b16 %v3309
    %v4693 = vunpack.c.l.b16 %v3310
    %v4694 = vunpack.c.h.b16 %v3310
    %v4695 = vunpack.c.l.b16 %v3311
    %v4696 = vunpack.c.h.b16 %v3311
    %v4697 = vunpack.c.l.b16 %v3312
    %v4698 = vunpack.c.l.b16 %v3313
    %v4699 = vunpack.c.h.b16 %v3313
    %v4700 = vunpack.c.l.b16 %v3314
    %v4701 = vunpack.c.h.b16 %v3314
    %v4702 = vunpack.c.l.b16 %v3315
    %v4703 = vunpack.c.h.b16 %v3315
    %v4704 = vunpack.c.l.b16 %v3316
    %v4705 = vunpack.c.l.b16 %v3317
    %v4706 = vunpack.c.h.b16 %v3317
    %v4707 = vunpack.c.l.b16 %v3318
    %v4708 = vunpack.c.h.b16 %v3318
    %v4709 = vunpack.c.l.b16 %v3319
    %v4710 = vunpack.c.h.b16 %v3319
    %v4711 = vunpack.c.l.b16 %v3320
    %v4712 = vunpack.c.l.b16 %v3321
    %v4713 = vunpack.c.h.b16 %v3321
    %v4714 = vunpack.c.l.b16 %v3322
    %v4715 = vunpack.c.h.b16 %v3322
    %v4716 = vunpack.c.l.b16 %v3323
    %v4717 = vunpack.c.h.b16 %v3323
    %v4718 = vunpack.c.l.b16 %v3324
    %v4719 = vunpack.c.l.b16 %v3325
    %v4720 = vunpack.c.h.b16 %v3325
    %v4721 = vunpack.c.l.b16 %v3326
    %v4722 = vunpack.c.h.b16 %v3326
    %v4723 = vunpack.c.l.b16 %v3327
    %v4724 = vunpack.c.h.b16 %v3327
    %v4725 = vunpack.c.l.b16 %v3328
    %v4726 = vunpack.c.l.b16 %v3329
    %v4727 = vunpack.c.h.b16 %v3329
    %v4728 = vunpack.c.l.b16 %v3330
    %v4729 = vunpack.c.h.b16 %v3330
    %v4730 = vunpack.c.l.b16 %v3331
    %v4731 = vunpack.c.h.b16 %v3331
    %v4732 = vunpack.c.l.b16 %v3332
    %v4733 = vunpack.c.l.b16 %v3333
    %v4734 = vunpack.c.h.b16 %v3333
    %v4735 = vunpack.c.l.b16 %v3334
    %v4736 = vunpack.c.h.b16 %v3334
    %v4737 = vunpack.c.l.b16 %v3335
    %v4738 = vunpack.c.h.b16 %v3335
    %v4739 = vunpack.c.l.b16 %v3336
    %v4740 = vunpack.c.l.b16 %v3337
    %v4741 = vunpack.c.h.b16 %v3337
    %v4742 = vunpack.c.l.b16 %v3338
    %v4743 = vunpack.c.h.b16 %v3338
    %v4744 = vunpack.c.l.b16 %v3339
    %v4745 = vunpack.c.h.b16 %v3339
    %v4746 = vunpack.c.l.b16 %v3340
    %v4747 = vunpack.c.l.b16 %v3341
    %v4748 = vunpack.c.h.b16 %v3341
    %v4749 = vunpack.c.l.b16 %v3342
    %v4750 = vunpack.c.h.b16 %v3342
    %v4751 = vunpack.c.l.b16 %v3343
    %v4752 = vunpack.c.h.b16 %v3343
    %v4753 = vunpack.c.l.b16 %v3344
    %v4754 = vunpack.c.l.b16 %v3345
    %v4755 = vunpack.c.h.b16 %v3345
    %v4756 = vunpack.c.l.b16 %v3346
    %v4757 = vunpack.c.h.b16 %v3346
    %v4758 = vunpack.c.l.b16 %v3347
    %v4759 = vunpack.c.h.b16 %v3347
    %v4760 = vunpack.c.l.b16 %v3348
    %v4761 = vunpack.c.l.b16 %v3349
    %v4762 = vunpack.c.h.b16 %v3349
    %v4763 = vunpack.c.l.b16 %v3350
    %v4764 = vunpack.c.h.b16 %v3350
    %v4765 = vunpack.c.l.b16 %v3351
    %v4766 = vunpack.c.h.b16 %v3351
    %v4767 = vunpack.c.l.b16 %v3352
    %v4768 = vunpack.c.l.b16 %v3353
    %v4769 = vunpack.c.h.b16 %v3353
    %v4770 = vunpack.c.l.b16 %v3354
    %v4771 = vunpack.c.h.b16 %v3354
    %v4772 = vunpack.c.l.b16 %v3355
    %v4773 = vunpack.c.h.b16 %v3355
    %v4774 = vunpack.c.l.b16 %v3356
    %v4775 = vunpack.c.l.b16 %v3357
    %v4776 = vunpack.c.h.b16 %v3357
    %v4777 = vunpack.c.l.b16 %v3358
    %v4778 = vunpack.c.h.b16 %v3358
    %v4779 = vunpack.c.l.b16 %v3359
    %v4780 = vunpack.c.h.b16 %v3359
    %v4781 = vunpack.c.l.b16 %v3360
    %v4782 = vunpack.c.l.b16 %v3361
    %v4783 = vunpack.c.h.b16 %v3361
    %v4784 = vunpack.c.l.b16 %v3362
    %v4785 = vunpack.c.h.b16 %v3362
    %v4786 = vunpack.c.l.b16 %v3363
    %v4787 = vunpack.c.h.b16 %v3363
    %v4788 = vunpack.c.l.b16 %v3364
    %v4789 = vpack.c.b16 %v3900, %v3893
    %v4790 = vpack.c.b16 %v3901, %v3894
    %v4791 = vpack.c.b16 %v3902, %v3895
    %v4792 = vpack.c.b16 %v3903, %v3896
    %v4793 = vpack.c.b16 %v3904, %v3897
    %v4794 = vpack.c.b16 %v3905, %v3898
    %v4795 = vpack.c.b16 %v3906, %v3899
    %v4796 = vpack.c.b16 %v3914, %v3907
    %v4797 = vpack.c.b16 %v3915, %v3908
    %v4798 = vpack.c.b16 %v3916, %v3909
    %v4799 = vpack.c.b16 %v3917, %v3910
    %v4800 = vpack.c.b16 %v3918, %v3911
    %v4801 = vpack.c.b16 %v3919, %v3912
    %v4802 = vpack.c.b16 %v3920, %v3913
    %v4803 = vpack.c.b16 %v3928, %v3921
    %v4804 = vpack.c.b16 %v3929, %v3922
    %v4805 = vpack.c.b16 %v3930, %v3923
    %v4806 = vpack.c.b16 %v3931, %v3924
    %v4807 = vpack.c.b16 %v3932, %v3925
    %v4808 = vpack.c.b16 %v3933, %v3926
    %v4809 = vpack.c.b16 %v3934, %v3927
    %v4810 = vpack.c.b16 %v3942, %v3935
    %v4811 = vpack.c.b16 %v3943, %v3936
    %v4812 = vpack.c.b16 %v3944, %v3937
    %v4813 = vpack.c.b16 %v3945, %v3938
    %v4814 = vpack.c.b16 %v3946, %v3939
    %v4815 = vpack.c.b16 %v3947, %v3940
    %v4816 = vpack.c.b16 %v3948, %v3941
    %v4817 = vpack.c.b16 %v3956, %v3949
    %v4818 = vpack.c.b16 %v3957, %v3950
    %v4819 = vpack.c.b16 %v3958, %v3951
    %v4820 = vpack.c.b16 %v3959, %v3952
    %v4821 = vpack.c.b16 %v3960, %v3953
    %v4822 = vpack.c.b16 %v3961, %v3954
    %v4823 = vpack.c.b16 %v3962, %v3955
    %v4824 = vpack.c.b16 %v3970, %v3963
    %v4825 = vpack.c.b16 %v3971, %v3964
    %v4826 = vpack.c.b16 %v3972, %v3965
    %v4827 = vpack.c.b16 %v3973, %v3966
    %v4828 = vpack.c.b16 %v3974, %v3967
    %v4829 = vpack.c.b16 %v3975, %v3968
    %v4830 = vpack.c.b16 %v3976, %v3969
    %v4831 = vpack.c.b16 %v3984, %v3977
    %v4832 = vpack.c.b16 %v3985, %v3978
    %v4833 = vpack.c.b16 %v3986, %v3979
    %v4834 = vpack.c.b16 %v3987, %v3980
    %v4835 = vpack.c.b16 %v3988, %v3981
    %v4836 = vpack.c.b16 %v3989, %v3982
    %v4837 = vpack.c.b16 %v3990, %v3983
    %v4838 = vpack.c.b16 %v3998, %v3991
    %v4839 = vpack.c.b16 %v3999, %v3992
    %v4840 = vpack.c.b16 %v4000, %v3993
    %v4841 = vpack.c.b16 %v4001, %v3994
    %v4842 = vpack.c.b16 %v4002, %v3995
    %v4843 = vpack.c.b16 %v4003, %v3996
    %v4844 = vpack.c.b16 %v4004, %v3997
    %v4845 = vpack.c.b16 %v4012, %v4005
    %v4846 = vpack.c.b16 %v4013, %v4006
    %v4847 = vpack.c.b16 %v4014, %v4007
    %v4848 = vpack.c.b16 %v4015, %v4008
    %v4849 = vpack.c.b16 %v4016, %v4009
    %v4850 = vpack.c.b16 %v4017, %v4010
    %v4851 = vpack.c.b16 %v4018, %v4011
    %v4852 = vpack.c.b16 %v4026, %v4019
    %v4853 = vpack.c.b16 %v4027, %v4020
    %v4854 = vpack.c.b16 %v4028, %v4021
    %v4855 = vpack.c.b16 %v4029, %v4022
    %v4856 = vpack.c.b16 %v4030, %v4023
    %v4857 = vpack.c.b16 %v4031, %v4024
    %v4858 = vpack.c.b16 %v4032, %v4025
    %v4859 = vpack.c.b16 %v4040, %v4033
    %v4860 = vpack.c.b16 %v4041, %v4034
    %v4861 = vpack.c.b16 %v4042, %v4035
    %v4862 = vpack.c.b16 %v4043, %v4036
    %v4863 = vpack.c.b16 %v4044, %v4037
    %v4864 = vpack.c.b16 %v4045, %v4038
    %v4865 = vpack.c.b16 %v4046, %v4039
    %v4866 = vpack.c.b16 %v4054, %v4047
    %v4867 = vpack.c.b16 %v4055, %v4048
    %v4868 = vpack.c.b16 %v4056, %v4049
    %v4869 = vpack.c.b16 %v4057, %v4050
    %v4870 = vpack.c.b16 %v4058, %v4051
    %v4871 = vpack.c.b16 %v4059, %v4052
    %v4872 = vpack.c.b16 %v4060, %v4053
    %v4873 = vpack.c.b16 %v4068, %v4061
    %v4874 = vpack.c.b16 %v4069, %v4062
    %v4875 = vpack.c.b16 %v4070, %v4063
    %v4876 = vpack.c.b16 %v4071, %v4064
    %v4877 = vpack.c.b16 %v4072, %v4065
    %v4878 = vpack.c.b16 %v4073, %v4066
    %v4879 = vpack.c.b16 %v4074, %v4067
    %v4880 = vpack.c.b16 %v4082, %v4075
    %v4881 = vpack.c.b16 %v4083, %v4076
    %v4882 = vpack.c.b16 %v4084, %v4077
    %v4883 = vpack.c.b16 %v4085, %v4078
    %v4884 = vpack.c.b16 %v4086, %v4079
    %v4885 = vpack.c.b16 %v4087, %v4080
    %v4886 = vpack.c.b16 %v4088, %v4081
    %v4887 = vpack.c.b16 %v4096, %v4089
    %v4888 = vpack.c.b16 %v4097, %v4090
    %v4889 = vpack.c.b16 %v4098, %v4091
    %v4890 = vpack.c.b16 %v4099, %v4092
    %v4891 = vpack.c.b16 %v4100, %v4093
    %v4892 = vpack.c.b16 %v4101, %v4094
    %v4893 = vpack.c.b16 %v4102, %v4095
    %v4894 = vpack.c.b16 %v4110, %v4103
    %v4895 = vpack.c.b16 %v4111, %v4104
    %v4896 = vpack.c.b16 %v4112, %v4105
    %v4897 = vpack.c.b16 %v4113, %v4106
    %v4898 = vpack.c.b16 %v4114, %v4107
    %v4899 = vpack.c.b16 %v4115, %v4108
    %v4900 = vpack.c.b16 %v4116, %v4109
    %v4901 = vpack.c.b16 %v4124, %v4117
    %v4902 = vpack.c.b16 %v4125, %v4118
    %v4903 = vpack.c.b16 %v4126, %v4119
    %v4904 = vpack.c.b16 %v4127, %v4120
    %v4905 = vpack.c.b16 %v4128, %v4121
    %v4906 = vpack.c.b16 %v4129, %v4122
    %v4907 = vpack.c.b16 %v4130, %v4123
    %v4908 = vpack.c.b16 %v4138, %v4131
    %v4909 = vpack.c.b16 %v4139, %v4132
    %v4910 = vpack.c.b16 %v4140, %v4133
    %v4911 = vpack.c.b16 %v4141, %v4134
    %v4912 = vpack.c.b16 %v4142, %v4135
    %v4913 = vpack.c.b16 %v4143, %v4136
    %v4914 = vpack.c.b16 %v4144, %v4137
    %v4915 = vpack.c.b16 %v4152, %v4145
    %v4916 = vpack.c.b16 %v4153, %v4146
    %v4917 = vpack.c.b16 %v4154, %v4147
    %v4918 = vpack.c.b16 %v4155, %v4148
    %v4919 = vpack.c.b16 %v4156, %v4149
    %v4920 = vpack.c.b16 %v4157, %v4150
    %v4921 = vpack.c.b16 %v4158, %v4151
    %v4922 = vpack.c.b16 %v4166, %v4159
    %v4923 = vpack.c.b16 %v4167, %v4160
    %v4924 = vpack.c.b16 %v4168, %v4161
    %v4925 = vpack.c.b16 %v4169, %v4162
    %v4926 = vpack.c.b16 %v4170, %v4163
    %v4927 = vpack.c.b16 %v4171, %v4164
    %v4928 = vpack.c.b16 %v4172, %v4165
    %v4929 = vpack.c.b16 %v4180, %v4173
    %v4930 = vpack.c.b16 %v4181, %v4174
    %v4931 = vpack.c.b16 %v4182, %v4175
    %v4932 = vpack.c.b16 %v4183, %v4176
    %v4933 = vpack.c.b16 %v4184, %v4177
    %v4934 = vpack.c.b16 %v4185, %v4178
    %v4935 = vpack.c.b16 %v4186, %v4179
    %v4936 = vpack.c.b16 %v4194, %v4187
    %v4937 = vpack.c.b16 %v4195, %v4188
    %v4938 = vpack.c.b16 %v4196, %v4189
    %v4939 = vpack.c.b16 %v4197, %v4190
    %v4940 = vpack.c.b16 %v4198, %v4191
    %v4941 = vpack.c.b16 %v4199, %v4192
    %v4942 = vpack.c.b16 %v4200, %v4193
    %v4943 = vpack.c.b16 %v4208, %v4201
    %v4944 = vpack.c.b16 %v4209, %v4202
    %v4945 = vpack.c.b16 %v4210, %v4203
    %v4946 = vpack.c.b16 %v4211, %v4204
    %v4947 = vpack.c.b16 %v4212, %v4205
    %v4948 = vpack.c.b16 %v4213, %v4206
    %v4949 = vpack.c.b16 %v4214, %v4207
    %v4950 = vpack.c.b16 %v4222, %v4215
    %v4951 = vpack.c.b16 %v4223, %v4216
    %v4952 = vpack.c.b16 %v4224, %v4217
    %v4953 = vpack.c.b16 %v4225, %v4218
    %v4954 = vpack.c.b16 %v4226, %v4219
    %v4955 = vpack.c.b16 %v4227, %v4220
    %v4956 = vpack.c.b16 %v4228, %v4221
    %v4957 = vpack.c.b16 %v4236, %v4229
    %v4958 = vpack.c.b16 %v4237, %v4230
    %v4959 = vpack.c.b16 %v4238, %v4231
    %v4960 = vpack.c.b16 %v4239, %v4232
    %v4961 = vpack.c.b16 %v4240, %v4233
    %v4962 = vpack.c.b16 %v4241, %v4234
    %v4963 = vpack.c.b16 %v4242, %v4235
    %v4964 = vpack.c.b16 %v4250, %v4243
    %v4965 = vpack.c.b16 %v4251, %v4244
    %v4966 = vpack.c.b16 %v4252, %v4245
    %v4967 = vpack.c.b16 %v4253, %v4246
    %v4968 = vpack.c.b16 %v4254, %v4247
    %v4969 = vpack.c.b16 %v4255, %v4248
    %v4970 = vpack.c.b16 %v4256, %v4249
    %v4971 = vpack.c.b16 %v4264, %v4257
    %v4972 = vpack.c.b16 %v4265, %v4258
    %v4973 = vpack.c.b16 %v4266, %v4259
    %v4974 = vpack.c.b16 %v4267, %v4260
    %v4975 = vpack.c.b16 %v4268, %v4261
    %v4976 = vpack.c.b16 %v4269, %v4262
    %v4977 = vpack.c.b16 %v4270, %v4263
    %v4978 = vpack.c.b16 %v4278, %v4271
    %v4979 = vpack.c.b16 %v4279, %v4272
    %v4980 = vpack.c.b16 %v4280, %v4273
    %v4981 = vpack.c.b16 %v4281, %v4274
    %v4982 = vpack.c.b16 %v4282, %v4275
    %v4983 = vpack.c.b16 %v4283, %v4276
    %v4984 = vpack.c.b16 %v4284, %v4277
    %v4985 = vpack.c.b16 %v4292, %v4285
    %v4986 = vpack.c.b16 %v4293, %v4286
    %v4987 = vpack.c.b16 %v4294, %v4287
    %v4988 = vpack.c.b16 %v4295, %v4288
    %v4989 = vpack.c.b16 %v4296, %v4289
    %v4990 = vpack.c.b16 %v4297, %v4290
    %v4991 = vpack.c.b16 %v4298, %v4291
    %v4992 = vpack.c.b16 %v4306, %v4299
    %v4993 = vpack.c.b16 %v4307, %v4300
    %v4994 = vpack.c.b16 %v4308, %v4301
    %v4995 = vpack.c.b16 %v4309, %v4302
    %v4996 = vpack.c.b16 %v4310, %v4303
    %v4997 = vpack.c.b16 %v4311, %v4304
    %v4998 = vpack.c.b16 %v4312, %v4305
    %v4999 = vpack.c.b16 %v4320, %v4313
    %v5000 = vpack.c.b16 %v4321, %v4314
    %v5001 = vpack.c.b16 %v4322, %v4315
    %v5002 = vpack.c.b16 %v4323, %v4316
    %v5003 = vpack.c.b16 %v4324, %v4317
    %v5004 = vpack.c.b16 %v4325, %v4318
    %v5005 = vpack.c.b16 %v4326, %v4319
    %v5006 = vpack.c.b16 %v4334, %v4327
    %v5007 = vpack.c.b16 %v4335, %v4328
    %v5008 = vpack.c.b16 %v4336, %v4329
    %v5009 = vpack.c.b16 %v4337, %v4330
    %v5010 = vpack.c.b16 %v4338, %v4331
    %v5011 = vpack.c.b16 %v4339, %v4332
    %v5012 = vpack.c.b16 %v4340, %v4333
    %v5013 = vpack.c.b16 %v4348, %v4341
    %v5014 = vpack.c.b16 %v4349, %v4342
    %v5015 = vpack.c.b16 %v4350, %v4343
    %v5016 = vpack.c.b16 %v4351, %v4344
    %v5017 = vpack.c.b16 %v4352, %v4345
    %v5018 = vpack.c.b16 %v4353, %v4346
    %v5019 = vpack.c.b16 %v4354, %v4347
    %v5020 = vpack.c.b16 %v4362, %v4355
    %v5021 = vpack.c.b16 %v4363, %v4356
    %v5022 = vpack.c.b16 %v4364, %v4357
    %v5023 = vpack.c.b16 %v4365, %v4358
    %v5024 = vpack.c.b16 %v4366, %v4359
    %v5025 = vpack.c.b16 %v4367, %v4360
    %v5026 = vpack.c.b16 %v4368, %v4361
    %v5027 = vpack.c.b16 %v4376, %v4369
    %v5028 = vpack.c.b16 %v4377, %v4370
    %v5029 = vpack.c.b16 %v4378, %v4371
    %v5030 = vpack.c.b16 %v4379, %v4372
    %v5031 = vpack.c.b16 %v4380, %v4373
    %v5032 = vpack.c.b16 %v4381, %v4374
    %v5033 = vpack.c.b16 %v4382, %v4375
    %v5034 = vpack.c.b16 %v4390, %v4383
    %v5035 = vpack.c.b16 %v4391, %v4384
    %v5036 = vpack.c.b16 %v4392, %v4385
    %v5037 = vpack.c.b16 %v4393, %v4386
    %v5038 = vpack.c.b16 %v4394, %v4387
    %v5039 = vpack.c.b16 %v4395, %v4388
    %v5040 = vpack.c.b16 %v4396, %v4389
    %v5041 = vpack.c.b16 %v4404, %v4397
    %v5042 = vpack.c.b16 %v4405, %v4398
    %v5043 = vpack.c.b16 %v4406, %v4399
    %v5044 = vpack.c.b16 %v4407, %v4400
    %v5045 = vpack.c.b16 %v4408, %v4401
    %v5046 = vpack.c.b16 %v4409, %v4402
    %v5047 = vpack.c.b16 %v4410, %v4403
    %v5048 = vpack.c.b16 %v4418, %v4411
    %v5049 = vpack.c.b16 %v4419, %v4412
    %v5050 = vpack.c.b16 %v4420, %v4413
    %v5051 = vpack.c.b16 %v4421, %v4414
    %v5052 = vpack.c.b16 %v4422, %v4415
    %v5053 = vpack.c.b16 %v4423, %v4416
    %v5054 = vpack.c.b16 %v4424, %v4417
    %v5055 = vpack.c.b16 %v4432, %v4425
    %v5056 = vpack.c.b16 %v4433, %v4426
    %v5057 = vpack.c.b16 %v4434, %v4427
    %v5058 = vpack.c.b16 %v4435, %v4428
    %v5059 = vpack.c.b16 %v4436, %v4429
    %v5060 = vpack.c.b16 %v4437, %v4430
    %v5061 = vpack.c.b16 %v4438, %v4431
    %v5062 = vpack.c.b16 %v4446, %v4439
    %v5063 = vpack.c.b16 %v4447, %v4440
    %v5064 = vpack.c.b16 %v4448, %v4441
    %v5065 = vpack.c.b16 %v4449, %v4442
    %v5066 = vpack.c.b16 %v4450, %v4443
    %v5067 = vpack.c.b16 %v4451, %v4444
    %v5068 = vpack.c.b16 %v4452, %v4445
    %v5069 = vpack.c.b16 %v4460, %v4453
    %v5070 = vpack.c.b16 %v4461, %v4454
    %v5071 = vpack.c.b16 %v4462, %v4455
    %v5072 = vpack.c.b16 %v4463, %v4456
    %v5073 = vpack.c.b16 %v4464, %v4457
    %v5074 = vpack.c.b16 %v4465, %v4458
    %v5075 = vpack.c.b16 %v4466, %v4459
    %v5076 = vpack.c.b16 %v4474, %v4467
    %v5077 = vpack.c.b16 %v4475, %v4468
    %v5078 = vpack.c.b16 %v4476, %v4469
    %v5079 = vpack.c.b16 %v4477, %v4470
    %v5080 = vpack.c.b16 %v4478, %v4471
    %v5081 = vpack.c.b16 %v4479, %v4472
    %v5082 = vpack.c.b16 %v4480, %v4473
    %v5083 = vpack.c.b16 %v4488, %v4481
    %v5084 = vpack.c.b16 %v4489, %v4482
    %v5085 = vpack.c.b16 %v4490, %v4483
    %v5086 = vpack.c.b16 %v4491, %v4484
    %v5087 = vpack.c.b16 %v4492, %v4485
    %v5088 = vpack.c.b16 %v4493, %v4486
    %v5089 = vpack.c.b16 %v4494, %v4487
    %v5090 = vpack.c.b16 %v4502, %v4495
    %v5091 = vpack.c.b16 %v4503, %v4496
    %v5092 = vpack.c.b16 %v4504, %v4497
    %v5093 = vpack.c.b16 %v4505, %v4498
    %v5094 = vpack.c.b16 %v4506, %v4499
    %v5095 = vpack.c.b16 %v4507, %v4500
    %v5096 = vpack.c.b16 %v4508, %v4501
    %v5097 = vpack.c.b16 %v4516, %v4509
    %v5098 = vpack.c.b16 %v4517, %v4510
    %v5099 = vpack.c.b16 %v4518, %v4511
    %v5100 = vpack.c.b16 %v4519, %v4512
    %v5101 = vpack.c.b16 %v4520, %v4513
    %v5102 = vpack.c.b16 %v4521, %v4514
    %v5103 = vpack.c.b16 %v4522, %v4515
    %v5104 = vpack.c.b16 %v4530, %v4523
    %v5105 = vpack.c.b16 %v4531, %v4524
    %v5106 = vpack.c.b16 %v4532, %v4525
    %v5107 = vpack.c.b16 %v4533, %v4526
    %v5108 = vpack.c.b16 %v4534, %v4527
    %v5109 = vpack.c.b16 %v4535, %v4528
    %v5110 = vpack.c.b16 %v4536, %v4529
    %v5111 = vpack.c.b16 %v4544, %v4537
    %v5112 = vpack.c.b16 %v4545, %v4538
    %v5113 = vpack.c.b16 %v4546, %v4539
    %v5114 = vpack.c.b16 %v4547, %v4540
    %v5115 = vpack.c.b16 %v4548, %v4541
    %v5116 = vpack.c.b16 %v4549, %v4542
    %v5117 = vpack.c.b16 %v4550, %v4543
    %v5118 = vpack.c.b16 %v4558, %v4551
    %v5119 = vpack.c.b16 %v4559, %v4552
    %v5120 = vpack.c.b16 %v4560, %v4553
    %v5121 = vpack.c.b16 %v4561, %v4554
    %v5122 = vpack.c.b16 %v4562, %v4555
    %v5123 = vpack.c.b16 %v4563, %v4556
    %v5124 = vpack.c.b16 %v4564, %v4557
    %v5125 = vpack.c.b16 %v4572, %v4565
    %v5126 = vpack.c.b16 %v4573, %v4566
    %v5127 = vpack.c.b16 %v4574, %v4567
    %v5128 = vpack.c.b16 %v4575, %v4568
    %v5129 = vpack.c.b16 %v4576, %v4569
    %v5130 = vpack.c.b16 %v4577, %v4570
    %v5131 = vpack.c.b16 %v4578, %v4571
    %v5132 = vpack.c.b16 %v4586, %v4579
    %v5133 = vpack.c.b16 %v4587, %v4580
    %v5134 = vpack.c.b16 %v4588, %v4581
    %v5135 = vpack.c.b16 %v4589, %v4582
    %v5136 = vpack.c.b16 %v4590, %v4583
    %v5137 = vpack.c.b16 %v4591, %v4584
    %v5138 = vpack.c.b16 %v4592, %v4585
    %v5139 = vpack.c.b16 %v4600, %v4593
    %v5140 = vpack.c.b16 %v4601, %v4594
    %v5141 = vpack.c.b16 %v4602, %v4595
    %v5142 = vpack.c.b16 %v4603, %v4596
    %v5143 = vpack.c.b16 %v4604, %v4597
    %v5144 = vpack.c.b16 %v4605, %v4598
    %v5145 = vpack.c.b16 %v4606, %v4599
    %v5146 = vpack.c.b16 %v4614, %v4607
    %v5147 = vpack.c.b16 %v4615, %v4608
    %v5148 = vpack.c.b16 %v4616, %v4609
    %v5149 = vpack.c.b16 %v4617, %v4610
    %v5150 = vpack.c.b16 %v4618, %v4611
    %v5151 = vpack.c.b16 %v4619, %v4612
    %v5152 = vpack.c.b16 %v4620, %v4613
    %v5153 = vpack.c.b16 %v4628, %v4621
    %v5154 = vpack.c.b16 %v4629, %v4622
    %v5155 = vpack.c.b16 %v4630, %v4623
    %v5156 = vpack.c.b16 %v4631, %v4624
    %v5157 = vpack.c.b16 %v4632, %v4625
    %v5158 = vpack.c.b16 %v4633, %v4626
    %v5159 = vpack.c.b16 %v4634, %v4627
    %v5160 = vpack.c.b16 %v4642, %v4635
    %v5161 = vpack.c.b16 %v4643, %v4636
    %v5162 = vpack.c.b16 %v4644, %v4637
    %v5163 = vpack.c.b16 %v4645, %v4638
    %v5164 = vpack.c.b16 %v4646, %v4639
    %v5165 = vpack.c.b16 %v4647, %v4640
    %v5166 = vpack.c.b16 %v4648, %v4641
    %v5167 = vpack.c.b16 %v4656, %v4649
    %v5168 = vpack.c.b16 %v4657, %v4650
    %v5169 = vpack.c.b16 %v4658, %v4651
    %v5170 = vpack.c.b16 %v4659, %v4652
    %v5171 = vpack.c.b16 %v4660, %v4653
    %v5172 = vpack.c.b16 %v4661, %v4654
    %v5173 = vpack.c.b16 %v4662, %v4655
    %v5174 = vpack.c.b16 %v4670, %v4663
    %v5175 = vpack.c.b16 %v4671, %v4664
    %v5176 = vpack.c.b16 %v4672, %v4665
    %v5177 = vpack.c.b16 %v4673, %v4666
    %v5178 = vpack.c.b16 %v4674, %v4667
    %v5179 = vpack.c.b16 %v4675, %v4668
    %v5180 = vpack.c.b16 %v4676, %v4669
    %v5181 = vpack.c.b16 %v4684, %v4677
    %v5182 = vpack.c.b16 %v4685, %v4678
    %v5183 = vpack.c.b16 %v4686, %v4679
    %v5184 = vpack.c.b16 %v4687, %v4680
    %v5185 = vpack.c.b16 %v4688, %v4681
    %v5186 = vpack.c.b16 %v4689, %v4682
    %v5187 = vpack.c.b16 %v4690, %v4683
    %v5188 = vpack.c.b16 %v4698, %v4691
    %v5189 = vpack.c.b16 %v4699, %v4692
    %v5190 = vpack.c.b16 %v4700, %v4693
    %v5191 = vpack.c.b16 %v4701, %v4694
    %v5192 = vpack.c.b16 %v4702, %v4695
    %v5193 = vpack.c.b16 %v4703, %v4696
    %v5194 = vpack.c.b16 %v4704, %v4697
    %v5195 = vpack.c.b16 %v4712, %v4705
    %v5196 = vpack.c.b16 %v4713, %v4706
    %v5197 = vpack.c.b16 %v4714, %v4707
    %v5198 = vpack.c.b16 %v4715, %v4708
    %v5199 = vpack.c.b16 %v4716, %v4709
    %v5200 = vpack.c.b16 %v4717, %v4710
    %v5201 = vpack.c.b16 %v4718, %v4711
    %v5202 = vpack.c.b16 %v4726, %v4719
    %v5203 = vpack.c.b16 %v4727, %v4720
    %v5204 = vpack.c.b16 %v4728, %v4721
    %v5205 = vpack.c.b16 %v4729, %v4722
    %v5206 = vpack.c.b16 %v4730, %v4723
    %v5207 = vpack.c.b16 %v4731, %v4724
    %v5208 = vpack.c.b16 %v4732, %v4725
    %v5209 = vpack.c.b16 %v4740, %v4733
    %v5210 = vpack.c.b16 %v4741, %v4734
    %v5211 = vpack.c.b16 %v4742, %v4735
    %v5212 = vpack.c.b16 %v4743, %v4736
    %v5213 = vpack.c.b16 %v4744, %v4737
    %v5214 = vpack.c.b16 %v4745, %v4738
    %v5215 = vpack.c.b16 %v4746, %v4739
    %v5216 = vpack.c.b16 %v4754, %v4747
    %v5217 = vpack.c.b16 %v4755, %v4748
    %v5218 = vpack.c.b16 %v4756, %v4749
    %v5219 = vpack.c.b16 %v4757, %v4750
    %v5220 = vpack.c.b16 %v4758, %v4751
    %v5221 = vpack.c.b16 %v4759, %v4752
    %v5222 = vpack.c.b16 %v4760, %v4753
    %v5223 = vpack.c.b16 %v4768, %v4761
    %v5224 = vpack.c.b16 %v4769, %v4762
    %v5225 = vpack.c.b16 %v4770, %v4763
    %v5226 = vpack.c.b16 %v4771, %v4764
    %v5227 = vpack.c.b16 %v4772, %v4765
    %v5228 = vpack.c.b16 %v4773, %v4766
    %v5229 = vpack.c.b16 %v4774, %v4767
    %v5230 = vpack.c.b16 %v4782, %v4775
    %v5231 = vpack.c.b16 %v4783, %v4776
    %v5232 = vpack.c.b16 %v4784, %v4777
    %v5233 = vpack.c.b16 %v4785, %v4778
    %v5234 = vpack.c.b16 %v4786, %v4779
    %v5235 = vpack.c.b16 %v4787, %v4780
    %v5236 = vpack.c.b16 %v4788, %v4781
    %5685 = vmatpush.bf16.msra.mxu0 %v4838
    %5686 = vmatpush.bf16.msra.mxu0 %v4831
    %5687 = vmatpush.bf16.msra.mxu0 %v4824
    %5688 = vmatpush.bf16.msra.mxu0 %v4817
    %5689 = vmatpush.bf16.msra.mxu0 %v4810
    %5690 = vmatpush.bf16.msra.mxu0 %v4803
    %5691 = vmatpush.bf16.msra.mxu0 %v4796
    %5692 = vmatpush.bf16.msra.mxu0 %v4789
    %5693 = vmatmul.bf16.gmra.mxu0 %v2845
    %v5694 = vpop.f32.mrf.mxu0
    %v5695 = vadd.f32 %v3367, %v5694
    %v5696 = vpop.f32.mrf.mxu0
    %v5697 = vadd.f32 %v3367, %v5696
    %5698 = vdwg.mxu0
    %5699 = vmatpush.bf16.msra.mxu0 %v4894
    %5700 = vmatpush.bf16.msra.mxu0 %v4887
    %5701 = vmatpush.bf16.msra.mxu0 %v4880
    %5702 = vmatpush.bf16.msra.mxu0 %v4873
    %5703 = vmatpush.bf16.msra.mxu0 %v4866
    %5704 = vmatpush.bf16.msra.mxu0 %v4859
    %5705 = vmatpush.bf16.msra.mxu0 %v4852
    %5706 = vmatpush.bf16.msra.mxu0 %v4845
    %5707 = vmatmul.bf16.gmra.mxu0 %v2846
    %v5708 = vpop.f32.mrf.mxu0
    %v5709 = vadd.f32 %v5695, %v5708
    %v5710 = vpop.f32.mrf.mxu0
    %v5711 = vadd.f32 %v5697, %v5710
    %5712 = vdwg.mxu0
    %5713 = vmatpush.bf16.msra.mxu0 %v4950
    %5714 = vmatpush.bf16.msra.mxu0 %v4943
    %5715 = vmatpush.bf16.msra.mxu0 %v4936
    %5716 = vmatpush.bf16.msra.mxu0 %v4929
    %5717 = vmatpush.bf16.msra.mxu0 %v4922
    %5718 = vmatpush.bf16.msra.mxu0 %v4915
    %5719 = vmatpush.bf16.msra.mxu0 %v4908
    %5720 = vmatpush.bf16.msra.mxu0 %v4901
    %5721 = vmatmul.bf16.gmra.mxu0 %v2847
    %v5722 = vpop.f32.mrf.mxu0
    %v5723 = vadd.f32 %v5709, %v5722
    %v5724 = vpop.f32.mrf.mxu0
    %v5725 = vadd.f32 %v5711, %v5724
    %5726 = vdwg.mxu0
    %5727 = vmatpush.bf16.msra.mxu0 %v5006
    %5728 = vmatpush.bf16.msra.mxu0 %v4999
    %5729 = vmatpush.bf16.msra.mxu0 %v4992
    %5730 = vmatpush.bf16.msra.mxu0 %v4985
    %5731 = vmatpush.bf16.msra.mxu0 %v4978
    %5732 = vmatpush.bf16.msra.mxu0 %v4971
    %5733 = vmatpush.bf16.msra.mxu0 %v4964
    %5734 = vmatpush.bf16.msra.mxu0 %v4957
    %5735 = vmatmul.bf16.gmra.mxu0 %v2848
    %v5736 = vpop.f32.mrf.mxu0
    %v5737 = vadd.f32 %v5723, %v5736
    %v5738 = vpop.f32.mrf.mxu0
    %v5739 = vadd.f32 %v5725, %v5738
    %5740 = vdwg.mxu0
    %5741 = vmatpush.bf16.msra.mxu0 %v5062
    %5742 = vmatpush.bf16.msra.mxu0 %v5055
    %5743 = vmatpush.bf16.msra.mxu0 %v5048
    %5744 = vmatpush.bf16.msra.mxu0 %v5041
    %5745 = vmatpush.bf16.msra.mxu0 %v5034
    %5746 = vmatpush.bf16.msra.mxu0 %v5027
    %5747 = vmatpush.bf16.msra.mxu0 %v5020
    %5748 = vmatpush.bf16.msra.mxu0 %v5013
    %5749 = vmatmul.bf16.gmra.mxu0 %v2849
    %v5750 = vpop.f32.mrf.mxu0
    %v5751 = vadd.f32 %v5737, %v5750
    %v5752 = vpop.f32.mrf.mxu0
    %v5753 = vadd.f32 %v5739, %v5752
    %5754 = vdwg.mxu0
    %5755 = vmatpush.bf16.msra.mxu0 %v5118
    %5756 = vmatpush.bf16.msra.mxu0 %v5111
    %5757 = vmatpush.bf16.msra.mxu0 %v5104
    %5758 = vmatpush.bf16.msra.mxu0 %v5097
    %5759 = vmatpush.bf16.msra.mxu0 %v5090
    %5760 = vmatpush.bf16.msra.mxu0 %v5083
    %5761 = vmatpush.bf16.msra.mxu0 %v5076
    %5762 = vmatpush.bf16.msra.mxu0 %v5069
    %5763 = vmatmul.bf16.gmra.mxu0 %v2850
    %v5764 = vpop.f32.mrf.mxu0
    %v5765 = vadd.f32 %v5751, %v5764
    %v5766 = vpop.f32.mrf.mxu0
    %v5767 = vadd.f32 %v5753, %v5766
    %5768 = vdwg.mxu0
    %5769 = vmatpush.bf16.msra.mxu0 %v5174
    %5770 = vmatpush.bf16.msra.mxu0 %v5167
    %5771 = vmatpush.bf16.msra.mxu0 %v5160
    %5772 = vmatpush.bf16.msra.mxu0 %v5153
    %5773 = vmatpush.bf16.msra.mxu0 %v5146
    %5774 = vmatpush.bf16.msra.mxu0 %v5139
    %5775 = vmatpush.bf16.msra.mxu0 %v5132
    %5776 = vmatpush.bf16.msra.mxu0 %v5125
    %5777 = vmatmul.bf16.gmra.mxu0 %v2851
    %v5778 = vpop.f32.mrf.mxu0
    %v5779 = vadd.f32 %v5765, %v5778
    %v5780 = vpop.f32.mrf.mxu0
    %v5781 = vadd.f32 %v5767, %v5780
    %5782 = vdwg.mxu0
    %5783 = vmatpush.bf16.msra.mxu0 %v5230
    %5784 = vmatpush.bf16.msra.mxu0 %v5223
    %5785 = vmatpush.bf16.msra.mxu0 %v5216
    %5786 = vmatpush.bf16.msra.mxu0 %v5209
    %5787 = vmatpush.bf16.msra.mxu0 %v5202
    %5788 = vmatpush.bf16.msra.mxu0 %v5195
    %5789 = vmatpush.bf16.msra.mxu0 %v5188
    %5790 = vmatpush.bf16.msra.mxu0 %v5181
    %5791 = vmatmul.bf16.gmra.mxu0 %v2852
    %v5792 = vpop.f32.mrf.mxu0
    %v5793 = vadd.f32 %v5779, %v5792
    %v5794 = vpop.f32.mrf.mxu0
    %v5795 = vadd.f32 %v5781, %v5794
    %5796 = vdwg.mxu0
    %5797 = vmatpush.bf16.msra.mxu0 %v4839
    %5798 = vmatpush.bf16.msra.mxu0 %v4832
    %5799 = vmatpush.bf16.msra.mxu0 %v4825
    %5800 = vmatpush.bf16.msra.mxu0 %v4818
    %5801 = vmatpush.bf16.msra.mxu0 %v4811
    %5802 = vmatpush.bf16.msra.mxu0 %v4804
    %5803 = vmatpush.bf16.msra.mxu0 %v4797
    %5804 = vmatpush.bf16.msra.mxu0 %v4790
    %5805 = vmatmul.bf16.gmra.mxu0 %v2845
    %v5806 = vpop.f32.mrf.mxu0
    %v5807 = vadd.f32 %v3368, %v5806
    %v5808 = vpop.f32.mrf.mxu0
    %v5809 = vadd.f32 %v3368, %v5808
    %5810 = vdwg.mxu0
    %5811 = vmatpush.bf16.msra.mxu0 %v4895
    %5812 = vmatpush.bf16.msra.mxu0 %v4888
    %5813 = vmatpush.bf16.msra.mxu0 %v4881
    %5814 = vmatpush.bf16.msra.mxu0 %v4874
    %5815 = vmatpush.bf16.msra.mxu0 %v4867
    %5816 = vmatpush.bf16.msra.mxu0 %v4860
    %5817 = vmatpush.bf16.msra.mxu0 %v4853
    %5818 = vmatpush.bf16.msra.mxu0 %v4846
    %5819 = vmatmul.bf16.gmra.mxu0 %v2846
    %v5820 = vpop.f32.mrf.mxu0
    %v5821 = vadd.f32 %v5807, %v5820
    %v5822 = vpop.f32.mrf.mxu0
    %v5823 = vadd.f32 %v5809, %v5822
    %5824 = vdwg.mxu0
    %5825 = vmatpush.bf16.msra.mxu0 %v4951
    %5826 = vmatpush.bf16.msra.mxu0 %v4944
    %5827 = vmatpush.bf16.msra.mxu0 %v4937
    %5828 = vmatpush.bf16.msra.mxu0 %v4930
    %5829 = vmatpush.bf16.msra.mxu0 %v4923
    %5830 = vmatpush.bf16.msra.mxu0 %v4916
    %5831 = vmatpush.bf16.msra.mxu0 %v4909
    %5832 = vmatpush.bf16.msra.mxu0 %v4902
    %5833 = vmatmul.bf16.gmra.mxu0 %v2847
    %v5834 = vpop.f32.mrf.mxu0
    %v5835 = vadd.f32 %v5821, %v5834
    %v5836 = vpop.f32.mrf.mxu0
    %v5837 = vadd.f32 %v5823, %v5836
    %5838 = vdwg.mxu0
    %5839 = vmatpush.bf16.msra.mxu0 %v5007
    %5840 = vmatpush.bf16.msra.mxu0 %v5000
    %5841 = vmatpush.bf16.msra.mxu0 %v4993
    %5842 = vmatpush.bf16.msra.mxu0 %v4986
    %5843 = vmatpush.bf16.msra.mxu0 %v4979
    %5844 = vmatpush.bf16.msra.mxu0 %v4972
    %5845 = vmatpush.bf16.msra.mxu0 %v4965
    %5846 = vmatpush.bf16.msra.mxu0 %v4958
    %5847 = vmatmul.bf16.gmra.mxu0 %v2848
    %v5848 = vpop.f32.mrf.mxu0
    %v5849 = vadd.f32 %v5835, %v5848
    %v5850 = vpop.f32.mrf.mxu0
    %v5851 = vadd.f32 %v5837, %v5850
    %5852 = vdwg.mxu0
    %5853 = vmatpush.bf16.msra.mxu0 %v5063
    %5854 = vmatpush.bf16.msra.mxu0 %v5056
    %5855 = vmatpush.bf16.msra.mxu0 %v5049
    %5856 = vmatpush.bf16.msra.mxu0 %v5042
    %5857 = vmatpush.bf16.msra.mxu0 %v5035
    %5858 = vmatpush.bf16.msra.mxu0 %v5028
    %5859 = vmatpush.bf16.msra.mxu0 %v5021
    %5860 = vmatpush.bf16.msra.mxu0 %v5014
    %5861 = vmatmul.bf16.gmra.mxu0 %v2849
    %v5862 = vpop.f32.mrf.mxu0
    %v5863 = vadd.f32 %v5849, %v5862
    %v5864 = vpop.f32.mrf.mxu0
    %v5865 = vadd.f32 %v5851, %v5864
    %5866 = vdwg.mxu0
    %5867 = vmatpush.bf16.msra.mxu0 %v5119
    %5868 = vmatpush.bf16.msra.mxu0 %v5112
    %5869 = vmatpush.bf16.msra.mxu0 %v5105
    %5870 = vmatpush.bf16.msra.mxu0 %v5098
    %5871 = vmatpush.bf16.msra.mxu0 %v5091
    %5872 = vmatpush.bf16.msra.mxu0 %v5084
    %5873 = vmatpush.bf16.msra.mxu0 %v5077
    %5874 = vmatpush.bf16.msra.mxu0 %v5070
    %5875 = vmatmul.bf16.gmra.mxu0 %v2850
    %v5876 = vpop.f32.mrf.mxu0
    %v5877 = vadd.f32 %v5863, %v5876
    %v5878 = vpop.f32.mrf.mxu0
    %v5879 = vadd.f32 %v5865, %v5878
    %5880 = vdwg.mxu0
    %5881 = vmatpush.bf16.msra.mxu0 %v5175
    %5882 = vmatpush.bf16.msra.mxu0 %v5168
    %5883 = vmatpush.bf16.msra.mxu0 %v5161
    %5884 = vmatpush.bf16.msra.mxu0 %v5154
    %5885 = vmatpush.bf16.msra.mxu0 %v5147
    %5886 = vmatpush.bf16.msra.mxu0 %v5140
    %5887 = vmatpush.bf16.msra.mxu0 %v5133
    %5888 = vmatpush.bf16.msra.mxu0 %v5126
    %5889 = vmatmul.bf16.gmra.mxu0 %v2851
    %v5890 = vpop.f32.mrf.mxu0
    %v5891 = vadd.f32 %v5877, %v5890
    %v5892 = vpop.f32.mrf.mxu0
    %v5893 = vadd.f32 %v5879, %v5892
    %5894 = vdwg.mxu0
    %5895 = vmatpush.bf16.msra.mxu0 %v5231
    %5896 = vmatpush.bf16.msra.mxu0 %v5224
    %5897 = vmatpush.bf16.msra.mxu0 %v5217
    %5898 = vmatpush.bf16.msra.mxu0 %v5210
    %5899 = vmatpush.bf16.msra.mxu0 %v5203
    %5900 = vmatpush.bf16.msra.mxu0 %v5196
    %5901 = vmatpush.bf16.msra.mxu0 %v5189
    %5902 = vmatpush.bf16.msra.mxu0 %v5182
    %5903 = vmatmul.bf16.gmra.mxu0 %v2852
    %v5904 = vpop.f32.mrf.mxu0
    %v5905 = vadd.f32 %v5891, %v5904
    %v5906 = vpop.f32.mrf.mxu0
    %v5907 = vadd.f32 %v5893, %v5906
    %5908 = vdwg.mxu0
    %5909 = vmatpush.bf16.msra.mxu0 %v4840
    %5910 = vmatpush.bf16.msra.mxu0 %v4833
    %5911 = vmatpush.bf16.msra.mxu0 %v4826
    %5912 = vmatpush.bf16.msra.mxu0 %v4819
    %5913 = vmatpush.bf16.msra.mxu0 %v4812
    %5914 = vmatpush.bf16.msra.mxu0 %v4805
    %5915 = vmatpush.bf16.msra.mxu0 %v4798
    %5916 = vmatpush.bf16.msra.mxu0 %v4791
    %5917 = vmatmul.bf16.gmra.mxu0 %v2845
    %v5918 = vpop.f32.mrf.mxu0
    %v5919 = vadd.f32 %v3369, %v5918
    %v5920 = vpop.f32.mrf.mxu0
    %v5921 = vadd.f32 %v3369, %v5920
    %5922 = vdwg.mxu0
    %5923 = vmatpush.bf16.msra.mxu0 %v4896
    %5924 = vmatpush.bf16.msra.mxu0 %v4889
    %5925 = vmatpush.bf16.msra.mxu0 %v4882
    %5926 = vmatpush.bf16.msra.mxu0 %v4875
    %5927 = vmatpush.bf16.msra.mxu0 %v4868
    %5928 = vmatpush.bf16.msra.mxu0 %v4861
    %5929 = vmatpush.bf16.msra.mxu0 %v4854
    %5930 = vmatpush.bf16.msra.mxu0 %v4847
    %5931 = vmatmul.bf16.gmra.mxu0 %v2846
    %v5932 = vpop.f32.mrf.mxu0
    %v5933 = vadd.f32 %v5919, %v5932
    %v5934 = vpop.f32.mrf.mxu0
    %v5935 = vadd.f32 %v5921, %v5934
    %5936 = vdwg.mxu0
    %5937 = vmatpush.bf16.msra.mxu0 %v4952
    %5938 = vmatpush.bf16.msra.mxu0 %v4945
    %5939 = vmatpush.bf16.msra.mxu0 %v4938
    %5940 = vmatpush.bf16.msra.mxu0 %v4931
    %5941 = vmatpush.bf16.msra.mxu0 %v4924
    %5942 = vmatpush.bf16.msra.mxu0 %v4917
    %5943 = vmatpush.bf16.msra.mxu0 %v4910
    %5944 = vmatpush.bf16.msra.mxu0 %v4903
    %5945 = vmatmul.bf16.gmra.mxu0 %v2847
    %v5946 = vpop.f32.mrf.mxu0
    %v5947 = vadd.f32 %v5933, %v5946
    %v5948 = vpop.f32.mrf.mxu0
    %v5949 = vadd.f32 %v5935, %v5948
    %5950 = vdwg.mxu0
    %5951 = vmatpush.bf16.msra.mxu0 %v5008
    %5952 = vmatpush.bf16.msra.mxu0 %v5001
    %5953 = vmatpush.bf16.msra.mxu0 %v4994
    %5954 = vmatpush.bf16.msra.mxu0 %v4987
    %5955 = vmatpush.bf16.msra.mxu0 %v4980
    %5956 = vmatpush.bf16.msra.mxu0 %v4973
    %5957 = vmatpush.bf16.msra.mxu0 %v4966
    %5958 = vmatpush.bf16.msra.mxu0 %v4959
    %5959 = vmatmul.bf16.gmra.mxu0 %v2848
    %v5960 = vpop.f32.mrf.mxu0
    %v5961 = vadd.f32 %v5947, %v5960
    %v5962 = vpop.f32.mrf.mxu0
    %v5963 = vadd.f32 %v5949, %v5962
    %5964 = vdwg.mxu0
    %5965 = vmatpush.bf16.msra.mxu0 %v5064
    %5966 = vmatpush.bf16.msra.mxu0 %v5057
    %5967 = vmatpush.bf16.msra.mxu0 %v5050
    %5968 = vmatpush.bf16.msra.mxu0 %v5043
    %5969 = vmatpush.bf16.msra.mxu0 %v5036
    %5970 = vmatpush.bf16.msra.mxu0 %v5029
    %5971 = vmatpush.bf16.msra.mxu0 %v5022
    %5972 = vmatpush.bf16.msra.mxu0 %v5015
    %5973 = vmatmul.bf16.gmra.mxu0 %v2849
    %v5974 = vpop.f32.mrf.mxu0
    %v5975 = vadd.f32 %v5961, %v5974
    %v5976 = vpop.f32.mrf.mxu0
    %v5977 = vadd.f32 %v5963, %v5976
    %5978 = vdwg.mxu0
    %5979 = vmatpush.bf16.msra.mxu0 %v5120
    %5980 = vmatpush.bf16.msra.mxu0 %v5113
    %5981 = vmatpush.bf16.msra.mxu0 %v5106
    %5982 = vmatpush.bf16.msra.mxu0 %v5099
    %5983 = vmatpush.bf16.msra.mxu0 %v5092
    %5984 = vmatpush.bf16.msra.mxu0 %v5085
    %5985 = vmatpush.bf16.msra.mxu0 %v5078
    %5986 = vmatpush.bf16.msra.mxu0 %v5071
    %5987 = vmatmul.bf16.gmra.mxu0 %v2850
    %v5988 = vpop.f32.mrf.mxu0
    %v5989 = vadd.f32 %v5975, %v5988
    %v5990 = vpop.f32.mrf.mxu0
    %v5991 = vadd.f32 %v5977, %v5990
    %5992 = vdwg.mxu0
    %5993 = vmatpush.bf16.msra.mxu0 %v5176
    %5994 = vmatpush.bf16.msra.mxu0 %v5169
    %5995 = vmatpush.bf16.msra.mxu0 %v5162
    %5996 = vmatpush.bf16.msra.mxu0 %v5155
    %5997 = vmatpush.bf16.msra.mxu0 %v5148
    %5998 = vmatpush.bf16.msra.mxu0 %v5141
    %5999 = vmatpush.bf16.msra.mxu0 %v5134
    %6000 = vmatpush.bf16.msra.mxu0 %v5127
    %6001 = vmatmul.bf16.gmra.mxu0 %v2851
    %v6002 = vpop.f32.mrf.mxu0
    %v6003 = vadd.f32 %v5989, %v6002
    %v6004 = vpop.f32.mrf.mxu0
    %v6005 = vadd.f32 %v5991, %v6004
    %6006 = vdwg.mxu0
    %6007 = vmatpush.bf16.msra.mxu0 %v5232
    %6008 = vmatpush.bf16.msra.mxu0 %v5225
    %6009 = vmatpush.bf16.msra.mxu0 %v5218
    %6010 = vmatpush.bf16.msra.mxu0 %v5211
    %6011 = vmatpush.bf16.msra.mxu0 %v5204
    %6012 = vmatpush.bf16.msra.mxu0 %v5197
    %6013 = vmatpush.bf16.msra.mxu0 %v5190
    %6014 = vmatpush.bf16.msra.mxu0 %v5183
    %6015 = vmatmul.bf16.gmra.mxu0 %v2852
    %v6016 = vpop.f32.mrf.mxu0
    %v6017 = vadd.f32 %v6003, %v6016
    %v6018 = vpop.f32.mrf.mxu0
    %v6019 = vadd.f32 %v6005, %v6018
    %6020 = vdwg.mxu0
    %6021 = vmatpush.bf16.msra.mxu0 %v4841
    %6022 = vmatpush.bf16.msra.mxu0 %v4834
    %6023 = vmatpush.bf16.msra.mxu0 %v4827
    %6024 = vmatpush.bf16.msra.mxu0 %v4820
    %6025 = vmatpush.bf16.msra.mxu0 %v4813
    %6026 = vmatpush.bf16.msra.mxu0 %v4806
    %6027 = vmatpush.bf16.msra.mxu0 %v4799
    %6028 = vmatpush.bf16.msra.mxu0 %v4792
    %6029 = vmatmul.bf16.gmra.mxu0 %v2845
    %v6030 = vpop.f32.mrf.mxu0
    %v6031 = vadd.f32 %v3370, %v6030
    %v6032 = vpop.f32.mrf.mxu0
    %v6033 = vadd.f32 %v3370, %v6032
    %6034 = vdwg.mxu0
    %6035 = vmatpush.bf16.msra.mxu0 %v4897
    %6036 = vmatpush.bf16.msra.mxu0 %v4890
    %6037 = vmatpush.bf16.msra.mxu0 %v4883
    %6038 = vmatpush.bf16.msra.mxu0 %v4876
    %6039 = vmatpush.bf16.msra.mxu0 %v4869
    %6040 = vmatpush.bf16.msra.mxu0 %v4862
    %6041 = vmatpush.bf16.msra.mxu0 %v4855
    %6042 = vmatpush.bf16.msra.mxu0 %v4848
    %6043 = vmatmul.bf16.gmra.mxu0 %v2846
    %v6044 = vpop.f32.mrf.mxu0
    %v6045 = vadd.f32 %v6031, %v6044
    %v6046 = vpop.f32.mrf.mxu0
    %v6047 = vadd.f32 %v6033, %v6046
    %6048 = vdwg.mxu0
    %6049 = vmatpush.bf16.msra.mxu0 %v4953
    %6050 = vmatpush.bf16.msra.mxu0 %v4946
    %6051 = vmatpush.bf16.msra.mxu0 %v4939
    %6052 = vmatpush.bf16.msra.mxu0 %v4932
    %6053 = vmatpush.bf16.msra.mxu0 %v4925
    %6054 = vmatpush.bf16.msra.mxu0 %v4918
    %6055 = vmatpush.bf16.msra.mxu0 %v4911
    %6056 = vmatpush.bf16.msra.mxu0 %v4904
    %6057 = vmatmul.bf16.gmra.mxu0 %v2847
    %v6058 = vpop.f32.mrf.mxu0
    %v6059 = vadd.f32 %v6045, %v6058
    %v6060 = vpop.f32.mrf.mxu0
    %v6061 = vadd.f32 %v6047, %v6060
    %6062 = vdwg.mxu0
    %6063 = vmatpush.bf16.msra.mxu0 %v5009
    %6064 = vmatpush.bf16.msra.mxu0 %v5002
    %6065 = vmatpush.bf16.msra.mxu0 %v4995
    %6066 = vmatpush.bf16.msra.mxu0 %v4988
    %6067 = vmatpush.bf16.msra.mxu0 %v4981
    %6068 = vmatpush.bf16.msra.mxu0 %v4974
    %6069 = vmatpush.bf16.msra.mxu0 %v4967
    %6070 = vmatpush.bf16.msra.mxu0 %v4960
    %6071 = vmatmul.bf16.gmra.mxu0 %v2848
    %v6072 = vpop.f32.mrf.mxu0
    %v6073 = vadd.f32 %v6059, %v6072
    %v6074 = vpop.f32.mrf.mxu0
    %v6075 = vadd.f32 %v6061, %v6074
    %6076 = vdwg.mxu0
    %6077 = vmatpush.bf16.msra.mxu0 %v5065
    %6078 = vmatpush.bf16.msra.mxu0 %v5058
    %6079 = vmatpush.bf16.msra.mxu0 %v5051
    %6080 = vmatpush.bf16.msra.mxu0 %v5044
    %6081 = vmatpush.bf16.msra.mxu0 %v5037
    %6082 = vmatpush.bf16.msra.mxu0 %v5030
    %6083 = vmatpush.bf16.msra.mxu0 %v5023
    %6084 = vmatpush.bf16.msra.mxu0 %v5016
    %6085 = vmatmul.bf16.gmra.mxu0 %v2849
    %v6086 = vpop.f32.mrf.mxu0
    %v6087 = vadd.f32 %v6073, %v6086
    %v6088 = vpop.f32.mrf.mxu0
    %v6089 = vadd.f32 %v6075, %v6088
    %6090 = vdwg.mxu0
    %6091 = vmatpush.bf16.msra.mxu0 %v5121
    %6092 = vmatpush.bf16.msra.mxu0 %v5114
    %6093 = vmatpush.bf16.msra.mxu0 %v5107
    %6094 = vmatpush.bf16.msra.mxu0 %v5100
    %6095 = vmatpush.bf16.msra.mxu0 %v5093
    %6096 = vmatpush.bf16.msra.mxu0 %v5086
    %6097 = vmatpush.bf16.msra.mxu0 %v5079
    %6098 = vmatpush.bf16.msra.mxu0 %v5072
    %6099 = vmatmul.bf16.gmra.mxu0 %v2850
    %v6100 = vpop.f32.mrf.mxu0
    %v6101 = vadd.f32 %v6087, %v6100
    %v6102 = vpop.f32.mrf.mxu0
    %v6103 = vadd.f32 %v6089, %v6102
    %6104 = vdwg.mxu0
    %6105 = vmatpush.bf16.msra.mxu0 %v5177
    %6106 = vmatpush.bf16.msra.mxu0 %v5170
    %6107 = vmatpush.bf16.msra.mxu0 %v5163
    %6108 = vmatpush.bf16.msra.mxu0 %v5156
    %6109 = vmatpush.bf16.msra.mxu0 %v5149
    %6110 = vmatpush.bf16.msra.mxu0 %v5142
    %6111 = vmatpush.bf16.msra.mxu0 %v5135
    %6112 = vmatpush.bf16.msra.mxu0 %v5128
    %6113 = vmatmul.bf16.gmra.mxu0 %v2851
    %v6114 = vpop.f32.mrf.mxu0
    %v6115 = vadd.f32 %v6101, %v6114
    %v6116 = vpop.f32.mrf.mxu0
    %v6117 = vadd.f32 %v6103, %v6116
    %6118 = vdwg.mxu0
    %6119 = vmatpush.bf16.msra.mxu0 %v5233
    %6120 = vmatpush.bf16.msra.mxu0 %v5226
    %6121 = vmatpush.bf16.msra.mxu0 %v5219
    %6122 = vmatpush.bf16.msra.mxu0 %v5212
    %6123 = vmatpush.bf16.msra.mxu0 %v5205
    %6124 = vmatpush.bf16.msra.mxu0 %v5198
    %6125 = vmatpush.bf16.msra.mxu0 %v5191
    %6126 = vmatpush.bf16.msra.mxu0 %v5184
    %6127 = vmatmul.bf16.gmra.mxu0 %v2852
    %v6128 = vpop.f32.mrf.mxu0
    %v6129 = vadd.f32 %v6115, %v6128
    %v6130 = vpop.f32.mrf.mxu0
    %v6131 = vadd.f32 %v6117, %v6130
    %6132 = vdwg.mxu0
    %6133 = vmatpush.bf16.msra.mxu0 %v4842
    %6134 = vmatpush.bf16.msra.mxu0 %v4835
    %6135 = vmatpush.bf16.msra.mxu0 %v4828
    %6136 = vmatpush.bf16.msra.mxu0 %v4821
    %6137 = vmatpush.bf16.msra.mxu0 %v4814
    %6138 = vmatpush.bf16.msra.mxu0 %v4807
    %6139 = vmatpush.bf16.msra.mxu0 %v4800
    %6140 = vmatpush.bf16.msra.mxu0 %v4793
    %6141 = vmatmul.bf16.gmra.mxu0 %v2845
    %v6142 = vpop.f32.mrf.mxu0
    %v6143 = vadd.f32 %v3371, %v6142
    %v6144 = vpop.f32.mrf.mxu0
    %v6145 = vadd.f32 %v3371, %v6144
    %6146 = vdwg.mxu0
    %6147 = vmatpush.bf16.msra.mxu0 %v4898
    %6148 = vmatpush.bf16.msra.mxu0 %v4891
    %6149 = vmatpush.bf16.msra.mxu0 %v4884
    %6150 = vmatpush.bf16.msra.mxu0 %v4877
    %6151 = vmatpush.bf16.msra.mxu0 %v4870
    %6152 = vmatpush.bf16.msra.mxu0 %v4863
    %6153 = vmatpush.bf16.msra.mxu0 %v4856
    %6154 = vmatpush.bf16.msra.mxu0 %v4849
    %6155 = vmatmul.bf16.gmra.mxu0 %v2846
    %v6156 = vpop.f32.mrf.mxu0
    %v6157 = vadd.f32 %v6143, %v6156
    %v6158 = vpop.f32.mrf.mxu0
    %v6159 = vadd.f32 %v6145, %v6158
    %6160 = vdwg.mxu0
    %6161 = vmatpush.bf16.msra.mxu0 %v4954
    %6162 = vmatpush.bf16.msra.mxu0 %v4947
    %6163 = vmatpush.bf16.msra.mxu0 %v4940
    %6164 = vmatpush.bf16.msra.mxu0 %v4933
    %6165 = vmatpush.bf16.msra.mxu0 %v4926
    %6166 = vmatpush.bf16.msra.mxu0 %v4919
    %6167 = vmatpush.bf16.msra.mxu0 %v4912
    %6168 = vmatpush.bf16.msra.mxu0 %v4905
    %6169 = vmatmul.bf16.gmra.mxu0 %v2847
    %v6170 = vpop.f32.mrf.mxu0
    %v6171 = vadd.f32 %v6157, %v6170
    %v6172 = vpop.f32.mrf.mxu0
    %v6173 = vadd.f32 %v6159, %v6172
    %6174 = vdwg.mxu0
    %6175 = vmatpush.bf16.msra.mxu0 %v5010
    %6176 = vmatpush.bf16.msra.mxu0 %v5003
    %6177 = vmatpush.bf16.msra.mxu0 %v4996
    %6178 = vmatpush.bf16.msra.mxu0 %v4989
    %6179 = vmatpush.bf16.msra.mxu0 %v4982
    %6180 = vmatpush.bf16.msra.mxu0 %v4975
    %6181 = vmatpush.bf16.msra.mxu0 %v4968
    %6182 = vmatpush.bf16.msra.mxu0 %v4961
    %6183 = vmatmul.bf16.gmra.mxu0 %v2848
    %v6184 = vpop.f32.mrf.mxu0
    %v6185 = vadd.f32 %v6171, %v6184
    %v6186 = vpop.f32.mrf.mxu0
    %v6187 = vadd.f32 %v6173, %v6186
    %6188 = vdwg.mxu0
    %6189 = vmatpush.bf16.msra.mxu0 %v5066
    %6190 = vmatpush.bf16.msra.mxu0 %v5059
    %6191 = vmatpush.bf16.msra.mxu0 %v5052
    %6192 = vmatpush.bf16.msra.mxu0 %v5045
    %6193 = vmatpush.bf16.msra.mxu0 %v5038
    %6194 = vmatpush.bf16.msra.mxu0 %v5031
    %6195 = vmatpush.bf16.msra.mxu0 %v5024
    %6196 = vmatpush.bf16.msra.mxu0 %v5017
    %6197 = vmatmul.bf16.gmra.mxu0 %v2849
    %v6198 = vpop.f32.mrf.mxu0
    %v6199 = vadd.f32 %v6185, %v6198
    %v6200 = vpop.f32.mrf.mxu0
    %v6201 = vadd.f32 %v6187, %v6200
    %6202 = vdwg.mxu0
    %6203 = vmatpush.bf16.msra.mxu0 %v5122
    %6204 = vmatpush.bf16.msra.mxu0 %v5115
    %6205 = vmatpush.bf16.msra.mxu0 %v5108
    %6206 = vmatpush.bf16.msra.mxu0 %v5101
    %6207 = vmatpush.bf16.msra.mxu0 %v5094
    %6208 = vmatpush.bf16.msra.mxu0 %v5087
    %6209 = vmatpush.bf16.msra.mxu0 %v5080
    %6210 = vmatpush.bf16.msra.mxu0 %v5073
    %6211 = vmatmul.bf16.gmra.mxu0 %v2850
    %v6212 = vpop.f32.mrf.mxu0
    %v6213 = vadd.f32 %v6199, %v6212
    %v6214 = vpop.f32.mrf.mxu0
    %v6215 = vadd.f32 %v6201, %v6214
    %6216 = vdwg.mxu0
    %6217 = vmatpush.bf16.msra.mxu0 %v5178
    %6218 = vmatpush.bf16.msra.mxu0 %v5171
    %6219 = vmatpush.bf16.msra.mxu0 %v5164
    %6220 = vmatpush.bf16.msra.mxu0 %v5157
    %6221 = vmatpush.bf16.msra.mxu0 %v5150
    %6222 = vmatpush.bf16.msra.mxu0 %v5143
    %6223 = vmatpush.bf16.msra.mxu0 %v5136
    %6224 = vmatpush.bf16.msra.mxu0 %v5129
    %6225 = vmatmul.bf16.gmra.mxu0 %v2851
    %v6226 = vpop.f32.mrf.mxu0
    %v6227 = vadd.f32 %v6213, %v6226
    %v6228 = vpop.f32.mrf.mxu0
    %v6229 = vadd.f32 %v6215, %v6228
    %6230 = vdwg.mxu0
    %6231 = vmatpush.bf16.msra.mxu0 %v5234
    %6232 = vmatpush.bf16.msra.mxu0 %v5227
    %6233 = vmatpush.bf16.msra.mxu0 %v5220
    %6234 = vmatpush.bf16.msra.mxu0 %v5213
    %6235 = vmatpush.bf16.msra.mxu0 %v5206
    %6236 = vmatpush.bf16.msra.mxu0 %v5199
    %6237 = vmatpush.bf16.msra.mxu0 %v5192
    %6238 = vmatpush.bf16.msra.mxu0 %v5185
    %6239 = vmatmul.bf16.gmra.mxu0 %v2852
    %v6240 = vpop.f32.mrf.mxu0
    %v6241 = vadd.f32 %v6227, %v6240
    %v6242 = vpop.f32.mrf.mxu0
    %v6243 = vadd.f32 %v6229, %v6242
    %6244 = vdwg.mxu0
    %6245 = vmatpush.bf16.msra.mxu0 %v4843
    %6246 = vmatpush.bf16.msra.mxu0 %v4836
    %6247 = vmatpush.bf16.msra.mxu0 %v4829
    %6248 = vmatpush.bf16.msra.mxu0 %v4822
    %6249 = vmatpush.bf16.msra.mxu0 %v4815
    %6250 = vmatpush.bf16.msra.mxu0 %v4808
    %6251 = vmatpush.bf16.msra.mxu0 %v4801
    %6252 = vmatpush.bf16.msra.mxu0 %v4794
    %6253 = vmatmul.bf16.gmra.mxu0 %v2845
    %v6254 = vpop.f32.mrf.mxu0
    %v6255 = vadd.f32 %v3372, %v6254
    %v6256 = vpop.f32.mrf.mxu0
    %v6257 = vadd.f32 %v3372, %v6256
    %6258 = vdwg.mxu0
    %6259 = vmatpush.bf16.msra.mxu0 %v4899
    %6260 = vmatpush.bf16.msra.mxu0 %v4892
    %6261 = vmatpush.bf16.msra.mxu0 %v4885
    %6262 = vmatpush.bf16.msra.mxu0 %v4878
    %6263 = vmatpush.bf16.msra.mxu0 %v4871
    %6264 = vmatpush.bf16.msra.mxu0 %v4864
    %6265 = vmatpush.bf16.msra.mxu0 %v4857
    %6266 = vmatpush.bf16.msra.mxu0 %v4850
    %6267 = vmatmul.bf16.gmra.mxu0 %v2846
    %v6268 = vpop.f32.mrf.mxu0
    %v6269 = vadd.f32 %v6255, %v6268
    %v6270 = vpop.f32.mrf.mxu0
    %v6271 = vadd.f32 %v6257, %v6270
    %6272 = vdwg.mxu0
    %6273 = vmatpush.bf16.msra.mxu0 %v4955
    %6274 = vmatpush.bf16.msra.mxu0 %v4948
    %6275 = vmatpush.bf16.msra.mxu0 %v4941
    %6276 = vmatpush.bf16.msra.mxu0 %v4934
    %6277 = vmatpush.bf16.msra.mxu0 %v4927
    %6278 = vmatpush.bf16.msra.mxu0 %v4920
    %6279 = vmatpush.bf16.msra.mxu0 %v4913
    %6280 = vmatpush.bf16.msra.mxu0 %v4906
    %6281 = vmatmul.bf16.gmra.mxu0 %v2847
    %v6282 = vpop.f32.mrf.mxu0
    %v6283 = vadd.f32 %v6269, %v6282
    %v6284 = vpop.f32.mrf.mxu0
    %v6285 = vadd.f32 %v6271, %v6284
    %6286 = vdwg.mxu0
    %6287 = vmatpush.bf16.msra.mxu0 %v5011
    %6288 = vmatpush.bf16.msra.mxu0 %v5004
    %6289 = vmatpush.bf16.msra.mxu0 %v4997
    %6290 = vmatpush.bf16.msra.mxu0 %v4990
    %6291 = vmatpush.bf16.msra.mxu0 %v4983
    %6292 = vmatpush.bf16.msra.mxu0 %v4976
    %6293 = vmatpush.bf16.msra.mxu0 %v4969
    %6294 = vmatpush.bf16.msra.mxu0 %v4962
    %6295 = vmatmul.bf16.gmra.mxu0 %v2848
    %v6296 = vpop.f32.mrf.mxu0
    %v6297 = vadd.f32 %v6283, %v6296
    %v6298 = vpop.f32.mrf.mxu0
    %v6299 = vadd.f32 %v6285, %v6298
    %6300 = vdwg.mxu0
    %6301 = vmatpush.bf16.msra.mxu0 %v5067
    %6302 = vmatpush.bf16.msra.mxu0 %v5060
    %6303 = vmatpush.bf16.msra.mxu0 %v5053
    %6304 = vmatpush.bf16.msra.mxu0 %v5046
    %6305 = vmatpush.bf16.msra.mxu0 %v5039
    %6306 = vmatpush.bf16.msra.mxu0 %v5032
    %6307 = vmatpush.bf16.msra.mxu0 %v5025
    %6308 = vmatpush.bf16.msra.mxu0 %v5018
    %6309 = vmatmul.bf16.gmra.mxu0 %v2849
    %v6310 = vpop.f32.mrf.mxu0
    %v6311 = vadd.f32 %v6297, %v6310
    %v6312 = vpop.f32.mrf.mxu0
    %v6313 = vadd.f32 %v6299, %v6312
    %6314 = vdwg.mxu0
    %6315 = vmatpush.bf16.msra.mxu0 %v5123
    %6316 = vmatpush.bf16.msra.mxu0 %v5116
    %6317 = vmatpush.bf16.msra.mxu0 %v5109
    %6318 = vmatpush.bf16.msra.mxu0 %v5102
    %6319 = vmatpush.bf16.msra.mxu0 %v5095
    %6320 = vmatpush.bf16.msra.mxu0 %v5088
    %6321 = vmatpush.bf16.msra.mxu0 %v5081
    %6322 = vmatpush.bf16.msra.mxu0 %v5074
    %6323 = vmatmul.bf16.gmra.mxu0 %v2850
    %v6324 = vpop.f32.mrf.mxu0
    %v6325 = vadd.f32 %v6311, %v6324
    %v6326 = vpop.f32.mrf.mxu0
    %v6327 = vadd.f32 %v6313, %v6326
    %6328 = vdwg.mxu0
    %6329 = vmatpush.bf16.msra.mxu0 %v5179
    %6330 = vmatpush.bf16.msra.mxu0 %v5172
    %6331 = vmatpush.bf16.msra.mxu0 %v5165
    %6332 = vmatpush.bf16.msra.mxu0 %v5158
    %6333 = vmatpush.bf16.msra.mxu0 %v5151
    %6334 = vmatpush.bf16.msra.mxu0 %v5144
    %6335 = vmatpush.bf16.msra.mxu0 %v5137
    %6336 = vmatpush.bf16.msra.mxu0 %v5130
    %6337 = vmatmul.bf16.gmra.mxu0 %v2851
    %v6338 = vpop.f32.mrf.mxu0
    %v6339 = vadd.f32 %v6325, %v6338
    %v6340 = vpop.f32.mrf.mxu0
    %v6341 = vadd.f32 %v6327, %v6340
    %6342 = vdwg.mxu0
    %6343 = vmatpush.bf16.msra.mxu0 %v5235
    %6344 = vmatpush.bf16.msra.mxu0 %v5228
    %6345 = vmatpush.bf16.msra.mxu0 %v5221
    %6346 = vmatpush.bf16.msra.mxu0 %v5214
    %6347 = vmatpush.bf16.msra.mxu0 %v5207
    %6348 = vmatpush.bf16.msra.mxu0 %v5200
    %6349 = vmatpush.bf16.msra.mxu0 %v5193
    %6350 = vmatpush.bf16.msra.mxu0 %v5186
    %6351 = vmatmul.bf16.gmra.mxu0 %v2852
    %v6352 = vpop.f32.mrf.mxu0
    %v6353 = vadd.f32 %v6339, %v6352
    %v6354 = vpop.f32.mrf.mxu0
    %v6355 = vadd.f32 %v6341, %v6354
    %6356 = vdwg.mxu0
    %6357 = vmatpush.bf16.msra.mxu0 %v4844
    %6358 = vmatpush.bf16.msra.mxu0 %v4837
    %6359 = vmatpush.bf16.msra.mxu0 %v4830
    %6360 = vmatpush.bf16.msra.mxu0 %v4823
    %6361 = vmatpush.bf16.msra.mxu0 %v4816
    %6362 = vmatpush.bf16.msra.mxu0 %v4809
    %6363 = vmatpush.bf16.msra.mxu0 %v4802
    %6364 = vmatpush.bf16.msra.mxu0 %v4795
    %6365 = vmatmul.bf16.gmra.mxu0 %v2845
    %v6366 = vpop.f32.mrf.mxu0
    %v6367 = vadd.f32 %v3373, %v6366
    %v6368 = vpop.f32.mrf.mxu0
    %v6369 = vadd.f32 %v3373, %v6368
    %6370 = vdwg.mxu0
    %6371 = vmatpush.bf16.msra.mxu0 %v4900
    %6372 = vmatpush.bf16.msra.mxu0 %v4893
    %6373 = vmatpush.bf16.msra.mxu0 %v4886
    %6374 = vmatpush.bf16.msra.mxu0 %v4879
    %6375 = vmatpush.bf16.msra.mxu0 %v4872
    %6376 = vmatpush.bf16.msra.mxu0 %v4865
    %6377 = vmatpush.bf16.msra.mxu0 %v4858
    %6378 = vmatpush.bf16.msra.mxu0 %v4851
    %6379 = vmatmul.bf16.gmra.mxu0 %v2846
    %v6380 = vpop.f32.mrf.mxu0
    %v6381 = vadd.f32 %v6367, %v6380
    %v6382 = vpop.f32.mrf.mxu0
    %v6383 = vadd.f32 %v6369, %v6382
    %6384 = vdwg.mxu0
    %6385 = vmatpush.bf16.msra.mxu0 %v4956
    %6386 = vmatpush.bf16.msra.mxu0 %v4949
    %6387 = vmatpush.bf16.msra.mxu0 %v4942
    %6388 = vmatpush.bf16.msra.mxu0 %v4935
    %6389 = vmatpush.bf16.msra.mxu0 %v4928
    %6390 = vmatpush.bf16.msra.mxu0 %v4921
    %6391 = vmatpush.bf16.msra.mxu0 %v4914
    %6392 = vmatpush.bf16.msra.mxu0 %v4907
    %6393 = vmatmul.bf16.gmra.mxu0 %v2847
    %v6394 = vpop.f32.mrf.mxu0
    %v6395 = vadd.f32 %v6381, %v6394
    %v6396 = vpop.f32.mrf.mxu0
    %v6397 = vadd.f32 %v6383, %v6396
    %6398 = vdwg.mxu0
    %6399 = vmatpush.bf16.msra.mxu0 %v5012
    %6400 = vmatpush.bf16.msra.mxu0 %v5005
    %6401 = vmatpush.bf16.msra.mxu0 %v4998
    %6402 = vmatpush.bf16.msra.mxu0 %v4991
    %6403 = vmatpush.bf16.msra.mxu0 %v4984
    %6404 = vmatpush.bf16.msra.mxu0 %v4977
    %6405 = vmatpush.bf16.msra.mxu0 %v4970
    %6406 = vmatpush.bf16.msra.mxu0 %v4963
    %6407 = vmatmul.bf16.gmra.mxu0 %v2848
    %v6408 = vpop.f32.mrf.mxu0
    %v6409 = vadd.f32 %v6395, %v6408
    %v6410 = vpop.f32.mrf.mxu0
    %v6411 = vadd.f32 %v6397, %v6410
    %6412 = vdwg.mxu0
    %6413 = vmatpush.bf16.msra.mxu0 %v5068
    %6414 = vmatpush.bf16.msra.mxu0 %v5061
    %6415 = vmatpush.bf16.msra.mxu0 %v5054
    %6416 = vmatpush.bf16.msra.mxu0 %v5047
    %6417 = vmatpush.bf16.msra.mxu0 %v5040
    %6418 = vmatpush.bf16.msra.mxu0 %v5033
    %6419 = vmatpush.bf16.msra.mxu0 %v5026
    %6420 = vmatpush.bf16.msra.mxu0 %v5019
    %6421 = vmatmul.bf16.gmra.mxu0 %v2849
    %v6422 = vpop.f32.mrf.mxu0
    %v6423 = vadd.f32 %v6409, %v6422
    %v6424 = vpop.f32.mrf.mxu0
    %v6425 = vadd.f32 %v6411, %v6424
    %6426 = vdwg.mxu0
    %6427 = vmatpush.bf16.msra.mxu0 %v5124
    %6428 = vmatpush.bf16.msra.mxu0 %v5117
    %6429 = vmatpush.bf16.msra.mxu0 %v5110
    %6430 = vmatpush.bf16.msra.mxu0 %v5103
    %6431 = vmatpush.bf16.msra.mxu0 %v5096
    %6432 = vmatpush.bf16.msra.mxu0 %v5089
    %6433 = vmatpush.bf16.msra.mxu0 %v5082
    %6434 = vmatpush.bf16.msra.mxu0 %v5075
    %6435 = vmatmul.bf16.gmra.mxu0 %v2850
    %v6436 = vpop.f32.mrf.mxu0
    %v6437 = vadd.f32 %v6423, %v6436
    %v6438 = vpop.f32.mrf.mxu0
    %v6439 = vadd.f32 %v6425, %v6438
    %6440 = vdwg.mxu0
    %6441 = vmatpush.bf16.msra.mxu0 %v5180
    %6442 = vmatpush.bf16.msra.mxu0 %v5173
    %6443 = vmatpush.bf16.msra.mxu0 %v5166
    %6444 = vmatpush.bf16.msra.mxu0 %v5159
    %6445 = vmatpush.bf16.msra.mxu0 %v5152
    %6446 = vmatpush.bf16.msra.mxu0 %v5145
    %6447 = vmatpush.bf16.msra.mxu0 %v5138
    %6448 = vmatpush.bf16.msra.mxu0 %v5131
    %6449 = vmatmul.bf16.gmra.mxu0 %v2851
    %v6450 = vpop.f32.mrf.mxu0
    %v6451 = vadd.f32 %v6437, %v6450
    %v6452 = vpop.f32.mrf.mxu0
    %v6453 = vadd.f32 %v6439, %v6452
    %6454 = vdwg.mxu0
    %6455 = vmatpush.bf16.msra.mxu0 %v5236
    %6456 = vmatpush.bf16.msra.mxu0 %v5229
    %6457 = vmatpush.bf16.msra.mxu0 %v5222
    %6458 = vmatpush.bf16.msra.mxu0 %v5215
    %6459 = vmatpush.bf16.msra.mxu0 %v5208
    %6460 = vmatpush.bf16.msra.mxu0 %v5201
    %6461 = vmatpush.bf16.msra.mxu0 %v5194
    %6462 = vmatpush.bf16.msra.mxu0 %v5187
    %6463 = vmatmul.bf16.gmra.mxu0 %v2852
    %v6464 = vpop.f32.mrf.mxu0
    %v6465 = vadd.f32 %v6451, %v6464
    %v6466 = vpop.f32.mrf.mxu0
    %v6467 = vadd.f32 %v6453, %v6466
    %6468 = vdwg.mxu0
    %v6469 = vtanh.pop %v5793
    %v6470 = vtanh.pop %v5905
    %v6471 = vtanh.pop %v6017
    %v6472 = vtanh.pop %v6129
    %v6473 = vtanh.pop %v6241
    %v6474 = vtanh.pop %v6353
    %v6475 = vtanh.pop %v6465
    %v6476 = vtanh.pop %v5795
    %v6477 = vtanh.pop %v5907
    %v6478 = vtanh.pop %v6019
    %v6479 = vtanh.pop %v6131
    %v6480 = vtanh.pop %v6243
    %v6481 = vtanh.pop %v6355
    %v6482 = vtanh.pop %v6467
    %v6483 = vpack.c.bf16 %v6470, %v6469
    %v6484 = vpack.c.bf16 %v6472, %v6471
    %v6485 = vpack.c.bf16 %v6474, %v6473
    %v6486 = vpack.c.bf16 %v6475, %v6475
    %v6487 = vpack.c.bf16 %v6477, %v6476
    %v6488 = vpack.c.bf16 %v6479, %v6478
    %v6489 = vpack.c.bf16 %v6481, %v6480
    %v6490 = vpack.c.bf16 %v6482, %v6482
    %6491 = vst [vmem:[#allocation17] sm:$0xff] %v6483
    %6492 = vst [vmem:[#allocation17 + $0x8] sm:$0xff] %v6484
    %6493 = vst [vmem:[#allocation17 + $0x10] sm:$0xff] %v6485
    %6494 = vst [vmem:[#allocation17 + $0x18] sm:$0xf] %v6486
    %6495 = vst [vmem:[#allocation17 + $0x1c] sm:$0xff] %v6487
    %6496 = vst [vmem:[#allocation17 + $0x24] sm:$0xff] %v6488
    %6497 = vst [vmem:[#allocation17 + $0x2c] sm:$0xff] %v6489
    %6498 = vst [vmem:[#allocation17 + $0x34] sm:$0xf] %v6490
    // Predicated region
    $region74: #{tpu_custom_call.1} parent=1 // pred_check
      _
    $region75: #{tpu_custom_call.1} parent=1 // pred_check_branch
      %6500 = sbr.rel (0) target = $region77
    $region76: #{tpu_custom_call.1} parent=1 // pred_region
      %6502 = vsyncadd [#allocation4], 0
      %s6503 = sshll.u32 [#allocation17], 4
      %s6504 = int_to_ptr.vmem [resolvable:$true] %s6503
      %s6505 = sshll.u32 %s9, 4
      %s6506 = int_to_ptr.hbm [resolvable:$true] %s6505
      %6511 = dma.vmem_to_hbm [thread:$0]  %s6504, 896, %s6506, [#allocation4], 448, 448, 28
    $region77: #{tpu_custom_call.1} parent=1 // pred_fallthru
      _
    // Predicated region
    $region78: #{tpu_custom_call.1} parent=1 // pred_check
      _
    $region79: #{tpu_custom_call.1} parent=1 // pred_check_branch
      %6513 = sbr.rel (0) target = $region81
    $region80: #{tpu_custom_call.1} parent=1 // pred_region
      %6515 = dma.done [#allocation4], 896
    $region81: #{tpu_custom_call.1} parent=1 // pred_fallthru
      _
    %6516 = vsyncpa [#allocation3], 1
    %6517 = vsyncpa [#allocation6], 1
    %6518 = vsyncpa [#allocation9], 1
    %6519 = vsyncpa [#allocation12], 1
    %6520 = vsyncpa [#allocation15], 1
    %6521 = vsyncpa [#allocation4], 1

</llo_original>
